<compile_context>
chip_gen: v7x
topology: tpu7x:2x2x1
jax: 0.10.0
libtpu: 0.0.40
codegen_flags: <defaults>
</compile_context>

<pallas_src>
import jax
import jax.numpy as jnp
from jax.experimental import pallas as pl
from jax.experimental.pallas import tpu as pltpu


def _mps_kernel(idx_ref, b0_ref, wp_ref, ct_ref, out_ref, tmp_ref):
    """One batch tile (lane axis = batch) of MPS amplitudes.

    idx_ref : [npairs+2, Bt] int32  row 0: site-0 phys index (0..3)
                                    rows 1..npairs: combined pair index (0..15)
                                    last row: final-site phys index (0..3)
    b0_ref  : [D, P]            f32  vL folded into site 0:    b0[j,n] = sum_i vL[i] A0[n,i,j]
    wp_ref  : [npairs, P*P*D, D] bf16 fused + transposed pair weights:
                                    wp[p, (n*P+m)*D + j, i] = (A_k[n] @ A_{k+1}[m])[i, j]
    ct_ref  : [D, P]            f32  vR folded into last site: ct[i,n] = sum_j A_L[n,i,j] vR[j]
    out_ref : [1, Bt]           f32  amplitudes (lane-dense)
    tmp_ref : [P*P*D, Bt]       f32  VMEM staging for the fused MXU result
    """
    R, _Bt = idx_ref.shape
    D, P = b0_ref.shape
    npairs = wp_ref.shape[0]
    PP = wp_ref.shape[1] // D

    # --- site 0: VPU select of the vL-contracted rows (init from n=0 term, no zeros+add).
    n0 = idx_ref[0:1, :]                                                # [1, Bt]
    v = (n0 == 0).astype(jnp.float32) * b0_ref[:, 0:1]                  # [D, Bt]
    for n in range(1, P):
        v = v + (n0 == n).astype(jnp.float32) * b0_ref[:, n:n + 1]

    # --- fused site pairs: one [P*P*D, D] x [D, Bt] bf16 MXU matmul per pair (M = 256 rows),
    #     staged through VMEM, then a 16-way masked sum (VPU) over the combined index.
    #     v and masks stay f32; only the MXU operands are bf16 (v5e has no bf16 VPU path).
    for p in range(npairs):
        tmp_ref[...] = jnp.dot(wp_ref[p], v.astype(jnp.bfloat16),
                               preferred_element_type=jnp.float32)      # [P*P*D, Bt]
        c = idx_ref[p + 1:p + 2, :]                                     # [1, Bt]
        acc = (c == 0).astype(jnp.float32) * tmp_ref[0:D, :]
        for cc in range(1, PP):
            acc = acc + (c == cc).astype(jnp.float32) * tmp_ref[cc * D:(cc + 1) * D, :]
        v = acc

    # --- last site: select the vR-contracted columns and reduce over the bond (XLU).
    nL = idx_ref[R - 1:R, :]                                            # [1, Bt]
    sel = (nL == 0).astype(jnp.float32) * ct_ref[:, 0:1]
    for n in range(1, P):
        sel = sel + (nL == n).astype(jnp.float32) * ct_ref[:, n:n + 1]
    out_ref[...] = jnp.sum(sel * v, axis=0, keepdims=True)              # [1, Bt]


def mps_amplitude(idx, b0t, wp, ct, *, batch_tile=512):
    """idx: [npairs+2, B] int32 packed physical/pair indices; returns [B, 1] f32 amplitudes."""
    R, B = idx.shape
    D, P = b0t.shape
    npairs, PPD, D2 = wp.shape
    assert npairs == R - 2 and PPD == P * P * D and D2 == D and ct.shape == (D, P)
    assert D % 8 == 0, "bond dim must be a multiple of 8 (aligned sublane slices of tmp)"
    assert batch_tile % 128 == 0, "batch tile must be lane-dense"

    # Pad ragged batches to a multiple of the (128-aligned) batch tile.
    Bp = -(-B // batch_tile) * batch_tile
    if Bp != B:
        idx = jnp.pad(idx, ((0, 0), (0, Bp - B)))
    grid = (Bp // batch_tile,)

    out = pl.pallas_call(
        _mps_kernel,
        out_shape=jax.ShapeDtypeStruct((1, Bp), jnp.float32),
        grid_spec=pltpu.PrefetchScalarGridSpec(
            num_scalar_prefetch=0,
            grid=grid,
            in_specs=[
                pl.BlockSpec((R, batch_tile), lambda i: (0, i)),         # packed indices
                pl.BlockSpec((D, P), lambda i: (0, 0)),                  # site 0 (vL folded)
                # TODO(synk): at realistic bond dims, stream site pairs through an inner
                # "arbitrary" grid axis (or pltpu.emit_pipeline) and single-buffer these
                # constant-index weights instead of keeping every pair tensor resident and
                # double-buffered in VMEM (v7x's 64 MiB is the binding tier).
                pl.BlockSpec((npairs, PPD, D), lambda i: (0, 0, 0)),     # fused pair tensors
                pl.BlockSpec((D, P), lambda i: (0, 0)),                  # last site (vR folded)
            ],
            out_specs=pl.BlockSpec((1, batch_tile), lambda i: (0, i)),   # lane-dense output
            scratch_shapes=[pltpu.VMEM((PPD, batch_tile), jnp.float32)],
        ),
        compiler_params=pltpu.CompilerParams(
            dimension_semantics=("parallel",)),
    )(idx, b0t, wp, ct)

    return out[0, :B].reshape(B, 1)


def mps_amplitude_ref(phys, tensors, vl, vr):
    """Exact f32 dense-MPS reference (explicit boundary vectors, no fusion, no bf16)."""
    B, L = phys.shape
    D = tensors.shape[2]
    v = jnp.broadcast_to(vl, (B, D)).astype(jnp.float32)
    for k in range(L):
        mats = tensors[k][phys[:, k]]                                    # [B, D, D]
        v = jnp.einsum("bd,bde->be", v, mats)
    return v @ vr                                                        # [B, 1]


def mps_amplitude_fused_ref(idx, b0t, wp, ct):
    """Pure-JAX replay of the exact fused/bf16 pipeline (structural check of the kernel)."""
    R, B = idx.shape
    D, P = b0t.shape
    npairs = R - 2
    PP = wp.shape[1] // D
    v = b0t[:, idx[0]]                                                   # [D, B]
    for p in range(npairs):
        tmp = jnp.dot(wp[p], v.astype(jnp.bfloat16),
                      preferred_element_type=jnp.float32).reshape(PP, D, B)
        onehot = jax.nn.one_hot(idx[p + 1], PP, dtype=jnp.float32)       # [B, PP]
        v = jnp.einsum("cdb,bc->db", tmp, onehot)                        # [D, B]
    sel = ct[:, idx[R - 1]]                                              # [D, B]
    return jnp.sum(sel * v, axis=0).reshape(B, 1)


class MPSWavefunctionPallas:
    """Synthetic stand-in for MPSWavefunction: dense uniform-bond MPS."""

    def __init__(self, nphysical: int, bond_dim: int, key):
        self.nphysical = nphysical
        self.bond_dim = bond_dim
        L, P, D = nphysical, 4, bond_dim
        assert L >= 3, "kernel splits off first/last site; need at least 3 sites"
        assert D % 8 == 0, "bond dim must be sublane-aligned"
        k1, k2, k3, k4 = jax.random.split(key, 4)
        # Deterministic synthetic "mps.data" (scaled to keep amplitudes O(1)).
        self.tensors = (jax.random.normal(k1, (L, P, D, D), jnp.float32)
                        / jnp.sqrt(jnp.float32(D)))
        self.vl = jax.random.normal(k2, (1, D), jnp.float32)
        self.vr = jax.random.normal(k3, (D, 1), jnp.float32) / jnp.sqrt(jnp.float32(D))
        # image2: permutation mapping the 2*nphysical spin orbitals onto sites.
        self.image2 = jax.random.permutation(k4, jnp.arange(2 * nphysical, dtype=jnp.int32))

        # ---- host-side pre-contraction (done once, outside the hot path) ----
        t = self.tensors
        # boundary folds -> per-physical-index select tables (pure VPU selects in-kernel)
        self.b0t = jnp.einsum("i,nij->jn", self.vl.reshape(-1), t[0])            # [D, P]
        self.ct = jnp.einsum("nij,j->in", t[L - 1], self.vr.reshape(-1))         # [D, P]
        # middle sites: fuse adjacent pairs so each in-kernel matmul has M = P*P*D rows
        mid = t[1:L - 1]                                                          # [L-2, P, D, D]
        if mid.shape[0] % 2 == 1:
            # pad with an identity "site" so every middle site belongs to a pair
            eye = jnp.broadcast_to(jnp.eye(D, dtype=jnp.float32), (1, P, D, D))
            mid = jnp.concatenate([mid, eye], axis=0)
        a, b = mid[0::2], mid[1::2]                                               # [npairs, P, D, D]
        pair = jnp.einsum("pnik,pmkj->pnmij", a, b)                               # A_k[n] @ A_{k+1}[m]
        # transposed blocks for the column-vector update; bf16 MXU operands (f32 accumulation)
        self.wp = (jnp.transpose(pair, (0, 1, 2, 4, 3))
                   .reshape(-1, P * P * D, D).astype(jnp.bfloat16))               # [npairs, 16*D, D]
        self.npairs = self.wp.shape[0]

    def _phys_index(self, onstate):
        # onstate: [B, 2*nphysical] in {0,1}; pairs of permuted spin orbitals -> site index {0..3}
        on_perm = onstate[:, self.image2]                                         # [B, 2L]
        return (2 * on_perm[:, 0::2] + on_perm[:, 1::2]).astype(jnp.int32)        # [B, L]

    def _pack_indices(self, phys):
        # rows: [site-0 index | combined pair indices (n*4+m) | last-site index], batch on lanes
        B, L = phys.shape
        mid = phys[:, 1:L - 1]
        if mid.shape[1] % 2 == 1:
            mid = jnp.pad(mid, ((0, 0), (0, 1)))      # identity-padded site -> index 0
        pairc = 4 * mid[:, 0::2] + mid[:, 1::2]                                   # [B, npairs]
        idx = jnp.concatenate([phys[:, :1], pairc, phys[:, L - 1:]], axis=1)      # [B, npairs+2]
        return jnp.transpose(idx).astype(jnp.int32)                               # [npairs+2, B]

    def forward(self, onstate):
        if onstate.shape[1] != 2 * self.nphysical:
            raise ValueError("onstate width != 2 * nphysical")
        phys = self._phys_index(onstate)              # glue (plain JAX)
        idx = self._pack_indices(phys)
        return mps_amplitude(idx, self.b0t, self.wp, self.ct)

    def forward_fused_ref(self, onstate):
        phys = self._phys_index(onstate)
        idx = self._pack_indices(phys)
        return mps_amplitude_fused_ref(idx, self.b0t, self.wp, self.ct)

    def forward_ref(self, onstate):
        phys = self._phys_index(onstate)
        return mps_amplitude_ref(phys, self.tensors, self.vl, self.vr)


if __name__ == "__main__":
    key = jax.random.PRNGKey(0)
    k_mod, k_state = jax.random.split(key)

    nphysical = 9        # -> 18 spin orbitals, 9 sites (odd middle count exercises identity pad)
    bond_dim = 16
    batch = 4096         # 8 tiles of 512 -> even grid with >=4 steps per v7x TensorCore

    model = MPSWavefunctionPallas(nphysical, bond_dim, k_mod)

    # Deterministic occupation-number configurations (0/1 bits).
    onstate = jax.random.bernoulli(
        k_state, 0.5, (batch, 2 * nphysical)).astype(jnp.int32)

    out = jax.block_until_ready(model.forward(onstate))
    assert out.shape == (batch, 1)

    # Structural check: the exact fused/bf16 pipeline replayed in plain JAX.
    fused = jax.block_until_ready(model.forward_fused_ref(onstate))
    assert jnp.allclose(out, fused, rtol=1e-3, atol=1e-3), "kernel mismatch vs fused JAX reference"

    # Numerical check vs the exact f32 dense-MPS product (bf16 weights -> norm-relative tolerance).
    exact = jax.block_until_ready(model.forward_ref(onstate))
    rel = jnp.linalg.norm(out - exact) / jnp.linalg.norm(exact)
    assert float(rel) < 3e-2, f"bf16 pipeline drift vs exact reference: rel={float(rel):.3e}"

    print("KERNEL_OK")
</pallas_src>

<mosaic_0001>
module attributes {stable_mosaic.version = 11 : i64} {
  func.func @_mps_kernel(%arg0: i32, %arg1: memref<6x512xi32, #tpu.memory_space<vmem>>, %arg2: memref<16x4xf32, #tpu.memory_space<vmem>>, %arg3: memref<4x256x16xbf16, #tpu.memory_space<vmem>>, %arg4: memref<16x4xf32, #tpu.memory_space<vmem>>, %arg5: memref<1x512xf32, #tpu.memory_space<vmem>>, %arg6: memref<256x512xf32, #tpu.memory_space<vmem>>) attributes {dimension_semantics = [#tpu.dimension_semantics<parallel>], iteration_bounds = array<i64: 8>, scalar_prefetch = 0 : i64, scratch_operands = 1 : i64, tpu.core_type = #tpu.core_type<tc>, window_params = [{transform_indices = @transform_0, window_bounds = array<i64: 6, 512>}, {pipeline_mode = #tpu.pipeline_mode<synchronous>, transform_indices = @transform_1, window_bounds = array<i64: 16, 4>}, {pipeline_mode = #tpu.pipeline_mode<synchronous>, transform_indices = @transform_2, window_bounds = array<i64: 4, 256, 16>}, {pipeline_mode = #tpu.pipeline_mode<synchronous>, transform_indices = @transform_3, window_bounds = array<i64: 16, 4>}, {transform_indices = @transform_4, window_bounds = array<i64: 1, 512>}]} {
    %c0 = arith.constant 0 : index
    %c0_0 = arith.constant 0 : index
    %0 = vector.load %arg1[%c0, %c0_0] : memref<6x512xi32, #tpu.memory_space<vmem>>, vector<1x512xi32>
    %c0_i32 = arith.constant 0 : i32
    %1 = vector.broadcast %c0_i32 : i32 to vector<1x512xi32>
    %2 = arith.cmpi eq, %0, %1 : vector<1x512xi32>
    %3 = arith.extui %2 : vector<1x512xi1> to vector<1x512xi32>
    %4 = arith.sitofp %3 : vector<1x512xi32> to vector<1x512xf32>
    %c0_1 = arith.constant 0 : index
    %c0_2 = arith.constant 0 : index
    %5 = vector.load %arg2[%c0_1, %c0_2] : memref<16x4xf32, #tpu.memory_space<vmem>>, vector<16x1xf32>
    %6 = vector.broadcast %4 : vector<1x512xf32> to vector<16x512xf32>
    %7 = vector.broadcast %5 : vector<16x1xf32> to vector<16x512xf32>
    %8 = arith.mulf %6, %7 : vector<16x512xf32>
    %c1_i32 = arith.constant 1 : i32
    %9 = vector.broadcast %c1_i32 : i32 to vector<1x512xi32>
    %10 = arith.cmpi eq, %0, %9 : vector<1x512xi32>
    %11 = arith.extui %10 : vector<1x512xi1> to vector<1x512xi32>
    %12 = arith.sitofp %11 : vector<1x512xi32> to vector<1x512xf32>
    %c0_3 = arith.constant 0 : index
    %c1 = arith.constant 1 : index
    %13 = vector.load %arg2[%c0_3, %c1] : memref<16x4xf32, #tpu.memory_space<vmem>>, vector<16x1xf32>
    %14 = vector.broadcast %12 : vector<1x512xf32> to vector<16x512xf32>
    %15 = vector.broadcast %13 : vector<16x1xf32> to vector<16x512xf32>
    %16 = arith.mulf %14, %15 : vector<16x512xf32>
    %17 = arith.addf %8, %16 : vector<16x512xf32>
    %c2_i32 = arith.constant 2 : i32
    %18 = vector.broadcast %c2_i32 : i32 to vector<1x512xi32>
    %19 = arith.cmpi eq, %0, %18 : vector<1x512xi32>
    %20 = arith.extui %19 : vector<1x512xi1> to vector<1x512xi32>
    %21 = arith.sitofp %20 : vector<1x512xi32> to vector<1x512xf32>
    %c0_4 = arith.constant 0 : index
    %c2 = arith.constant 2 : index
    %22 = vector.load %arg2[%c0_4, %c2] : memref<16x4xf32, #tpu.memory_space<vmem>>, vector<16x1xf32>
    %23 = vector.broadcast %21 : vector<1x512xf32> to vector<16x512xf32>
    %24 = vector.broadcast %22 : vector<16x1xf32> to vector<16x512xf32>
    %25 = arith.mulf %23, %24 : vector<16x512xf32>
    %26 = arith.addf %17, %25 : vector<16x512xf32>
    %c3_i32 = arith.constant 3 : i32
    %27 = vector.broadcast %c3_i32 : i32 to vector<1x512xi32>
    %28 = arith.cmpi eq, %0, %27 : vector<1x512xi32>
    %29 = arith.extui %28 : vector<1x512xi1> to vector<1x512xi32>
    %30 = arith.sitofp %29 : vector<1x512xi32> to vector<1x512xf32>
    %c0_5 = arith.constant 0 : index
    %c3 = arith.constant 3 : index
    %31 = vector.load %arg2[%c0_5, %c3] : memref<16x4xf32, #tpu.memory_space<vmem>>, vector<16x1xf32>
    %32 = vector.broadcast %30 : vector<1x512xf32> to vector<16x512xf32>
    %33 = vector.broadcast %31 : vector<16x1xf32> to vector<16x512xf32>
    %34 = arith.mulf %32, %33 : vector<16x512xf32>
    %35 = arith.addf %26, %34 : vector<16x512xf32>
    %c0_6 = arith.constant 0 : index
    %c0_7 = arith.constant 0 : index
    %c0_8 = arith.constant 0 : index
    %36 = vector.load %arg3[%c0_6, %c0_7, %c0_8] : memref<4x256x16xbf16, #tpu.memory_space<vmem>>, vector<1x256x16xbf16>
    %37 = vector.shape_cast %36 : vector<1x256x16xbf16> to vector<256x16xbf16>
    %38 = arith.truncf %35 : vector<16x512xf32> to vector<16x512xbf16>
    %cst = arith.constant dense<0.000000e+00> : vector<256x512xf32>
    %39 = tpu.matmul %37, %38, %cst {dimension_numbers = #tpu.dot_dimension_numbers<[1], [0], [0], [1], [0, 0, 1, 1], [], []>} : vector<256x16xbf16>, vector<16x512xbf16>, vector<256x512xf32> -> vector<256x512xf32>
    %c0_9 = arith.constant 0 : index
    %c0_10 = arith.constant 0 : index
    %40 = vector.load %arg6[%c0_9, %c0_10] : memref<256x512xf32, #tpu.memory_space<vmem>>, vector<256x512xf32>
    tpu.vector_store %arg6[%c0_9, %c0_10], %39 {strides = array<i32>} : memref<256x512xf32, #tpu.memory_space<vmem>>, vector<256x512xf32>,
    %c1_11 = arith.constant 1 : index
    %c0_12 = arith.constant 0 : index
    %41 = vector.load %arg1[%c1_11, %c0_12] : memref<6x512xi32, #tpu.memory_space<vmem>>, vector<1x512xi32>
    %c0_i32_13 = arith.constant 0 : i32
    %42 = vector.broadcast %c0_i32_13 : i32 to vector<1x512xi32>
    %43 = arith.cmpi eq, %41, %42 : vector<1x512xi32>
    %44 = arith.extui %43 : vector<1x512xi1> to vector<1x512xi32>
    %45 = arith.sitofp %44 : vector<1x512xi32> to vector<1x512xf32>
    %c0_14 = arith.constant 0 : index
    %c0_15 = arith.constant 0 : index
    %46 = vector.load %arg6[%c0_14, %c0_15] : memref<256x512xf32, #tpu.memory_space<vmem>>, vector<16x512xf32>
    %47 = vector.broadcast %45 : vector<1x512xf32> to vector<16x512xf32>
    %48 = arith.mulf %47, %46 : vector<16x512xf32>
    %c1_i32_16 = arith.constant 1 : i32
    %49 = vector.broadcast %c1_i32_16 : i32 to vector<1x512xi32>
    %50 = arith.cmpi eq, %41, %49 : vector<1x512xi32>
    %51 = arith.extui %50 : vector<1x512xi1> to vector<1x512xi32>
    %52 = arith.sitofp %51 : vector<1x512xi32> to vector<1x512xf32>
    %c16 = arith.constant 16 : index
    %c0_17 = arith.constant 0 : index
    %53 = vector.load %arg6[%c16, %c0_17] : memref<256x512xf32, #tpu.memory_space<vmem>>, vector<16x512xf32>
    %54 = vector.broadcast %52 : vector<1x512xf32> to vector<16x512xf32>
    %55 = arith.mulf %54, %53 : vector<16x512xf32>
    %56 = arith.addf %48, %55 : vector<16x512xf32>
    %c2_i32_18 = arith.constant 2 : i32
    %57 = vector.broadcast %c2_i32_18 : i32 to vector<1x512xi32>
    %58 = arith.cmpi eq, %41, %57 : vector<1x512xi32>
    %59 = arith.extui %58 : vector<1x512xi1> to vector<1x512xi32>
    %60 = arith.sitofp %59 : vector<1x512xi32> to vector<1x512xf32>
    %c32 = arith.constant 32 : index
    %c0_19 = arith.constant 0 : index
    %61 = vector.load %arg6[%c32, %c0_19] : memref<256x512xf32, #tpu.memory_space<vmem>>, vector<16x512xf32>
    %62 = vector.broadcast %60 : vector<1x512xf32> to vector<16x512xf32>
    %63 = arith.mulf %62, %61 : vector<16x512xf32>
    %64 = arith.addf %56, %63 : vector<16x512xf32>
    %c3_i32_20 = arith.constant 3 : i32
    %65 = vector.broadcast %c3_i32_20 : i32 to vector<1x512xi32>
    %66 = arith.cmpi eq, %41, %65 : vector<1x512xi32>
    %67 = arith.extui %66 : vector<1x512xi1> to vector<1x512xi32>
    %68 = arith.sitofp %67 : vector<1x512xi32> to vector<1x512xf32>
    %c48 = arith.constant 48 : index
    %c0_21 = arith.constant 0 : index
    %69 = vector.load %arg6[%c48, %c0_21] : memref<256x512xf32, #tpu.memory_space<vmem>>, vector<16x512xf32>
    %70 = vector.broadcast %68 : vector<1x512xf32> to vector<16x512xf32>
    %71 = arith.mulf %70, %69 : vector<16x512xf32>
    %72 = arith.addf %64, %71 : vector<16x512xf32>
    %c4_i32 = arith.constant 4 : i32
    %73 = vector.broadcast %c4_i32 : i32 to vector<1x512xi32>
    %74 = arith.cmpi eq, %41, %73 : vector<1x512xi32>
    %75 = arith.extui %74 : vector<1x512xi1> to vector<1x512xi32>
    %76 = arith.sitofp %75 : vector<1x512xi32> to vector<1x512xf32>
    %c64 = arith.constant 64 : index
    %c0_22 = arith.constant 0 : index
    %77 = vector.load %arg6[%c64, %c0_22] : memref<256x512xf32, #tpu.memory_space<vmem>>, vector<16x512xf32>
    %78 = vector.broadcast %76 : vector<1x512xf32> to vector<16x512xf32>
    %79 = arith.mulf %78, %77 : vector<16x512xf32>
    %80 = arith.addf %72, %79 : vector<16x512xf32>
    %c5_i32 = arith.constant 5 : i32
    %81 = vector.broadcast %c5_i32 : i32 to vector<1x512xi32>
    %82 = arith.cmpi eq, %41, %81 : vector<1x512xi32>
    %83 = arith.extui %82 : vector<1x512xi1> to vector<1x512xi32>
    %84 = arith.sitofp %83 : vector<1x512xi32> to vector<1x512xf32>
    %c80 = arith.constant 80 : index
    %c0_23 = arith.constant 0 : index
    %85 = vector.load %arg6[%c80, %c0_23] : memref<256x512xf32, #tpu.memory_space<vmem>>, vector<16x512xf32>
    %86 = vector.broadcast %84 : vector<1x512xf32> to vector<16x512xf32>
    %87 = arith.mulf %86, %85 : vector<16x512xf32>
    %88 = arith.addf %80, %87 : vector<16x512xf32>
    %c6_i32 = arith.constant 6 : i32
    %89 = vector.broadcast %c6_i32 : i32 to vector<1x512xi32>
    %90 = arith.cmpi eq, %41, %89 : vector<1x512xi32>
    %91 = arith.extui %90 : vector<1x512xi1> to vector<1x512xi32>
    %92 = arith.sitofp %91 : vector<1x512xi32> to vector<1x512xf32>
    %c96 = arith.constant 96 : index
    %c0_24 = arith.constant 0 : index
    %93 = vector.load %arg6[%c96, %c0_24] : memref<256x512xf32, #tpu.memory_space<vmem>>, vector<16x512xf32>
    %94 = vector.broadcast %92 : vector<1x512xf32> to vector<16x512xf32>
    %95 = arith.mulf %94, %93 : vector<16x512xf32>
    %96 = arith.addf %88, %95 : vector<16x512xf32>
    %c7_i32 = arith.constant 7 : i32
    %97 = vector.broadcast %c7_i32 : i32 to vector<1x512xi32>
    %98 = arith.cmpi eq, %41, %97 : vector<1x512xi32>
    %99 = arith.extui %98 : vector<1x512xi1> to vector<1x512xi32>
    %100 = arith.sitofp %99 : vector<1x512xi32> to vector<1x512xf32>
    %c112 = arith.constant 112 : index
    %c0_25 = arith.constant 0 : index
    %101 = vector.load %arg6[%c112, %c0_25] : memref<256x512xf32, #tpu.memory_space<vmem>>, vector<16x512xf32>
    %102 = vector.broadcast %100 : vector<1x512xf32> to vector<16x512xf32>
    %103 = arith.mulf %102, %101 : vector<16x512xf32>
    %104 = arith.addf %96, %103 : vector<16x512xf32>
    %c8_i32 = arith.constant 8 : i32
    %105 = vector.broadcast %c8_i32 : i32 to vector<1x512xi32>
    %106 = arith.cmpi eq, %41, %105 : vector<1x512xi32>
    %107 = arith.extui %106 : vector<1x512xi1> to vector<1x512xi32>
    %108 = arith.sitofp %107 : vector<1x512xi32> to vector<1x512xf32>
    %c128 = arith.constant 128 : index
    %c0_26 = arith.constant 0 : index
    %109 = vector.load %arg6[%c128, %c0_26] : memref<256x512xf32, #tpu.memory_space<vmem>>, vector<16x512xf32>
    %110 = vector.broadcast %108 : vector<1x512xf32> to vector<16x512xf32>
    %111 = arith.mulf %110, %109 : vector<16x512xf32>
    %112 = arith.addf %104, %111 : vector<16x512xf32>
    %c9_i32 = arith.constant 9 : i32
    %113 = vector.broadcast %c9_i32 : i32 to vector<1x512xi32>
    %114 = arith.cmpi eq, %41, %113 : vector<1x512xi32>
    %115 = arith.extui %114 : vector<1x512xi1> to vector<1x512xi32>
    %116 = arith.sitofp %115 : vector<1x512xi32> to vector<1x512xf32>
    %c144 = arith.constant 144 : index
    %c0_27 = arith.constant 0 : index
    %117 = vector.load %arg6[%c144, %c0_27] : memref<256x512xf32, #tpu.memory_space<vmem>>, vector<16x512xf32>
    %118 = vector.broadcast %116 : vector<1x512xf32> to vector<16x512xf32>
    %119 = arith.mulf %118, %117 : vector<16x512xf32>
    %120 = arith.addf %112, %119 : vector<16x512xf32>
    %c10_i32 = arith.constant 10 : i32
    %121 = vector.broadcast %c10_i32 : i32 to vector<1x512xi32>
    %122 = arith.cmpi eq, %41, %121 : vector<1x512xi32>
    %123 = arith.extui %122 : vector<1x512xi1> to vector<1x512xi32>
    %124 = arith.sitofp %123 : vector<1x512xi32> to vector<1x512xf32>
    %c160 = arith.constant 160 : index
    %c0_28 = arith.constant 0 : index
    %125 = vector.load %arg6[%c160, %c0_28] : memref<256x512xf32, #tpu.memory_space<vmem>>, vector<16x512xf32>
    %126 = vector.broadcast %124 : vector<1x512xf32> to vector<16x512xf32>
    %127 = arith.mulf %126, %125 : vector<16x512xf32>
    %128 = arith.addf %120, %127 : vector<16x512xf32>
    %c11_i32 = arith.constant 11 : i32
    %129 = vector.broadcast %c11_i32 : i32 to vector<1x512xi32>
    %130 = arith.cmpi eq, %41, %129 : vector<1x512xi32>
    %131 = arith.extui %130 : vector<1x512xi1> to vector<1x512xi32>
    %132 = arith.sitofp %131 : vector<1x512xi32> to vector<1x512xf32>
    %c176 = arith.constant 176 : index
    %c0_29 = arith.constant 0 : index
    %133 = vector.load %arg6[%c176, %c0_29] : memref<256x512xf32, #tpu.memory_space<vmem>>, vector<16x512xf32>
    %134 = vector.broadcast %132 : vector<1x512xf32> to vector<16x512xf32>
    %135 = arith.mulf %134, %133 : vector<16x512xf32>
    %136 = arith.addf %128, %135 : vector<16x512xf32>
    %c12_i32 = arith.constant 12 : i32
    %137 = vector.broadcast %c12_i32 : i32 to vector<1x512xi32>
    %138 = arith.cmpi eq, %41, %137 : vector<1x512xi32>
    %139 = arith.extui %138 : vector<1x512xi1> to vector<1x512xi32>
    %140 = arith.sitofp %139 : vector<1x512xi32> to vector<1x512xf32>
    %c192 = arith.constant 192 : index
    %c0_30 = arith.constant 0 : index
    %141 = vector.load %arg6[%c192, %c0_30] : memref<256x512xf32, #tpu.memory_space<vmem>>, vector<16x512xf32>
    %142 = vector.broadcast %140 : vector<1x512xf32> to vector<16x512xf32>
    %143 = arith.mulf %142, %141 : vector<16x512xf32>
    %144 = arith.addf %136, %143 : vector<16x512xf32>
    %c13_i32 = arith.constant 13 : i32
    %145 = vector.broadcast %c13_i32 : i32 to vector<1x512xi32>
    %146 = arith.cmpi eq, %41, %145 : vector<1x512xi32>
    %147 = arith.extui %146 : vector<1x512xi1> to vector<1x512xi32>
    %148 = arith.sitofp %147 : vector<1x512xi32> to vector<1x512xf32>
    %c208 = arith.constant 208 : index
    %c0_31 = arith.constant 0 : index
    %149 = vector.load %arg6[%c208, %c0_31] : memref<256x512xf32, #tpu.memory_space<vmem>>, vector<16x512xf32>
    %150 = vector.broadcast %148 : vector<1x512xf32> to vector<16x512xf32>
    %151 = arith.mulf %150, %149 : vector<16x512xf32>
    %152 = arith.addf %144, %151 : vector<16x512xf32>
    %c14_i32 = arith.constant 14 : i32
    %153 = vector.broadcast %c14_i32 : i32 to vector<1x512xi32>
    %154 = arith.cmpi eq, %41, %153 : vector<1x512xi32>
    %155 = arith.extui %154 : vector<1x512xi1> to vector<1x512xi32>
    %156 = arith.sitofp %155 : vector<1x512xi32> to vector<1x512xf32>
    %c224 = arith.constant 224 : index
    %c0_32 = arith.constant 0 : index
    %157 = vector.load %arg6[%c224, %c0_32] : memref<256x512xf32, #tpu.memory_space<vmem>>, vector<16x512xf32>
    %158 = vector.broadcast %156 : vector<1x512xf32> to vector<16x512xf32>
    %159 = arith.mulf %158, %157 : vector<16x512xf32>
    %160 = arith.addf %152, %159 : vector<16x512xf32>
    %c15_i32 = arith.constant 15 : i32
    %161 = vector.broadcast %c15_i32 : i32 to vector<1x512xi32>
    %162 = arith.cmpi eq, %41, %161 : vector<1x512xi32>
    %163 = arith.extui %162 : vector<1x512xi1> to vector<1x512xi32>
    %164 = arith.sitofp %163 : vector<1x512xi32> to vector<1x512xf32>
    %c240 = arith.constant 240 : index
    %c0_33 = arith.constant 0 : index
    %165 = vector.load %arg6[%c240, %c0_33] : memref<256x512xf32, #tpu.memory_space<vmem>>, vector<16x512xf32>
    %166 = vector.broadcast %164 : vector<1x512xf32> to vector<16x512xf32>
    %167 = arith.mulf %166, %165 : vector<16x512xf32>
    %168 = arith.addf %160, %167 : vector<16x512xf32>
    %c1_34 = arith.constant 1 : index
    %c0_35 = arith.constant 0 : index
    %c0_36 = arith.constant 0 : index
    %169 = vector.load %arg3[%c1_34, %c0_35, %c0_36] : memref<4x256x16xbf16, #tpu.memory_space<vmem>>, vector<1x256x16xbf16>
    %170 = vector.shape_cast %169 : vector<1x256x16xbf16> to vector<256x16xbf16>
    %171 = arith.truncf %168 : vector<16x512xf32> to vector<16x512xbf16>
    %cst_37 = arith.constant dense<0.000000e+00> : vector<256x512xf32>
    %172 = tpu.matmul %170, %171, %cst_37 {dimension_numbers = #tpu.dot_dimension_numbers<[1], [0], [0], [1], [0, 0, 1, 1], [], []>} : vector<256x16xbf16>, vector<16x512xbf16>, vector<256x512xf32> -> vector<256x512xf32>
    %c0_38 = arith.constant 0 : index
    %c0_39 = arith.constant 0 : index
    %173 = vector.load %arg6[%c0_38, %c0_39] : memref<256x512xf32, #tpu.memory_space<vmem>>, vector<256x512xf32>
    tpu.vector_store %arg6[%c0_38, %c0_39], %172 {strides = array<i32>} : memref<256x512xf32, #tpu.memory_space<vmem>>, vector<256x512xf32>,
    %c2_40 = arith.constant 2 : index
    %c0_41 = arith.constant 0 : index
    %174 = vector.load %arg1[%c2_40, %c0_41] : memref<6x512xi32, #tpu.memory_space<vmem>>, vector<1x512xi32>
    %c0_i32_42 = arith.constant 0 : i32
    %175 = vector.broadcast %c0_i32_42 : i32 to vector<1x512xi32>
    %176 = arith.cmpi eq, %174, %175 : vector<1x512xi32>
    %177 = arith.extui %176 : vector<1x512xi1> to vector<1x512xi32>
    %178 = arith.sitofp %177 : vector<1x512xi32> to vector<1x512xf32>
    %c0_43 = arith.constant 0 : index
    %c0_44 = arith.constant 0 : index
    %179 = vector.load %arg6[%c0_43, %c0_44] : memref<256x512xf32, #tpu.memory_space<vmem>>, vector<16x512xf32>
    %180 = vector.broadcast %178 : vector<1x512xf32> to vector<16x512xf32>
    %181 = arith.mulf %180, %179 : vector<16x512xf32>
    %c1_i32_45 = arith.constant 1 : i32
    %182 = vector.broadcast %c1_i32_45 : i32 to vector<1x512xi32>
    %183 = arith.cmpi eq, %174, %182 : vector<1x512xi32>
    %184 = arith.extui %183 : vector<1x512xi1> to vector<1x512xi32>
    %185 = arith.sitofp %184 : vector<1x512xi32> to vector<1x512xf32>
    %c16_46 = arith.constant 16 : index
    %c0_47 = arith.constant 0 : index
    %186 = vector.load %arg6[%c16_46, %c0_47] : memref<256x512xf32, #tpu.memory_space<vmem>>, vector<16x512xf32>
    %187 = vector.broadcast %185 : vector<1x512xf32> to vector<16x512xf32>
    %188 = arith.mulf %187, %186 : vector<16x512xf32>
    %189 = arith.addf %181, %188 : vector<16x512xf32>
    %c2_i32_48 = arith.constant 2 : i32
    %190 = vector.broadcast %c2_i32_48 : i32 to vector<1x512xi32>
    %191 = arith.cmpi eq, %174, %190 : vector<1x512xi32>
    %192 = arith.extui %191 : vector<1x512xi1> to vector<1x512xi32>
    %193 = arith.sitofp %192 : vector<1x512xi32> to vector<1x512xf32>
    %c32_49 = arith.constant 32 : index
    %c0_50 = arith.constant 0 : index
    %194 = vector.load %arg6[%c32_49, %c0_50] : memref<256x512xf32, #tpu.memory_space<vmem>>, vector<16x512xf32>
    %195 = vector.broadcast %193 : vector<1x512xf32> to vector<16x512xf32>
    %196 = arith.mulf %195, %194 : vector<16x512xf32>
    %197 = arith.addf %189, %196 : vector<16x512xf32>
    %c3_i32_51 = arith.constant 3 : i32
    %198 = vector.broadcast %c3_i32_51 : i32 to vector<1x512xi32>
    %199 = arith.cmpi eq, %174, %198 : vector<1x512xi32>
    %200 = arith.extui %199 : vector<1x512xi1> to vector<1x512xi32>
    %201 = arith.sitofp %200 : vector<1x512xi32> to vector<1x512xf32>
    %c48_52 = arith.constant 48 : index
    %c0_53 = arith.constant 0 : index
    %202 = vector.load %arg6[%c48_52, %c0_53] : memref<256x512xf32, #tpu.memory_space<vmem>>, vector<16x512xf32>
    %203 = vector.broadcast %201 : vector<1x512xf32> to vector<16x512xf32>
    %204 = arith.mulf %203, %202 : vector<16x512xf32>
    %205 = arith.addf %197, %204 : vector<16x512xf32>
    %c4_i32_54 = arith.constant 4 : i32
    %206 = vector.broadcast %c4_i32_54 : i32 to vector<1x512xi32>
    %207 = arith.cmpi eq, %174, %206 : vector<1x512xi32>
    %208 = arith.extui %207 : vector<1x512xi1> to vector<1x512xi32>
    %209 = arith.sitofp %208 : vector<1x512xi32> to vector<1x512xf32>
    %c64_55 = arith.constant 64 : index
    %c0_56 = arith.constant 0 : index
    %210 = vector.load %arg6[%c64_55, %c0_56] : memref<256x512xf32, #tpu.memory_space<vmem>>, vector<16x512xf32>
    %211 = vector.broadcast %209 : vector<1x512xf32> to vector<16x512xf32>
    %212 = arith.mulf %211, %210 : vector<16x512xf32>
    %213 = arith.addf %205, %212 : vector<16x512xf32>
    %c5_i32_57 = arith.constant 5 : i32
    %214 = vector.broadcast %c5_i32_57 : i32 to vector<1x512xi32>
    %215 = arith.cmpi eq, %174, %214 : vector<1x512xi32>
    %216 = arith.extui %215 : vector<1x512xi1> to vector<1x512xi32>
    %217 = arith.sitofp %216 : vector<1x512xi32> to vector<1x512xf32>
    %c80_58 = arith.constant 80 : index
    %c0_59 = arith.constant 0 : index
    %218 = vector.load %arg6[%c80_58, %c0_59] : memref<256x512xf32, #tpu.memory_space<vmem>>, vector<16x512xf32>
    %219 = vector.broadcast %217 : vector<1x512xf32> to vector<16x512xf32>
    %220 = arith.mulf %219, %218 : vector<16x512xf32>
    %221 = arith.addf %213, %220 : vector<16x512xf32>
    %c6_i32_60 = arith.constant 6 : i32
    %222 = vector.broadcast %c6_i32_60 : i32 to vector<1x512xi32>
    %223 = arith.cmpi eq, %174, %222 : vector<1x512xi32>
    %224 = arith.extui %223 : vector<1x512xi1> to vector<1x512xi32>
    %225 = arith.sitofp %224 : vector<1x512xi32> to vector<1x512xf32>
    %c96_61 = arith.constant 96 : index
    %c0_62 = arith.constant 0 : index
    %226 = vector.load %arg6[%c96_61, %c0_62] : memref<256x512xf32, #tpu.memory_space<vmem>>, vector<16x512xf32>
    %227 = vector.broadcast %225 : vector<1x512xf32> to vector<16x512xf32>
    %228 = arith.mulf %227, %226 : vector<16x512xf32>
    %229 = arith.addf %221, %228 : vector<16x512xf32>
    %c7_i32_63 = arith.constant 7 : i32
    %230 = vector.broadcast %c7_i32_63 : i32 to vector<1x512xi32>
    %231 = arith.cmpi eq, %174, %230 : vector<1x512xi32>
    %232 = arith.extui %231 : vector<1x512xi1> to vector<1x512xi32>
    %233 = arith.sitofp %232 : vector<1x512xi32> to vector<1x512xf32>
    %c112_64 = arith.constant 112 : index
    %c0_65 = arith.constant 0 : index
    %234 = vector.load %arg6[%c112_64, %c0_65] : memref<256x512xf32, #tpu.memory_space<vmem>>, vector<16x512xf32>
    %235 = vector.broadcast %233 : vector<1x512xf32> to vector<16x512xf32>
    %236 = arith.mulf %235, %234 : vector<16x512xf32>
    %237 = arith.addf %229, %236 : vector<16x512xf32>
    %c8_i32_66 = arith.constant 8 : i32
    %238 = vector.broadcast %c8_i32_66 : i32 to vector<1x512xi32>
    %239 = arith.cmpi eq, %174, %238 : vector<1x512xi32>
    %240 = arith.extui %239 : vector<1x512xi1> to vector<1x512xi32>
    %241 = arith.sitofp %240 : vector<1x512xi32> to vector<1x512xf32>
    %c128_67 = arith.constant 128 : index
    %c0_68 = arith.constant 0 : index
    %242 = vector.load %arg6[%c128_67, %c0_68] : memref<256x512xf32, #tpu.memory_space<vmem>>, vector<16x512xf32>
    %243 = vector.broadcast %241 : vector<1x512xf32> to vector<16x512xf32>
    %244 = arith.mulf %243, %242 : vector<16x512xf32>
    %245 = arith.addf %237, %244 : vector<16x512xf32>
    %c9_i32_69 = arith.constant 9 : i32
    %246 = vector.broadcast %c9_i32_69 : i32 to vector<1x512xi32>
    %247 = arith.cmpi eq, %174, %246 : vector<1x512xi32>
    %248 = arith.extui %247 : vector<1x512xi1> to vector<1x512xi32>
    %249 = arith.sitofp %248 : vector<1x512xi32> to vector<1x512xf32>
    %c144_70 = arith.constant 144 : index
    %c0_71 = arith.constant 0 : index
    %250 = vector.load %arg6[%c144_70, %c0_71] : memref<256x512xf32, #tpu.memory_space<vmem>>, vector<16x512xf32>
    %251 = vector.broadcast %249 : vector<1x512xf32> to vector<16x512xf32>
    %252 = arith.mulf %251, %250 : vector<16x512xf32>
    %253 = arith.addf %245, %252 : vector<16x512xf32>
    %c10_i32_72 = arith.constant 10 : i32
    %254 = vector.broadcast %c10_i32_72 : i32 to vector<1x512xi32>
    %255 = arith.cmpi eq, %174, %254 : vector<1x512xi32>
    %256 = arith.extui %255 : vector<1x512xi1> to vector<1x512xi32>
    %257 = arith.sitofp %256 : vector<1x512xi32> to vector<1x512xf32>
    %c160_73 = arith.constant 160 : index
    %c0_74 = arith.constant 0 : index
    %258 = vector.load %arg6[%c160_73, %c0_74] : memref<256x512xf32, #tpu.memory_space<vmem>>, vector<16x512xf32>
    %259 = vector.broadcast %257 : vector<1x512xf32> to vector<16x512xf32>
    %260 = arith.mulf %259, %258 : vector<16x512xf32>
    %261 = arith.addf %253, %260 : vector<16x512xf32>
    %c11_i32_75 = arith.constant 11 : i32
    %262 = vector.broadcast %c11_i32_75 : i32 to vector<1x512xi32>
    %263 = arith.cmpi eq, %174, %262 : vector<1x512xi32>
    %264 = arith.extui %263 : vector<1x512xi1> to vector<1x512xi32>
    %265 = arith.sitofp %264 : vector<1x512xi32> to vector<1x512xf32>
    %c176_76 = arith.constant 176 : index
    %c0_77 = arith.constant 0 : index
    %266 = vector.load %arg6[%c176_76, %c0_77] : memref<256x512xf32, #tpu.memory_space<vmem>>, vector<16x512xf32>
    %267 = vector.broadcast %265 : vector<1x512xf32> to vector<16x512xf32>
    %268 = arith.mulf %267, %266 : vector<16x512xf32>
    %269 = arith.addf %261, %268 : vector<16x512xf32>
    %c12_i32_78 = arith.constant 12 : i32
    %270 = vector.broadcast %c12_i32_78 : i32 to vector<1x512xi32>
    %271 = arith.cmpi eq, %174, %270 : vector<1x512xi32>
    %272 = arith.extui %271 : vector<1x512xi1> to vector<1x512xi32>
    %273 = arith.sitofp %272 : vector<1x512xi32> to vector<1x512xf32>
    %c192_79 = arith.constant 192 : index
    %c0_80 = arith.constant 0 : index
    %274 = vector.load %arg6[%c192_79, %c0_80] : memref<256x512xf32, #tpu.memory_space<vmem>>, vector<16x512xf32>
    %275 = vector.broadcast %273 : vector<1x512xf32> to vector<16x512xf32>
    %276 = arith.mulf %275, %274 : vector<16x512xf32>
    %277 = arith.addf %269, %276 : vector<16x512xf32>
    %c13_i32_81 = arith.constant 13 : i32
    %278 = vector.broadcast %c13_i32_81 : i32 to vector<1x512xi32>
    %279 = arith.cmpi eq, %174, %278 : vector<1x512xi32>
    %280 = arith.extui %279 : vector<1x512xi1> to vector<1x512xi32>
    %281 = arith.sitofp %280 : vector<1x512xi32> to vector<1x512xf32>
    %c208_82 = arith.constant 208 : index
    %c0_83 = arith.constant 0 : index
    %282 = vector.load %arg6[%c208_82, %c0_83] : memref<256x512xf32, #tpu.memory_space<vmem>>, vector<16x512xf32>
    %283 = vector.broadcast %281 : vector<1x512xf32> to vector<16x512xf32>
    %284 = arith.mulf %283, %282 : vector<16x512xf32>
    %285 = arith.addf %277, %284 : vector<16x512xf32>
    %c14_i32_84 = arith.constant 14 : i32
    %286 = vector.broadcast %c14_i32_84 : i32 to vector<1x512xi32>
    %287 = arith.cmpi eq, %174, %286 : vector<1x512xi32>
    %288 = arith.extui %287 : vector<1x512xi1> to vector<1x512xi32>
    %289 = arith.sitofp %288 : vector<1x512xi32> to vector<1x512xf32>
    %c224_85 = arith.constant 224 : index
    %c0_86 = arith.constant 0 : index
    %290 = vector.load %arg6[%c224_85, %c0_86] : memref<256x512xf32, #tpu.memory_space<vmem>>, vector<16x512xf32>
    %291 = vector.broadcast %289 : vector<1x512xf32> to vector<16x512xf32>
    %292 = arith.mulf %291, %290 : vector<16x512xf32>
    %293 = arith.addf %285, %292 : vector<16x512xf32>
    %c15_i32_87 = arith.constant 15 : i32
    %294 = vector.broadcast %c15_i32_87 : i32 to vector<1x512xi32>
    %295 = arith.cmpi eq, %174, %294 : vector<1x512xi32>
    %296 = arith.extui %295 : vector<1x512xi1> to vector<1x512xi32>
    %297 = arith.sitofp %296 : vector<1x512xi32> to vector<1x512xf32>
    %c240_88 = arith.constant 240 : index
    %c0_89 = arith.constant 0 : index
    %298 = vector.load %arg6[%c240_88, %c0_89] : memref<256x512xf32, #tpu.memory_space<vmem>>, vector<16x512xf32>
    %299 = vector.broadcast %297 : vector<1x512xf32> to vector<16x512xf32>
    %300 = arith.mulf %299, %298 : vector<16x512xf32>
    %301 = arith.addf %293, %300 : vector<16x512xf32>
    %c2_90 = arith.constant 2 : index
    %c0_91 = arith.constant 0 : index
    %c0_92 = arith.constant 0 : index
    %302 = vector.load %arg3[%c2_90, %c0_91, %c0_92] : memref<4x256x16xbf16, #tpu.memory_space<vmem>>, vector<1x256x16xbf16>
    %303 = vector.shape_cast %302 : vector<1x256x16xbf16> to vector<256x16xbf16>
    %304 = arith.truncf %301 : vector<16x512xf32> to vector<16x512xbf16>
    %cst_93 = arith.constant dense<0.000000e+00> : vector<256x512xf32>
    %305 = tpu.matmul %303, %304, %cst_93 {dimension_numbers = #tpu.dot_dimension_numbers<[1], [0], [0], [1], [0, 0, 1, 1], [], []>} : vector<256x16xbf16>, vector<16x512xbf16>, vector<256x512xf32> -> vector<256x512xf32>
    %c0_94 = arith.constant 0 : index
    %c0_95 = arith.constant 0 : index
    %306 = vector.load %arg6[%c0_94, %c0_95] : memref<256x512xf32, #tpu.memory_space<vmem>>, vector<256x512xf32>
    tpu.vector_store %arg6[%c0_94, %c0_95], %305 {strides = array<i32>} : memref<256x512xf32, #tpu.memory_space<vmem>>, vector<256x512xf32>,
    %c3_96 = arith.constant 3 : index
    %c0_97 = arith.constant 0 : index
    %307 = vector.load %arg1[%c3_96, %c0_97] : memref<6x512xi32, #tpu.memory_space<vmem>>, vector<1x512xi32>
    %c0_i32_98 = arith.constant 0 : i32
    %308 = vector.broadcast %c0_i32_98 : i32 to vector<1x512xi32>
    %309 = arith.cmpi eq, %307, %308 : vector<1x512xi32>
    %310 = arith.extui %309 : vector<1x512xi1> to vector<1x512xi32>
    %311 = arith.sitofp %310 : vector<1x512xi32> to vector<1x512xf32>
    %c0_99 = arith.constant 0 : index
    %c0_100 = arith.constant 0 : index
    %312 = vector.load %arg6[%c0_99, %c0_100] : memref<256x512xf32, #tpu.memory_space<vmem>>, vector<16x512xf32>
    %313 = vector.broadcast %311 : vector<1x512xf32> to vector<16x512xf32>
    %314 = arith.mulf %313, %312 : vector<16x512xf32>
    %c1_i32_101 = arith.constant 1 : i32
    %315 = vector.broadcast %c1_i32_101 : i32 to vector<1x512xi32>
    %316 = arith.cmpi eq, %307, %315 : vector<1x512xi32>
    %317 = arith.extui %316 : vector<1x512xi1> to vector<1x512xi32>
    %318 = arith.sitofp %317 : vector<1x512xi32> to vector<1x512xf32>
    %c16_102 = arith.constant 16 : index
    %c0_103 = arith.constant 0 : index
    %319 = vector.load %arg6[%c16_102, %c0_103] : memref<256x512xf32, #tpu.memory_space<vmem>>, vector<16x512xf32>
    %320 = vector.broadcast %318 : vector<1x512xf32> to vector<16x512xf32>
    %321 = arith.mulf %320, %319 : vector<16x512xf32>
    %322 = arith.addf %314, %321 : vector<16x512xf32>
    %c2_i32_104 = arith.constant 2 : i32
    %323 = vector.broadcast %c2_i32_104 : i32 to vector<1x512xi32>
    %324 = arith.cmpi eq, %307, %323 : vector<1x512xi32>
    %325 = arith.extui %324 : vector<1x512xi1> to vector<1x512xi32>
    %326 = arith.sitofp %325 : vector<1x512xi32> to vector<1x512xf32>
    %c32_105 = arith.constant 32 : index
    %c0_106 = arith.constant 0 : index
    %327 = vector.load %arg6[%c32_105, %c0_106] : memref<256x512xf32, #tpu.memory_space<vmem>>, vector<16x512xf32>
    %328 = vector.broadcast %326 : vector<1x512xf32> to vector<16x512xf32>
    %329 = arith.mulf %328, %327 : vector<16x512xf32>
    %330 = arith.addf %322, %329 : vector<16x512xf32>
    %c3_i32_107 = arith.constant 3 : i32
    %331 = vector.broadcast %c3_i32_107 : i32 to vector<1x512xi32>
    %332 = arith.cmpi eq, %307, %331 : vector<1x512xi32>
    %333 = arith.extui %332 : vector<1x512xi1> to vector<1x512xi32>
    %334 = arith.sitofp %333 : vector<1x512xi32> to vector<1x512xf32>
    %c48_108 = arith.constant 48 : index
    %c0_109 = arith.constant 0 : index
    %335 = vector.load %arg6[%c48_108, %c0_109] : memref<256x512xf32, #tpu.memory_space<vmem>>, vector<16x512xf32>
    %336 = vector.broadcast %334 : vector<1x512xf32> to vector<16x512xf32>
    %337 = arith.mulf %336, %335 : vector<16x512xf32>
    %338 = arith.addf %330, %337 : vector<16x512xf32>
    %c4_i32_110 = arith.constant 4 : i32
    %339 = vector.broadcast %c4_i32_110 : i32 to vector<1x512xi32>
    %340 = arith.cmpi eq, %307, %339 : vector<1x512xi32>
    %341 = arith.extui %340 : vector<1x512xi1> to vector<1x512xi32>
    %342 = arith.sitofp %341 : vector<1x512xi32> to vector<1x512xf32>
    %c64_111 = arith.constant 64 : index
    %c0_112 = arith.constant 0 : index
    %343 = vector.load %arg6[%c64_111, %c0_112] : memref<256x512xf32, #tpu.memory_space<vmem>>, vector<16x512xf32>
    %344 = vector.broadcast %342 : vector<1x512xf32> to vector<16x512xf32>
    %345 = arith.mulf %344, %343 : vector<16x512xf32>
    %346 = arith.addf %338, %345 : vector<16x512xf32>
    %c5_i32_113 = arith.constant 5 : i32
    %347 = vector.broadcast %c5_i32_113 : i32 to vector<1x512xi32>
    %348 = arith.cmpi eq, %307, %347 : vector<1x512xi32>
    %349 = arith.extui %348 : vector<1x512xi1> to vector<1x512xi32>
    %350 = arith.sitofp %349 : vector<1x512xi32> to vector<1x512xf32>
    %c80_114 = arith.constant 80 : index
    %c0_115 = arith.constant 0 : index
    %351 = vector.load %arg6[%c80_114, %c0_115] : memref<256x512xf32, #tpu.memory_space<vmem>>, vector<16x512xf32>
    %352 = vector.broadcast %350 : vector<1x512xf32> to vector<16x512xf32>
    %353 = arith.mulf %352, %351 : vector<16x512xf32>
    %354 = arith.addf %346, %353 : vector<16x512xf32>
    %c6_i32_116 = arith.constant 6 : i32
    %355 = vector.broadcast %c6_i32_116 : i32 to vector<1x512xi32>
    %356 = arith.cmpi eq, %307, %355 : vector<1x512xi32>
    %357 = arith.extui %356 : vector<1x512xi1> to vector<1x512xi32>
    %358 = arith.sitofp %357 : vector<1x512xi32> to vector<1x512xf32>
    %c96_117 = arith.constant 96 : index
    %c0_118 = arith.constant 0 : index
    %359 = vector.load %arg6[%c96_117, %c0_118] : memref<256x512xf32, #tpu.memory_space<vmem>>, vector<16x512xf32>
    %360 = vector.broadcast %358 : vector<1x512xf32> to vector<16x512xf32>
    %361 = arith.mulf %360, %359 : vector<16x512xf32>
    %362 = arith.addf %354, %361 : vector<16x512xf32>
    %c7_i32_119 = arith.constant 7 : i32
    %363 = vector.broadcast %c7_i32_119 : i32 to vector<1x512xi32>
    %364 = arith.cmpi eq, %307, %363 : vector<1x512xi32>
    %365 = arith.extui %364 : vector<1x512xi1> to vector<1x512xi32>
    %366 = arith.sitofp %365 : vector<1x512xi32> to vector<1x512xf32>
    %c112_120 = arith.constant 112 : index
    %c0_121 = arith.constant 0 : index
    %367 = vector.load %arg6[%c112_120, %c0_121] : memref<256x512xf32, #tpu.memory_space<vmem>>, vector<16x512xf32>
    %368 = vector.broadcast %366 : vector<1x512xf32> to vector<16x512xf32>
    %369 = arith.mulf %368, %367 : vector<16x512xf32>
    %370 = arith.addf %362, %369 : vector<16x512xf32>
    %c8_i32_122 = arith.constant 8 : i32
    %371 = vector.broadcast %c8_i32_122 : i32 to vector<1x512xi32>
    %372 = arith.cmpi eq, %307, %371 : vector<1x512xi32>
    %373 = arith.extui %372 : vector<1x512xi1> to vector<1x512xi32>
    %374 = arith.sitofp %373 : vector<1x512xi32> to vector<1x512xf32>
    %c128_123 = arith.constant 128 : index
    %c0_124 = arith.constant 0 : index
    %375 = vector.load %arg6[%c128_123, %c0_124] : memref<256x512xf32, #tpu.memory_space<vmem>>, vector<16x512xf32>
    %376 = vector.broadcast %374 : vector<1x512xf32> to vector<16x512xf32>
    %377 = arith.mulf %376, %375 : vector<16x512xf32>
    %378 = arith.addf %370, %377 : vector<16x512xf32>
    %c9_i32_125 = arith.constant 9 : i32
    %379 = vector.broadcast %c9_i32_125 : i32 to vector<1x512xi32>
    %380 = arith.cmpi eq, %307, %379 : vector<1x512xi32>
    %381 = arith.extui %380 : vector<1x512xi1> to vector<1x512xi32>
    %382 = arith.sitofp %381 : vector<1x512xi32> to vector<1x512xf32>
    %c144_126 = arith.constant 144 : index
    %c0_127 = arith.constant 0 : index
    %383 = vector.load %arg6[%c144_126, %c0_127] : memref<256x512xf32, #tpu.memory_space<vmem>>, vector<16x512xf32>
    %384 = vector.broadcast %382 : vector<1x512xf32> to vector<16x512xf32>
    %385 = arith.mulf %384, %383 : vector<16x512xf32>
    %386 = arith.addf %378, %385 : vector<16x512xf32>
    %c10_i32_128 = arith.constant 10 : i32
    %387 = vector.broadcast %c10_i32_128 : i32 to vector<1x512xi32>
    %388 = arith.cmpi eq, %307, %387 : vector<1x512xi32>
    %389 = arith.extui %388 : vector<1x512xi1> to vector<1x512xi32>
    %390 = arith.sitofp %389 : vector<1x512xi32> to vector<1x512xf32>
    %c160_129 = arith.constant 160 : index
    %c0_130 = arith.constant 0 : index
    %391 = vector.load %arg6[%c160_129, %c0_130] : memref<256x512xf32, #tpu.memory_space<vmem>>, vector<16x512xf32>
    %392 = vector.broadcast %390 : vector<1x512xf32> to vector<16x512xf32>
    %393 = arith.mulf %392, %391 : vector<16x512xf32>
    %394 = arith.addf %386, %393 : vector<16x512xf32>
    %c11_i32_131 = arith.constant 11 : i32
    %395 = vector.broadcast %c11_i32_131 : i32 to vector<1x512xi32>
    %396 = arith.cmpi eq, %307, %395 : vector<1x512xi32>
    %397 = arith.extui %396 : vector<1x512xi1> to vector<1x512xi32>
    %398 = arith.sitofp %397 : vector<1x512xi32> to vector<1x512xf32>
    %c176_132 = arith.constant 176 : index
    %c0_133 = arith.constant 0 : index
    %399 = vector.load %arg6[%c176_132, %c0_133] : memref<256x512xf32, #tpu.memory_space<vmem>>, vector<16x512xf32>
    %400 = vector.broadcast %398 : vector<1x512xf32> to vector<16x512xf32>
    %401 = arith.mulf %400, %399 : vector<16x512xf32>
    %402 = arith.addf %394, %401 : vector<16x512xf32>
    %c12_i32_134 = arith.constant 12 : i32
    %403 = vector.broadcast %c12_i32_134 : i32 to vector<1x512xi32>
    %404 = arith.cmpi eq, %307, %403 : vector<1x512xi32>
    %405 = arith.extui %404 : vector<1x512xi1> to vector<1x512xi32>
    %406 = arith.sitofp %405 : vector<1x512xi32> to vector<1x512xf32>
    %c192_135 = arith.constant 192 : index
    %c0_136 = arith.constant 0 : index
    %407 = vector.load %arg6[%c192_135, %c0_136] : memref<256x512xf32, #tpu.memory_space<vmem>>, vector<16x512xf32>
    %408 = vector.broadcast %406 : vector<1x512xf32> to vector<16x512xf32>
    %409 = arith.mulf %408, %407 : vector<16x512xf32>
    %410 = arith.addf %402, %409 : vector<16x512xf32>
    %c13_i32_137 = arith.constant 13 : i32
    %411 = vector.broadcast %c13_i32_137 : i32 to vector<1x512xi32>
    %412 = arith.cmpi eq, %307, %411 : vector<1x512xi32>
    %413 = arith.extui %412 : vector<1x512xi1> to vector<1x512xi32>
    %414 = arith.sitofp %413 : vector<1x512xi32> to vector<1x512xf32>
    %c208_138 = arith.constant 208 : index
    %c0_139 = arith.constant 0 : index
    %415 = vector.load %arg6[%c208_138, %c0_139] : memref<256x512xf32, #tpu.memory_space<vmem>>, vector<16x512xf32>
    %416 = vector.broadcast %414 : vector<1x512xf32> to vector<16x512xf32>
    %417 = arith.mulf %416, %415 : vector<16x512xf32>
    %418 = arith.addf %410, %417 : vector<16x512xf32>
    %c14_i32_140 = arith.constant 14 : i32
    %419 = vector.broadcast %c14_i32_140 : i32 to vector<1x512xi32>
    %420 = arith.cmpi eq, %307, %419 : vector<1x512xi32>
    %421 = arith.extui %420 : vector<1x512xi1> to vector<1x512xi32>
    %422 = arith.sitofp %421 : vector<1x512xi32> to vector<1x512xf32>
    %c224_141 = arith.constant 224 : index
    %c0_142 = arith.constant 0 : index
    %423 = vector.load %arg6[%c224_141, %c0_142] : memref<256x512xf32, #tpu.memory_space<vmem>>, vector<16x512xf32>
    %424 = vector.broadcast %422 : vector<1x512xf32> to vector<16x512xf32>
    %425 = arith.mulf %424, %423 : vector<16x512xf32>
    %426 = arith.addf %418, %425 : vector<16x512xf32>
    %c15_i32_143 = arith.constant 15 : i32
    %427 = vector.broadcast %c15_i32_143 : i32 to vector<1x512xi32>
    %428 = arith.cmpi eq, %307, %427 : vector<1x512xi32>
    %429 = arith.extui %428 : vector<1x512xi1> to vector<1x512xi32>
    %430 = arith.sitofp %429 : vector<1x512xi32> to vector<1x512xf32>
    %c240_144 = arith.constant 240 : index
    %c0_145 = arith.constant 0 : index
    %431 = vector.load %arg6[%c240_144, %c0_145] : memref<256x512xf32, #tpu.memory_space<vmem>>, vector<16x512xf32>
    %432 = vector.broadcast %430 : vector<1x512xf32> to vector<16x512xf32>
    %433 = arith.mulf %432, %431 : vector<16x512xf32>
    %434 = arith.addf %426, %433 : vector<16x512xf32>
    %c3_146 = arith.constant 3 : index
    %c0_147 = arith.constant 0 : index
    %c0_148 = arith.constant 0 : index
    %435 = vector.load %arg3[%c3_146, %c0_147, %c0_148] : memref<4x256x16xbf16, #tpu.memory_space<vmem>>, vector<1x256x16xbf16>
    %436 = vector.shape_cast %435 : vector<1x256x16xbf16> to vector<256x16xbf16>
    %437 = arith.truncf %434 : vector<16x512xf32> to vector<16x512xbf16>
    %cst_149 = arith.constant dense<0.000000e+00> : vector<256x512xf32>
    %438 = tpu.matmul %436, %437, %cst_149 {dimension_numbers = #tpu.dot_dimension_numbers<[1], [0], [0], [1], [0, 0, 1, 1], [], []>} : vector<256x16xbf16>, vector<16x512xbf16>, vector<256x512xf32> -> vector<256x512xf32>
    %c0_150 = arith.constant 0 : index
    %c0_151 = arith.constant 0 : index
    %439 = vector.load %arg6[%c0_150, %c0_151] : memref<256x512xf32, #tpu.memory_space<vmem>>, vector<256x512xf32>
    tpu.vector_store %arg6[%c0_150, %c0_151], %438 {strides = array<i32>} : memref<256x512xf32, #tpu.memory_space<vmem>>, vector<256x512xf32>,
    %c4 = arith.constant 4 : index
    %c0_152 = arith.constant 0 : index
    %440 = vector.load %arg1[%c4, %c0_152] : memref<6x512xi32, #tpu.memory_space<vmem>>, vector<1x512xi32>
    %c0_i32_153 = arith.constant 0 : i32
    %441 = vector.broadcast %c0_i32_153 : i32 to vector<1x512xi32>
    %442 = arith.cmpi eq, %440, %441 : vector<1x512xi32>
    %443 = arith.extui %442 : vector<1x512xi1> to vector<1x512xi32>
    %444 = arith.sitofp %443 : vector<1x512xi32> to vector<1x512xf32>
    %c0_154 = arith.constant 0 : index
    %c0_155 = arith.constant 0 : index
    %445 = vector.load %arg6[%c0_154, %c0_155] : memref<256x512xf32, #tpu.memory_space<vmem>>, vector<16x512xf32>
    %446 = vector.broadcast %444 : vector<1x512xf32> to vector<16x512xf32>
    %447 = arith.mulf %446, %445 : vector<16x512xf32>
    %c1_i32_156 = arith.constant 1 : i32
    %448 = vector.broadcast %c1_i32_156 : i32 to vector<1x512xi32>
    %449 = arith.cmpi eq, %440, %448 : vector<1x512xi32>
    %450 = arith.extui %449 : vector<1x512xi1> to vector<1x512xi32>
    %451 = arith.sitofp %450 : vector<1x512xi32> to vector<1x512xf32>
    %c16_157 = arith.constant 16 : index
    %c0_158 = arith.constant 0 : index
    %452 = vector.load %arg6[%c16_157, %c0_158] : memref<256x512xf32, #tpu.memory_space<vmem>>, vector<16x512xf32>
    %453 = vector.broadcast %451 : vector<1x512xf32> to vector<16x512xf32>
    %454 = arith.mulf %453, %452 : vector<16x512xf32>
    %455 = arith.addf %447, %454 : vector<16x512xf32>
    %c2_i32_159 = arith.constant 2 : i32
    %456 = vector.broadcast %c2_i32_159 : i32 to vector<1x512xi32>
    %457 = arith.cmpi eq, %440, %456 : vector<1x512xi32>
    %458 = arith.extui %457 : vector<1x512xi1> to vector<1x512xi32>
    %459 = arith.sitofp %458 : vector<1x512xi32> to vector<1x512xf32>
    %c32_160 = arith.constant 32 : index
    %c0_161 = arith.constant 0 : index
    %460 = vector.load %arg6[%c32_160, %c0_161] : memref<256x512xf32, #tpu.memory_space<vmem>>, vector<16x512xf32>
    %461 = vector.broadcast %459 : vector<1x512xf32> to vector<16x512xf32>
    %462 = arith.mulf %461, %460 : vector<16x512xf32>
    %463 = arith.addf %455, %462 : vector<16x512xf32>
    %c3_i32_162 = arith.constant 3 : i32
    %464 = vector.broadcast %c3_i32_162 : i32 to vector<1x512xi32>
    %465 = arith.cmpi eq, %440, %464 : vector<1x512xi32>
    %466 = arith.extui %465 : vector<1x512xi1> to vector<1x512xi32>
    %467 = arith.sitofp %466 : vector<1x512xi32> to vector<1x512xf32>
    %c48_163 = arith.constant 48 : index
    %c0_164 = arith.constant 0 : index
    %468 = vector.load %arg6[%c48_163, %c0_164] : memref<256x512xf32, #tpu.memory_space<vmem>>, vector<16x512xf32>
    %469 = vector.broadcast %467 : vector<1x512xf32> to vector<16x512xf32>
    %470 = arith.mulf %469, %468 : vector<16x512xf32>
    %471 = arith.addf %463, %470 : vector<16x512xf32>
    %c4_i32_165 = arith.constant 4 : i32
    %472 = vector.broadcast %c4_i32_165 : i32 to vector<1x512xi32>
    %473 = arith.cmpi eq, %440, %472 : vector<1x512xi32>
    %474 = arith.extui %473 : vector<1x512xi1> to vector<1x512xi32>
    %475 = arith.sitofp %474 : vector<1x512xi32> to vector<1x512xf32>
    %c64_166 = arith.constant 64 : index
    %c0_167 = arith.constant 0 : index
    %476 = vector.load %arg6[%c64_166, %c0_167] : memref<256x512xf32, #tpu.memory_space<vmem>>, vector<16x512xf32>
    %477 = vector.broadcast %475 : vector<1x512xf32> to vector<16x512xf32>
    %478 = arith.mulf %477, %476 : vector<16x512xf32>
    %479 = arith.addf %471, %478 : vector<16x512xf32>
    %c5_i32_168 = arith.constant 5 : i32
    %480 = vector.broadcast %c5_i32_168 : i32 to vector<1x512xi32>
    %481 = arith.cmpi eq, %440, %480 : vector<1x512xi32>
    %482 = arith.extui %481 : vector<1x512xi1> to vector<1x512xi32>
    %483 = arith.sitofp %482 : vector<1x512xi32> to vector<1x512xf32>
    %c80_169 = arith.constant 80 : index
    %c0_170 = arith.constant 0 : index
    %484 = vector.load %arg6[%c80_169, %c0_170] : memref<256x512xf32, #tpu.memory_space<vmem>>, vector<16x512xf32>
    %485 = vector.broadcast %483 : vector<1x512xf32> to vector<16x512xf32>
    %486 = arith.mulf %485, %484 : vector<16x512xf32>
    %487 = arith.addf %479, %486 : vector<16x512xf32>
    %c6_i32_171 = arith.constant 6 : i32
    %488 = vector.broadcast %c6_i32_171 : i32 to vector<1x512xi32>
    %489 = arith.cmpi eq, %440, %488 : vector<1x512xi32>
    %490 = arith.extui %489 : vector<1x512xi1> to vector<1x512xi32>
    %491 = arith.sitofp %490 : vector<1x512xi32> to vector<1x512xf32>
    %c96_172 = arith.constant 96 : index
    %c0_173 = arith.constant 0 : index
    %492 = vector.load %arg6[%c96_172, %c0_173] : memref<256x512xf32, #tpu.memory_space<vmem>>, vector<16x512xf32>
    %493 = vector.broadcast %491 : vector<1x512xf32> to vector<16x512xf32>
    %494 = arith.mulf %493, %492 : vector<16x512xf32>
    %495 = arith.addf %487, %494 : vector<16x512xf32>
    %c7_i32_174 = arith.constant 7 : i32
    %496 = vector.broadcast %c7_i32_174 : i32 to vector<1x512xi32>
    %497 = arith.cmpi eq, %440, %496 : vector<1x512xi32>
    %498 = arith.extui %497 : vector<1x512xi1> to vector<1x512xi32>
    %499 = arith.sitofp %498 : vector<1x512xi32> to vector<1x512xf32>
    %c112_175 = arith.constant 112 : index
    %c0_176 = arith.constant 0 : index
    %500 = vector.load %arg6[%c112_175, %c0_176] : memref<256x512xf32, #tpu.memory_space<vmem>>, vector<16x512xf32>
    %501 = vector.broadcast %499 : vector<1x512xf32> to vector<16x512xf32>
    %502 = arith.mulf %501, %500 : vector<16x512xf32>
    %503 = arith.addf %495, %502 : vector<16x512xf32>
    %c8_i32_177 = arith.constant 8 : i32
    %504 = vector.broadcast %c8_i32_177 : i32 to vector<1x512xi32>
    %505 = arith.cmpi eq, %440, %504 : vector<1x512xi32>
    %506 = arith.extui %505 : vector<1x512xi1> to vector<1x512xi32>
    %507 = arith.sitofp %506 : vector<1x512xi32> to vector<1x512xf32>
    %c128_178 = arith.constant 128 : index
    %c0_179 = arith.constant 0 : index
    %508 = vector.load %arg6[%c128_178, %c0_179] : memref<256x512xf32, #tpu.memory_space<vmem>>, vector<16x512xf32>
    %509 = vector.broadcast %507 : vector<1x512xf32> to vector<16x512xf32>
    %510 = arith.mulf %509, %508 : vector<16x512xf32>
    %511 = arith.addf %503, %510 : vector<16x512xf32>
    %c9_i32_180 = arith.constant 9 : i32
    %512 = vector.broadcast %c9_i32_180 : i32 to vector<1x512xi32>
    %513 = arith.cmpi eq, %440, %512 : vector<1x512xi32>
    %514 = arith.extui %513 : vector<1x512xi1> to vector<1x512xi32>
    %515 = arith.sitofp %514 : vector<1x512xi32> to vector<1x512xf32>
    %c144_181 = arith.constant 144 : index
    %c0_182 = arith.constant 0 : index
    %516 = vector.load %arg6[%c144_181, %c0_182] : memref<256x512xf32, #tpu.memory_space<vmem>>, vector<16x512xf32>
    %517 = vector.broadcast %515 : vector<1x512xf32> to vector<16x512xf32>
    %518 = arith.mulf %517, %516 : vector<16x512xf32>
    %519 = arith.addf %511, %518 : vector<16x512xf32>
    %c10_i32_183 = arith.constant 10 : i32
    %520 = vector.broadcast %c10_i32_183 : i32 to vector<1x512xi32>
    %521 = arith.cmpi eq, %440, %520 : vector<1x512xi32>
    %522 = arith.extui %521 : vector<1x512xi1> to vector<1x512xi32>
    %523 = arith.sitofp %522 : vector<1x512xi32> to vector<1x512xf32>
    %c160_184 = arith.constant 160 : index
    %c0_185 = arith.constant 0 : index
    %524 = vector.load %arg6[%c160_184, %c0_185] : memref<256x512xf32, #tpu.memory_space<vmem>>, vector<16x512xf32>
    %525 = vector.broadcast %523 : vector<1x512xf32> to vector<16x512xf32>
    %526 = arith.mulf %525, %524 : vector<16x512xf32>
    %527 = arith.addf %519, %526 : vector<16x512xf32>
    %c11_i32_186 = arith.constant 11 : i32
    %528 = vector.broadcast %c11_i32_186 : i32 to vector<1x512xi32>
    %529 = arith.cmpi eq, %440, %528 : vector<1x512xi32>
    %530 = arith.extui %529 : vector<1x512xi1> to vector<1x512xi32>
    %531 = arith.sitofp %530 : vector<1x512xi32> to vector<1x512xf32>
    %c176_187 = arith.constant 176 : index
    %c0_188 = arith.constant 0 : index
    %532 = vector.load %arg6[%c176_187, %c0_188] : memref<256x512xf32, #tpu.memory_space<vmem>>, vector<16x512xf32>
    %533 = vector.broadcast %531 : vector<1x512xf32> to vector<16x512xf32>
    %534 = arith.mulf %533, %532 : vector<16x512xf32>
    %535 = arith.addf %527, %534 : vector<16x512xf32>
    %c12_i32_189 = arith.constant 12 : i32
    %536 = vector.broadcast %c12_i32_189 : i32 to vector<1x512xi32>
    %537 = arith.cmpi eq, %440, %536 : vector<1x512xi32>
    %538 = arith.extui %537 : vector<1x512xi1> to vector<1x512xi32>
    %539 = arith.sitofp %538 : vector<1x512xi32> to vector<1x512xf32>
    %c192_190 = arith.constant 192 : index
    %c0_191 = arith.constant 0 : index
    %540 = vector.load %arg6[%c192_190, %c0_191] : memref<256x512xf32, #tpu.memory_space<vmem>>, vector<16x512xf32>
    %541 = vector.broadcast %539 : vector<1x512xf32> to vector<16x512xf32>
    %542 = arith.mulf %541, %540 : vector<16x512xf32>
    %543 = arith.addf %535, %542 : vector<16x512xf32>
    %c13_i32_192 = arith.constant 13 : i32
    %544 = vector.broadcast %c13_i32_192 : i32 to vector<1x512xi32>
    %545 = arith.cmpi eq, %440, %544 : vector<1x512xi32>
    %546 = arith.extui %545 : vector<1x512xi1> to vector<1x512xi32>
    %547 = arith.sitofp %546 : vector<1x512xi32> to vector<1x512xf32>
    %c208_193 = arith.constant 208 : index
    %c0_194 = arith.constant 0 : index
    %548 = vector.load %arg6[%c208_193, %c0_194] : memref<256x512xf32, #tpu.memory_space<vmem>>, vector<16x512xf32>
    %549 = vector.broadcast %547 : vector<1x512xf32> to vector<16x512xf32>
    %550 = arith.mulf %549, %548 : vector<16x512xf32>
    %551 = arith.addf %543, %550 : vector<16x512xf32>
    %c14_i32_195 = arith.constant 14 : i32
    %552 = vector.broadcast %c14_i32_195 : i32 to vector<1x512xi32>
    %553 = arith.cmpi eq, %440, %552 : vector<1x512xi32>
    %554 = arith.extui %553 : vector<1x512xi1> to vector<1x512xi32>
    %555 = arith.sitofp %554 : vector<1x512xi32> to vector<1x512xf32>
    %c224_196 = arith.constant 224 : index
    %c0_197 = arith.constant 0 : index
    %556 = vector.load %arg6[%c224_196, %c0_197] : memref<256x512xf32, #tpu.memory_space<vmem>>, vector<16x512xf32>
    %557 = vector.broadcast %555 : vector<1x512xf32> to vector<16x512xf32>
    %558 = arith.mulf %557, %556 : vector<16x512xf32>
    %559 = arith.addf %551, %558 : vector<16x512xf32>
    %c15_i32_198 = arith.constant 15 : i32
    %560 = vector.broadcast %c15_i32_198 : i32 to vector<1x512xi32>
    %561 = arith.cmpi eq, %440, %560 : vector<1x512xi32>
    %562 = arith.extui %561 : vector<1x512xi1> to vector<1x512xi32>
    %563 = arith.sitofp %562 : vector<1x512xi32> to vector<1x512xf32>
    %c240_199 = arith.constant 240 : index
    %c0_200 = arith.constant 0 : index
    %564 = vector.load %arg6[%c240_199, %c0_200] : memref<256x512xf32, #tpu.memory_space<vmem>>, vector<16x512xf32>
    %565 = vector.broadcast %563 : vector<1x512xf32> to vector<16x512xf32>
    %566 = arith.mulf %565, %564 : vector<16x512xf32>
    %567 = arith.addf %559, %566 : vector<16x512xf32>
    %c5 = arith.constant 5 : index
    %c0_201 = arith.constant 0 : index
    %568 = vector.load %arg1[%c5, %c0_201] : memref<6x512xi32, #tpu.memory_space<vmem>>, vector<1x512xi32>
    %c0_i32_202 = arith.constant 0 : i32
    %569 = vector.broadcast %c0_i32_202 : i32 to vector<1x512xi32>
    %570 = arith.cmpi eq, %568, %569 : vector<1x512xi32>
    %571 = arith.extui %570 : vector<1x512xi1> to vector<1x512xi32>
    %572 = arith.sitofp %571 : vector<1x512xi32> to vector<1x512xf32>
    %c0_203 = arith.constant 0 : index
    %c0_204 = arith.constant 0 : index
    %573 = vector.load %arg4[%c0_203, %c0_204] : memref<16x4xf32, #tpu.memory_space<vmem>>, vector<16x1xf32>
    %574 = vector.broadcast %572 : vector<1x512xf32> to vector<16x512xf32>
    %575 = vector.broadcast %573 : vector<16x1xf32> to vector<16x512xf32>
    %576 = arith.mulf %574, %575 : vector<16x512xf32>
    %c1_i32_205 = arith.constant 1 : i32
    %577 = vector.broadcast %c1_i32_205 : i32 to vector<1x512xi32>
    %578 = arith.cmpi eq, %568, %577 : vector<1x512xi32>
    %579 = arith.extui %578 : vector<1x512xi1> to vector<1x512xi32>
    %580 = arith.sitofp %579 : vector<1x512xi32> to vector<1x512xf32>
    %c0_206 = arith.constant 0 : index
    %c1_207 = arith.constant 1 : index
    %581 = vector.load %arg4[%c0_206, %c1_207] : memref<16x4xf32, #tpu.memory_space<vmem>>, vector<16x1xf32>
    %582 = vector.broadcast %580 : vector<1x512xf32> to vector<16x512xf32>
    %583 = vector.broadcast %581 : vector<16x1xf32> to vector<16x512xf32>
    %584 = arith.mulf %582, %583 : vector<16x512xf32>
    %585 = arith.addf %576, %584 : vector<16x512xf32>
    %c2_i32_208 = arith.constant 2 : i32
    %586 = vector.broadcast %c2_i32_208 : i32 to vector<1x512xi32>
    %587 = arith.cmpi eq, %568, %586 : vector<1x512xi32>
    %588 = arith.extui %587 : vector<1x512xi1> to vector<1x512xi32>
    %589 = arith.sitofp %588 : vector<1x512xi32> to vector<1x512xf32>
    %c0_209 = arith.constant 0 : index
    %c2_210 = arith.constant 2 : index
    %590 = vector.load %arg4[%c0_209, %c2_210] : memref<16x4xf32, #tpu.memory_space<vmem>>, vector<16x1xf32>
    %591 = vector.broadcast %589 : vector<1x512xf32> to vector<16x512xf32>
    %592 = vector.broadcast %590 : vector<16x1xf32> to vector<16x512xf32>
    %593 = arith.mulf %591, %592 : vector<16x512xf32>
    %594 = arith.addf %585, %593 : vector<16x512xf32>
    %c3_i32_211 = arith.constant 3 : i32
    %595 = vector.broadcast %c3_i32_211 : i32 to vector<1x512xi32>
    %596 = arith.cmpi eq, %568, %595 : vector<1x512xi32>
    %597 = arith.extui %596 : vector<1x512xi1> to vector<1x512xi32>
    %598 = arith.sitofp %597 : vector<1x512xi32> to vector<1x512xf32>
    %c0_212 = arith.constant 0 : index
    %c3_213 = arith.constant 3 : index
    %599 = vector.load %arg4[%c0_212, %c3_213] : memref<16x4xf32, #tpu.memory_space<vmem>>, vector<16x1xf32>
    %600 = vector.broadcast %598 : vector<1x512xf32> to vector<16x512xf32>
    %601 = vector.broadcast %599 : vector<16x1xf32> to vector<16x512xf32>
    %602 = arith.mulf %600, %601 : vector<16x512xf32>
    %603 = arith.addf %594, %602 : vector<16x512xf32>
    %604 = arith.mulf %603, %567 : vector<16x512xf32>
    %cst_214 = arith.constant dense<0.000000e+00> : vector<512xf32>
    %605 = vector.multi_reduction <add>, %604, %cst_214 [0] : vector<16x512xf32> to vector<512xf32>
    %606 = vector.shape_cast %605 : vector<512xf32> to vector<1x512xf32>
    %c0_215 = arith.constant 0 : index
    %c0_216 = arith.constant 0 : index
    %607 = vector.load %arg5[%c0_215, %c0_216] : memref<1x512xf32, #tpu.memory_space<vmem>>, vector<1x512xf32>
    tpu.vector_store %arg5[%c0_215, %c0_216], %606 {strides = array<i32>} : memref<1x512xf32, #tpu.memory_space<vmem>>, vector<1x512xf32>,
    return
  }
  func.func @transform_0(%arg0: i32) -> (i32, i32) {
    %c0_i32 = arith.constant 0 : i32
    %c0_i32_0 = arith.constant 0 : i32
    return %c0_i32, %arg0 : i32, i32
  }
  func.func @transform_1(%arg0: i32) -> (i32, i32) {
    %c0_i32 = arith.constant 0 : i32
    %c0_i32_0 = arith.constant 0 : i32
    %c0_i32_1 = arith.constant 0 : i32
    return %c0_i32, %c0_i32_0 : i32, i32
  }
  func.func @transform_2(%arg0: i32) -> (i32, i32, i32) {
    %c0_i32 = arith.constant 0 : i32
    %c0_i32_0 = arith.constant 0 : i32
    %c0_i32_1 = arith.constant 0 : i32
    %c0_i32_2 = arith.constant 0 : i32
    return %c0_i32, %c0_i32_0, %c0_i32_1 : i32, i32, i32
  }
  func.func @transform_3(%arg0: i32) -> (i32, i32) {
    %c0_i32 = arith.constant 0 : i32
    %c0_i32_0 = arith.constant 0 : i32
    %c0_i32_1 = arith.constant 0 : i32
    return %c0_i32, %c0_i32_0 : i32, i32
  }
  func.func @transform_4(%arg0: i32) -> (i32, i32) {
    %c0_i32 = arith.constant 0 : i32
    %c0_i32_0 = arith.constant 0 : i32
    return %c0_i32, %arg0 : i32, i32
  }
}

</mosaic_0001>

<llo_original>
// kernel: tpu_custom_call.1
$region0: #{tpu_custom_call.1}
  #allocation0 [shape = 'u32[]', space=smem, size = 0x4, offset = 0x4, fixed_abs, tag = 'smem constant byte address 0x4 - core index']
  #allocation1 [shape = 'u32[144,128]{1,0:T(1,128)}', space=vmem, size = 0x12000, scoped, tag = 'internal scratch']
  #allocation2 [shape = 'f32[256,512]{1,0:T(8,128)}', space=vmem, size = 0x80000, scoped, tag = 'scratch operand']
  %s0 = inlined_call_operand.vmem [shape: s32[6,4096], index: 0, kind: input, shape index: {}]
  %s1 = inlined_call_operand.vmem [shape: f32[16,4], index: 1, kind: input, shape index: {}]
  %s2 = inlined_call_operand.vmem [shape: bf16[4,256,16], index: 2, kind: input, shape index: {}]
  %s3 = inlined_call_operand.vmem [shape: f32[16,4], index: 3, kind: input, shape index: {}]
  %s4 = inlined_call_operand.hbm [shape: f32[1,4096], index: 4, kind: output, shape index: {}]
  %s5 = sld [smem:[#allocation0]]
  $region49: #{tpu_custom_call.1} parent=0
    _
  %s7 = ssub.s32 1, %s5
  %s8 = scalar_select 0, %s7, %s5
  $region1: #{tpu_custom_call.1} parent=0
    #allocation3 [shape = 'u8[4096]{0}', space=vmem, size = 0x1000, scoped, tag = 'output window, operand 0']
    #allocation4 [shape = 's32[2]{0}', space=sflag, size = 0x8, scoped, tag = 'scoped memory for tpu_custom_call.1']
    %9 = vsyncpa [#allocation4], 0
    %s10 = scalar_lea.sflag [#allocation4], 1
    %11 = vsyncpa %s10, 0
    loop: start=0, step=1, limit=10
    $region2: #{tpu_custom_call.1} parent=1 // loop_pre_header
      _
    $region3: #{tpu_custom_call.1} parent=1 // loop_header
      %s13 = sphi 0, %s17
      %p14 = scmp.ge.s32.totalorder %s13, 10
      %s23 = sphi 0, %s25
      %s26 = sphi 0, %s23
      %s27 = sphi 0, %s26
      %s43 = sphi 0, %s27
      %s47 = sphi 0, %s47
      %s49 = sphi 0, %s47
      %s50 = sphi 0, %s49
      %s64 = sphi 0, %s50
      %s68 = sphi 0, %s68
      %s70 = sphi 0, %s68
      %s71 = sphi 0, %s70
      %s85 = sphi 0, %s71
      %s89 = sphi 0, %s89
      %s91 = sphi 0, %s89
      %s92 = sphi 0, %s91
      %s106 = sphi 0, %s92
      %s112 = sphi 0, %s114
      %s115 = sphi 0, %s112
      %s116 = sphi 0, %s115
      %s132 = sphi 0, %s116
    $region4: #{tpu_custom_call.1} parent=1 // loop_header_branch
      %16 = sbr.rel (%p14) target = $region8
    $region5: #{tpu_custom_call.1} parent=1 // loop_body
      %s18 = ssub.s32 %s13, 1
      %s19 = ssub.s32 %s13, 2
      %s20 = sadd.s32 %s13, 1
      %s21 = ssub.s32 %s13, %s20
      %p22 = scmp.eq.s32.totalorder %s21, 0
      %s24 = sadd.s32 %s23, 1
      %s25 = scalar_select %p22, %s23, %s24
      %p28 = pneg %p22
      %p29 = scmp.eq.s32.totalorder %s13, 7
      %p30 = por %p28, %p29
      %p31 = scmp.ne.s32.totalorder %s23, %s26
      %p32 = scmp.eq.s32.totalorder %s13, 0
      %p33 = por %p31, %p32
      %p34 = scmp.ne.s32.totalorder %s23, %s26
      %p35 = scmp.eq.s32.totalorder %s18, 7
      %p36 = por %p34, %p35
      %p37 = scmp.ne.s32.totalorder %s26, %s27
      %p38 = scmp.eq.s32.totalorder %s18, 0
      %p39 = por %p37, %p38
      %p40 = scmp.ne.s32.totalorder %s26, %s27
      %p41 = scmp.eq.s32.totalorder %s19, 7
      %p42 = por %p40, %p41
      %p44 = scmp.ne.s32.totalorder %s27, %s43
      %p45 = scmp.eq.s32.totalorder %s19, 0
      %p46 = por %p44, %p45
      %s48 = sadd.s32 %s47, 1
      %p51 = scmp.eq.s32.totalorder %s13, 7
      %p52 = scmp.ne.s32.totalorder %s47, %s49
      %p53 = scmp.eq.s32.totalorder %s13, 0
      %p54 = por %p52, %p53
      %p55 = scmp.ne.s32.totalorder %s47, %s49
      %p56 = scmp.eq.s32.totalorder %s18, 7
      %p57 = por %p55, %p56
      %p58 = scmp.ne.s32.totalorder %s49, %s50
      %p59 = scmp.eq.s32.totalorder %s18, 0
      %p60 = por %p58, %p59
      %p61 = scmp.ne.s32.totalorder %s49, %s50
      %p62 = scmp.eq.s32.totalorder %s19, 7
      %p63 = por %p61, %p62
      %p65 = scmp.ne.s32.totalorder %s50, %s64
      %p66 = scmp.eq.s32.totalorder %s19, 0
      %p67 = por %p65, %p66
      %s69 = sadd.s32 %s68, 1
      %p72 = scmp.eq.s32.totalorder %s13, 7
      %p73 = scmp.ne.s32.totalorder %s68, %s70
      %p74 = scmp.eq.s32.totalorder %s13, 0
      %p75 = por %p73, %p74
      %p76 = scmp.ne.s32.totalorder %s68, %s70
      %p77 = scmp.eq.s32.totalorder %s18, 7
      %p78 = por %p76, %p77
      %p79 = scmp.ne.s32.totalorder %s70, %s71
      %p80 = scmp.eq.s32.totalorder %s18, 0
      %p81 = por %p79, %p80
      %p82 = scmp.ne.s32.totalorder %s70, %s71
      %p83 = scmp.eq.s32.totalorder %s19, 7
      %p84 = por %p82, %p83
      %p86 = scmp.ne.s32.totalorder %s71, %s85
      %p87 = scmp.eq.s32.totalorder %s19, 0
      %p88 = por %p86, %p87
      %s90 = sadd.s32 %s89, 1
      %p93 = scmp.eq.s32.totalorder %s13, 7
      %p94 = scmp.ne.s32.totalorder %s89, %s91
      %p95 = scmp.eq.s32.totalorder %s13, 0
      %p96 = por %p94, %p95
      %p97 = scmp.ne.s32.totalorder %s89, %s91
      %p98 = scmp.eq.s32.totalorder %s18, 7
      %p99 = por %p97, %p98
      %p100 = scmp.ne.s32.totalorder %s91, %s92
      %p101 = scmp.eq.s32.totalorder %s18, 0
      %p102 = por %p100, %p101
      %p103 = scmp.ne.s32.totalorder %s91, %s92
      %p104 = scmp.eq.s32.totalorder %s19, 7
      %p105 = por %p103, %p104
      %p107 = scmp.ne.s32.totalorder %s92, %s106
      %p108 = scmp.eq.s32.totalorder %s19, 0
      %p109 = por %p107, %p108
      %s110 = ssub.s32 %s13, %s20
      %p111 = scmp.eq.s32.totalorder %s110, 0
      %s113 = sadd.s32 %s112, 1
      %s114 = scalar_select %p111, %s112, %s113
      %p117 = pneg %p111
      %p118 = scmp.eq.s32.totalorder %s13, 7
      %p119 = por %p117, %p118
      %p120 = scmp.ne.s32.totalorder %s112, %s115
      %p121 = scmp.eq.s32.totalorder %s13, 0
      %p122 = por %p120, %p121
      %p123 = scmp.ne.s32.totalorder %s112, %s115
      %p124 = scmp.eq.s32.totalorder %s18, 7
      %p125 = por %p123, %p124
      %p126 = scmp.ne.s32.totalorder %s115, %s116
      %p127 = scmp.eq.s32.totalorder %s18, 0
      %p128 = por %p126, %p127
      %p129 = scmp.ne.s32.totalorder %s115, %s116
      %p130 = scmp.eq.s32.totalorder %s19, 7
      %p131 = por %p129, %p130
      %p133 = scmp.ne.s32.totalorder %s116, %s132
      %p134 = scmp.eq.s32.totalorder %s19, 0
      %p135 = por %p133, %p134
      %p136 = scmp.le.s32.totalorder 1, %s13
      %p137 = scmp.lt.s32.totalorder %s13, 9
      %p138 = pnand %p136, %p137
      %p139 = pneg %p138
      // Predicated region
      $region9: #{tpu_custom_call.1} parent=5 // pred_check
        _
      $region10: #{tpu_custom_call.1} parent=5 // pred_check_branch
        %141 = sbr.rel (%p138) target = $region12
      $region11: #{tpu_custom_call.1} parent=5 // pred_region
        %s142 = ssub.s32 %s13, 1
        // Predicated region
        $region13: #{tpu_custom_call.1} parent=11 // pred_check
          %p143 = pneg %p60
        $region14: #{tpu_custom_call.1} parent=11 // pred_check_branch
          %145 = sbr.rel (%p143) target = $region16
        $region15: #{tpu_custom_call.1} parent=11 // pred_region
          _
        $region16: #{tpu_custom_call.1} parent=11 // pred_fallthru
          _
        // Predicated region
        $region17: #{tpu_custom_call.1} parent=11 // pred_check
          %p146 = pneg %p81
        $region18: #{tpu_custom_call.1} parent=11 // pred_check_branch
          %148 = sbr.rel (%p146) target = $region20
        $region19: #{tpu_custom_call.1} parent=11 // pred_region
          _
        $region20: #{tpu_custom_call.1} parent=11 // pred_fallthru
          _
        // Predicated region
        $region21: #{tpu_custom_call.1} parent=11 // pred_check
          %p149 = pneg %p102
        $region22: #{tpu_custom_call.1} parent=11 // pred_check_branch
          %151 = sbr.rel (%p149) target = $region24
        $region23: #{tpu_custom_call.1} parent=11 // pred_region
          _
        $region24: #{tpu_custom_call.1} parent=11 // pred_fallthru
          _
      $region12: #{tpu_custom_call.1} parent=5 // pred_fallthru
        _
      %p152 = scmp.lt.s32.totalorder %s13, 8
      // Predicated region
      $region25: #{tpu_custom_call.1} parent=5 // pred_check
        %p153 = pneg %p152
      $region26: #{tpu_custom_call.1} parent=5 // pred_check_branch
        %155 = sbr.rel (%p153) target = $region28
      $region27: #{tpu_custom_call.1} parent=5 // pred_region
        // Predicated region
        $region29: #{tpu_custom_call.1} parent=27 // pred_check
          %p156 = pneg %p33
        $region30: #{tpu_custom_call.1} parent=27 // pred_check_branch
          %158 = sbr.rel (%p156) target = $region32
        $region31: #{tpu_custom_call.1} parent=27 // pred_region
          %s159 = smul.u32 4, %s13
          %p160 = scmp.lt.s32.totalorder %s159, 31
          %s161 = scalar_select %p160, %s159, 31
          %s162 = smul.addr %s161, 8
          %s163 = scalar_lea.vmem %s0, %s162
          %s164 = smul.u32 4, %s13
        $region32: #{tpu_custom_call.1} parent=27 // pred_fallthru
          _
      $region28: #{tpu_custom_call.1} parent=5 // pred_fallthru
        _
      %p165 = scmp.le.s32.totalorder 1, %s13
      %p166 = scmp.lt.s32.totalorder %s13, 9
      %p167 = pnand %p165, %p166
      %p168 = pneg %p167
      // Predicated region
      $region33: #{tpu_custom_call.1} parent=5 // pred_check
        _
      $region34: #{tpu_custom_call.1} parent=5 // pred_check_branch
        %170 = sbr.rel (%p167) target = $region36
      $region35: #{tpu_custom_call.1} parent=5 // pred_region
        %s171 = ssub.s32 %s13, 1
        %s172 = smul.u32 4, %s18
        %p173 = scmp.lt.s32.totalorder %s172, 31
        %s174 = scalar_select %p173, %s172, 31
        %s175 = smul.addr %s174, 8
        %s176 = scalar_lea.vmem %s0, %s175
        %p177 = pneg %p39
        %p178 = pneg %p36
        %p179 = pneg %p60
        %p180 = pneg %p57
        %p181 = pneg %p81
        %p182 = pneg %p78
        %p183 = pneg %p102
        %p184 = pneg %p99
        %p185 = pneg %p128
        %p186 = pneg %p125
        %s187 = sand.u32 %s115, 1
        %s188 = scalar_lea.sflag [#allocation4], %s187
        %s189 = sand.u32 %s115, 1
        %s190 = smul.addr %s189, 4
        %s191 = scalar_lea.vmem [#allocation3], %s190
        %s192 = smul.u32 4, %s18
        %p193 = scmp.lt.s32.totalorder %s192, 31
        %s194 = scalar_select %p193, %s192, 31
        %s195 = smul.addr %s194, 8
        %s196 = scalar_lea.vmem %s0, %s195
        %s197 = smul.u32 4, %s18
        %s198 = smul.u32 4, %s18
        %v200 = vld [vmem:[%s196] ss:$8 sm:$0xf]
        %vm201 = vcmp.eq.s32.totalorder %v200, 0
        %v202 = vsel %vm201, 1, 0
        %v203 = vcvt.s32.f32 %v202
        %v204 = vld [vmem:[%s1] sm:$0xff]
        %v205 = vld [vmem:[%s1 + $0x8] sm:$0xff]
        %v207 = vlaneseq
        %v208 = vshrl.u32 %v207, 7
        %v209 = vsub.s32 0, %v208
        %v210 = vrot.slane %v203, %v209
        %v211 = vlaneseq
        %v212 = vshrl.u32 %v211, 7
        %v213 = vsub.s32 1, %v212
        %v214 = vrot.slane %v203, %v213
        %v215 = vlaneseq
        %v216 = vshrl.u32 %v215, 7
        %v217 = vsub.s32 2, %v216
        %v218 = vrot.slane %v203, %v217
        %v219 = vlaneseq
        %v220 = vshrl.u32 %v219, 7
        %v221 = vsub.s32 3, %v220
        %v222 = vrot.slane %v203, %v221
        %228 = vset.pattern.permute.xlu0 0
        %229 = vperm.xlu0 %228, %v204
        %v230 = vpop.permute.xlu0 %229
        %233 = vset.pattern.permute.xlu0 0
        %234 = vperm.xlu0 %233, %v205
        %v235 = vpop.permute.xlu0 %234
        %v237 = vmul.f32 %v210, %v230
        %v238 = vmul.f32 %v214, %v230
        %v239 = vmul.f32 %v218, %v230
        %v240 = vmul.f32 %v222, %v230
        %v241 = vmul.f32 %v210, %v235
        %v242 = vmul.f32 %v214, %v235
        %v243 = vmul.f32 %v218, %v235
        %v244 = vmul.f32 %v222, %v235
        %vm245 = vcmp.eq.s32.totalorder %v200, 1
        %v246 = vsel %vm245, 1, 0
        %v247 = vcvt.s32.f32 %v246
        %v249 = vlaneseq
        %v250 = vshrl.u32 %v249, 7
        %v251 = vsub.s32 0, %v250
        %v252 = vrot.slane %v247, %v251
        %v253 = vlaneseq
        %v254 = vshrl.u32 %v253, 7
        %v255 = vsub.s32 1, %v254
        %v256 = vrot.slane %v247, %v255
        %v257 = vlaneseq
        %v258 = vshrl.u32 %v257, 7
        %v259 = vsub.s32 2, %v258
        %v260 = vrot.slane %v247, %v259
        %v261 = vlaneseq
        %v262 = vshrl.u32 %v261, 7
        %v263 = vsub.s32 3, %v262
        %v264 = vrot.slane %v247, %v263
        %269 = vset.pattern.permute.xlu0 1
        %270 = vperm.xlu0 %269, %v204
        %v271 = vpop.permute.xlu0 %270
        %273 = vset.pattern.permute.xlu0 1
        %274 = vperm.xlu0 %273, %v205
        %v275 = vpop.permute.xlu0 %274
        %v277 = vmul.f32 %v252, %v271
        %v278 = vmul.f32 %v256, %v271
        %v279 = vmul.f32 %v260, %v271
        %v280 = vmul.f32 %v264, %v271
        %v281 = vmul.f32 %v252, %v275
        %v282 = vmul.f32 %v256, %v275
        %v283 = vmul.f32 %v260, %v275
        %v284 = vmul.f32 %v264, %v275
        %v285 = vadd.f32 %v237, %v277
        %v286 = vadd.f32 %v238, %v278
        %v287 = vadd.f32 %v239, %v279
        %v288 = vadd.f32 %v240, %v280
        %v289 = vadd.f32 %v241, %v281
        %v290 = vadd.f32 %v242, %v282
        %v291 = vadd.f32 %v243, %v283
        %v292 = vadd.f32 %v244, %v284
        %vm293 = vcmp.eq.s32.totalorder %v200, 2
        %v294 = vsel %vm293, 1, 0
        %v295 = vcvt.s32.f32 %v294
        %v297 = vlaneseq
        %v298 = vshrl.u32 %v297, 7
        %v299 = vsub.s32 0, %v298
        %v300 = vrot.slane %v295, %v299
        %v301 = vlaneseq
        %v302 = vshrl.u32 %v301, 7
        %v303 = vsub.s32 1, %v302
        %v304 = vrot.slane %v295, %v303
        %v305 = vlaneseq
        %v306 = vshrl.u32 %v305, 7
        %v307 = vsub.s32 2, %v306
        %v308 = vrot.slane %v295, %v307
        %v309 = vlaneseq
        %v310 = vshrl.u32 %v309, 7
        %v311 = vsub.s32 3, %v310
        %v312 = vrot.slane %v295, %v311
        %317 = vset.pattern.permute.xlu0 2
        %318 = vperm.xlu0 %317, %v204
        %v319 = vpop.permute.xlu0 %318
        %321 = vset.pattern.permute.xlu0 2
        %322 = vperm.xlu0 %321, %v205
        %v323 = vpop.permute.xlu0 %322
        %v325 = vmul.f32 %v300, %v319
        %v326 = vmul.f32 %v304, %v319
        %v327 = vmul.f32 %v308, %v319
        %v328 = vmul.f32 %v312, %v319
        %v329 = vmul.f32 %v300, %v323
        %v330 = vmul.f32 %v304, %v323
        %v331 = vmul.f32 %v308, %v323
        %v332 = vmul.f32 %v312, %v323
        %v333 = vadd.f32 %v285, %v325
        %v334 = vadd.f32 %v286, %v326
        %v335 = vadd.f32 %v287, %v327
        %v336 = vadd.f32 %v288, %v328
        %v337 = vadd.f32 %v289, %v329
        %v338 = vadd.f32 %v290, %v330
        %v339 = vadd.f32 %v291, %v331
        %v340 = vadd.f32 %v292, %v332
        %vm341 = vcmp.eq.s32.totalorder %v200, 3
        %v342 = vsel %vm341, 1, 0
        %v343 = vcvt.s32.f32 %v342
        %v345 = vlaneseq
        %v346 = vshrl.u32 %v345, 7
        %v347 = vsub.s32 0, %v346
        %v348 = vrot.slane %v343, %v347
        %v349 = vlaneseq
        %v350 = vshrl.u32 %v349, 7
        %v351 = vsub.s32 1, %v350
        %v352 = vrot.slane %v343, %v351
        %v353 = vlaneseq
        %v354 = vshrl.u32 %v353, 7
        %v355 = vsub.s32 2, %v354
        %v356 = vrot.slane %v343, %v355
        %v357 = vlaneseq
        %v358 = vshrl.u32 %v357, 7
        %v359 = vsub.s32 3, %v358
        %v360 = vrot.slane %v343, %v359
        %365 = vset.pattern.permute.xlu0 3
        %366 = vperm.xlu0 %365, %v204
        %v367 = vpop.permute.xlu0 %366
        %369 = vset.pattern.permute.xlu0 3
        %370 = vperm.xlu0 %369, %v205
        %v371 = vpop.permute.xlu0 %370
        %v373 = vmul.f32 %v348, %v367
        %v374 = vmul.f32 %v352, %v367
        %v375 = vmul.f32 %v356, %v367
        %v376 = vmul.f32 %v360, %v367
        %v377 = vmul.f32 %v348, %v371
        %v378 = vmul.f32 %v352, %v371
        %v379 = vmul.f32 %v356, %v371
        %v380 = vmul.f32 %v360, %v371
        %v381 = vadd.f32 %v333, %v373
        %v382 = vadd.f32 %v334, %v374
        %v383 = vadd.f32 %v335, %v375
        %v384 = vadd.f32 %v336, %v376
        %v385 = vadd.f32 %v337, %v377
        %v386 = vadd.f32 %v338, %v378
        %v387 = vadd.f32 %v339, %v379
        %v388 = vadd.f32 %v340, %v380
        %v389 = vld [vmem:[%s2] sm:$0xf]
        %v390 = vld [vmem:[%s2 + $0x4] sm:$0xf]
        %v391 = vld [vmem:[%s2 + $0x8] sm:$0xf]
        %v392 = vld [vmem:[%s2 + $0xc] sm:$0xf]
        %v393 = vld [vmem:[%s2 + $0x10] sm:$0xf]
        %v394 = vld [vmem:[%s2 + $0x14] sm:$0xf]
        %v395 = vld [vmem:[%s2 + $0x18] sm:$0xf]
        %v396 = vld [vmem:[%s2 + $0x1c] sm:$0xf]
        %v397 = vld [vmem:[%s2 + $0x20] sm:$0xf]
        %v398 = vld [vmem:[%s2 + $0x24] sm:$0xf]
        %v399 = vld [vmem:[%s2 + $0x28] sm:$0xf]
        %v400 = vld [vmem:[%s2 + $0x2c] sm:$0xf]
        %v401 = vld [vmem:[%s2 + $0x30] sm:$0xf]
        %v402 = vld [vmem:[%s2 + $0x34] sm:$0xf]
        %v403 = vld [vmem:[%s2 + $0x38] sm:$0xf]
        %v404 = vld [vmem:[%s2 + $0x3c] sm:$0xf]
        %v405 = vld [vmem:[%s2 + $0x40] sm:$0xf]
        %v406 = vld [vmem:[%s2 + $0x44] sm:$0xf]
        %v407 = vld [vmem:[%s2 + $0x48] sm:$0xf]
        %v408 = vld [vmem:[%s2 + $0x4c] sm:$0xf]
        %v409 = vld [vmem:[%s2 + $0x50] sm:$0xf]
        %v410 = vld [vmem:[%s2 + $0x54] sm:$0xf]
        %v411 = vld [vmem:[%s2 + $0x58] sm:$0xf]
        %v412 = vld [vmem:[%s2 + $0x5c] sm:$0xf]
        %v413 = vld [vmem:[%s2 + $0x60] sm:$0xf]
        %v414 = vld [vmem:[%s2 + $0x64] sm:$0xf]
        %v415 = vld [vmem:[%s2 + $0x68] sm:$0xf]
        %v416 = vld [vmem:[%s2 + $0x6c] sm:$0xf]
        %v417 = vld [vmem:[%s2 + $0x70] sm:$0xf]
        %v418 = vld [vmem:[%s2 + $0x74] sm:$0xf]
        %v419 = vld [vmem:[%s2 + $0x78] sm:$0xf]
        %v420 = vld [vmem:[%s2 + $0x7c] sm:$0xf]
        %v421 = vpack.c.bf16 %v385, %v381
        %v422 = vpack.c.bf16 %v386, %v382
        %v423 = vpack.c.bf16 %v387, %v383
        %v424 = vpack.c.bf16 %v388, %v384
        %v457 = vunpack.c.l.b16 %v389
        %v458 = vunpack.c.l.b16 %v390
        %v459 = vunpack.c.l.b16 %v391
        %v460 = vunpack.c.l.b16 %v392
        %v461 = vunpack.c.l.b16 %v393
        %v462 = vunpack.c.l.b16 %v394
        %v463 = vunpack.c.l.b16 %v395
        %v464 = vunpack.c.l.b16 %v396
        %v465 = vunpack.c.l.b16 %v397
        %v466 = vunpack.c.l.b16 %v398
        %v467 = vunpack.c.l.b16 %v399
        %v468 = vunpack.c.l.b16 %v400
        %v469 = vunpack.c.l.b16 %v401
        %v470 = vunpack.c.l.b16 %v402
        %v471 = vunpack.c.l.b16 %v403
        %v472 = vunpack.c.l.b16 %v404
        %v473 = vunpack.c.l.b16 %v405
        %v474 = vunpack.c.l.b16 %v406
        %v475 = vunpack.c.l.b16 %v407
        %v476 = vunpack.c.l.b16 %v408
        %v477 = vunpack.c.l.b16 %v409
        %v478 = vunpack.c.l.b16 %v410
        %v479 = vunpack.c.l.b16 %v411
        %v480 = vunpack.c.l.b16 %v412
        %v481 = vunpack.c.l.b16 %v413
        %v482 = vunpack.c.l.b16 %v414
        %v483 = vunpack.c.l.b16 %v415
        %v484 = vunpack.c.l.b16 %v416
        %v485 = vunpack.c.l.b16 %v417
        %v486 = vunpack.c.l.b16 %v418
        %v487 = vunpack.c.l.b16 %v419
        %v488 = vunpack.c.l.b16 %v420
        %v489 = vpack.c.b16 %v458, %v457
        %v490 = vpack.c.b16 %v460, %v459
        %v491 = vpack.c.b16 %v462, %v461
        %v492 = vpack.c.b16 %v464, %v463
        %v493 = vpack.c.b16 %v466, %v465
        %v494 = vpack.c.b16 %v468, %v467
        %v495 = vpack.c.b16 %v470, %v469
        %v496 = vpack.c.b16 %v472, %v471
        %v497 = vpack.c.b16 %v474, %v473
        %v498 = vpack.c.b16 %v476, %v475
        %v499 = vpack.c.b16 %v478, %v477
        %v500 = vpack.c.b16 %v480, %v479
        %v501 = vpack.c.b16 %v482, %v481
        %v502 = vpack.c.b16 %v484, %v483
        %v503 = vpack.c.b16 %v486, %v485
        %v504 = vpack.c.b16 %v488, %v487
        %vm505 = vcmask 130048
        %v507 = vsel %vm505, %v489, 0
        %v510 = vsel %vm505, %v490, 0
        %v513 = vsel %vm505, %v491, 0
        %v516 = vsel %vm505, %v492, 0
        %v519 = vsel %vm505, %v493, 0
        %v522 = vsel %vm505, %v494, 0
        %v525 = vsel %vm505, %v495, 0
        %v528 = vsel %vm505, %v496, 0
        %v531 = vsel %vm505, %v497, 0
        %v534 = vsel %vm505, %v498, 0
        %v537 = vsel %vm505, %v499, 0
        %v540 = vsel %vm505, %v500, 0
        %v543 = vsel %vm505, %v501, 0
        %v546 = vsel %vm505, %v502, 0
        %v549 = vsel %vm505, %v503, 0
        %v552 = vsel %vm505, %v504, 0
        %554 = vmatprep.subr.bf16.mxu0 %v422
        %555 = vmatpush1.bf16.msra.mxu0 %v421
        %556 = vmatprep.subr.bf16.mxu0 0
        %557 = vmatpush1.bf16.msra.mxu0 0
        %558 = vmatprep.subr.bf16.mxu0 0
        %559 = vmatpush1.bf16.msra.mxu0 0
        %560 = vmatprep.subr.bf16.mxu0 0
        %561 = vmatpush1.bf16.msra.mxu0 0
        %562 = vmatprep.subr.bf16.mxu0 0
        %563 = vmatpush1.bf16.msra.mxu0 0
        %564 = vmatprep.subr.bf16.mxu0 0
        %565 = vmatpush1.bf16.msra.mxu0 0
        %566 = vmatprep.subr.bf16.mxu0 0
        %567 = vmatpush1.bf16.msra.mxu0 0
        %568 = vmatprep.subr.bf16.mxu0 0
        %569 = vmatpush1.bf16.msra.mxu0 0
        %570 = vmatprep.subr.bf16.mxu0 0
        %571 = vmatpush1.bf16.msra.mxu0 0
        %572 = vmatprep.subr.bf16.mxu0 0
        %573 = vmatpush1.bf16.msra.mxu0 0
        %574 = vmatprep.subr.bf16.mxu0 0
        %575 = vmatpush1.bf16.msra.mxu0 0
        %576 = vmatprep.subr.bf16.mxu0 0
        %577 = vmatpush1.bf16.msra.mxu0 0
        %578 = vmatprep.subr.bf16.mxu0 0
        %579 = vmatpush1.bf16.msra.mxu0 0
        %580 = vmatprep.subr.bf16.mxu0 0
        %581 = vmatpush1.bf16.msra.mxu0 0
        %582 = vmatprep.subr.bf16.mxu0 0
        %583 = vmatpush1.bf16.msra.mxu0 0
        %584 = vmatprep.subr.bf16.mxu0 0
        %585 = vmatpush1.bf16.msra.mxu0 0
        %586 = vmatprep.mubr.bf16.mxu0 0
        %587 = vmatmul.mubr.bf16.gmra.mrb[0].mxu0 %v507
        %v588 = vpop.f32.mrb[0].mxu0
        %v589 = vadd.f32 0.0, %v588
        %v590 = vpop.f32.mrb[0].mxu0
        %v591 = vadd.f32 0.0, %v590
        %v592 = vpop.f32.mrb[0].mxu0
        %v593 = vadd.f32 0.0, %v592
        %v594 = vpop.f32.mrb[0].mxu0
        %v595 = vadd.f32 0.0, %v594
        %596 = vmatprep.mubr.bf16.mxu0 0
        %597 = vmatmul.mubr.bf16.gmra.mrb[0].mxu0 %v510
        %v598 = vpop.f32.mrb[0].mxu0
        %v599 = vadd.f32 0.0, %v598
        %v600 = vpop.f32.mrb[0].mxu0
        %v601 = vadd.f32 0.0, %v600
        %v602 = vpop.f32.mrb[0].mxu0
        %v603 = vadd.f32 0.0, %v602
        %v604 = vpop.f32.mrb[0].mxu0
        %v605 = vadd.f32 0.0, %v604
        %606 = vmatprep.mubr.bf16.mxu0 0
        %607 = vmatmul.mubr.bf16.gmra.mrb[0].mxu0 %v513
        %v608 = vpop.f32.mrb[0].mxu0
        %v609 = vadd.f32 0.0, %v608
        %v610 = vpop.f32.mrb[0].mxu0
        %v611 = vadd.f32 0.0, %v610
        %v612 = vpop.f32.mrb[0].mxu0
        %v613 = vadd.f32 0.0, %v612
        %v614 = vpop.f32.mrb[0].mxu0
        %v615 = vadd.f32 0.0, %v614
        %616 = vmatprep.mubr.bf16.mxu0 0
        %617 = vmatmul.mubr.bf16.gmra.mrb[0].mxu0 %v516
        %v618 = vpop.f32.mrb[0].mxu0
        %v619 = vadd.f32 0.0, %v618
        %v620 = vpop.f32.mrb[0].mxu0
        %v621 = vadd.f32 0.0, %v620
        %v622 = vpop.f32.mrb[0].mxu0
        %v623 = vadd.f32 0.0, %v622
        %v624 = vpop.f32.mrb[0].mxu0
        %v625 = vadd.f32 0.0, %v624
        %626 = vmatprep.mubr.bf16.mxu0 0
        %627 = vmatmul.mubr.bf16.gmra.mrb[0].mxu0 %v519
        %v628 = vpop.f32.mrb[0].mxu0
        %v629 = vadd.f32 0.0, %v628
        %v630 = vpop.f32.mrb[0].mxu0
        %v631 = vadd.f32 0.0, %v630
        %v632 = vpop.f32.mrb[0].mxu0
        %v633 = vadd.f32 0.0, %v632
        %v634 = vpop.f32.mrb[0].mxu0
        %v635 = vadd.f32 0.0, %v634
        %636 = vmatprep.mubr.bf16.mxu0 0
        %637 = vmatmul.mubr.bf16.gmra.mrb[0].mxu0 %v522
        %v638 = vpop.f32.mrb[0].mxu0
        %v639 = vadd.f32 0.0, %v638
        %v640 = vpop.f32.mrb[0].mxu0
        %v641 = vadd.f32 0.0, %v640
        %v642 = vpop.f32.mrb[0].mxu0
        %v643 = vadd.f32 0.0, %v642
        %v644 = vpop.f32.mrb[0].mxu0
        %v645 = vadd.f32 0.0, %v644
        %646 = vmatprep.mubr.bf16.mxu0 0
        %647 = vmatmul.mubr.bf16.gmra.mrb[0].mxu0 %v525
        %v648 = vpop.f32.mrb[0].mxu0
        %v649 = vadd.f32 0.0, %v648
        %v650 = vpop.f32.mrb[0].mxu0
        %v651 = vadd.f32 0.0, %v650
        %v652 = vpop.f32.mrb[0].mxu0
        %v653 = vadd.f32 0.0, %v652
        %v654 = vpop.f32.mrb[0].mxu0
        %v655 = vadd.f32 0.0, %v654
        %656 = vmatprep.mubr.bf16.mxu0 0
        %657 = vmatmul.mubr.bf16.gmra.mrb[0].mxu0 %v528
        %v658 = vpop.f32.mrb[0].mxu0
        %v659 = vadd.f32 0.0, %v658
        %v660 = vpop.f32.mrb[0].mxu0
        %v661 = vadd.f32 0.0, %v660
        %v662 = vpop.f32.mrb[0].mxu0
        %v663 = vadd.f32 0.0, %v662
        %v664 = vpop.f32.mrb[0].mxu0
        %v665 = vadd.f32 0.0, %v664
        %666 = vmatprep.mubr.bf16.mxu0 0
        %667 = vmatmul.mubr.bf16.gmra.mrb[0].mxu0 %v531
        %v668 = vpop.f32.mrb[0].mxu0
        %v669 = vadd.f32 0.0, %v668
        %v670 = vpop.f32.mrb[0].mxu0
        %v671 = vadd.f32 0.0, %v670
        %v672 = vpop.f32.mrb[0].mxu0
        %v673 = vadd.f32 0.0, %v672
        %v674 = vpop.f32.mrb[0].mxu0
        %v675 = vadd.f32 0.0, %v674
        %676 = vmatprep.mubr.bf16.mxu0 0
        %677 = vmatmul.mubr.bf16.gmra.mrb[0].mxu0 %v534
        %v678 = vpop.f32.mrb[0].mxu0
        %v679 = vadd.f32 0.0, %v678
        %v680 = vpop.f32.mrb[0].mxu0
        %v681 = vadd.f32 0.0, %v680
        %v682 = vpop.f32.mrb[0].mxu0
        %v683 = vadd.f32 0.0, %v682
        %v684 = vpop.f32.mrb[0].mxu0
        %v685 = vadd.f32 0.0, %v684
        %686 = vmatprep.mubr.bf16.mxu0 0
        %687 = vmatmul.mubr.bf16.gmra.mrb[0].mxu0 %v537
        %v688 = vpop.f32.mrb[0].mxu0
        %v689 = vadd.f32 0.0, %v688
        %v690 = vpop.f32.mrb[0].mxu0
        %v691 = vadd.f32 0.0, %v690
        %v692 = vpop.f32.mrb[0].mxu0
        %v693 = vadd.f32 0.0, %v692
        %v694 = vpop.f32.mrb[0].mxu0
        %v695 = vadd.f32 0.0, %v694
        %696 = vmatprep.mubr.bf16.mxu0 0
        %697 = vmatmul.mubr.bf16.gmra.mrb[0].mxu0 %v540
        %v698 = vpop.f32.mrb[0].mxu0
        %v699 = vadd.f32 0.0, %v698
        %v700 = vpop.f32.mrb[0].mxu0
        %v701 = vadd.f32 0.0, %v700
        %v702 = vpop.f32.mrb[0].mxu0
        %v703 = vadd.f32 0.0, %v702
        %v704 = vpop.f32.mrb[0].mxu0
        %v705 = vadd.f32 0.0, %v704
        %706 = vmatprep.mubr.bf16.mxu0 0
        %707 = vmatmul.mubr.bf16.gmra.mrb[0].mxu0 %v543
        %v708 = vpop.f32.mrb[0].mxu0
        %v709 = vadd.f32 0.0, %v708
        %v710 = vpop.f32.mrb[0].mxu0
        %v711 = vadd.f32 0.0, %v710
        %v712 = vpop.f32.mrb[0].mxu0
        %v713 = vadd.f32 0.0, %v712
        %v714 = vpop.f32.mrb[0].mxu0
        %v715 = vadd.f32 0.0, %v714
        %716 = vmatprep.mubr.bf16.mxu0 0
        %717 = vmatmul.mubr.bf16.gmra.mrb[0].mxu0 %v546
        %v718 = vpop.f32.mrb[0].mxu0
        %v719 = vadd.f32 0.0, %v718
        %v720 = vpop.f32.mrb[0].mxu0
        %v721 = vadd.f32 0.0, %v720
        %v722 = vpop.f32.mrb[0].mxu0
        %v723 = vadd.f32 0.0, %v722
        %v724 = vpop.f32.mrb[0].mxu0
        %v725 = vadd.f32 0.0, %v724
        %726 = vmatprep.mubr.bf16.mxu0 0
        %727 = vmatmul.mubr.bf16.gmra.mrb[0].mxu0 %v549
        %v728 = vpop.f32.mrb[0].mxu0
        %v729 = vadd.f32 0.0, %v728
        %v730 = vpop.f32.mrb[0].mxu0
        %v731 = vadd.f32 0.0, %v730
        %v732 = vpop.f32.mrb[0].mxu0
        %v733 = vadd.f32 0.0, %v732
        %v734 = vpop.f32.mrb[0].mxu0
        %v735 = vadd.f32 0.0, %v734
        %736 = vmatprep.mubr.bf16.mxu0 0
        %737 = vmatmul.mubr.bf16.gmra.mrb[0].mxu0 %v552
        %v738 = vpop.f32.mrb[0].mxu0
        %v739 = vadd.f32 0.0, %v738
        %v740 = vpop.f32.mrb[0].mxu0
        %v741 = vadd.f32 0.0, %v740
        %v742 = vpop.f32.mrb[0].mxu0
        %v743 = vadd.f32 0.0, %v742
        %v744 = vpop.f32.mrb[0].mxu0
        %v745 = vadd.f32 0.0, %v744
        %746 = vdwg.mxu0
        %747 = vmatprep.subr.bf16.mxu0 %v424
        %748 = vmatpush1.bf16.msra.mxu0 %v423
        %749 = vmatprep.subr.bf16.mxu0 0
        %750 = vmatpush1.bf16.msra.mxu0 0
        %751 = vmatprep.subr.bf16.mxu0 0
        %752 = vmatpush1.bf16.msra.mxu0 0
        %753 = vmatprep.subr.bf16.mxu0 0
        %754 = vmatpush1.bf16.msra.mxu0 0
        %755 = vmatprep.subr.bf16.mxu0 0
        %756 = vmatpush1.bf16.msra.mxu0 0
        %757 = vmatprep.subr.bf16.mxu0 0
        %758 = vmatpush1.bf16.msra.mxu0 0
        %759 = vmatprep.subr.bf16.mxu0 0
        %760 = vmatpush1.bf16.msra.mxu0 0
        %761 = vmatprep.subr.bf16.mxu0 0
        %762 = vmatpush1.bf16.msra.mxu0 0
        %763 = vmatprep.subr.bf16.mxu0 0
        %764 = vmatpush1.bf16.msra.mxu0 0
        %765 = vmatprep.subr.bf16.mxu0 0
        %766 = vmatpush1.bf16.msra.mxu0 0
        %767 = vmatprep.subr.bf16.mxu0 0
        %768 = vmatpush1.bf16.msra.mxu0 0
        %769 = vmatprep.subr.bf16.mxu0 0
        %770 = vmatpush1.bf16.msra.mxu0 0
        %771 = vmatprep.subr.bf16.mxu0 0
        %772 = vmatpush1.bf16.msra.mxu0 0
        %773 = vmatprep.subr.bf16.mxu0 0
        %774 = vmatpush1.bf16.msra.mxu0 0
        %775 = vmatprep.subr.bf16.mxu0 0
        %776 = vmatpush1.bf16.msra.mxu0 0
        %777 = vmatprep.subr.bf16.mxu0 0
        %778 = vmatpush1.bf16.msra.mxu0 0
        %779 = vmatprep.mubr.bf16.mxu0 0
        %780 = vmatmul.mubr.bf16.gmra.mrb[0].mxu0 %v507
        %v781 = vpop.f32.mrb[0].mxu0
        %v782 = vadd.f32 0.0, %v781
        %v783 = vpop.f32.mrb[0].mxu0
        %v784 = vadd.f32 0.0, %v783
        %v785 = vpop.f32.mrb[0].mxu0
        %v786 = vadd.f32 0.0, %v785
        %v787 = vpop.f32.mrb[0].mxu0
        %v788 = vadd.f32 0.0, %v787
        %789 = vmatprep.mubr.bf16.mxu0 0
        %790 = vmatmul.mubr.bf16.gmra.mrb[0].mxu0 %v510
        %v791 = vpop.f32.mrb[0].mxu0
        %v792 = vadd.f32 0.0, %v791
        %v793 = vpop.f32.mrb[0].mxu0
        %v794 = vadd.f32 0.0, %v793
        %v795 = vpop.f32.mrb[0].mxu0
        %v796 = vadd.f32 0.0, %v795
        %v797 = vpop.f32.mrb[0].mxu0
        %v798 = vadd.f32 0.0, %v797
        %799 = vmatprep.mubr.bf16.mxu0 0
        %800 = vmatmul.mubr.bf16.gmra.mrb[0].mxu0 %v513
        %v801 = vpop.f32.mrb[0].mxu0
        %v802 = vadd.f32 0.0, %v801
        %v803 = vpop.f32.mrb[0].mxu0
        %v804 = vadd.f32 0.0, %v803
        %v805 = vpop.f32.mrb[0].mxu0
        %v806 = vadd.f32 0.0, %v805
        %v807 = vpop.f32.mrb[0].mxu0
        %v808 = vadd.f32 0.0, %v807
        %809 = vmatprep.mubr.bf16.mxu0 0
        %810 = vmatmul.mubr.bf16.gmra.mrb[0].mxu0 %v516
        %v811 = vpop.f32.mrb[0].mxu0
        %v812 = vadd.f32 0.0, %v811
        %v813 = vpop.f32.mrb[0].mxu0
        %v814 = vadd.f32 0.0, %v813
        %v815 = vpop.f32.mrb[0].mxu0
        %v816 = vadd.f32 0.0, %v815
        %v817 = vpop.f32.mrb[0].mxu0
        %v818 = vadd.f32 0.0, %v817
        %819 = vmatprep.mubr.bf16.mxu0 0
        %820 = vmatmul.mubr.bf16.gmra.mrb[0].mxu0 %v519
        %v821 = vpop.f32.mrb[0].mxu0
        %v822 = vadd.f32 0.0, %v821
        %v823 = vpop.f32.mrb[0].mxu0
        %v824 = vadd.f32 0.0, %v823
        %v825 = vpop.f32.mrb[0].mxu0
        %v826 = vadd.f32 0.0, %v825
        %v827 = vpop.f32.mrb[0].mxu0
        %v828 = vadd.f32 0.0, %v827
        %829 = vmatprep.mubr.bf16.mxu0 0
        %830 = vmatmul.mubr.bf16.gmra.mrb[0].mxu0 %v522
        %v831 = vpop.f32.mrb[0].mxu0
        %v832 = vadd.f32 0.0, %v831
        %v833 = vpop.f32.mrb[0].mxu0
        %v834 = vadd.f32 0.0, %v833
        %v835 = vpop.f32.mrb[0].mxu0
        %v836 = vadd.f32 0.0, %v835
        %v837 = vpop.f32.mrb[0].mxu0
        %v838 = vadd.f32 0.0, %v837
        %839 = vmatprep.mubr.bf16.mxu0 0
        %840 = vmatmul.mubr.bf16.gmra.mrb[0].mxu0 %v525
        %v841 = vpop.f32.mrb[0].mxu0
        %v842 = vadd.f32 0.0, %v841
        %v843 = vpop.f32.mrb[0].mxu0
        %v844 = vadd.f32 0.0, %v843
        %v845 = vpop.f32.mrb[0].mxu0
        %v846 = vadd.f32 0.0, %v845
        %v847 = vpop.f32.mrb[0].mxu0
        %v848 = vadd.f32 0.0, %v847
        %849 = vmatprep.mubr.bf16.mxu0 0
        %850 = vmatmul.mubr.bf16.gmra.mrb[0].mxu0 %v528
        %v851 = vpop.f32.mrb[0].mxu0
        %v852 = vadd.f32 0.0, %v851
        %v853 = vpop.f32.mrb[0].mxu0
        %v854 = vadd.f32 0.0, %v853
        %v855 = vpop.f32.mrb[0].mxu0
        %v856 = vadd.f32 0.0, %v855
        %v857 = vpop.f32.mrb[0].mxu0
        %v858 = vadd.f32 0.0, %v857
        %859 = vmatprep.mubr.bf16.mxu0 0
        %860 = vmatmul.mubr.bf16.gmra.mrb[0].mxu0 %v531
        %v861 = vpop.f32.mrb[0].mxu0
        %v862 = vadd.f32 0.0, %v861
        %v863 = vpop.f32.mrb[0].mxu0
        %v864 = vadd.f32 0.0, %v863
        %v865 = vpop.f32.mrb[0].mxu0
        %v866 = vadd.f32 0.0, %v865
        %v867 = vpop.f32.mrb[0].mxu0
        %v868 = vadd.f32 0.0, %v867
        %869 = vmatprep.mubr.bf16.mxu0 0
        %870 = vmatmul.mubr.bf16.gmra.mrb[0].mxu0 %v534
        %v871 = vpop.f32.mrb[0].mxu0
        %v872 = vadd.f32 0.0, %v871
        %v873 = vpop.f32.mrb[0].mxu0
        %v874 = vadd.f32 0.0, %v873
        %v875 = vpop.f32.mrb[0].mxu0
        %v876 = vadd.f32 0.0, %v875
        %v877 = vpop.f32.mrb[0].mxu0
        %v878 = vadd.f32 0.0, %v877
        %879 = vmatprep.mubr.bf16.mxu0 0
        %880 = vmatmul.mubr.bf16.gmra.mrb[0].mxu0 %v537
        %v881 = vpop.f32.mrb[0].mxu0
        %v882 = vadd.f32 0.0, %v881
        %v883 = vpop.f32.mrb[0].mxu0
        %v884 = vadd.f32 0.0, %v883
        %v885 = vpop.f32.mrb[0].mxu0
        %v886 = vadd.f32 0.0, %v885
        %v887 = vpop.f32.mrb[0].mxu0
        %v888 = vadd.f32 0.0, %v887
        %889 = vmatprep.mubr.bf16.mxu0 0
        %890 = vmatmul.mubr.bf16.gmra.mrb[0].mxu0 %v540
        %v891 = vpop.f32.mrb[0].mxu0
        %v892 = vadd.f32 0.0, %v891
        %v893 = vpop.f32.mrb[0].mxu0
        %v894 = vadd.f32 0.0, %v893
        %v895 = vpop.f32.mrb[0].mxu0
        %v896 = vadd.f32 0.0, %v895
        %v897 = vpop.f32.mrb[0].mxu0
        %v898 = vadd.f32 0.0, %v897
        %899 = vmatprep.mubr.bf16.mxu0 0
        %900 = vmatmul.mubr.bf16.gmra.mrb[0].mxu0 %v543
        %v901 = vpop.f32.mrb[0].mxu0
        %v902 = vadd.f32 0.0, %v901
        %v903 = vpop.f32.mrb[0].mxu0
        %v904 = vadd.f32 0.0, %v903
        %v905 = vpop.f32.mrb[0].mxu0
        %v906 = vadd.f32 0.0, %v905
        %v907 = vpop.f32.mrb[0].mxu0
        %v908 = vadd.f32 0.0, %v907
        %909 = vmatprep.mubr.bf16.mxu0 0
        %910 = vmatmul.mubr.bf16.gmra.mrb[0].mxu0 %v546
        %v911 = vpop.f32.mrb[0].mxu0
        %v912 = vadd.f32 0.0, %v911
        %v913 = vpop.f32.mrb[0].mxu0
        %v914 = vadd.f32 0.0, %v913
        %v915 = vpop.f32.mrb[0].mxu0
        %v916 = vadd.f32 0.0, %v915
        %v917 = vpop.f32.mrb[0].mxu0
        %v918 = vadd.f32 0.0, %v917
        %919 = vmatprep.mubr.bf16.mxu0 0
        %920 = vmatmul.mubr.bf16.gmra.mrb[0].mxu0 %v549
        %v921 = vpop.f32.mrb[0].mxu0
        %v922 = vadd.f32 0.0, %v921
        %v923 = vpop.f32.mrb[0].mxu0
        %v924 = vadd.f32 0.0, %v923
        %v925 = vpop.f32.mrb[0].mxu0
        %v926 = vadd.f32 0.0, %v925
        %v927 = vpop.f32.mrb[0].mxu0
        %v928 = vadd.f32 0.0, %v927
        %929 = vmatprep.mubr.bf16.mxu0 0
        %930 = vmatmul.mubr.bf16.gmra.mrb[0].mxu0 %v552
        %v931 = vpop.f32.mrb[0].mxu0
        %v932 = vadd.f32 0.0, %v931
        %v933 = vpop.f32.mrb[0].mxu0
        %v934 = vadd.f32 0.0, %v933
        %v935 = vpop.f32.mrb[0].mxu0
        %v936 = vadd.f32 0.0, %v935
        %v937 = vpop.f32.mrb[0].mxu0
        %v938 = vadd.f32 0.0, %v937
        %939 = vdwg.mxu0
        %940 = vst [vmem:[#allocation2] sm:$0xff] %v589
        %941 = vst [vmem:[#allocation2 + $0x8] sm:$0xff] %v591
        %942 = vst [vmem:[#allocation2 + $0x10] sm:$0xff] %v782
        %943 = vst [vmem:[#allocation2 + $0x18] sm:$0xff] %v784
        %944 = vst [vmem:[#allocation2 + $0x20] sm:$0xff] %v593
        %945 = vst [vmem:[#allocation2 + $0x28] sm:$0xff] %v595
        %946 = vst [vmem:[#allocation2 + $0x30] sm:$0xff] %v786
        %947 = vst [vmem:[#allocation2 + $0x38] sm:$0xff] %v788
        %948 = vst [vmem:[#allocation2 + $0x40] sm:$0xff] %v599
        %949 = vst [vmem:[#allocation2 + $0x48] sm:$0xff] %v601
        %950 = vst [vmem:[#allocation2 + $0x50] sm:$0xff] %v792
        %951 = vst [vmem:[#allocation2 + $0x58] sm:$0xff] %v794
        %952 = vst [vmem:[#allocation2 + $0x60] sm:$0xff] %v603
        %953 = vst [vmem:[#allocation2 + $0x68] sm:$0xff] %v605
        %954 = vst [vmem:[#allocation2 + $0x70] sm:$0xff] %v796
        %955 = vst [vmem:[#allocation2 + $0x78] sm:$0xff] %v798
        %956 = vst [vmem:[#allocation2 + $0x80] sm:$0xff] %v609
        %957 = vst [vmem:[#allocation2 + $0x88] sm:$0xff] %v611
        %958 = vst [vmem:[#allocation2 + $0x90] sm:$0xff] %v802
        %959 = vst [vmem:[#allocation2 + $0x98] sm:$0xff] %v804
        %960 = vst [vmem:[#allocation2 + $0xa0] sm:$0xff] %v613
        %961 = vst [vmem:[#allocation2 + $0xa8] sm:$0xff] %v615
        %962 = vst [vmem:[#allocation2 + $0xb0] sm:$0xff] %v806
        %963 = vst [vmem:[#allocation2 + $0xb8] sm:$0xff] %v808
        %964 = vst [vmem:[#allocation2 + $0xc0] sm:$0xff] %v619
        %965 = vst [vmem:[#allocation2 + $0xc8] sm:$0xff] %v621
        %966 = vst [vmem:[#allocation2 + $0xd0] sm:$0xff] %v812
        %967 = vst [vmem:[#allocation2 + $0xd8] sm:$0xff] %v814
        %968 = vst [vmem:[#allocation2 + $0xe0] sm:$0xff] %v623
        %969 = vst [vmem:[#allocation2 + $0xe8] sm:$0xff] %v625
        %970 = vst [vmem:[#allocation2 + $0xf0] sm:$0xff] %v816
        %971 = vst [vmem:[#allocation2 + $0xf8] sm:$0xff] %v818
        %972 = vst [vmem:[#allocation2 + $0x100] sm:$0xff] %v629
        %973 = vst [vmem:[#allocation2 + $0x108] sm:$0xff] %v631
        %974 = vst [vmem:[#allocation2 + $0x110] sm:$0xff] %v822
        %975 = vst [vmem:[#allocation2 + $0x118] sm:$0xff] %v824
        %976 = vst [vmem:[#allocation2 + $0x120] sm:$0xff] %v633
        %977 = vst [vmem:[#allocation2 + $0x128] sm:$0xff] %v635
        %978 = vst [vmem:[#allocation2 + $0x130] sm:$0xff] %v826
        %979 = vst [vmem:[#allocation2 + $0x138] sm:$0xff] %v828
        %980 = vst [vmem:[#allocation2 + $0x140] sm:$0xff] %v639
        %981 = vst [vmem:[#allocation2 + $0x148] sm:$0xff] %v641
        %982 = vst [vmem:[#allocation2 + $0x150] sm:$0xff] %v832
        %983 = vst [vmem:[#allocation2 + $0x158] sm:$0xff] %v834
        %984 = vst [vmem:[#allocation2 + $0x160] sm:$0xff] %v643
        %985 = vst [vmem:[#allocation2 + $0x168] sm:$0xff] %v645
        %986 = vst [vmem:[#allocation2 + $0x170] sm:$0xff] %v836
        %987 = vst [vmem:[#allocation2 + $0x178] sm:$0xff] %v838
        %988 = vst [vmem:[#allocation2 + $0x180] sm:$0xff] %v649
        %989 = vst [vmem:[#allocation2 + $0x188] sm:$0xff] %v651
        %990 = vst [vmem:[#allocation2 + $0x190] sm:$0xff] %v842
        %991 = vst [vmem:[#allocation2 + $0x198] sm:$0xff] %v844
        %992 = vst [vmem:[#allocation2 + $0x1a0] sm:$0xff] %v653
        %993 = vst [vmem:[#allocation2 + $0x1a8] sm:$0xff] %v655
        %994 = vst [vmem:[#allocation2 + $0x1b0] sm:$0xff] %v846
        %995 = vst [vmem:[#allocation2 + $0x1b8] sm:$0xff] %v848
        %996 = vst [vmem:[#allocation2 + $0x1c0] sm:$0xff] %v659
        %997 = vst [vmem:[#allocation2 + $0x1c8] sm:$0xff] %v661
        %998 = vst [vmem:[#allocation2 + $0x1d0] sm:$0xff] %v852
        %999 = vst [vmem:[#allocation2 + $0x1d8] sm:$0xff] %v854
        %1000 = vst [vmem:[#allocation2 + $0x1e0] sm:$0xff] %v663
        %1001 = vst [vmem:[#allocation2 + $0x1e8] sm:$0xff] %v665
        %1002 = vst [vmem:[#allocation2 + $0x1f0] sm:$0xff] %v856
        %1003 = vst [vmem:[#allocation2 + $0x1f8] sm:$0xff] %v858
        %1004 = vst [vmem:[#allocation2 + $0x200] sm:$0xff] %v669
        %1005 = vst [vmem:[#allocation2 + $0x208] sm:$0xff] %v671
        %1006 = vst [vmem:[#allocation2 + $0x210] sm:$0xff] %v862
        %1007 = vst [vmem:[#allocation2 + $0x218] sm:$0xff] %v864
        %1008 = vst [vmem:[#allocation2 + $0x220] sm:$0xff] %v673
        %1009 = vst [vmem:[#allocation2 + $0x228] sm:$0xff] %v675
        %1010 = vst [vmem:[#allocation2 + $0x230] sm:$0xff] %v866
        %1011 = vst [vmem:[#allocation2 + $0x238] sm:$0xff] %v868
        %1012 = vst [vmem:[#allocation2 + $0x240] sm:$0xff] %v679
        %1013 = vst [vmem:[#allocation2 + $0x248] sm:$0xff] %v681
        %1014 = vst [vmem:[#allocation2 + $0x250] sm:$0xff] %v872
        %1015 = vst [vmem:[#allocation2 + $0x258] sm:$0xff] %v874
        %1016 = vst [vmem:[#allocation2 + $0x260] sm:$0xff] %v683
        %1017 = vst [vmem:[#allocation2 + $0x268] sm:$0xff] %v685
        %1018 = vst [vmem:[#allocation2 + $0x270] sm:$0xff] %v876
        %1019 = vst [vmem:[#allocation2 + $0x278] sm:$0xff] %v878
        %1020 = vst [vmem:[#allocation2 + $0x280] sm:$0xff] %v689
        %1021 = vst [vmem:[#allocation2 + $0x288] sm:$0xff] %v691
        %1022 = vst [vmem:[#allocation2 + $0x290] sm:$0xff] %v882
        %1023 = vst [vmem:[#allocation2 + $0x298] sm:$0xff] %v884
        %1024 = vst [vmem:[#allocation2 + $0x2a0] sm:$0xff] %v693
        %1025 = vst [vmem:[#allocation2 + $0x2a8] sm:$0xff] %v695
        %1026 = vst [vmem:[#allocation2 + $0x2b0] sm:$0xff] %v886
        %1027 = vst [vmem:[#allocation2 + $0x2b8] sm:$0xff] %v888
        %1028 = vst [vmem:[#allocation2 + $0x2c0] sm:$0xff] %v699
        %1029 = vst [vmem:[#allocation2 + $0x2c8] sm:$0xff] %v701
        %1030 = vst [vmem:[#allocation2 + $0x2d0] sm:$0xff] %v892
        %1031 = vst [vmem:[#allocation2 + $0x2d8] sm:$0xff] %v894
        %1032 = vst [vmem:[#allocation2 + $0x2e0] sm:$0xff] %v703
        %1033 = vst [vmem:[#allocation2 + $0x2e8] sm:$0xff] %v705
        %1034 = vst [vmem:[#allocation2 + $0x2f0] sm:$0xff] %v896
        %1035 = vst [vmem:[#allocation2 + $0x2f8] sm:$0xff] %v898
        %1036 = vst [vmem:[#allocation2 + $0x300] sm:$0xff] %v709
        %1037 = vst [vmem:[#allocation2 + $0x308] sm:$0xff] %v711
        %1038 = vst [vmem:[#allocation2 + $0x310] sm:$0xff] %v902
        %1039 = vst [vmem:[#allocation2 + $0x318] sm:$0xff] %v904
        %1040 = vst [vmem:[#allocation2 + $0x320] sm:$0xff] %v713
        %1041 = vst [vmem:[#allocation2 + $0x328] sm:$0xff] %v715
        %1042 = vst [vmem:[#allocation2 + $0x330] sm:$0xff] %v906
        %1043 = vst [vmem:[#allocation2 + $0x338] sm:$0xff] %v908
        %1044 = vst [vmem:[#allocation2 + $0x340] sm:$0xff] %v719
        %1045 = vst [vmem:[#allocation2 + $0x348] sm:$0xff] %v721
        %1046 = vst [vmem:[#allocation2 + $0x350] sm:$0xff] %v912
        %1047 = vst [vmem:[#allocation2 + $0x358] sm:$0xff] %v914
        %1048 = vst [vmem:[#allocation2 + $0x360] sm:$0xff] %v723
        %1049 = vst [vmem:[#allocation2 + $0x368] sm:$0xff] %v725
        %1050 = vst [vmem:[#allocation2 + $0x370] sm:$0xff] %v916
        %1051 = vst [vmem:[#allocation2 + $0x378] sm:$0xff] %v918
        %1052 = vst [vmem:[#allocation2 + $0x380] sm:$0xff] %v729
        %1053 = vst [vmem:[#allocation2 + $0x388] sm:$0xff] %v731
        %1054 = vst [vmem:[#allocation2 + $0x390] sm:$0xff] %v922
        %1055 = vst [vmem:[#allocation2 + $0x398] sm:$0xff] %v924
        %1056 = vst [vmem:[#allocation2 + $0x3a0] sm:$0xff] %v733
        %1057 = vst [vmem:[#allocation2 + $0x3a8] sm:$0xff] %v735
        %1058 = vst [vmem:[#allocation2 + $0x3b0] sm:$0xff] %v926
        %1059 = vst [vmem:[#allocation2 + $0x3b8] sm:$0xff] %v928
        %1060 = vst [vmem:[#allocation2 + $0x3c0] sm:$0xff] %v739
        %1061 = vst [vmem:[#allocation2 + $0x3c8] sm:$0xff] %v741
        %1062 = vst [vmem:[#allocation2 + $0x3d0] sm:$0xff] %v932
        %1063 = vst [vmem:[#allocation2 + $0x3d8] sm:$0xff] %v934
        %1064 = vst [vmem:[#allocation2 + $0x3e0] sm:$0xff] %v743
        %1065 = vst [vmem:[#allocation2 + $0x3e8] sm:$0xff] %v745
        %1066 = vst [vmem:[#allocation2 + $0x3f0] sm:$0xff] %v936
        %1067 = vst [vmem:[#allocation2 + $0x3f8] sm:$0xff] %v938
        %s1068 = scalar_lea.vmem %s196, 1
        %v1069 = vld [vmem:[%s1068] ss:$8 sm:$0xf]
        %vm1070 = vcmp.eq.s32.totalorder %v1069, 0
        %v1071 = vsel %vm1070, 1, 0
        %v1072 = vcvt.s32.f32 %v1071
        %v1073 = vld [vmem:[#allocation2] sm:$0xff]
        %v1074 = vld [vmem:[#allocation2 + $0x8] sm:$0xff]
        %v1075 = vld [vmem:[#allocation2 + $0x10] sm:$0xff]
        %v1076 = vld [vmem:[#allocation2 + $0x18] sm:$0xff]
        %v1077 = vld [vmem:[#allocation2 + $0x20] sm:$0xff]
        %v1078 = vld [vmem:[#allocation2 + $0x28] sm:$0xff]
        %v1079 = vld [vmem:[#allocation2 + $0x30] sm:$0xff]
        %v1080 = vld [vmem:[#allocation2 + $0x38] sm:$0xff]
        %v1082 = vlaneseq
        %v1083 = vshrl.u32 %v1082, 7
        %v1084 = vsub.s32 0, %v1083
        %v1085 = vrot.slane %v1072, %v1084
        %v1086 = vlaneseq
        %v1087 = vshrl.u32 %v1086, 7
        %v1088 = vsub.s32 1, %v1087
        %v1089 = vrot.slane %v1072, %v1088
        %v1090 = vlaneseq
        %v1091 = vshrl.u32 %v1090, 7
        %v1092 = vsub.s32 2, %v1091
        %v1093 = vrot.slane %v1072, %v1092
        %v1094 = vlaneseq
        %v1095 = vshrl.u32 %v1094, 7
        %v1096 = vsub.s32 3, %v1095
        %v1097 = vrot.slane %v1072, %v1096
        %v1102 = vmul.f32 %v1085, %v1073
        %v1103 = vmul.f32 %v1089, %v1074
        %v1104 = vmul.f32 %v1093, %v1075
        %v1105 = vmul.f32 %v1097, %v1076
        %v1106 = vmul.f32 %v1085, %v1077
        %v1107 = vmul.f32 %v1089, %v1078
        %v1108 = vmul.f32 %v1093, %v1079
        %v1109 = vmul.f32 %v1097, %v1080
        %vm1110 = vcmp.eq.s32.totalorder %v1069, 1
        %v1111 = vsel %vm1110, 1, 0
        %v1112 = vcvt.s32.f32 %v1111
        %v1113 = vld [vmem:[#allocation2 + $0x40] sm:$0xff]
        %v1114 = vld [vmem:[#allocation2 + $0x48] sm:$0xff]
        %v1115 = vld [vmem:[#allocation2 + $0x50] sm:$0xff]
        %v1116 = vld [vmem:[#allocation2 + $0x58] sm:$0xff]
        %v1117 = vld [vmem:[#allocation2 + $0x60] sm:$0xff]
        %v1118 = vld [vmem:[#allocation2 + $0x68] sm:$0xff]
        %v1119 = vld [vmem:[#allocation2 + $0x70] sm:$0xff]
        %v1120 = vld [vmem:[#allocation2 + $0x78] sm:$0xff]
        %v1122 = vlaneseq
        %v1123 = vshrl.u32 %v1122, 7
        %v1124 = vsub.s32 0, %v1123
        %v1125 = vrot.slane %v1112, %v1124
        %v1126 = vlaneseq
        %v1127 = vshrl.u32 %v1126, 7
        %v1128 = vsub.s32 1, %v1127
        %v1129 = vrot.slane %v1112, %v1128
        %v1130 = vlaneseq
        %v1131 = vshrl.u32 %v1130, 7
        %v1132 = vsub.s32 2, %v1131
        %v1133 = vrot.slane %v1112, %v1132
        %v1134 = vlaneseq
        %v1135 = vshrl.u32 %v1134, 7
        %v1136 = vsub.s32 3, %v1135
        %v1137 = vrot.slane %v1112, %v1136
        %v1142 = vmul.f32 %v1125, %v1113
        %v1143 = vmul.f32 %v1129, %v1114
        %v1144 = vmul.f32 %v1133, %v1115
        %v1145 = vmul.f32 %v1137, %v1116
        %v1146 = vmul.f32 %v1125, %v1117
        %v1147 = vmul.f32 %v1129, %v1118
        %v1148 = vmul.f32 %v1133, %v1119
        %v1149 = vmul.f32 %v1137, %v1120
        %v1150 = vadd.f32 %v1102, %v1142
        %v1151 = vadd.f32 %v1103, %v1143
        %v1152 = vadd.f32 %v1104, %v1144
        %v1153 = vadd.f32 %v1105, %v1145
        %v1154 = vadd.f32 %v1106, %v1146
        %v1155 = vadd.f32 %v1107, %v1147
        %v1156 = vadd.f32 %v1108, %v1148
        %v1157 = vadd.f32 %v1109, %v1149
        %vm1158 = vcmp.eq.s32.totalorder %v1069, 2
        %v1159 = vsel %vm1158, 1, 0
        %v1160 = vcvt.s32.f32 %v1159
        %v1161 = vld [vmem:[#allocation2 + $0x80] sm:$0xff]
        %v1162 = vld [vmem:[#allocation2 + $0x88] sm:$0xff]
        %v1163 = vld [vmem:[#allocation2 + $0x90] sm:$0xff]
        %v1164 = vld [vmem:[#allocation2 + $0x98] sm:$0xff]
        %v1165 = vld [vmem:[#allocation2 + $0xa0] sm:$0xff]
        %v1166 = vld [vmem:[#allocation2 + $0xa8] sm:$0xff]
        %v1167 = vld [vmem:[#allocation2 + $0xb0] sm:$0xff]
        %v1168 = vld [vmem:[#allocation2 + $0xb8] sm:$0xff]
        %v1170 = vlaneseq
        %v1171 = vshrl.u32 %v1170, 7
        %v1172 = vsub.s32 0, %v1171
        %v1173 = vrot.slane %v1160, %v1172
        %v1174 = vlaneseq
        %v1175 = vshrl.u32 %v1174, 7
        %v1176 = vsub.s32 1, %v1175
        %v1177 = vrot.slane %v1160, %v1176
        %v1178 = vlaneseq
        %v1179 = vshrl.u32 %v1178, 7
        %v1180 = vsub.s32 2, %v1179
        %v1181 = vrot.slane %v1160, %v1180
        %v1182 = vlaneseq
        %v1183 = vshrl.u32 %v1182, 7
        %v1184 = vsub.s32 3, %v1183
        %v1185 = vrot.slane %v1160, %v1184
        %v1190 = vmul.f32 %v1173, %v1161
        %v1191 = vmul.f32 %v1177, %v1162
        %v1192 = vmul.f32 %v1181, %v1163
        %v1193 = vmul.f32 %v1185, %v1164
        %v1194 = vmul.f32 %v1173, %v1165
        %v1195 = vmul.f32 %v1177, %v1166
        %v1196 = vmul.f32 %v1181, %v1167
        %v1197 = vmul.f32 %v1185, %v1168
        %v1198 = vadd.f32 %v1150, %v1190
        %v1199 = vadd.f32 %v1151, %v1191
        %v1200 = vadd.f32 %v1152, %v1192
        %v1201 = vadd.f32 %v1153, %v1193
        %v1202 = vadd.f32 %v1154, %v1194
        %v1203 = vadd.f32 %v1155, %v1195
        %v1204 = vadd.f32 %v1156, %v1196
        %v1205 = vadd.f32 %v1157, %v1197
        %vm1206 = vcmp.eq.s32.totalorder %v1069, 3
        %v1207 = vsel %vm1206, 1, 0
        %v1208 = vcvt.s32.f32 %v1207
        %v1209 = vld [vmem:[#allocation2 + $0xc0] sm:$0xff]
        %v1210 = vld [vmem:[#allocation2 + $0xc8] sm:$0xff]
        %v1211 = vld [vmem:[#allocation2 + $0xd0] sm:$0xff]
        %v1212 = vld [vmem:[#allocation2 + $0xd8] sm:$0xff]
        %v1213 = vld [vmem:[#allocation2 + $0xe0] sm:$0xff]
        %v1214 = vld [vmem:[#allocation2 + $0xe8] sm:$0xff]
        %v1215 = vld [vmem:[#allocation2 + $0xf0] sm:$0xff]
        %v1216 = vld [vmem:[#allocation2 + $0xf8] sm:$0xff]
        %v1218 = vlaneseq
        %v1219 = vshrl.u32 %v1218, 7
        %v1220 = vsub.s32 0, %v1219
        %v1221 = vrot.slane %v1208, %v1220
        %v1222 = vlaneseq
        %v1223 = vshrl.u32 %v1222, 7
        %v1224 = vsub.s32 1, %v1223
        %v1225 = vrot.slane %v1208, %v1224
        %v1226 = vlaneseq
        %v1227 = vshrl.u32 %v1226, 7
        %v1228 = vsub.s32 2, %v1227
        %v1229 = vrot.slane %v1208, %v1228
        %v1230 = vlaneseq
        %v1231 = vshrl.u32 %v1230, 7
        %v1232 = vsub.s32 3, %v1231
        %v1233 = vrot.slane %v1208, %v1232
        %v1238 = vmul.f32 %v1221, %v1209
        %v1239 = vmul.f32 %v1225, %v1210
        %v1240 = vmul.f32 %v1229, %v1211
        %v1241 = vmul.f32 %v1233, %v1212
        %v1242 = vmul.f32 %v1221, %v1213
        %v1243 = vmul.f32 %v1225, %v1214
        %v1244 = vmul.f32 %v1229, %v1215
        %v1245 = vmul.f32 %v1233, %v1216
        %v1246 = vadd.f32 %v1198, %v1238
        %v1247 = vadd.f32 %v1199, %v1239
        %v1248 = vadd.f32 %v1200, %v1240
        %v1249 = vadd.f32 %v1201, %v1241
        %v1250 = vadd.f32 %v1202, %v1242
        %v1251 = vadd.f32 %v1203, %v1243
        %v1252 = vadd.f32 %v1204, %v1244
        %v1253 = vadd.f32 %v1205, %v1245
        %vm1254 = vcmp.eq.s32.totalorder %v1069, 4
        %v1255 = vsel %vm1254, 1, 0
        %v1256 = vcvt.s32.f32 %v1255
        %v1257 = vld [vmem:[#allocation2 + $0x100] sm:$0xff]
        %v1258 = vld [vmem:[#allocation2 + $0x108] sm:$0xff]
        %v1259 = vld [vmem:[#allocation2 + $0x110] sm:$0xff]
        %v1260 = vld [vmem:[#allocation2 + $0x118] sm:$0xff]
        %v1261 = vld [vmem:[#allocation2 + $0x120] sm:$0xff]
        %v1262 = vld [vmem:[#allocation2 + $0x128] sm:$0xff]
        %v1263 = vld [vmem:[#allocation2 + $0x130] sm:$0xff]
        %v1264 = vld [vmem:[#allocation2 + $0x138] sm:$0xff]
        %v1266 = vlaneseq
        %v1267 = vshrl.u32 %v1266, 7
        %v1268 = vsub.s32 0, %v1267
        %v1269 = vrot.slane %v1256, %v1268
        %v1270 = vlaneseq
        %v1271 = vshrl.u32 %v1270, 7
        %v1272 = vsub.s32 1, %v1271
        %v1273 = vrot.slane %v1256, %v1272
        %v1274 = vlaneseq
        %v1275 = vshrl.u32 %v1274, 7
        %v1276 = vsub.s32 2, %v1275
        %v1277 = vrot.slane %v1256, %v1276
        %v1278 = vlaneseq
        %v1279 = vshrl.u32 %v1278, 7
        %v1280 = vsub.s32 3, %v1279
        %v1281 = vrot.slane %v1256, %v1280
        %v1286 = vmul.f32 %v1269, %v1257
        %v1287 = vmul.f32 %v1273, %v1258
        %v1288 = vmul.f32 %v1277, %v1259
        %v1289 = vmul.f32 %v1281, %v1260
        %v1290 = vmul.f32 %v1269, %v1261
        %v1291 = vmul.f32 %v1273, %v1262
        %v1292 = vmul.f32 %v1277, %v1263
        %v1293 = vmul.f32 %v1281, %v1264
        %v1294 = vadd.f32 %v1246, %v1286
        %v1295 = vadd.f32 %v1247, %v1287
        %v1296 = vadd.f32 %v1248, %v1288
        %v1297 = vadd.f32 %v1249, %v1289
        %v1298 = vadd.f32 %v1250, %v1290
        %v1299 = vadd.f32 %v1251, %v1291
        %v1300 = vadd.f32 %v1252, %v1292
        %v1301 = vadd.f32 %v1253, %v1293
        %vm1302 = vcmp.eq.s32.totalorder %v1069, 5
        %v1303 = vsel %vm1302, 1, 0
        %v1304 = vcvt.s32.f32 %v1303
        %v1305 = vld [vmem:[#allocation2 + $0x140] sm:$0xff]
        %v1306 = vld [vmem:[#allocation2 + $0x148] sm:$0xff]
        %v1307 = vld [vmem:[#allocation2 + $0x150] sm:$0xff]
        %v1308 = vld [vmem:[#allocation2 + $0x158] sm:$0xff]
        %v1309 = vld [vmem:[#allocation2 + $0x160] sm:$0xff]
        %v1310 = vld [vmem:[#allocation2 + $0x168] sm:$0xff]
        %v1311 = vld [vmem:[#allocation2 + $0x170] sm:$0xff]
        %v1312 = vld [vmem:[#allocation2 + $0x178] sm:$0xff]
        %v1314 = vlaneseq
        %v1315 = vshrl.u32 %v1314, 7
        %v1316 = vsub.s32 0, %v1315
        %v1317 = vrot.slane %v1304, %v1316
        %v1318 = vlaneseq
        %v1319 = vshrl.u32 %v1318, 7
        %v1320 = vsub.s32 1, %v1319
        %v1321 = vrot.slane %v1304, %v1320
        %v1322 = vlaneseq
        %v1323 = vshrl.u32 %v1322, 7
        %v1324 = vsub.s32 2, %v1323
        %v1325 = vrot.slane %v1304, %v1324
        %v1326 = vlaneseq
        %v1327 = vshrl.u32 %v1326, 7
        %v1328 = vsub.s32 3, %v1327
        %v1329 = vrot.slane %v1304, %v1328
        %v1334 = vmul.f32 %v1317, %v1305
        %v1335 = vmul.f32 %v1321, %v1306
        %v1336 = vmul.f32 %v1325, %v1307
        %v1337 = vmul.f32 %v1329, %v1308
        %v1338 = vmul.f32 %v1317, %v1309
        %v1339 = vmul.f32 %v1321, %v1310
        %v1340 = vmul.f32 %v1325, %v1311
        %v1341 = vmul.f32 %v1329, %v1312
        %v1342 = vadd.f32 %v1294, %v1334
        %v1343 = vadd.f32 %v1295, %v1335
        %v1344 = vadd.f32 %v1296, %v1336
        %v1345 = vadd.f32 %v1297, %v1337
        %v1346 = vadd.f32 %v1298, %v1338
        %v1347 = vadd.f32 %v1299, %v1339
        %v1348 = vadd.f32 %v1300, %v1340
        %v1349 = vadd.f32 %v1301, %v1341
        %vm1350 = vcmp.eq.s32.totalorder %v1069, 6
        %v1351 = vsel %vm1350, 1, 0
        %v1352 = vcvt.s32.f32 %v1351
        %v1353 = vld [vmem:[#allocation2 + $0x180] sm:$0xff]
        %v1354 = vld [vmem:[#allocation2 + $0x188] sm:$0xff]
        %v1355 = vld [vmem:[#allocation2 + $0x190] sm:$0xff]
        %v1356 = vld [vmem:[#allocation2 + $0x198] sm:$0xff]
        %v1357 = vld [vmem:[#allocation2 + $0x1a0] sm:$0xff]
        %v1358 = vld [vmem:[#allocation2 + $0x1a8] sm:$0xff]
        %v1359 = vld [vmem:[#allocation2 + $0x1b0] sm:$0xff]
        %v1360 = vld [vmem:[#allocation2 + $0x1b8] sm:$0xff]
        %v1362 = vlaneseq
        %v1363 = vshrl.u32 %v1362, 7
        %v1364 = vsub.s32 0, %v1363
        %v1365 = vrot.slane %v1352, %v1364
        %v1366 = vlaneseq
        %v1367 = vshrl.u32 %v1366, 7
        %v1368 = vsub.s32 1, %v1367
        %v1369 = vrot.slane %v1352, %v1368
        %v1370 = vlaneseq
        %v1371 = vshrl.u32 %v1370, 7
        %v1372 = vsub.s32 2, %v1371
        %v1373 = vrot.slane %v1352, %v1372
        %v1374 = vlaneseq
        %v1375 = vshrl.u32 %v1374, 7
        %v1376 = vsub.s32 3, %v1375
        %v1377 = vrot.slane %v1352, %v1376
        %v1382 = vmul.f32 %v1365, %v1353
        %v1383 = vmul.f32 %v1369, %v1354
        %v1384 = vmul.f32 %v1373, %v1355
        %v1385 = vmul.f32 %v1377, %v1356
        %v1386 = vmul.f32 %v1365, %v1357
        %v1387 = vmul.f32 %v1369, %v1358
        %v1388 = vmul.f32 %v1373, %v1359
        %v1389 = vmul.f32 %v1377, %v1360
        %v1390 = vadd.f32 %v1342, %v1382
        %v1391 = vadd.f32 %v1343, %v1383
        %v1392 = vadd.f32 %v1344, %v1384
        %v1393 = vadd.f32 %v1345, %v1385
        %v1394 = vadd.f32 %v1346, %v1386
        %v1395 = vadd.f32 %v1347, %v1387
        %v1396 = vadd.f32 %v1348, %v1388
        %v1397 = vadd.f32 %v1349, %v1389
        %vm1398 = vcmp.eq.s32.totalorder %v1069, 7
        %v1399 = vsel %vm1398, 1, 0
        %v1400 = vcvt.s32.f32 %v1399
        %v1401 = vld [vmem:[#allocation2 + $0x1c0] sm:$0xff]
        %v1402 = vld [vmem:[#allocation2 + $0x1c8] sm:$0xff]
        %v1403 = vld [vmem:[#allocation2 + $0x1d0] sm:$0xff]
        %v1404 = vld [vmem:[#allocation2 + $0x1d8] sm:$0xff]
        %v1405 = vld [vmem:[#allocation2 + $0x1e0] sm:$0xff]
        %v1406 = vld [vmem:[#allocation2 + $0x1e8] sm:$0xff]
        %v1407 = vld [vmem:[#allocation2 + $0x1f0] sm:$0xff]
        %v1408 = vld [vmem:[#allocation2 + $0x1f8] sm:$0xff]
        %v1410 = vlaneseq
        %v1411 = vshrl.u32 %v1410, 7
        %v1412 = vsub.s32 0, %v1411
        %v1413 = vrot.slane %v1400, %v1412
        %v1414 = vlaneseq
        %v1415 = vshrl.u32 %v1414, 7
        %v1416 = vsub.s32 1, %v1415
        %v1417 = vrot.slane %v1400, %v1416
        %v1418 = vlaneseq
        %v1419 = vshrl.u32 %v1418, 7
        %v1420 = vsub.s32 2, %v1419
        %v1421 = vrot.slane %v1400, %v1420
        %v1422 = vlaneseq
        %v1423 = vshrl.u32 %v1422, 7
        %v1424 = vsub.s32 3, %v1423
        %v1425 = vrot.slane %v1400, %v1424
        %v1430 = vmul.f32 %v1413, %v1401
        %v1431 = vmul.f32 %v1417, %v1402
        %v1432 = vmul.f32 %v1421, %v1403
        %v1433 = vmul.f32 %v1425, %v1404
        %v1434 = vmul.f32 %v1413, %v1405
        %v1435 = vmul.f32 %v1417, %v1406
        %v1436 = vmul.f32 %v1421, %v1407
        %v1437 = vmul.f32 %v1425, %v1408
        %v1438 = vadd.f32 %v1390, %v1430
        %v1439 = vadd.f32 %v1391, %v1431
        %v1440 = vadd.f32 %v1392, %v1432
        %v1441 = vadd.f32 %v1393, %v1433
        %v1442 = vadd.f32 %v1394, %v1434
        %v1443 = vadd.f32 %v1395, %v1435
        %v1444 = vadd.f32 %v1396, %v1436
        %v1445 = vadd.f32 %v1397, %v1437
        %vm1446 = vcmp.eq.s32.totalorder %v1069, 8
        %v1447 = vsel %vm1446, 1, 0
        %v1448 = vcvt.s32.f32 %v1447
        %v1449 = vld [vmem:[#allocation2 + $0x200] sm:$0xff]
        %v1450 = vld [vmem:[#allocation2 + $0x208] sm:$0xff]
        %v1451 = vld [vmem:[#allocation2 + $0x210] sm:$0xff]
        %v1452 = vld [vmem:[#allocation2 + $0x218] sm:$0xff]
        %v1453 = vld [vmem:[#allocation2 + $0x220] sm:$0xff]
        %v1454 = vld [vmem:[#allocation2 + $0x228] sm:$0xff]
        %v1455 = vld [vmem:[#allocation2 + $0x230] sm:$0xff]
        %v1456 = vld [vmem:[#allocation2 + $0x238] sm:$0xff]
        %v1458 = vlaneseq
        %v1459 = vshrl.u32 %v1458, 7
        %v1460 = vsub.s32 0, %v1459
        %v1461 = vrot.slane %v1448, %v1460
        %v1462 = vlaneseq
        %v1463 = vshrl.u32 %v1462, 7
        %v1464 = vsub.s32 1, %v1463
        %v1465 = vrot.slane %v1448, %v1464
        %v1466 = vlaneseq
        %v1467 = vshrl.u32 %v1466, 7
        %v1468 = vsub.s32 2, %v1467
        %v1469 = vrot.slane %v1448, %v1468
        %v1470 = vlaneseq
        %v1471 = vshrl.u32 %v1470, 7
        %v1472 = vsub.s32 3, %v1471
        %v1473 = vrot.slane %v1448, %v1472
        %v1478 = vmul.f32 %v1461, %v1449
        %v1479 = vmul.f32 %v1465, %v1450
        %v1480 = vmul.f32 %v1469, %v1451
        %v1481 = vmul.f32 %v1473, %v1452
        %v1482 = vmul.f32 %v1461, %v1453
        %v1483 = vmul.f32 %v1465, %v1454
        %v1484 = vmul.f32 %v1469, %v1455
        %v1485 = vmul.f32 %v1473, %v1456
        %v1486 = vadd.f32 %v1438, %v1478
        %v1487 = vadd.f32 %v1439, %v1479
        %v1488 = vadd.f32 %v1440, %v1480
        %v1489 = vadd.f32 %v1441, %v1481
        %v1490 = vadd.f32 %v1442, %v1482
        %v1491 = vadd.f32 %v1443, %v1483
        %v1492 = vadd.f32 %v1444, %v1484
        %v1493 = vadd.f32 %v1445, %v1485
        %vm1494 = vcmp.eq.s32.totalorder %v1069, 9
        %v1495 = vsel %vm1494, 1, 0
        %v1496 = vcvt.s32.f32 %v1495
        %v1497 = vld [vmem:[#allocation2 + $0x240] sm:$0xff]
        %v1498 = vld [vmem:[#allocation2 + $0x248] sm:$0xff]
        %v1499 = vld [vmem:[#allocation2 + $0x250] sm:$0xff]
        %v1500 = vld [vmem:[#allocation2 + $0x258] sm:$0xff]
        %v1501 = vld [vmem:[#allocation2 + $0x260] sm:$0xff]
        %v1502 = vld [vmem:[#allocation2 + $0x268] sm:$0xff]
        %v1503 = vld [vmem:[#allocation2 + $0x270] sm:$0xff]
        %v1504 = vld [vmem:[#allocation2 + $0x278] sm:$0xff]
        %v1506 = vlaneseq
        %v1507 = vshrl.u32 %v1506, 7
        %v1508 = vsub.s32 0, %v1507
        %v1509 = vrot.slane %v1496, %v1508
        %v1510 = vlaneseq
        %v1511 = vshrl.u32 %v1510, 7
        %v1512 = vsub.s32 1, %v1511
        %v1513 = vrot.slane %v1496, %v1512
        %v1514 = vlaneseq
        %v1515 = vshrl.u32 %v1514, 7
        %v1516 = vsub.s32 2, %v1515
        %v1517 = vrot.slane %v1496, %v1516
        %v1518 = vlaneseq
        %v1519 = vshrl.u32 %v1518, 7
        %v1520 = vsub.s32 3, %v1519
        %v1521 = vrot.slane %v1496, %v1520
        %v1526 = vmul.f32 %v1509, %v1497
        %v1527 = vmul.f32 %v1513, %v1498
        %v1528 = vmul.f32 %v1517, %v1499
        %v1529 = vmul.f32 %v1521, %v1500
        %v1530 = vmul.f32 %v1509, %v1501
        %v1531 = vmul.f32 %v1513, %v1502
        %v1532 = vmul.f32 %v1517, %v1503
        %v1533 = vmul.f32 %v1521, %v1504
        %v1534 = vadd.f32 %v1486, %v1526
        %v1535 = vadd.f32 %v1487, %v1527
        %v1536 = vadd.f32 %v1488, %v1528
        %v1537 = vadd.f32 %v1489, %v1529
        %v1538 = vadd.f32 %v1490, %v1530
        %v1539 = vadd.f32 %v1491, %v1531
        %v1540 = vadd.f32 %v1492, %v1532
        %v1541 = vadd.f32 %v1493, %v1533
        %vm1542 = vcmp.eq.s32.totalorder %v1069, 10
        %v1543 = vsel %vm1542, 1, 0
        %v1544 = vcvt.s32.f32 %v1543
        %v1545 = vld [vmem:[#allocation2 + $0x280] sm:$0xff]
        %v1546 = vld [vmem:[#allocation2 + $0x288] sm:$0xff]
        %v1547 = vld [vmem:[#allocation2 + $0x290] sm:$0xff]
        %v1548 = vld [vmem:[#allocation2 + $0x298] sm:$0xff]
        %v1549 = vld [vmem:[#allocation2 + $0x2a0] sm:$0xff]
        %v1550 = vld [vmem:[#allocation2 + $0x2a8] sm:$0xff]
        %v1551 = vld [vmem:[#allocation2 + $0x2b0] sm:$0xff]
        %v1552 = vld [vmem:[#allocation2 + $0x2b8] sm:$0xff]
        %v1554 = vlaneseq
        %v1555 = vshrl.u32 %v1554, 7
        %v1556 = vsub.s32 0, %v1555
        %v1557 = vrot.slane %v1544, %v1556
        %v1558 = vlaneseq
        %v1559 = vshrl.u32 %v1558, 7
        %v1560 = vsub.s32 1, %v1559
        %v1561 = vrot.slane %v1544, %v1560
        %v1562 = vlaneseq
        %v1563 = vshrl.u32 %v1562, 7
        %v1564 = vsub.s32 2, %v1563
        %v1565 = vrot.slane %v1544, %v1564
        %v1566 = vlaneseq
        %v1567 = vshrl.u32 %v1566, 7
        %v1568 = vsub.s32 3, %v1567
        %v1569 = vrot.slane %v1544, %v1568
        %v1574 = vmul.f32 %v1557, %v1545
        %v1575 = vmul.f32 %v1561, %v1546
        %v1576 = vmul.f32 %v1565, %v1547
        %v1577 = vmul.f32 %v1569, %v1548
        %v1578 = vmul.f32 %v1557, %v1549
        %v1579 = vmul.f32 %v1561, %v1550
        %v1580 = vmul.f32 %v1565, %v1551
        %v1581 = vmul.f32 %v1569, %v1552
        %v1582 = vadd.f32 %v1534, %v1574
        %v1583 = vadd.f32 %v1535, %v1575
        %v1584 = vadd.f32 %v1536, %v1576
        %v1585 = vadd.f32 %v1537, %v1577
        %v1586 = vadd.f32 %v1538, %v1578
        %v1587 = vadd.f32 %v1539, %v1579
        %v1588 = vadd.f32 %v1540, %v1580
        %v1589 = vadd.f32 %v1541, %v1581
        %vm1590 = vcmp.eq.s32.totalorder %v1069, 11
        %v1591 = vsel %vm1590, 1, 0
        %v1592 = vcvt.s32.f32 %v1591
        %v1593 = vld [vmem:[#allocation2 + $0x2c0] sm:$0xff]
        %v1594 = vld [vmem:[#allocation2 + $0x2c8] sm:$0xff]
        %v1595 = vld [vmem:[#allocation2 + $0x2d0] sm:$0xff]
        %v1596 = vld [vmem:[#allocation2 + $0x2d8] sm:$0xff]
        %v1597 = vld [vmem:[#allocation2 + $0x2e0] sm:$0xff]
        %v1598 = vld [vmem:[#allocation2 + $0x2e8] sm:$0xff]
        %v1599 = vld [vmem:[#allocation2 + $0x2f0] sm:$0xff]
        %v1600 = vld [vmem:[#allocation2 + $0x2f8] sm:$0xff]
        %v1602 = vlaneseq
        %v1603 = vshrl.u32 %v1602, 7
        %v1604 = vsub.s32 0, %v1603
        %v1605 = vrot.slane %v1592, %v1604
        %v1606 = vlaneseq
        %v1607 = vshrl.u32 %v1606, 7
        %v1608 = vsub.s32 1, %v1607
        %v1609 = vrot.slane %v1592, %v1608
        %v1610 = vlaneseq
        %v1611 = vshrl.u32 %v1610, 7
        %v1612 = vsub.s32 2, %v1611
        %v1613 = vrot.slane %v1592, %v1612
        %v1614 = vlaneseq
        %v1615 = vshrl.u32 %v1614, 7
        %v1616 = vsub.s32 3, %v1615
        %v1617 = vrot.slane %v1592, %v1616
        %v1622 = vmul.f32 %v1605, %v1593
        %v1623 = vmul.f32 %v1609, %v1594
        %v1624 = vmul.f32 %v1613, %v1595
        %v1625 = vmul.f32 %v1617, %v1596
        %v1626 = vmul.f32 %v1605, %v1597
        %v1627 = vmul.f32 %v1609, %v1598
        %v1628 = vmul.f32 %v1613, %v1599
        %v1629 = vmul.f32 %v1617, %v1600
        %v1630 = vadd.f32 %v1582, %v1622
        %v1631 = vadd.f32 %v1583, %v1623
        %v1632 = vadd.f32 %v1584, %v1624
        %v1633 = vadd.f32 %v1585, %v1625
        %v1634 = vadd.f32 %v1586, %v1626
        %v1635 = vadd.f32 %v1587, %v1627
        %v1636 = vadd.f32 %v1588, %v1628
        %v1637 = vadd.f32 %v1589, %v1629
        %vm1638 = vcmp.eq.s32.totalorder %v1069, 12
        %v1639 = vsel %vm1638, 1, 0
        %v1640 = vcvt.s32.f32 %v1639
        %v1641 = vld [vmem:[#allocation2 + $0x300] sm:$0xff]
        %v1642 = vld [vmem:[#allocation2 + $0x308] sm:$0xff]
        %v1643 = vld [vmem:[#allocation2 + $0x310] sm:$0xff]
        %v1644 = vld [vmem:[#allocation2 + $0x318] sm:$0xff]
        %v1645 = vld [vmem:[#allocation2 + $0x320] sm:$0xff]
        %v1646 = vld [vmem:[#allocation2 + $0x328] sm:$0xff]
        %v1647 = vld [vmem:[#allocation2 + $0x330] sm:$0xff]
        %v1648 = vld [vmem:[#allocation2 + $0x338] sm:$0xff]
        %v1650 = vlaneseq
        %v1651 = vshrl.u32 %v1650, 7
        %v1652 = vsub.s32 0, %v1651
        %v1653 = vrot.slane %v1640, %v1652
        %v1654 = vlaneseq
        %v1655 = vshrl.u32 %v1654, 7
        %v1656 = vsub.s32 1, %v1655
        %v1657 = vrot.slane %v1640, %v1656
        %v1658 = vlaneseq
        %v1659 = vshrl.u32 %v1658, 7
        %v1660 = vsub.s32 2, %v1659
        %v1661 = vrot.slane %v1640, %v1660
        %v1662 = vlaneseq
        %v1663 = vshrl.u32 %v1662, 7
        %v1664 = vsub.s32 3, %v1663
        %v1665 = vrot.slane %v1640, %v1664
        %v1670 = vmul.f32 %v1653, %v1641
        %v1671 = vmul.f32 %v1657, %v1642
        %v1672 = vmul.f32 %v1661, %v1643
        %v1673 = vmul.f32 %v1665, %v1644
        %v1674 = vmul.f32 %v1653, %v1645
        %v1675 = vmul.f32 %v1657, %v1646
        %v1676 = vmul.f32 %v1661, %v1647
        %v1677 = vmul.f32 %v1665, %v1648
        %v1678 = vadd.f32 %v1630, %v1670
        %v1679 = vadd.f32 %v1631, %v1671
        %v1680 = vadd.f32 %v1632, %v1672
        %v1681 = vadd.f32 %v1633, %v1673
        %v1682 = vadd.f32 %v1634, %v1674
        %v1683 = vadd.f32 %v1635, %v1675
        %v1684 = vadd.f32 %v1636, %v1676
        %v1685 = vadd.f32 %v1637, %v1677
        %vm1686 = vcmp.eq.s32.totalorder %v1069, 13
        %v1687 = vsel %vm1686, 1, 0
        %v1688 = vcvt.s32.f32 %v1687
        %v1689 = vld [vmem:[#allocation2 + $0x340] sm:$0xff]
        %v1690 = vld [vmem:[#allocation2 + $0x348] sm:$0xff]
        %v1691 = vld [vmem:[#allocation2 + $0x350] sm:$0xff]
        %v1692 = vld [vmem:[#allocation2 + $0x358] sm:$0xff]
        %v1693 = vld [vmem:[#allocation2 + $0x360] sm:$0xff]
        %v1694 = vld [vmem:[#allocation2 + $0x368] sm:$0xff]
        %v1695 = vld [vmem:[#allocation2 + $0x370] sm:$0xff]
        %v1696 = vld [vmem:[#allocation2 + $0x378] sm:$0xff]
        %v1698 = vlaneseq
        %v1699 = vshrl.u32 %v1698, 7
        %v1700 = vsub.s32 0, %v1699
        %v1701 = vrot.slane %v1688, %v1700
        %v1702 = vlaneseq
        %v1703 = vshrl.u32 %v1702, 7
        %v1704 = vsub.s32 1, %v1703
        %v1705 = vrot.slane %v1688, %v1704
        %v1706 = vlaneseq
        %v1707 = vshrl.u32 %v1706, 7
        %v1708 = vsub.s32 2, %v1707
        %v1709 = vrot.slane %v1688, %v1708
        %v1710 = vlaneseq
        %v1711 = vshrl.u32 %v1710, 7
        %v1712 = vsub.s32 3, %v1711
        %v1713 = vrot.slane %v1688, %v1712
        %v1718 = vmul.f32 %v1701, %v1689
        %v1719 = vmul.f32 %v1705, %v1690
        %v1720 = vmul.f32 %v1709, %v1691
        %v1721 = vmul.f32 %v1713, %v1692
        %v1722 = vmul.f32 %v1701, %v1693
        %v1723 = vmul.f32 %v1705, %v1694
        %v1724 = vmul.f32 %v1709, %v1695
        %v1725 = vmul.f32 %v1713, %v1696
        %v1726 = vadd.f32 %v1678, %v1718
        %v1727 = vadd.f32 %v1679, %v1719
        %v1728 = vadd.f32 %v1680, %v1720
        %v1729 = vadd.f32 %v1681, %v1721
        %v1730 = vadd.f32 %v1682, %v1722
        %v1731 = vadd.f32 %v1683, %v1723
        %v1732 = vadd.f32 %v1684, %v1724
        %v1733 = vadd.f32 %v1685, %v1725
        %vm1734 = vcmp.eq.s32.totalorder %v1069, 14
        %v1735 = vsel %vm1734, 1, 0
        %v1736 = vcvt.s32.f32 %v1735
        %v1737 = vld [vmem:[#allocation2 + $0x380] sm:$0xff]
        %v1738 = vld [vmem:[#allocation2 + $0x388] sm:$0xff]
        %v1739 = vld [vmem:[#allocation2 + $0x390] sm:$0xff]
        %v1740 = vld [vmem:[#allocation2 + $0x398] sm:$0xff]
        %v1741 = vld [vmem:[#allocation2 + $0x3a0] sm:$0xff]
        %v1742 = vld [vmem:[#allocation2 + $0x3a8] sm:$0xff]
        %v1743 = vld [vmem:[#allocation2 + $0x3b0] sm:$0xff]
        %v1744 = vld [vmem:[#allocation2 + $0x3b8] sm:$0xff]
        %v1746 = vlaneseq
        %v1747 = vshrl.u32 %v1746, 7
        %v1748 = vsub.s32 0, %v1747
        %v1749 = vrot.slane %v1736, %v1748
        %v1750 = vlaneseq
        %v1751 = vshrl.u32 %v1750, 7
        %v1752 = vsub.s32 1, %v1751
        %v1753 = vrot.slane %v1736, %v1752
        %v1754 = vlaneseq
        %v1755 = vshrl.u32 %v1754, 7
        %v1756 = vsub.s32 2, %v1755
        %v1757 = vrot.slane %v1736, %v1756
        %v1758 = vlaneseq
        %v1759 = vshrl.u32 %v1758, 7
        %v1760 = vsub.s32 3, %v1759
        %v1761 = vrot.slane %v1736, %v1760
        %v1766 = vmul.f32 %v1749, %v1737
        %v1767 = vmul.f32 %v1753, %v1738
        %v1768 = vmul.f32 %v1757, %v1739
        %v1769 = vmul.f32 %v1761, %v1740
        %v1770 = vmul.f32 %v1749, %v1741
        %v1771 = vmul.f32 %v1753, %v1742
        %v1772 = vmul.f32 %v1757, %v1743
        %v1773 = vmul.f32 %v1761, %v1744
        %v1774 = vadd.f32 %v1726, %v1766
        %v1775 = vadd.f32 %v1727, %v1767
        %v1776 = vadd.f32 %v1728, %v1768
        %v1777 = vadd.f32 %v1729, %v1769
        %v1778 = vadd.f32 %v1730, %v1770
        %v1779 = vadd.f32 %v1731, %v1771
        %v1780 = vadd.f32 %v1732, %v1772
        %v1781 = vadd.f32 %v1733, %v1773
        %vm1782 = vcmp.eq.s32.totalorder %v1069, 15
        %v1783 = vsel %vm1782, 1, 0
        %v1784 = vcvt.s32.f32 %v1783
        %v1785 = vld [vmem:[#allocation2 + $0x3c0] sm:$0xff]
        %v1786 = vld [vmem:[#allocation2 + $0x3c8] sm:$0xff]
        %v1787 = vld [vmem:[#allocation2 + $0x3d0] sm:$0xff]
        %v1788 = vld [vmem:[#allocation2 + $0x3d8] sm:$0xff]
        %v1789 = vld [vmem:[#allocation2 + $0x3e0] sm:$0xff]
        %v1790 = vld [vmem:[#allocation2 + $0x3e8] sm:$0xff]
        %v1791 = vld [vmem:[#allocation2 + $0x3f0] sm:$0xff]
        %v1792 = vld [vmem:[#allocation2 + $0x3f8] sm:$0xff]
        %v1794 = vlaneseq
        %v1795 = vshrl.u32 %v1794, 7
        %v1796 = vsub.s32 0, %v1795
        %v1797 = vrot.slane %v1784, %v1796
        %v1798 = vlaneseq
        %v1799 = vshrl.u32 %v1798, 7
        %v1800 = vsub.s32 1, %v1799
        %v1801 = vrot.slane %v1784, %v1800
        %v1802 = vlaneseq
        %v1803 = vshrl.u32 %v1802, 7
        %v1804 = vsub.s32 2, %v1803
        %v1805 = vrot.slane %v1784, %v1804
        %v1806 = vlaneseq
        %v1807 = vshrl.u32 %v1806, 7
        %v1808 = vsub.s32 3, %v1807
        %v1809 = vrot.slane %v1784, %v1808
        %v1814 = vmul.f32 %v1797, %v1785
        %v1815 = vmul.f32 %v1801, %v1786
        %v1816 = vmul.f32 %v1805, %v1787
        %v1817 = vmul.f32 %v1809, %v1788
        %v1818 = vmul.f32 %v1797, %v1789
        %v1819 = vmul.f32 %v1801, %v1790
        %v1820 = vmul.f32 %v1805, %v1791
        %v1821 = vmul.f32 %v1809, %v1792
        %v1822 = vadd.f32 %v1774, %v1814
        %v1823 = vadd.f32 %v1775, %v1815
        %v1824 = vadd.f32 %v1776, %v1816
        %v1825 = vadd.f32 %v1777, %v1817
        %v1826 = vadd.f32 %v1778, %v1818
        %v1827 = vadd.f32 %v1779, %v1819
        %v1828 = vadd.f32 %v1780, %v1820
        %v1829 = vadd.f32 %v1781, %v1821
        %s1830 = scalar_lea.vmem %s2, 128
        %v1831 = vld [vmem:[%s1830] sm:$0xf]
        %v1832 = vld [vmem:[%s1830 + $0x4] sm:$0xf]
        %v1833 = vld [vmem:[%s1830 + $0x8] sm:$0xf]
        %v1834 = vld [vmem:[%s1830 + $0xc] sm:$0xf]
        %v1835 = vld [vmem:[%s1830 + $0x10] sm:$0xf]
        %v1836 = vld [vmem:[%s1830 + $0x14] sm:$0xf]
        %v1837 = vld [vmem:[%s1830 + $0x18] sm:$0xf]
        %v1838 = vld [vmem:[%s1830 + $0x1c] sm:$0xf]
        %v1839 = vld [vmem:[%s1830 + $0x20] sm:$0xf]
        %v1840 = vld [vmem:[%s1830 + $0x24] sm:$0xf]
        %v1841 = vld [vmem:[%s1830 + $0x28] sm:$0xf]
        %v1842 = vld [vmem:[%s1830 + $0x2c] sm:$0xf]
        %v1843 = vld [vmem:[%s1830 + $0x30] sm:$0xf]
        %v1844 = vld [vmem:[%s1830 + $0x34] sm:$0xf]
        %v1845 = vld [vmem:[%s1830 + $0x38] sm:$0xf]
        %v1846 = vld [vmem:[%s1830 + $0x3c] sm:$0xf]
        %v1847 = vld [vmem:[%s1830 + $0x40] sm:$0xf]
        %v1848 = vld [vmem:[%s1830 + $0x44] sm:$0xf]
        %v1849 = vld [vmem:[%s1830 + $0x48] sm:$0xf]
        %v1850 = vld [vmem:[%s1830 + $0x4c] sm:$0xf]
        %v1851 = vld [vmem:[%s1830 + $0x50] sm:$0xf]
        %v1852 = vld [vmem:[%s1830 + $0x54] sm:$0xf]
        %v1853 = vld [vmem:[%s1830 + $0x58] sm:$0xf]
        %v1854 = vld [vmem:[%s1830 + $0x5c] sm:$0xf]
        %v1855 = vld [vmem:[%s1830 + $0x60] sm:$0xf]
        %v1856 = vld [vmem:[%s1830 + $0x64] sm:$0xf]
        %v1857 = vld [vmem:[%s1830 + $0x68] sm:$0xf]
        %v1858 = vld [vmem:[%s1830 + $0x6c] sm:$0xf]
        %v1859 = vld [vmem:[%s1830 + $0x70] sm:$0xf]
        %v1860 = vld [vmem:[%s1830 + $0x74] sm:$0xf]
        %v1861 = vld [vmem:[%s1830 + $0x78] sm:$0xf]
        %v1862 = vld [vmem:[%s1830 + $0x7c] sm:$0xf]
        %v1863 = vpack.c.bf16 %v1826, %v1822
        %v1864 = vpack.c.bf16 %v1827, %v1823
        %v1865 = vpack.c.bf16 %v1828, %v1824
        %v1866 = vpack.c.bf16 %v1829, %v1825
        %v1899 = vunpack.c.l.b16 %v1831
        %v1900 = vunpack.c.l.b16 %v1832
        %v1901 = vunpack.c.l.b16 %v1833
        %v1902 = vunpack.c.l.b16 %v1834
        %v1903 = vunpack.c.l.b16 %v1835
        %v1904 = vunpack.c.l.b16 %v1836
        %v1905 = vunpack.c.l.b16 %v1837
        %v1906 = vunpack.c.l.b16 %v1838
        %v1907 = vunpack.c.l.b16 %v1839
        %v1908 = vunpack.c.l.b16 %v1840
        %v1909 = vunpack.c.l.b16 %v1841
        %v1910 = vunpack.c.l.b16 %v1842
        %v1911 = vunpack.c.l.b16 %v1843
        %v1912 = vunpack.c.l.b16 %v1844
        %v1913 = vunpack.c.l.b16 %v1845
        %v1914 = vunpack.c.l.b16 %v1846
        %v1915 = vunpack.c.l.b16 %v1847
        %v1916 = vunpack.c.l.b16 %v1848
        %v1917 = vunpack.c.l.b16 %v1849
        %v1918 = vunpack.c.l.b16 %v1850
        %v1919 = vunpack.c.l.b16 %v1851
        %v1920 = vunpack.c.l.b16 %v1852
        %v1921 = vunpack.c.l.b16 %v1853
        %v1922 = vunpack.c.l.b16 %v1854
        %v1923 = vunpack.c.l.b16 %v1855
        %v1924 = vunpack.c.l.b16 %v1856
        %v1925 = vunpack.c.l.b16 %v1857
        %v1926 = vunpack.c.l.b16 %v1858
        %v1927 = vunpack.c.l.b16 %v1859
        %v1928 = vunpack.c.l.b16 %v1860
        %v1929 = vunpack.c.l.b16 %v1861
        %v1930 = vunpack.c.l.b16 %v1862
        %v1931 = vpack.c.b16 %v1900, %v1899
        %v1932 = vpack.c.b16 %v1902, %v1901
        %v1933 = vpack.c.b16 %v1904, %v1903
        %v1934 = vpack.c.b16 %v1906, %v1905
        %v1935 = vpack.c.b16 %v1908, %v1907
        %v1936 = vpack.c.b16 %v1910, %v1909
        %v1937 = vpack.c.b16 %v1912, %v1911
        %v1938 = vpack.c.b16 %v1914, %v1913
        %v1939 = vpack.c.b16 %v1916, %v1915
        %v1940 = vpack.c.b16 %v1918, %v1917
        %v1941 = vpack.c.b16 %v1920, %v1919
        %v1942 = vpack.c.b16 %v1922, %v1921
        %v1943 = vpack.c.b16 %v1924, %v1923
        %v1944 = vpack.c.b16 %v1926, %v1925
        %v1945 = vpack.c.b16 %v1928, %v1927
        %v1946 = vpack.c.b16 %v1930, %v1929
        %v1948 = vsel %vm505, %v1931, 0
        %v1951 = vsel %vm505, %v1932, 0
        %v1954 = vsel %vm505, %v1933, 0
        %v1957 = vsel %vm505, %v1934, 0
        %v1960 = vsel %vm505, %v1935, 0
        %v1963 = vsel %vm505, %v1936, 0
        %v1966 = vsel %vm505, %v1937, 0
        %v1969 = vsel %vm505, %v1938, 0
        %v1972 = vsel %vm505, %v1939, 0
        %v1975 = vsel %vm505, %v1940, 0
        %v1978 = vsel %vm505, %v1941, 0
        %v1981 = vsel %vm505, %v1942, 0
        %v1984 = vsel %vm505, %v1943, 0
        %v1987 = vsel %vm505, %v1944, 0
        %v1990 = vsel %vm505, %v1945, 0
        %v1993 = vsel %vm505, %v1946, 0
        %1995 = vmatprep.subr.bf16.mxu0 %v1864
        %1996 = vmatpush1.bf16.msra.mxu0 %v1863
        %1997 = vmatprep.subr.bf16.mxu0 0
        %1998 = vmatpush1.bf16.msra.mxu0 0
        %1999 = vmatprep.subr.bf16.mxu0 0
        %2000 = vmatpush1.bf16.msra.mxu0 0
        %2001 = vmatprep.subr.bf16.mxu0 0
        %2002 = vmatpush1.bf16.msra.mxu0 0
        %2003 = vmatprep.subr.bf16.mxu0 0
        %2004 = vmatpush1.bf16.msra.mxu0 0
        %2005 = vmatprep.subr.bf16.mxu0 0
        %2006 = vmatpush1.bf16.msra.mxu0 0
        %2007 = vmatprep.subr.bf16.mxu0 0
        %2008 = vmatpush1.bf16.msra.mxu0 0
        %2009 = vmatprep.subr.bf16.mxu0 0
        %2010 = vmatpush1.bf16.msra.mxu0 0
        %2011 = vmatprep.subr.bf16.mxu0 0
        %2012 = vmatpush1.bf16.msra.mxu0 0
        %2013 = vmatprep.subr.bf16.mxu0 0
        %2014 = vmatpush1.bf16.msra.mxu0 0
        %2015 = vmatprep.subr.bf16.mxu0 0
        %2016 = vmatpush1.bf16.msra.mxu0 0
        %2017 = vmatprep.subr.bf16.mxu0 0
        %2018 = vmatpush1.bf16.msra.mxu0 0
        %2019 = vmatprep.subr.bf16.mxu0 0
        %2020 = vmatpush1.bf16.msra.mxu0 0
        %2021 = vmatprep.subr.bf16.mxu0 0
        %2022 = vmatpush1.bf16.msra.mxu0 0
        %2023 = vmatprep.subr.bf16.mxu0 0
        %2024 = vmatpush1.bf16.msra.mxu0 0
        %2025 = vmatprep.subr.bf16.mxu0 0
        %2026 = vmatpush1.bf16.msra.mxu0 0
        %2027 = vmatprep.mubr.bf16.mxu0 0
        %2028 = vmatmul.mubr.bf16.gmra.mrb[0].mxu0 %v1948
        %v2029 = vpop.f32.mrb[0].mxu0
        %v2030 = vadd.f32 0.0, %v2029
        %v2031 = vpop.f32.mrb[0].mxu0
        %v2032 = vadd.f32 0.0, %v2031
        %v2033 = vpop.f32.mrb[0].mxu0
        %v2034 = vadd.f32 0.0, %v2033
        %v2035 = vpop.f32.mrb[0].mxu0
        %v2036 = vadd.f32 0.0, %v2035
        %2037 = vmatprep.mubr.bf16.mxu0 0
        %2038 = vmatmul.mubr.bf16.gmra.mrb[0].mxu0 %v1951
        %v2039 = vpop.f32.mrb[0].mxu0
        %v2040 = vadd.f32 0.0, %v2039
        %v2041 = vpop.f32.mrb[0].mxu0
        %v2042 = vadd.f32 0.0, %v2041
        %v2043 = vpop.f32.mrb[0].mxu0
        %v2044 = vadd.f32 0.0, %v2043
        %v2045 = vpop.f32.mrb[0].mxu0
        %v2046 = vadd.f32 0.0, %v2045
        %2047 = vmatprep.mubr.bf16.mxu0 0
        %2048 = vmatmul.mubr.bf16.gmra.mrb[0].mxu0 %v1954
        %v2049 = vpop.f32.mrb[0].mxu0
        %v2050 = vadd.f32 0.0, %v2049
        %v2051 = vpop.f32.mrb[0].mxu0
        %v2052 = vadd.f32 0.0, %v2051
        %v2053 = vpop.f32.mrb[0].mxu0
        %v2054 = vadd.f32 0.0, %v2053
        %v2055 = vpop.f32.mrb[0].mxu0
        %v2056 = vadd.f32 0.0, %v2055
        %2057 = vmatprep.mubr.bf16.mxu0 0
        %2058 = vmatmul.mubr.bf16.gmra.mrb[0].mxu0 %v1957
        %v2059 = vpop.f32.mrb[0].mxu0
        %v2060 = vadd.f32 0.0, %v2059
        %v2061 = vpop.f32.mrb[0].mxu0
        %v2062 = vadd.f32 0.0, %v2061
        %v2063 = vpop.f32.mrb[0].mxu0
        %v2064 = vadd.f32 0.0, %v2063
        %v2065 = vpop.f32.mrb[0].mxu0
        %v2066 = vadd.f32 0.0, %v2065
        %2067 = vmatprep.mubr.bf16.mxu0 0
        %2068 = vmatmul.mubr.bf16.gmra.mrb[0].mxu0 %v1960
        %v2069 = vpop.f32.mrb[0].mxu0
        %v2070 = vadd.f32 0.0, %v2069
        %v2071 = vpop.f32.mrb[0].mxu0
        %v2072 = vadd.f32 0.0, %v2071
        %v2073 = vpop.f32.mrb[0].mxu0
        %v2074 = vadd.f32 0.0, %v2073
        %v2075 = vpop.f32.mrb[0].mxu0
        %v2076 = vadd.f32 0.0, %v2075
        %2077 = vmatprep.mubr.bf16.mxu0 0
        %2078 = vmatmul.mubr.bf16.gmra.mrb[0].mxu0 %v1963
        %v2079 = vpop.f32.mrb[0].mxu0
        %v2080 = vadd.f32 0.0, %v2079
        %v2081 = vpop.f32.mrb[0].mxu0
        %v2082 = vadd.f32 0.0, %v2081
        %v2083 = vpop.f32.mrb[0].mxu0
        %v2084 = vadd.f32 0.0, %v2083
        %v2085 = vpop.f32.mrb[0].mxu0
        %v2086 = vadd.f32 0.0, %v2085
        %2087 = vmatprep.mubr.bf16.mxu0 0
        %2088 = vmatmul.mubr.bf16.gmra.mrb[0].mxu0 %v1966
        %v2089 = vpop.f32.mrb[0].mxu0
        %v2090 = vadd.f32 0.0, %v2089
        %v2091 = vpop.f32.mrb[0].mxu0
        %v2092 = vadd.f32 0.0, %v2091
        %v2093 = vpop.f32.mrb[0].mxu0
        %v2094 = vadd.f32 0.0, %v2093
        %v2095 = vpop.f32.mrb[0].mxu0
        %v2096 = vadd.f32 0.0, %v2095
        %2097 = vmatprep.mubr.bf16.mxu0 0
        %2098 = vmatmul.mubr.bf16.gmra.mrb[0].mxu0 %v1969
        %v2099 = vpop.f32.mrb[0].mxu0
        %v2100 = vadd.f32 0.0, %v2099
        %v2101 = vpop.f32.mrb[0].mxu0
        %v2102 = vadd.f32 0.0, %v2101
        %v2103 = vpop.f32.mrb[0].mxu0
        %v2104 = vadd.f32 0.0, %v2103
        %v2105 = vpop.f32.mrb[0].mxu0
        %v2106 = vadd.f32 0.0, %v2105
        %2107 = vmatprep.mubr.bf16.mxu0 0
        %2108 = vmatmul.mubr.bf16.gmra.mrb[0].mxu0 %v1972
        %v2109 = vpop.f32.mrb[0].mxu0
        %v2110 = vadd.f32 0.0, %v2109
        %v2111 = vpop.f32.mrb[0].mxu0
        %v2112 = vadd.f32 0.0, %v2111
        %v2113 = vpop.f32.mrb[0].mxu0
        %v2114 = vadd.f32 0.0, %v2113
        %v2115 = vpop.f32.mrb[0].mxu0
        %v2116 = vadd.f32 0.0, %v2115
        %2117 = vmatprep.mubr.bf16.mxu0 0
        %2118 = vmatmul.mubr.bf16.gmra.mrb[0].mxu0 %v1975
        %v2119 = vpop.f32.mrb[0].mxu0
        %v2120 = vadd.f32 0.0, %v2119
        %v2121 = vpop.f32.mrb[0].mxu0
        %v2122 = vadd.f32 0.0, %v2121
        %v2123 = vpop.f32.mrb[0].mxu0
        %v2124 = vadd.f32 0.0, %v2123
        %v2125 = vpop.f32.mrb[0].mxu0
        %v2126 = vadd.f32 0.0, %v2125
        %2127 = vmatprep.mubr.bf16.mxu0 0
        %2128 = vmatmul.mubr.bf16.gmra.mrb[0].mxu0 %v1978
        %v2129 = vpop.f32.mrb[0].mxu0
        %v2130 = vadd.f32 0.0, %v2129
        %v2131 = vpop.f32.mrb[0].mxu0
        %v2132 = vadd.f32 0.0, %v2131
        %v2133 = vpop.f32.mrb[0].mxu0
        %v2134 = vadd.f32 0.0, %v2133
        %v2135 = vpop.f32.mrb[0].mxu0
        %v2136 = vadd.f32 0.0, %v2135
        %2137 = vmatprep.mubr.bf16.mxu0 0
        %2138 = vmatmul.mubr.bf16.gmra.mrb[0].mxu0 %v1981
        %v2139 = vpop.f32.mrb[0].mxu0
        %v2140 = vadd.f32 0.0, %v2139
        %v2141 = vpop.f32.mrb[0].mxu0
        %v2142 = vadd.f32 0.0, %v2141
        %v2143 = vpop.f32.mrb[0].mxu0
        %v2144 = vadd.f32 0.0, %v2143
        %v2145 = vpop.f32.mrb[0].mxu0
        %v2146 = vadd.f32 0.0, %v2145
        %2147 = vmatprep.mubr.bf16.mxu0 0
        %2148 = vmatmul.mubr.bf16.gmra.mrb[0].mxu0 %v1984
        %v2149 = vpop.f32.mrb[0].mxu0
        %v2150 = vadd.f32 0.0, %v2149
        %v2151 = vpop.f32.mrb[0].mxu0
        %v2152 = vadd.f32 0.0, %v2151
        %v2153 = vpop.f32.mrb[0].mxu0
        %v2154 = vadd.f32 0.0, %v2153
        %v2155 = vpop.f32.mrb[0].mxu0
        %v2156 = vadd.f32 0.0, %v2155
        %2157 = vmatprep.mubr.bf16.mxu0 0
        %2158 = vmatmul.mubr.bf16.gmra.mrb[0].mxu0 %v1987
        %v2159 = vpop.f32.mrb[0].mxu0
        %v2160 = vadd.f32 0.0, %v2159
        %v2161 = vpop.f32.mrb[0].mxu0
        %v2162 = vadd.f32 0.0, %v2161
        %v2163 = vpop.f32.mrb[0].mxu0
        %v2164 = vadd.f32 0.0, %v2163
        %v2165 = vpop.f32.mrb[0].mxu0
        %v2166 = vadd.f32 0.0, %v2165
        %2167 = vmatprep.mubr.bf16.mxu0 0
        %2168 = vmatmul.mubr.bf16.gmra.mrb[0].mxu0 %v1990
        %v2169 = vpop.f32.mrb[0].mxu0
        %v2170 = vadd.f32 0.0, %v2169
        %v2171 = vpop.f32.mrb[0].mxu0
        %v2172 = vadd.f32 0.0, %v2171
        %v2173 = vpop.f32.mrb[0].mxu0
        %v2174 = vadd.f32 0.0, %v2173
        %v2175 = vpop.f32.mrb[0].mxu0
        %v2176 = vadd.f32 0.0, %v2175
        %2177 = vmatprep.mubr.bf16.mxu0 0
        %2178 = vmatmul.mubr.bf16.gmra.mrb[0].mxu0 %v1993
        %v2179 = vpop.f32.mrb[0].mxu0
        %v2180 = vadd.f32 0.0, %v2179
        %v2181 = vpop.f32.mrb[0].mxu0
        %v2182 = vadd.f32 0.0, %v2181
        %v2183 = vpop.f32.mrb[0].mxu0
        %v2184 = vadd.f32 0.0, %v2183
        %v2185 = vpop.f32.mrb[0].mxu0
        %v2186 = vadd.f32 0.0, %v2185
        %2187 = vdwg.mxu0
        %2188 = vmatprep.subr.bf16.mxu0 %v1866
        %2189 = vmatpush1.bf16.msra.mxu0 %v1865
        %2190 = vmatprep.subr.bf16.mxu0 0
        %2191 = vmatpush1.bf16.msra.mxu0 0
        %2192 = vmatprep.subr.bf16.mxu0 0
        %2193 = vmatpush1.bf16.msra.mxu0 0
        %2194 = vmatprep.subr.bf16.mxu0 0
        %2195 = vmatpush1.bf16.msra.mxu0 0
        %2196 = vmatprep.subr.bf16.mxu0 0
        %2197 = vmatpush1.bf16.msra.mxu0 0
        %2198 = vmatprep.subr.bf16.mxu0 0
        %2199 = vmatpush1.bf16.msra.mxu0 0
        %2200 = vmatprep.subr.bf16.mxu0 0
        %2201 = vmatpush1.bf16.msra.mxu0 0
        %2202 = vmatprep.subr.bf16.mxu0 0
        %2203 = vmatpush1.bf16.msra.mxu0 0
        %2204 = vmatprep.subr.bf16.mxu0 0
        %2205 = vmatpush1.bf16.msra.mxu0 0
        %2206 = vmatprep.subr.bf16.mxu0 0
        %2207 = vmatpush1.bf16.msra.mxu0 0
        %2208 = vmatprep.subr.bf16.mxu0 0
        %2209 = vmatpush1.bf16.msra.mxu0 0
        %2210 = vmatprep.subr.bf16.mxu0 0
        %2211 = vmatpush1.bf16.msra.mxu0 0
        %2212 = vmatprep.subr.bf16.mxu0 0
        %2213 = vmatpush1.bf16.msra.mxu0 0
        %2214 = vmatprep.subr.bf16.mxu0 0
        %2215 = vmatpush1.bf16.msra.mxu0 0
        %2216 = vmatprep.subr.bf16.mxu0 0
        %2217 = vmatpush1.bf16.msra.mxu0 0
        %2218 = vmatprep.subr.bf16.mxu0 0
        %2219 = vmatpush1.bf16.msra.mxu0 0
        %2220 = vmatprep.mubr.bf16.mxu0 0
        %2221 = vmatmul.mubr.bf16.gmra.mrb[0].mxu0 %v1948
        %v2222 = vpop.f32.mrb[0].mxu0
        %v2223 = vadd.f32 0.0, %v2222
        %v2224 = vpop.f32.mrb[0].mxu0
        %v2225 = vadd.f32 0.0, %v2224
        %v2226 = vpop.f32.mrb[0].mxu0
        %v2227 = vadd.f32 0.0, %v2226
        %v2228 = vpop.f32.mrb[0].mxu0
        %v2229 = vadd.f32 0.0, %v2228
        %2230 = vmatprep.mubr.bf16.mxu0 0
        %2231 = vmatmul.mubr.bf16.gmra.mrb[0].mxu0 %v1951
        %v2232 = vpop.f32.mrb[0].mxu0
        %v2233 = vadd.f32 0.0, %v2232
        %v2234 = vpop.f32.mrb[0].mxu0
        %v2235 = vadd.f32 0.0, %v2234
        %v2236 = vpop.f32.mrb[0].mxu0
        %v2237 = vadd.f32 0.0, %v2236
        %v2238 = vpop.f32.mrb[0].mxu0
        %v2239 = vadd.f32 0.0, %v2238
        %2240 = vmatprep.mubr.bf16.mxu0 0
        %2241 = vmatmul.mubr.bf16.gmra.mrb[0].mxu0 %v1954
        %v2242 = vpop.f32.mrb[0].mxu0
        %v2243 = vadd.f32 0.0, %v2242
        %v2244 = vpop.f32.mrb[0].mxu0
        %v2245 = vadd.f32 0.0, %v2244
        %v2246 = vpop.f32.mrb[0].mxu0
        %v2247 = vadd.f32 0.0, %v2246
        %v2248 = vpop.f32.mrb[0].mxu0
        %v2249 = vadd.f32 0.0, %v2248
        %2250 = vmatprep.mubr.bf16.mxu0 0
        %2251 = vmatmul.mubr.bf16.gmra.mrb[0].mxu0 %v1957
        %v2252 = vpop.f32.mrb[0].mxu0
        %v2253 = vadd.f32 0.0, %v2252
        %v2254 = vpop.f32.mrb[0].mxu0
        %v2255 = vadd.f32 0.0, %v2254
        %v2256 = vpop.f32.mrb[0].mxu0
        %v2257 = vadd.f32 0.0, %v2256
        %v2258 = vpop.f32.mrb[0].mxu0
        %v2259 = vadd.f32 0.0, %v2258
        %2260 = vmatprep.mubr.bf16.mxu0 0
        %2261 = vmatmul.mubr.bf16.gmra.mrb[0].mxu0 %v1960
        %v2262 = vpop.f32.mrb[0].mxu0
        %v2263 = vadd.f32 0.0, %v2262
        %v2264 = vpop.f32.mrb[0].mxu0
        %v2265 = vadd.f32 0.0, %v2264
        %v2266 = vpop.f32.mrb[0].mxu0
        %v2267 = vadd.f32 0.0, %v2266
        %v2268 = vpop.f32.mrb[0].mxu0
        %v2269 = vadd.f32 0.0, %v2268
        %2270 = vmatprep.mubr.bf16.mxu0 0
        %2271 = vmatmul.mubr.bf16.gmra.mrb[0].mxu0 %v1963
        %v2272 = vpop.f32.mrb[0].mxu0
        %v2273 = vadd.f32 0.0, %v2272
        %v2274 = vpop.f32.mrb[0].mxu0
        %v2275 = vadd.f32 0.0, %v2274
        %v2276 = vpop.f32.mrb[0].mxu0
        %v2277 = vadd.f32 0.0, %v2276
        %v2278 = vpop.f32.mrb[0].mxu0
        %v2279 = vadd.f32 0.0, %v2278
        %2280 = vmatprep.mubr.bf16.mxu0 0
        %2281 = vmatmul.mubr.bf16.gmra.mrb[0].mxu0 %v1966
        %v2282 = vpop.f32.mrb[0].mxu0
        %v2283 = vadd.f32 0.0, %v2282
        %v2284 = vpop.f32.mrb[0].mxu0
        %v2285 = vadd.f32 0.0, %v2284
        %v2286 = vpop.f32.mrb[0].mxu0
        %v2287 = vadd.f32 0.0, %v2286
        %v2288 = vpop.f32.mrb[0].mxu0
        %v2289 = vadd.f32 0.0, %v2288
        %2290 = vmatprep.mubr.bf16.mxu0 0
        %2291 = vmatmul.mubr.bf16.gmra.mrb[0].mxu0 %v1969
        %v2292 = vpop.f32.mrb[0].mxu0
        %v2293 = vadd.f32 0.0, %v2292
        %v2294 = vpop.f32.mrb[0].mxu0
        %v2295 = vadd.f32 0.0, %v2294
        %v2296 = vpop.f32.mrb[0].mxu0
        %v2297 = vadd.f32 0.0, %v2296
        %v2298 = vpop.f32.mrb[0].mxu0
        %v2299 = vadd.f32 0.0, %v2298
        %2300 = vmatprep.mubr.bf16.mxu0 0
        %2301 = vmatmul.mubr.bf16.gmra.mrb[0].mxu0 %v1972
        %v2302 = vpop.f32.mrb[0].mxu0
        %v2303 = vadd.f32 0.0, %v2302
        %v2304 = vpop.f32.mrb[0].mxu0
        %v2305 = vadd.f32 0.0, %v2304
        %v2306 = vpop.f32.mrb[0].mxu0
        %v2307 = vadd.f32 0.0, %v2306
        %v2308 = vpop.f32.mrb[0].mxu0
        %v2309 = vadd.f32 0.0, %v2308
        %2310 = vmatprep.mubr.bf16.mxu0 0
        %2311 = vmatmul.mubr.bf16.gmra.mrb[0].mxu0 %v1975
        %v2312 = vpop.f32.mrb[0].mxu0
        %v2313 = vadd.f32 0.0, %v2312
        %v2314 = vpop.f32.mrb[0].mxu0
        %v2315 = vadd.f32 0.0, %v2314
        %v2316 = vpop.f32.mrb[0].mxu0
        %v2317 = vadd.f32 0.0, %v2316
        %v2318 = vpop.f32.mrb[0].mxu0
        %v2319 = vadd.f32 0.0, %v2318
        %2320 = vmatprep.mubr.bf16.mxu0 0
        %2321 = vmatmul.mubr.bf16.gmra.mrb[0].mxu0 %v1978
        %v2322 = vpop.f32.mrb[0].mxu0
        %v2323 = vadd.f32 0.0, %v2322
        %v2324 = vpop.f32.mrb[0].mxu0
        %v2325 = vadd.f32 0.0, %v2324
        %v2326 = vpop.f32.mrb[0].mxu0
        %v2327 = vadd.f32 0.0, %v2326
        %v2328 = vpop.f32.mrb[0].mxu0
        %v2329 = vadd.f32 0.0, %v2328
        %2330 = vmatprep.mubr.bf16.mxu0 0
        %2331 = vmatmul.mubr.bf16.gmra.mrb[0].mxu0 %v1981
        %v2332 = vpop.f32.mrb[0].mxu0
        %v2333 = vadd.f32 0.0, %v2332
        %v2334 = vpop.f32.mrb[0].mxu0
        %v2335 = vadd.f32 0.0, %v2334
        %v2336 = vpop.f32.mrb[0].mxu0
        %v2337 = vadd.f32 0.0, %v2336
        %v2338 = vpop.f32.mrb[0].mxu0
        %v2339 = vadd.f32 0.0, %v2338
        %2340 = vmatprep.mubr.bf16.mxu0 0
        %2341 = vmatmul.mubr.bf16.gmra.mrb[0].mxu0 %v1984
        %v2342 = vpop.f32.mrb[0].mxu0
        %v2343 = vadd.f32 0.0, %v2342
        %v2344 = vpop.f32.mrb[0].mxu0
        %v2345 = vadd.f32 0.0, %v2344
        %v2346 = vpop.f32.mrb[0].mxu0
        %v2347 = vadd.f32 0.0, %v2346
        %v2348 = vpop.f32.mrb[0].mxu0
        %v2349 = vadd.f32 0.0, %v2348
        %2350 = vmatprep.mubr.bf16.mxu0 0
        %2351 = vmatmul.mubr.bf16.gmra.mrb[0].mxu0 %v1987
        %v2352 = vpop.f32.mrb[0].mxu0
        %v2353 = vadd.f32 0.0, %v2352
        %v2354 = vpop.f32.mrb[0].mxu0
        %v2355 = vadd.f32 0.0, %v2354
        %v2356 = vpop.f32.mrb[0].mxu0
        %v2357 = vadd.f32 0.0, %v2356
        %v2358 = vpop.f32.mrb[0].mxu0
        %v2359 = vadd.f32 0.0, %v2358
        %2360 = vmatprep.mubr.bf16.mxu0 0
        %2361 = vmatmul.mubr.bf16.gmra.mrb[0].mxu0 %v1990
        %v2362 = vpop.f32.mrb[0].mxu0
        %v2363 = vadd.f32 0.0, %v2362
        %v2364 = vpop.f32.mrb[0].mxu0
        %v2365 = vadd.f32 0.0, %v2364
        %v2366 = vpop.f32.mrb[0].mxu0
        %v2367 = vadd.f32 0.0, %v2366
        %v2368 = vpop.f32.mrb[0].mxu0
        %v2369 = vadd.f32 0.0, %v2368
        %2370 = vmatprep.mubr.bf16.mxu0 0
        %2371 = vmatmul.mubr.bf16.gmra.mrb[0].mxu0 %v1993
        %v2372 = vpop.f32.mrb[0].mxu0
        %v2373 = vadd.f32 0.0, %v2372
        %v2374 = vpop.f32.mrb[0].mxu0
        %v2375 = vadd.f32 0.0, %v2374
        %v2376 = vpop.f32.mrb[0].mxu0
        %v2377 = vadd.f32 0.0, %v2376
        %v2378 = vpop.f32.mrb[0].mxu0
        %v2379 = vadd.f32 0.0, %v2378
        %2380 = vdwg.mxu0
        %2381 = vst [vmem:[#allocation2] sm:$0xff] %v2030
        %2382 = vst [vmem:[#allocation2 + $0x8] sm:$0xff] %v2032
        %2383 = vst [vmem:[#allocation2 + $0x10] sm:$0xff] %v2223
        %2384 = vst [vmem:[#allocation2 + $0x18] sm:$0xff] %v2225
        %2385 = vst [vmem:[#allocation2 + $0x20] sm:$0xff] %v2034
        %2386 = vst [vmem:[#allocation2 + $0x28] sm:$0xff] %v2036
        %2387 = vst [vmem:[#allocation2 + $0x30] sm:$0xff] %v2227
        %2388 = vst [vmem:[#allocation2 + $0x38] sm:$0xff] %v2229
        %2389 = vst [vmem:[#allocation2 + $0x40] sm:$0xff] %v2040
        %2390 = vst [vmem:[#allocation2 + $0x48] sm:$0xff] %v2042
        %2391 = vst [vmem:[#allocation2 + $0x50] sm:$0xff] %v2233
        %2392 = vst [vmem:[#allocation2 + $0x58] sm:$0xff] %v2235
        %2393 = vst [vmem:[#allocation2 + $0x60] sm:$0xff] %v2044
        %2394 = vst [vmem:[#allocation2 + $0x68] sm:$0xff] %v2046
        %2395 = vst [vmem:[#allocation2 + $0x70] sm:$0xff] %v2237
        %2396 = vst [vmem:[#allocation2 + $0x78] sm:$0xff] %v2239
        %2397 = vst [vmem:[#allocation2 + $0x80] sm:$0xff] %v2050
        %2398 = vst [vmem:[#allocation2 + $0x88] sm:$0xff] %v2052
        %2399 = vst [vmem:[#allocation2 + $0x90] sm:$0xff] %v2243
        %2400 = vst [vmem:[#allocation2 + $0x98] sm:$0xff] %v2245
        %2401 = vst [vmem:[#allocation2 + $0xa0] sm:$0xff] %v2054
        %2402 = vst [vmem:[#allocation2 + $0xa8] sm:$0xff] %v2056
        %2403 = vst [vmem:[#allocation2 + $0xb0] sm:$0xff] %v2247
        %2404 = vst [vmem:[#allocation2 + $0xb8] sm:$0xff] %v2249
        %2405 = vst [vmem:[#allocation2 + $0xc0] sm:$0xff] %v2060
        %2406 = vst [vmem:[#allocation2 + $0xc8] sm:$0xff] %v2062
        %2407 = vst [vmem:[#allocation2 + $0xd0] sm:$0xff] %v2253
        %2408 = vst [vmem:[#allocation2 + $0xd8] sm:$0xff] %v2255
        %2409 = vst [vmem:[#allocation2 + $0xe0] sm:$0xff] %v2064
        %2410 = vst [vmem:[#allocation2 + $0xe8] sm:$0xff] %v2066
        %2411 = vst [vmem:[#allocation2 + $0xf0] sm:$0xff] %v2257
        %2412 = vst [vmem:[#allocation2 + $0xf8] sm:$0xff] %v2259
        %2413 = vst [vmem:[#allocation2 + $0x100] sm:$0xff] %v2070
        %2414 = vst [vmem:[#allocation2 + $0x108] sm:$0xff] %v2072
        %2415 = vst [vmem:[#allocation2 + $0x110] sm:$0xff] %v2263
        %2416 = vst [vmem:[#allocation2 + $0x118] sm:$0xff] %v2265
        %2417 = vst [vmem:[#allocation2 + $0x120] sm:$0xff] %v2074
        %2418 = vst [vmem:[#allocation2 + $0x128] sm:$0xff] %v2076
        %2419 = vst [vmem:[#allocation2 + $0x130] sm:$0xff] %v2267
        %2420 = vst [vmem:[#allocation2 + $0x138] sm:$0xff] %v2269
        %2421 = vst [vmem:[#allocation2 + $0x140] sm:$0xff] %v2080
        %2422 = vst [vmem:[#allocation2 + $0x148] sm:$0xff] %v2082
        %2423 = vst [vmem:[#allocation2 + $0x150] sm:$0xff] %v2273
        %2424 = vst [vmem:[#allocation2 + $0x158] sm:$0xff] %v2275
        %2425 = vst [vmem:[#allocation2 + $0x160] sm:$0xff] %v2084
        %2426 = vst [vmem:[#allocation2 + $0x168] sm:$0xff] %v2086
        %2427 = vst [vmem:[#allocation2 + $0x170] sm:$0xff] %v2277
        %2428 = vst [vmem:[#allocation2 + $0x178] sm:$0xff] %v2279
        %2429 = vst [vmem:[#allocation2 + $0x180] sm:$0xff] %v2090
        %2430 = vst [vmem:[#allocation2 + $0x188] sm:$0xff] %v2092
        %2431 = vst [vmem:[#allocation2 + $0x190] sm:$0xff] %v2283
        %2432 = vst [vmem:[#allocation2 + $0x198] sm:$0xff] %v2285
        %2433 = vst [vmem:[#allocation2 + $0x1a0] sm:$0xff] %v2094
        %2434 = vst [vmem:[#allocation2 + $0x1a8] sm:$0xff] %v2096
        %2435 = vst [vmem:[#allocation2 + $0x1b0] sm:$0xff] %v2287
        %2436 = vst [vmem:[#allocation2 + $0x1b8] sm:$0xff] %v2289
        %2437 = vst [vmem:[#allocation2 + $0x1c0] sm:$0xff] %v2100
        %2438 = vst [vmem:[#allocation2 + $0x1c8] sm:$0xff] %v2102
        %2439 = vst [vmem:[#allocation2 + $0x1d0] sm:$0xff] %v2293
        %2440 = vst [vmem:[#allocation2 + $0x1d8] sm:$0xff] %v2295
        %2441 = vst [vmem:[#allocation2 + $0x1e0] sm:$0xff] %v2104
        %2442 = vst [vmem:[#allocation2 + $0x1e8] sm:$0xff] %v2106
        %2443 = vst [vmem:[#allocation2 + $0x1f0] sm:$0xff] %v2297
        %2444 = vst [vmem:[#allocation2 + $0x1f8] sm:$0xff] %v2299
        %2445 = vst [vmem:[#allocation2 + $0x200] sm:$0xff] %v2110
        %2446 = vst [vmem:[#allocation2 + $0x208] sm:$0xff] %v2112
        %2447 = vst [vmem:[#allocation2 + $0x210] sm:$0xff] %v2303
        %2448 = vst [vmem:[#allocation2 + $0x218] sm:$0xff] %v2305
        %2449 = vst [vmem:[#allocation2 + $0x220] sm:$0xff] %v2114
        %2450 = vst [vmem:[#allocation2 + $0x228] sm:$0xff] %v2116
        %2451 = vst [vmem:[#allocation2 + $0x230] sm:$0xff] %v2307
        %2452 = vst [vmem:[#allocation2 + $0x238] sm:$0xff] %v2309
        %2453 = vst [vmem:[#allocation2 + $0x240] sm:$0xff] %v2120
        %2454 = vst [vmem:[#allocation2 + $0x248] sm:$0xff] %v2122
        %2455 = vst [vmem:[#allocation2 + $0x250] sm:$0xff] %v2313
        %2456 = vst [vmem:[#allocation2 + $0x258] sm:$0xff] %v2315
        %2457 = vst [vmem:[#allocation2 + $0x260] sm:$0xff] %v2124
        %2458 = vst [vmem:[#allocation2 + $0x268] sm:$0xff] %v2126
        %2459 = vst [vmem:[#allocation2 + $0x270] sm:$0xff] %v2317
        %2460 = vst [vmem:[#allocation2 + $0x278] sm:$0xff] %v2319
        %2461 = vst [vmem:[#allocation2 + $0x280] sm:$0xff] %v2130
        %2462 = vst [vmem:[#allocation2 + $0x288] sm:$0xff] %v2132
        %2463 = vst [vmem:[#allocation2 + $0x290] sm:$0xff] %v2323
        %2464 = vst [vmem:[#allocation2 + $0x298] sm:$0xff] %v2325
        %2465 = vst [vmem:[#allocation2 + $0x2a0] sm:$0xff] %v2134
        %2466 = vst [vmem:[#allocation2 + $0x2a8] sm:$0xff] %v2136
        %2467 = vst [vmem:[#allocation2 + $0x2b0] sm:$0xff] %v2327
        %2468 = vst [vmem:[#allocation2 + $0x2b8] sm:$0xff] %v2329
        %2469 = vst [vmem:[#allocation2 + $0x2c0] sm:$0xff] %v2140
        %2470 = vst [vmem:[#allocation2 + $0x2c8] sm:$0xff] %v2142
        %2471 = vst [vmem:[#allocation2 + $0x2d0] sm:$0xff] %v2333
        %2472 = vst [vmem:[#allocation2 + $0x2d8] sm:$0xff] %v2335
        %2473 = vst [vmem:[#allocation2 + $0x2e0] sm:$0xff] %v2144
        %2474 = vst [vmem:[#allocation2 + $0x2e8] sm:$0xff] %v2146
        %2475 = vst [vmem:[#allocation2 + $0x2f0] sm:$0xff] %v2337
        %2476 = vst [vmem:[#allocation2 + $0x2f8] sm:$0xff] %v2339
        %2477 = vst [vmem:[#allocation2 + $0x300] sm:$0xff] %v2150
        %2478 = vst [vmem:[#allocation2 + $0x308] sm:$0xff] %v2152
        %2479 = vst [vmem:[#allocation2 + $0x310] sm:$0xff] %v2343
        %2480 = vst [vmem:[#allocation2 + $0x318] sm:$0xff] %v2345
        %2481 = vst [vmem:[#allocation2 + $0x320] sm:$0xff] %v2154
        %2482 = vst [vmem:[#allocation2 + $0x328] sm:$0xff] %v2156
        %2483 = vst [vmem:[#allocation2 + $0x330] sm:$0xff] %v2347
        %2484 = vst [vmem:[#allocation2 + $0x338] sm:$0xff] %v2349
        %2485 = vst [vmem:[#allocation2 + $0x340] sm:$0xff] %v2160
        %2486 = vst [vmem:[#allocation2 + $0x348] sm:$0xff] %v2162
        %2487 = vst [vmem:[#allocation2 + $0x350] sm:$0xff] %v2353
        %2488 = vst [vmem:[#allocation2 + $0x358] sm:$0xff] %v2355
        %2489 = vst [vmem:[#allocation2 + $0x360] sm:$0xff] %v2164
        %2490 = vst [vmem:[#allocation2 + $0x368] sm:$0xff] %v2166
        %2491 = vst [vmem:[#allocation2 + $0x370] sm:$0xff] %v2357
        %2492 = vst [vmem:[#allocation2 + $0x378] sm:$0xff] %v2359
        %2493 = vst [vmem:[#allocation2 + $0x380] sm:$0xff] %v2170
        %2494 = vst [vmem:[#allocation2 + $0x388] sm:$0xff] %v2172
        %2495 = vst [vmem:[#allocation2 + $0x390] sm:$0xff] %v2363
        %2496 = vst [vmem:[#allocation2 + $0x398] sm:$0xff] %v2365
        %2497 = vst [vmem:[#allocation2 + $0x3a0] sm:$0xff] %v2174
        %2498 = vst [vmem:[#allocation2 + $0x3a8] sm:$0xff] %v2176
        %2499 = vst [vmem:[#allocation2 + $0x3b0] sm:$0xff] %v2367
        %2500 = vst [vmem:[#allocation2 + $0x3b8] sm:$0xff] %v2369
        %2501 = vst [vmem:[#allocation2 + $0x3c0] sm:$0xff] %v2180
        %2502 = vst [vmem:[#allocation2 + $0x3c8] sm:$0xff] %v2182
        %2503 = vst [vmem:[#allocation2 + $0x3d0] sm:$0xff] %v2373
        %2504 = vst [vmem:[#allocation2 + $0x3d8] sm:$0xff] %v2375
        %2505 = vst [vmem:[#allocation2 + $0x3e0] sm:$0xff] %v2184
        %2506 = vst [vmem:[#allocation2 + $0x3e8] sm:$0xff] %v2186
        %2507 = vst [vmem:[#allocation2 + $0x3f0] sm:$0xff] %v2377
        %2508 = vst [vmem:[#allocation2 + $0x3f8] sm:$0xff] %v2379
        %s2509 = scalar_lea.vmem %s196, 2
        %v2510 = vld [vmem:[%s2509] ss:$8 sm:$0xf]
        %vm2511 = vcmp.eq.s32.totalorder %v2510, 0
        %v2512 = vsel %vm2511, 1, 0
        %v2513 = vcvt.s32.f32 %v2512
        %v2514 = vld [vmem:[#allocation2] sm:$0xff]
        %v2515 = vld [vmem:[#allocation2 + $0x8] sm:$0xff]
        %v2516 = vld [vmem:[#allocation2 + $0x10] sm:$0xff]
        %v2517 = vld [vmem:[#allocation2 + $0x18] sm:$0xff]
        %v2518 = vld [vmem:[#allocation2 + $0x20] sm:$0xff]
        %v2519 = vld [vmem:[#allocation2 + $0x28] sm:$0xff]
        %v2520 = vld [vmem:[#allocation2 + $0x30] sm:$0xff]
        %v2521 = vld [vmem:[#allocation2 + $0x38] sm:$0xff]
        %v2523 = vlaneseq
        %v2524 = vshrl.u32 %v2523, 7
        %v2525 = vsub.s32 0, %v2524
        %v2526 = vrot.slane %v2513, %v2525
        %v2527 = vlaneseq
        %v2528 = vshrl.u32 %v2527, 7
        %v2529 = vsub.s32 1, %v2528
        %v2530 = vrot.slane %v2513, %v2529
        %v2531 = vlaneseq
        %v2532 = vshrl.u32 %v2531, 7
        %v2533 = vsub.s32 2, %v2532
        %v2534 = vrot.slane %v2513, %v2533
        %v2535 = vlaneseq
        %v2536 = vshrl.u32 %v2535, 7
        %v2537 = vsub.s32 3, %v2536
        %v2538 = vrot.slane %v2513, %v2537
        %v2543 = vmul.f32 %v2526, %v2514
        %v2544 = vmul.f32 %v2530, %v2515
        %v2545 = vmul.f32 %v2534, %v2516
        %v2546 = vmul.f32 %v2538, %v2517
        %v2547 = vmul.f32 %v2526, %v2518
        %v2548 = vmul.f32 %v2530, %v2519
        %v2549 = vmul.f32 %v2534, %v2520
        %v2550 = vmul.f32 %v2538, %v2521
        %vm2551 = vcmp.eq.s32.totalorder %v2510, 1
        %v2552 = vsel %vm2551, 1, 0
        %v2553 = vcvt.s32.f32 %v2552
        %v2554 = vld [vmem:[#allocation2 + $0x40] sm:$0xff]
        %v2555 = vld [vmem:[#allocation2 + $0x48] sm:$0xff]
        %v2556 = vld [vmem:[#allocation2 + $0x50] sm:$0xff]
        %v2557 = vld [vmem:[#allocation2 + $0x58] sm:$0xff]
        %v2558 = vld [vmem:[#allocation2 + $0x60] sm:$0xff]
        %v2559 = vld [vmem:[#allocation2 + $0x68] sm:$0xff]
        %v2560 = vld [vmem:[#allocation2 + $0x70] sm:$0xff]
        %v2561 = vld [vmem:[#allocation2 + $0x78] sm:$0xff]
        %v2563 = vlaneseq
        %v2564 = vshrl.u32 %v2563, 7
        %v2565 = vsub.s32 0, %v2564
        %v2566 = vrot.slane %v2553, %v2565
        %v2567 = vlaneseq
        %v2568 = vshrl.u32 %v2567, 7
        %v2569 = vsub.s32 1, %v2568
        %v2570 = vrot.slane %v2553, %v2569
        %v2571 = vlaneseq
        %v2572 = vshrl.u32 %v2571, 7
        %v2573 = vsub.s32 2, %v2572
        %v2574 = vrot.slane %v2553, %v2573
        %v2575 = vlaneseq
        %v2576 = vshrl.u32 %v2575, 7
        %v2577 = vsub.s32 3, %v2576
        %v2578 = vrot.slane %v2553, %v2577
        %v2583 = vmul.f32 %v2566, %v2554
        %v2584 = vmul.f32 %v2570, %v2555
        %v2585 = vmul.f32 %v2574, %v2556
        %v2586 = vmul.f32 %v2578, %v2557
        %v2587 = vmul.f32 %v2566, %v2558
        %v2588 = vmul.f32 %v2570, %v2559
        %v2589 = vmul.f32 %v2574, %v2560
        %v2590 = vmul.f32 %v2578, %v2561
        %v2591 = vadd.f32 %v2543, %v2583
        %v2592 = vadd.f32 %v2544, %v2584
        %v2593 = vadd.f32 %v2545, %v2585
        %v2594 = vadd.f32 %v2546, %v2586
        %v2595 = vadd.f32 %v2547, %v2587
        %v2596 = vadd.f32 %v2548, %v2588
        %v2597 = vadd.f32 %v2549, %v2589
        %v2598 = vadd.f32 %v2550, %v2590
        %vm2599 = vcmp.eq.s32.totalorder %v2510, 2
        %v2600 = vsel %vm2599, 1, 0
        %v2601 = vcvt.s32.f32 %v2600
        %v2602 = vld [vmem:[#allocation2 + $0x80] sm:$0xff]
        %v2603 = vld [vmem:[#allocation2 + $0x88] sm:$0xff]
        %v2604 = vld [vmem:[#allocation2 + $0x90] sm:$0xff]
        %v2605 = vld [vmem:[#allocation2 + $0x98] sm:$0xff]
        %v2606 = vld [vmem:[#allocation2 + $0xa0] sm:$0xff]
        %v2607 = vld [vmem:[#allocation2 + $0xa8] sm:$0xff]
        %v2608 = vld [vmem:[#allocation2 + $0xb0] sm:$0xff]
        %v2609 = vld [vmem:[#allocation2 + $0xb8] sm:$0xff]
        %v2611 = vlaneseq
        %v2612 = vshrl.u32 %v2611, 7
        %v2613 = vsub.s32 0, %v2612
        %v2614 = vrot.slane %v2601, %v2613
        %v2615 = vlaneseq
        %v2616 = vshrl.u32 %v2615, 7
        %v2617 = vsub.s32 1, %v2616
        %v2618 = vrot.slane %v2601, %v2617
        %v2619 = vlaneseq
        %v2620 = vshrl.u32 %v2619, 7
        %v2621 = vsub.s32 2, %v2620
        %v2622 = vrot.slane %v2601, %v2621
        %v2623 = vlaneseq
        %v2624 = vshrl.u32 %v2623, 7
        %v2625 = vsub.s32 3, %v2624
        %v2626 = vrot.slane %v2601, %v2625
        %v2631 = vmul.f32 %v2614, %v2602
        %v2632 = vmul.f32 %v2618, %v2603
        %v2633 = vmul.f32 %v2622, %v2604
        %v2634 = vmul.f32 %v2626, %v2605
        %v2635 = vmul.f32 %v2614, %v2606
        %v2636 = vmul.f32 %v2618, %v2607
        %v2637 = vmul.f32 %v2622, %v2608
        %v2638 = vmul.f32 %v2626, %v2609
        %v2639 = vadd.f32 %v2591, %v2631
        %v2640 = vadd.f32 %v2592, %v2632
        %v2641 = vadd.f32 %v2593, %v2633
        %v2642 = vadd.f32 %v2594, %v2634
        %v2643 = vadd.f32 %v2595, %v2635
        %v2644 = vadd.f32 %v2596, %v2636
        %v2645 = vadd.f32 %v2597, %v2637
        %v2646 = vadd.f32 %v2598, %v2638
        %vm2647 = vcmp.eq.s32.totalorder %v2510, 3
        %v2648 = vsel %vm2647, 1, 0
        %v2649 = vcvt.s32.f32 %v2648
        %v2650 = vld [vmem:[#allocation2 + $0xc0] sm:$0xff]
        %v2651 = vld [vmem:[#allocation2 + $0xc8] sm:$0xff]
        %v2652 = vld [vmem:[#allocation2 + $0xd0] sm:$0xff]
        %v2653 = vld [vmem:[#allocation2 + $0xd8] sm:$0xff]
        %v2654 = vld [vmem:[#allocation2 + $0xe0] sm:$0xff]
        %v2655 = vld [vmem:[#allocation2 + $0xe8] sm:$0xff]
        %v2656 = vld [vmem:[#allocation2 + $0xf0] sm:$0xff]
        %v2657 = vld [vmem:[#allocation2 + $0xf8] sm:$0xff]
        %v2659 = vlaneseq
        %v2660 = vshrl.u32 %v2659, 7
        %v2661 = vsub.s32 0, %v2660
        %v2662 = vrot.slane %v2649, %v2661
        %v2663 = vlaneseq
        %v2664 = vshrl.u32 %v2663, 7
        %v2665 = vsub.s32 1, %v2664
        %v2666 = vrot.slane %v2649, %v2665
        %v2667 = vlaneseq
        %v2668 = vshrl.u32 %v2667, 7
        %v2669 = vsub.s32 2, %v2668
        %v2670 = vrot.slane %v2649, %v2669
        %v2671 = vlaneseq
        %v2672 = vshrl.u32 %v2671, 7
        %v2673 = vsub.s32 3, %v2672
        %v2674 = vrot.slane %v2649, %v2673
        %v2679 = vmul.f32 %v2662, %v2650
        %v2680 = vmul.f32 %v2666, %v2651
        %v2681 = vmul.f32 %v2670, %v2652
        %v2682 = vmul.f32 %v2674, %v2653
        %v2683 = vmul.f32 %v2662, %v2654
        %v2684 = vmul.f32 %v2666, %v2655
        %v2685 = vmul.f32 %v2670, %v2656
        %v2686 = vmul.f32 %v2674, %v2657
        %v2687 = vadd.f32 %v2639, %v2679
        %v2688 = vadd.f32 %v2640, %v2680
        %v2689 = vadd.f32 %v2641, %v2681
        %v2690 = vadd.f32 %v2642, %v2682
        %v2691 = vadd.f32 %v2643, %v2683
        %v2692 = vadd.f32 %v2644, %v2684
        %v2693 = vadd.f32 %v2645, %v2685
        %v2694 = vadd.f32 %v2646, %v2686
        %vm2695 = vcmp.eq.s32.totalorder %v2510, 4
        %v2696 = vsel %vm2695, 1, 0
        %v2697 = vcvt.s32.f32 %v2696
        %v2698 = vld [vmem:[#allocation2 + $0x100] sm:$0xff]
        %v2699 = vld [vmem:[#allocation2 + $0x108] sm:$0xff]
        %v2700 = vld [vmem:[#allocation2 + $0x110] sm:$0xff]
        %v2701 = vld [vmem:[#allocation2 + $0x118] sm:$0xff]
        %v2702 = vld [vmem:[#allocation2 + $0x120] sm:$0xff]
        %v2703 = vld [vmem:[#allocation2 + $0x128] sm:$0xff]
        %v2704 = vld [vmem:[#allocation2 + $0x130] sm:$0xff]
        %v2705 = vld [vmem:[#allocation2 + $0x138] sm:$0xff]
        %v2707 = vlaneseq
        %v2708 = vshrl.u32 %v2707, 7
        %v2709 = vsub.s32 0, %v2708
        %v2710 = vrot.slane %v2697, %v2709
        %v2711 = vlaneseq
        %v2712 = vshrl.u32 %v2711, 7
        %v2713 = vsub.s32 1, %v2712
        %v2714 = vrot.slane %v2697, %v2713
        %v2715 = vlaneseq
        %v2716 = vshrl.u32 %v2715, 7
        %v2717 = vsub.s32 2, %v2716
        %v2718 = vrot.slane %v2697, %v2717
        %v2719 = vlaneseq
        %v2720 = vshrl.u32 %v2719, 7
        %v2721 = vsub.s32 3, %v2720
        %v2722 = vrot.slane %v2697, %v2721
        %v2727 = vmul.f32 %v2710, %v2698
        %v2728 = vmul.f32 %v2714, %v2699
        %v2729 = vmul.f32 %v2718, %v2700
        %v2730 = vmul.f32 %v2722, %v2701
        %v2731 = vmul.f32 %v2710, %v2702
        %v2732 = vmul.f32 %v2714, %v2703
        %v2733 = vmul.f32 %v2718, %v2704
        %v2734 = vmul.f32 %v2722, %v2705
        %v2735 = vadd.f32 %v2687, %v2727
        %v2736 = vadd.f32 %v2688, %v2728
        %v2737 = vadd.f32 %v2689, %v2729
        %v2738 = vadd.f32 %v2690, %v2730
        %v2739 = vadd.f32 %v2691, %v2731
        %v2740 = vadd.f32 %v2692, %v2732
        %v2741 = vadd.f32 %v2693, %v2733
        %v2742 = vadd.f32 %v2694, %v2734
        %vm2743 = vcmp.eq.s32.totalorder %v2510, 5
        %v2744 = vsel %vm2743, 1, 0
        %v2745 = vcvt.s32.f32 %v2744
        %v2746 = vld [vmem:[#allocation2 + $0x140] sm:$0xff]
        %v2747 = vld [vmem:[#allocation2 + $0x148] sm:$0xff]
        %v2748 = vld [vmem:[#allocation2 + $0x150] sm:$0xff]
        %v2749 = vld [vmem:[#allocation2 + $0x158] sm:$0xff]
        %v2750 = vld [vmem:[#allocation2 + $0x160] sm:$0xff]
        %v2751 = vld [vmem:[#allocation2 + $0x168] sm:$0xff]
        %v2752 = vld [vmem:[#allocation2 + $0x170] sm:$0xff]
        %v2753 = vld [vmem:[#allocation2 + $0x178] sm:$0xff]
        %v2755 = vlaneseq
        %v2756 = vshrl.u32 %v2755, 7
        %v2757 = vsub.s32 0, %v2756
        %v2758 = vrot.slane %v2745, %v2757
        %v2759 = vlaneseq
        %v2760 = vshrl.u32 %v2759, 7
        %v2761 = vsub.s32 1, %v2760
        %v2762 = vrot.slane %v2745, %v2761
        %v2763 = vlaneseq
        %v2764 = vshrl.u32 %v2763, 7
        %v2765 = vsub.s32 2, %v2764
        %v2766 = vrot.slane %v2745, %v2765
        %v2767 = vlaneseq
        %v2768 = vshrl.u32 %v2767, 7
        %v2769 = vsub.s32 3, %v2768
        %v2770 = vrot.slane %v2745, %v2769
        %v2775 = vmul.f32 %v2758, %v2746
        %v2776 = vmul.f32 %v2762, %v2747
        %v2777 = vmul.f32 %v2766, %v2748
        %v2778 = vmul.f32 %v2770, %v2749
        %v2779 = vmul.f32 %v2758, %v2750
        %v2780 = vmul.f32 %v2762, %v2751
        %v2781 = vmul.f32 %v2766, %v2752
        %v2782 = vmul.f32 %v2770, %v2753
        %v2783 = vadd.f32 %v2735, %v2775
        %v2784 = vadd.f32 %v2736, %v2776
        %v2785 = vadd.f32 %v2737, %v2777
        %v2786 = vadd.f32 %v2738, %v2778
        %v2787 = vadd.f32 %v2739, %v2779
        %v2788 = vadd.f32 %v2740, %v2780
        %v2789 = vadd.f32 %v2741, %v2781
        %v2790 = vadd.f32 %v2742, %v2782
        %vm2791 = vcmp.eq.s32.totalorder %v2510, 6
        %v2792 = vsel %vm2791, 1, 0
        %v2793 = vcvt.s32.f32 %v2792
        %v2794 = vld [vmem:[#allocation2 + $0x180] sm:$0xff]
        %v2795 = vld [vmem:[#allocation2 + $0x188] sm:$0xff]
        %v2796 = vld [vmem:[#allocation2 + $0x190] sm:$0xff]
        %v2797 = vld [vmem:[#allocation2 + $0x198] sm:$0xff]
        %v2798 = vld [vmem:[#allocation2 + $0x1a0] sm:$0xff]
        %v2799 = vld [vmem:[#allocation2 + $0x1a8] sm:$0xff]
        %v2800 = vld [vmem:[#allocation2 + $0x1b0] sm:$0xff]
        %v2801 = vld [vmem:[#allocation2 + $0x1b8] sm:$0xff]
        %v2803 = vlaneseq
        %v2804 = vshrl.u32 %v2803, 7
        %v2805 = vsub.s32 0, %v2804
        %v2806 = vrot.slane %v2793, %v2805
        %v2807 = vlaneseq
        %v2808 = vshrl.u32 %v2807, 7
        %v2809 = vsub.s32 1, %v2808
        %v2810 = vrot.slane %v2793, %v2809
        %v2811 = vlaneseq
        %v2812 = vshrl.u32 %v2811, 7
        %v2813 = vsub.s32 2, %v2812
        %v2814 = vrot.slane %v2793, %v2813
        %v2815 = vlaneseq
        %v2816 = vshrl.u32 %v2815, 7
        %v2817 = vsub.s32 3, %v2816
        %v2818 = vrot.slane %v2793, %v2817
        %v2823 = vmul.f32 %v2806, %v2794
        %v2824 = vmul.f32 %v2810, %v2795
        %v2825 = vmul.f32 %v2814, %v2796
        %v2826 = vmul.f32 %v2818, %v2797
        %v2827 = vmul.f32 %v2806, %v2798
        %v2828 = vmul.f32 %v2810, %v2799
        %v2829 = vmul.f32 %v2814, %v2800
        %v2830 = vmul.f32 %v2818, %v2801
        %v2831 = vadd.f32 %v2783, %v2823
        %v2832 = vadd.f32 %v2784, %v2824
        %v2833 = vadd.f32 %v2785, %v2825
        %v2834 = vadd.f32 %v2786, %v2826
        %v2835 = vadd.f32 %v2787, %v2827
        %v2836 = vadd.f32 %v2788, %v2828
        %v2837 = vadd.f32 %v2789, %v2829
        %v2838 = vadd.f32 %v2790, %v2830
        %vm2839 = vcmp.eq.s32.totalorder %v2510, 7
        %v2840 = vsel %vm2839, 1, 0
        %v2841 = vcvt.s32.f32 %v2840
        %v2842 = vld [vmem:[#allocation2 + $0x1c0] sm:$0xff]
        %v2843 = vld [vmem:[#allocation2 + $0x1c8] sm:$0xff]
        %v2844 = vld [vmem:[#allocation2 + $0x1d0] sm:$0xff]
        %v2845 = vld [vmem:[#allocation2 + $0x1d8] sm:$0xff]
        %v2846 = vld [vmem:[#allocation2 + $0x1e0] sm:$0xff]
        %v2847 = vld [vmem:[#allocation2 + $0x1e8] sm:$0xff]
        %v2848 = vld [vmem:[#allocation2 + $0x1f0] sm:$0xff]
        %v2849 = vld [vmem:[#allocation2 + $0x1f8] sm:$0xff]
        %v2851 = vlaneseq
        %v2852 = vshrl.u32 %v2851, 7
        %v2853 = vsub.s32 0, %v2852
        %v2854 = vrot.slane %v2841, %v2853
        %v2855 = vlaneseq
        %v2856 = vshrl.u32 %v2855, 7
        %v2857 = vsub.s32 1, %v2856
        %v2858 = vrot.slane %v2841, %v2857
        %v2859 = vlaneseq
        %v2860 = vshrl.u32 %v2859, 7
        %v2861 = vsub.s32 2, %v2860
        %v2862 = vrot.slane %v2841, %v2861
        %v2863 = vlaneseq
        %v2864 = vshrl.u32 %v2863, 7
        %v2865 = vsub.s32 3, %v2864
        %v2866 = vrot.slane %v2841, %v2865
        %v2871 = vmul.f32 %v2854, %v2842
        %v2872 = vmul.f32 %v2858, %v2843
        %v2873 = vmul.f32 %v2862, %v2844
        %v2874 = vmul.f32 %v2866, %v2845
        %v2875 = vmul.f32 %v2854, %v2846
        %v2876 = vmul.f32 %v2858, %v2847
        %v2877 = vmul.f32 %v2862, %v2848
        %v2878 = vmul.f32 %v2866, %v2849
        %v2879 = vadd.f32 %v2831, %v2871
        %v2880 = vadd.f32 %v2832, %v2872
        %v2881 = vadd.f32 %v2833, %v2873
        %v2882 = vadd.f32 %v2834, %v2874
        %v2883 = vadd.f32 %v2835, %v2875
        %v2884 = vadd.f32 %v2836, %v2876
        %v2885 = vadd.f32 %v2837, %v2877
        %v2886 = vadd.f32 %v2838, %v2878
        %vm2887 = vcmp.eq.s32.totalorder %v2510, 8
        %v2888 = vsel %vm2887, 1, 0
        %v2889 = vcvt.s32.f32 %v2888
        %v2890 = vld [vmem:[#allocation2 + $0x200] sm:$0xff]
        %v2891 = vld [vmem:[#allocation2 + $0x208] sm:$0xff]
        %v2892 = vld [vmem:[#allocation2 + $0x210] sm:$0xff]
        %v2893 = vld [vmem:[#allocation2 + $0x218] sm:$0xff]
        %v2894 = vld [vmem:[#allocation2 + $0x220] sm:$0xff]
        %v2895 = vld [vmem:[#allocation2 + $0x228] sm:$0xff]
        %v2896 = vld [vmem:[#allocation2 + $0x230] sm:$0xff]
        %v2897 = vld [vmem:[#allocation2 + $0x238] sm:$0xff]
        %v2899 = vlaneseq
        %v2900 = vshrl.u32 %v2899, 7
        %v2901 = vsub.s32 0, %v2900
        %v2902 = vrot.slane %v2889, %v2901
        %v2903 = vlaneseq
        %v2904 = vshrl.u32 %v2903, 7
        %v2905 = vsub.s32 1, %v2904
        %v2906 = vrot.slane %v2889, %v2905
        %v2907 = vlaneseq
        %v2908 = vshrl.u32 %v2907, 7
        %v2909 = vsub.s32 2, %v2908
        %v2910 = vrot.slane %v2889, %v2909
        %v2911 = vlaneseq
        %v2912 = vshrl.u32 %v2911, 7
        %v2913 = vsub.s32 3, %v2912
        %v2914 = vrot.slane %v2889, %v2913
        %v2919 = vmul.f32 %v2902, %v2890
        %v2920 = vmul.f32 %v2906, %v2891
        %v2921 = vmul.f32 %v2910, %v2892
        %v2922 = vmul.f32 %v2914, %v2893
        %v2923 = vmul.f32 %v2902, %v2894
        %v2924 = vmul.f32 %v2906, %v2895
        %v2925 = vmul.f32 %v2910, %v2896
        %v2926 = vmul.f32 %v2914, %v2897
        %v2927 = vadd.f32 %v2879, %v2919
        %v2928 = vadd.f32 %v2880, %v2920
        %v2929 = vadd.f32 %v2881, %v2921
        %v2930 = vadd.f32 %v2882, %v2922
        %v2931 = vadd.f32 %v2883, %v2923
        %v2932 = vadd.f32 %v2884, %v2924
        %v2933 = vadd.f32 %v2885, %v2925
        %v2934 = vadd.f32 %v2886, %v2926
        %vm2935 = vcmp.eq.s32.totalorder %v2510, 9
        %v2936 = vsel %vm2935, 1, 0
        %v2937 = vcvt.s32.f32 %v2936
        %v2938 = vld [vmem:[#allocation2 + $0x240] sm:$0xff]
        %v2939 = vld [vmem:[#allocation2 + $0x248] sm:$0xff]
        %v2940 = vld [vmem:[#allocation2 + $0x250] sm:$0xff]
        %v2941 = vld [vmem:[#allocation2 + $0x258] sm:$0xff]
        %v2942 = vld [vmem:[#allocation2 + $0x260] sm:$0xff]
        %v2943 = vld [vmem:[#allocation2 + $0x268] sm:$0xff]
        %v2944 = vld [vmem:[#allocation2 + $0x270] sm:$0xff]
        %v2945 = vld [vmem:[#allocation2 + $0x278] sm:$0xff]
        %v2947 = vlaneseq
        %v2948 = vshrl.u32 %v2947, 7
        %v2949 = vsub.s32 0, %v2948
        %v2950 = vrot.slane %v2937, %v2949
        %v2951 = vlaneseq
        %v2952 = vshrl.u32 %v2951, 7
        %v2953 = vsub.s32 1, %v2952
        %v2954 = vrot.slane %v2937, %v2953
        %v2955 = vlaneseq
        %v2956 = vshrl.u32 %v2955, 7
        %v2957 = vsub.s32 2, %v2956
        %v2958 = vrot.slane %v2937, %v2957
        %v2959 = vlaneseq
        %v2960 = vshrl.u32 %v2959, 7
        %v2961 = vsub.s32 3, %v2960
        %v2962 = vrot.slane %v2937, %v2961
        %v2967 = vmul.f32 %v2950, %v2938
        %v2968 = vmul.f32 %v2954, %v2939
        %v2969 = vmul.f32 %v2958, %v2940
        %v2970 = vmul.f32 %v2962, %v2941
        %v2971 = vmul.f32 %v2950, %v2942
        %v2972 = vmul.f32 %v2954, %v2943
        %v2973 = vmul.f32 %v2958, %v2944
        %v2974 = vmul.f32 %v2962, %v2945
        %v2975 = vadd.f32 %v2927, %v2967
        %v2976 = vadd.f32 %v2928, %v2968
        %v2977 = vadd.f32 %v2929, %v2969
        %v2978 = vadd.f32 %v2930, %v2970
        %v2979 = vadd.f32 %v2931, %v2971
        %v2980 = vadd.f32 %v2932, %v2972
        %v2981 = vadd.f32 %v2933, %v2973
        %v2982 = vadd.f32 %v2934, %v2974
        %vm2983 = vcmp.eq.s32.totalorder %v2510, 10
        %v2984 = vsel %vm2983, 1, 0
        %v2985 = vcvt.s32.f32 %v2984
        %v2986 = vld [vmem:[#allocation2 + $0x280] sm:$0xff]
        %v2987 = vld [vmem:[#allocation2 + $0x288] sm:$0xff]
        %v2988 = vld [vmem:[#allocation2 + $0x290] sm:$0xff]
        %v2989 = vld [vmem:[#allocation2 + $0x298] sm:$0xff]
        %v2990 = vld [vmem:[#allocation2 + $0x2a0] sm:$0xff]
        %v2991 = vld [vmem:[#allocation2 + $0x2a8] sm:$0xff]
        %v2992 = vld [vmem:[#allocation2 + $0x2b0] sm:$0xff]
        %v2993 = vld [vmem:[#allocation2 + $0x2b8] sm:$0xff]
        %v2995 = vlaneseq
        %v2996 = vshrl.u32 %v2995, 7
        %v2997 = vsub.s32 0, %v2996
        %v2998 = vrot.slane %v2985, %v2997
        %v2999 = vlaneseq
        %v3000 = vshrl.u32 %v2999, 7
        %v3001 = vsub.s32 1, %v3000
        %v3002 = vrot.slane %v2985, %v3001
        %v3003 = vlaneseq
        %v3004 = vshrl.u32 %v3003, 7
        %v3005 = vsub.s32 2, %v3004
        %v3006 = vrot.slane %v2985, %v3005
        %v3007 = vlaneseq
        %v3008 = vshrl.u32 %v3007, 7
        %v3009 = vsub.s32 3, %v3008
        %v3010 = vrot.slane %v2985, %v3009
        %v3015 = vmul.f32 %v2998, %v2986
        %v3016 = vmul.f32 %v3002, %v2987
        %v3017 = vmul.f32 %v3006, %v2988
        %v3018 = vmul.f32 %v3010, %v2989
        %v3019 = vmul.f32 %v2998, %v2990
        %v3020 = vmul.f32 %v3002, %v2991
        %v3021 = vmul.f32 %v3006, %v2992
        %v3022 = vmul.f32 %v3010, %v2993
        %v3023 = vadd.f32 %v2975, %v3015
        %v3024 = vadd.f32 %v2976, %v3016
        %v3025 = vadd.f32 %v2977, %v3017
        %v3026 = vadd.f32 %v2978, %v3018
        %v3027 = vadd.f32 %v2979, %v3019
        %v3028 = vadd.f32 %v2980, %v3020
        %v3029 = vadd.f32 %v2981, %v3021
        %v3030 = vadd.f32 %v2982, %v3022
        %vm3031 = vcmp.eq.s32.totalorder %v2510, 11
        %v3032 = vsel %vm3031, 1, 0
        %v3033 = vcvt.s32.f32 %v3032
        %v3034 = vld [vmem:[#allocation2 + $0x2c0] sm:$0xff]
        %v3035 = vld [vmem:[#allocation2 + $0x2c8] sm:$0xff]
        %v3036 = vld [vmem:[#allocation2 + $0x2d0] sm:$0xff]
        %v3037 = vld [vmem:[#allocation2 + $0x2d8] sm:$0xff]
        %v3038 = vld [vmem:[#allocation2 + $0x2e0] sm:$0xff]
        %v3039 = vld [vmem:[#allocation2 + $0x2e8] sm:$0xff]
        %v3040 = vld [vmem:[#allocation2 + $0x2f0] sm:$0xff]
        %v3041 = vld [vmem:[#allocation2 + $0x2f8] sm:$0xff]
        %v3043 = vlaneseq
        %v3044 = vshrl.u32 %v3043, 7
        %v3045 = vsub.s32 0, %v3044
        %v3046 = vrot.slane %v3033, %v3045
        %v3047 = vlaneseq
        %v3048 = vshrl.u32 %v3047, 7
        %v3049 = vsub.s32 1, %v3048
        %v3050 = vrot.slane %v3033, %v3049
        %v3051 = vlaneseq
        %v3052 = vshrl.u32 %v3051, 7
        %v3053 = vsub.s32 2, %v3052
        %v3054 = vrot.slane %v3033, %v3053
        %v3055 = vlaneseq
        %v3056 = vshrl.u32 %v3055, 7
        %v3057 = vsub.s32 3, %v3056
        %v3058 = vrot.slane %v3033, %v3057
        %v3063 = vmul.f32 %v3046, %v3034
        %v3064 = vmul.f32 %v3050, %v3035
        %v3065 = vmul.f32 %v3054, %v3036
        %v3066 = vmul.f32 %v3058, %v3037
        %v3067 = vmul.f32 %v3046, %v3038
        %v3068 = vmul.f32 %v3050, %v3039
        %v3069 = vmul.f32 %v3054, %v3040
        %v3070 = vmul.f32 %v3058, %v3041
        %v3071 = vadd.f32 %v3023, %v3063
        %v3072 = vadd.f32 %v3024, %v3064
        %v3073 = vadd.f32 %v3025, %v3065
        %v3074 = vadd.f32 %v3026, %v3066
        %v3075 = vadd.f32 %v3027, %v3067
        %v3076 = vadd.f32 %v3028, %v3068
        %v3077 = vadd.f32 %v3029, %v3069
        %v3078 = vadd.f32 %v3030, %v3070
        %vm3079 = vcmp.eq.s32.totalorder %v2510, 12
        %v3080 = vsel %vm3079, 1, 0
        %v3081 = vcvt.s32.f32 %v3080
        %v3082 = vld [vmem:[#allocation2 + $0x300] sm:$0xff]
        %v3083 = vld [vmem:[#allocation2 + $0x308] sm:$0xff]
        %v3084 = vld [vmem:[#allocation2 + $0x310] sm:$0xff]
        %v3085 = vld [vmem:[#allocation2 + $0x318] sm:$0xff]
        %v3086 = vld [vmem:[#allocation2 + $0x320] sm:$0xff]
        %v3087 = vld [vmem:[#allocation2 + $0x328] sm:$0xff]
        %v3088 = vld [vmem:[#allocation2 + $0x330] sm:$0xff]
        %v3089 = vld [vmem:[#allocation2 + $0x338] sm:$0xff]
        %v3091 = vlaneseq
        %v3092 = vshrl.u32 %v3091, 7
        %v3093 = vsub.s32 0, %v3092
        %v3094 = vrot.slane %v3081, %v3093
        %v3095 = vlaneseq
        %v3096 = vshrl.u32 %v3095, 7
        %v3097 = vsub.s32 1, %v3096
        %v3098 = vrot.slane %v3081, %v3097
        %v3099 = vlaneseq
        %v3100 = vshrl.u32 %v3099, 7
        %v3101 = vsub.s32 2, %v3100
        %v3102 = vrot.slane %v3081, %v3101
        %v3103 = vlaneseq
        %v3104 = vshrl.u32 %v3103, 7
        %v3105 = vsub.s32 3, %v3104
        %v3106 = vrot.slane %v3081, %v3105
        %v3111 = vmul.f32 %v3094, %v3082
        %v3112 = vmul.f32 %v3098, %v3083
        %v3113 = vmul.f32 %v3102, %v3084
        %v3114 = vmul.f32 %v3106, %v3085
        %v3115 = vmul.f32 %v3094, %v3086
        %v3116 = vmul.f32 %v3098, %v3087
        %v3117 = vmul.f32 %v3102, %v3088
        %v3118 = vmul.f32 %v3106, %v3089
        %v3119 = vadd.f32 %v3071, %v3111
        %v3120 = vadd.f32 %v3072, %v3112
        %v3121 = vadd.f32 %v3073, %v3113
        %v3122 = vadd.f32 %v3074, %v3114
        %v3123 = vadd.f32 %v3075, %v3115
        %v3124 = vadd.f32 %v3076, %v3116
        %v3125 = vadd.f32 %v3077, %v3117
        %v3126 = vadd.f32 %v3078, %v3118
        %vm3127 = vcmp.eq.s32.totalorder %v2510, 13
        %v3128 = vsel %vm3127, 1, 0
        %v3129 = vcvt.s32.f32 %v3128
        %v3130 = vld [vmem:[#allocation2 + $0x340] sm:$0xff]
        %v3131 = vld [vmem:[#allocation2 + $0x348] sm:$0xff]
        %v3132 = vld [vmem:[#allocation2 + $0x350] sm:$0xff]
        %v3133 = vld [vmem:[#allocation2 + $0x358] sm:$0xff]
        %v3134 = vld [vmem:[#allocation2 + $0x360] sm:$0xff]
        %v3135 = vld [vmem:[#allocation2 + $0x368] sm:$0xff]
        %v3136 = vld [vmem:[#allocation2 + $0x370] sm:$0xff]
        %v3137 = vld [vmem:[#allocation2 + $0x378] sm:$0xff]
        %v3139 = vlaneseq
        %v3140 = vshrl.u32 %v3139, 7
        %v3141 = vsub.s32 0, %v3140
        %v3142 = vrot.slane %v3129, %v3141
        %v3143 = vlaneseq
        %v3144 = vshrl.u32 %v3143, 7
        %v3145 = vsub.s32 1, %v3144
        %v3146 = vrot.slane %v3129, %v3145
        %v3147 = vlaneseq
        %v3148 = vshrl.u32 %v3147, 7
        %v3149 = vsub.s32 2, %v3148
        %v3150 = vrot.slane %v3129, %v3149
        %v3151 = vlaneseq
        %v3152 = vshrl.u32 %v3151, 7
        %v3153 = vsub.s32 3, %v3152
        %v3154 = vrot.slane %v3129, %v3153
        %v3159 = vmul.f32 %v3142, %v3130
        %v3160 = vmul.f32 %v3146, %v3131
        %v3161 = vmul.f32 %v3150, %v3132
        %v3162 = vmul.f32 %v3154, %v3133
        %v3163 = vmul.f32 %v3142, %v3134
        %v3164 = vmul.f32 %v3146, %v3135
        %v3165 = vmul.f32 %v3150, %v3136
        %v3166 = vmul.f32 %v3154, %v3137
        %v3167 = vadd.f32 %v3119, %v3159
        %v3168 = vadd.f32 %v3120, %v3160
        %v3169 = vadd.f32 %v3121, %v3161
        %v3170 = vadd.f32 %v3122, %v3162
        %v3171 = vadd.f32 %v3123, %v3163
        %v3172 = vadd.f32 %v3124, %v3164
        %v3173 = vadd.f32 %v3125, %v3165
        %v3174 = vadd.f32 %v3126, %v3166
        %vm3175 = vcmp.eq.s32.totalorder %v2510, 14
        %v3176 = vsel %vm3175, 1, 0
        %v3177 = vcvt.s32.f32 %v3176
        %v3178 = vld [vmem:[#allocation2 + $0x380] sm:$0xff]
        %v3179 = vld [vmem:[#allocation2 + $0x388] sm:$0xff]
        %v3180 = vld [vmem:[#allocation2 + $0x390] sm:$0xff]
        %v3181 = vld [vmem:[#allocation2 + $0x398] sm:$0xff]
        %v3182 = vld [vmem:[#allocation2 + $0x3a0] sm:$0xff]
        %v3183 = vld [vmem:[#allocation2 + $0x3a8] sm:$0xff]
        %v3184 = vld [vmem:[#allocation2 + $0x3b0] sm:$0xff]
        %v3185 = vld [vmem:[#allocation2 + $0x3b8] sm:$0xff]
        %v3187 = vlaneseq
        %v3188 = vshrl.u32 %v3187, 7
        %v3189 = vsub.s32 0, %v3188
        %v3190 = vrot.slane %v3177, %v3189
        %v3191 = vlaneseq
        %v3192 = vshrl.u32 %v3191, 7
        %v3193 = vsub.s32 1, %v3192
        %v3194 = vrot.slane %v3177, %v3193
        %v3195 = vlaneseq
        %v3196 = vshrl.u32 %v3195, 7
        %v3197 = vsub.s32 2, %v3196
        %v3198 = vrot.slane %v3177, %v3197
        %v3199 = vlaneseq
        %v3200 = vshrl.u32 %v3199, 7
        %v3201 = vsub.s32 3, %v3200
        %v3202 = vrot.slane %v3177, %v3201
        %v3207 = vmul.f32 %v3190, %v3178
        %v3208 = vmul.f32 %v3194, %v3179
        %v3209 = vmul.f32 %v3198, %v3180
        %v3210 = vmul.f32 %v3202, %v3181
        %v3211 = vmul.f32 %v3190, %v3182
        %v3212 = vmul.f32 %v3194, %v3183
        %v3213 = vmul.f32 %v3198, %v3184
        %v3214 = vmul.f32 %v3202, %v3185
        %v3215 = vadd.f32 %v3167, %v3207
        %v3216 = vadd.f32 %v3168, %v3208
        %v3217 = vadd.f32 %v3169, %v3209
        %v3218 = vadd.f32 %v3170, %v3210
        %v3219 = vadd.f32 %v3171, %v3211
        %v3220 = vadd.f32 %v3172, %v3212
        %v3221 = vadd.f32 %v3173, %v3213
        %v3222 = vadd.f32 %v3174, %v3214
        %vm3223 = vcmp.eq.s32.totalorder %v2510, 15
        %v3224 = vsel %vm3223, 1, 0
        %v3225 = vcvt.s32.f32 %v3224
        %v3226 = vld [vmem:[#allocation2 + $0x3c0] sm:$0xff]
        %v3227 = vld [vmem:[#allocation2 + $0x3c8] sm:$0xff]
        %v3228 = vld [vmem:[#allocation2 + $0x3d0] sm:$0xff]
        %v3229 = vld [vmem:[#allocation2 + $0x3d8] sm:$0xff]
        %v3230 = vld [vmem:[#allocation2 + $0x3e0] sm:$0xff]
        %v3231 = vld [vmem:[#allocation2 + $0x3e8] sm:$0xff]
        %v3232 = vld [vmem:[#allocation2 + $0x3f0] sm:$0xff]
        %v3233 = vld [vmem:[#allocation2 + $0x3f8] sm:$0xff]
        %v3235 = vlaneseq
        %v3236 = vshrl.u32 %v3235, 7
        %v3237 = vsub.s32 0, %v3236
        %v3238 = vrot.slane %v3225, %v3237
        %v3239 = vlaneseq
        %v3240 = vshrl.u32 %v3239, 7
        %v3241 = vsub.s32 1, %v3240
        %v3242 = vrot.slane %v3225, %v3241
        %v3243 = vlaneseq
        %v3244 = vshrl.u32 %v3243, 7
        %v3245 = vsub.s32 2, %v3244
        %v3246 = vrot.slane %v3225, %v3245
        %v3247 = vlaneseq
        %v3248 = vshrl.u32 %v3247, 7
        %v3249 = vsub.s32 3, %v3248
        %v3250 = vrot.slane %v3225, %v3249
        %v3255 = vmul.f32 %v3238, %v3226
        %v3256 = vmul.f32 %v3242, %v3227
        %v3257 = vmul.f32 %v3246, %v3228
        %v3258 = vmul.f32 %v3250, %v3229
        %v3259 = vmul.f32 %v3238, %v3230
        %v3260 = vmul.f32 %v3242, %v3231
        %v3261 = vmul.f32 %v3246, %v3232
        %v3262 = vmul.f32 %v3250, %v3233
        %v3263 = vadd.f32 %v3215, %v3255
        %v3264 = vadd.f32 %v3216, %v3256
        %v3265 = vadd.f32 %v3217, %v3257
        %v3266 = vadd.f32 %v3218, %v3258
        %v3267 = vadd.f32 %v3219, %v3259
        %v3268 = vadd.f32 %v3220, %v3260
        %v3269 = vadd.f32 %v3221, %v3261
        %v3270 = vadd.f32 %v3222, %v3262
        %s3271 = scalar_lea.vmem %s2, 256
        %v3272 = vld [vmem:[%s3271] sm:$0xf]
        %v3273 = vld [vmem:[%s3271 + $0x4] sm:$0xf]
        %v3274 = vld [vmem:[%s3271 + $0x8] sm:$0xf]
        %v3275 = vld [vmem:[%s3271 + $0xc] sm:$0xf]
        %v3276 = vld [vmem:[%s3271 + $0x10] sm:$0xf]
        %v3277 = vld [vmem:[%s3271 + $0x14] sm:$0xf]
        %v3278 = vld [vmem:[%s3271 + $0x18] sm:$0xf]
        %v3279 = vld [vmem:[%s3271 + $0x1c] sm:$0xf]
        %v3280 = vld [vmem:[%s3271 + $0x20] sm:$0xf]
        %v3281 = vld [vmem:[%s3271 + $0x24] sm:$0xf]
        %v3282 = vld [vmem:[%s3271 + $0x28] sm:$0xf]
        %v3283 = vld [vmem:[%s3271 + $0x2c] sm:$0xf]
        %v3284 = vld [vmem:[%s3271 + $0x30] sm:$0xf]
        %v3285 = vld [vmem:[%s3271 + $0x34] sm:$0xf]
        %v3286 = vld [vmem:[%s3271 + $0x38] sm:$0xf]
        %v3287 = vld [vmem:[%s3271 + $0x3c] sm:$0xf]
        %v3288 = vld [vmem:[%s3271 + $0x40] sm:$0xf]
        %v3289 = vld [vmem:[%s3271 + $0x44] sm:$0xf]
        %v3290 = vld [vmem:[%s3271 + $0x48] sm:$0xf]
        %v3291 = vld [vmem:[%s3271 + $0x4c] sm:$0xf]
        %v3292 = vld [vmem:[%s3271 + $0x50] sm:$0xf]
        %v3293 = vld [vmem:[%s3271 + $0x54] sm:$0xf]
        %v3294 = vld [vmem:[%s3271 + $0x58] sm:$0xf]
        %v3295 = vld [vmem:[%s3271 + $0x5c] sm:$0xf]
        %v3296 = vld [vmem:[%s3271 + $0x60] sm:$0xf]
        %v3297 = vld [vmem:[%s3271 + $0x64] sm:$0xf]
        %v3298 = vld [vmem:[%s3271 + $0x68] sm:$0xf]
        %v3299 = vld [vmem:[%s3271 + $0x6c] sm:$0xf]
        %v3300 = vld [vmem:[%s3271 + $0x70] sm:$0xf]
        %v3301 = vld [vmem:[%s3271 + $0x74] sm:$0xf]
        %v3302 = vld [vmem:[%s3271 + $0x78] sm:$0xf]
        %v3303 = vld [vmem:[%s3271 + $0x7c] sm:$0xf]
        %v3304 = vpack.c.bf16 %v3267, %v3263
        %v3305 = vpack.c.bf16 %v3268, %v3264
        %v3306 = vpack.c.bf16 %v3269, %v3265
        %v3307 = vpack.c.bf16 %v3270, %v3266
        %v3340 = vunpack.c.l.b16 %v3272
        %v3341 = vunpack.c.l.b16 %v3273
        %v3342 = vunpack.c.l.b16 %v3274
        %v3343 = vunpack.c.l.b16 %v3275
        %v3344 = vunpack.c.l.b16 %v3276
        %v3345 = vunpack.c.l.b16 %v3277
        %v3346 = vunpack.c.l.b16 %v3278
        %v3347 = vunpack.c.l.b16 %v3279
        %v3348 = vunpack.c.l.b16 %v3280
        %v3349 = vunpack.c.l.b16 %v3281
        %v3350 = vunpack.c.l.b16 %v3282
        %v3351 = vunpack.c.l.b16 %v3283
        %v3352 = vunpack.c.l.b16 %v3284
        %v3353 = vunpack.c.l.b16 %v3285
        %v3354 = vunpack.c.l.b16 %v3286
        %v3355 = vunpack.c.l.b16 %v3287
        %v3356 = vunpack.c.l.b16 %v3288
        %v3357 = vunpack.c.l.b16 %v3289
        %v3358 = vunpack.c.l.b16 %v3290
        %v3359 = vunpack.c.l.b16 %v3291
        %v3360 = vunpack.c.l.b16 %v3292
        %v3361 = vunpack.c.l.b16 %v3293
        %v3362 = vunpack.c.l.b16 %v3294
        %v3363 = vunpack.c.l.b16 %v3295
        %v3364 = vunpack.c.l.b16 %v3296
        %v3365 = vunpack.c.l.b16 %v3297
        %v3366 = vunpack.c.l.b16 %v3298
        %v3367 = vunpack.c.l.b16 %v3299
        %v3368 = vunpack.c.l.b16 %v3300
        %v3369 = vunpack.c.l.b16 %v3301
        %v3370 = vunpack.c.l.b16 %v3302
        %v3371 = vunpack.c.l.b16 %v3303
        %v3372 = vpack.c.b16 %v3341, %v3340
        %v3373 = vpack.c.b16 %v3343, %v3342
        %v3374 = vpack.c.b16 %v3345, %v3344
        %v3375 = vpack.c.b16 %v3347, %v3346
        %v3376 = vpack.c.b16 %v3349, %v3348
        %v3377 = vpack.c.b16 %v3351, %v3350
        %v3378 = vpack.c.b16 %v3353, %v3352
        %v3379 = vpack.c.b16 %v3355, %v3354
        %v3380 = vpack.c.b16 %v3357, %v3356
        %v3381 = vpack.c.b16 %v3359, %v3358
        %v3382 = vpack.c.b16 %v3361, %v3360
        %v3383 = vpack.c.b16 %v3363, %v3362
        %v3384 = vpack.c.b16 %v3365, %v3364
        %v3385 = vpack.c.b16 %v3367, %v3366
        %v3386 = vpack.c.b16 %v3369, %v3368
        %v3387 = vpack.c.b16 %v3371, %v3370
        %v3389 = vsel %vm505, %v3372, 0
        %v3392 = vsel %vm505, %v3373, 0
        %v3395 = vsel %vm505, %v3374, 0
        %v3398 = vsel %vm505, %v3375, 0
        %v3401 = vsel %vm505, %v3376, 0
        %v3404 = vsel %vm505, %v3377, 0
        %v3407 = vsel %vm505, %v3378, 0
        %v3410 = vsel %vm505, %v3379, 0
        %v3413 = vsel %vm505, %v3380, 0
        %v3416 = vsel %vm505, %v3381, 0
        %v3419 = vsel %vm505, %v3382, 0
        %v3422 = vsel %vm505, %v3383, 0
        %v3425 = vsel %vm505, %v3384, 0
        %v3428 = vsel %vm505, %v3385, 0
        %v3431 = vsel %vm505, %v3386, 0
        %v3434 = vsel %vm505, %v3387, 0
        %3436 = vmatprep.subr.bf16.mxu0 %v3305
        %3437 = vmatpush1.bf16.msra.mxu0 %v3304
        %3438 = vmatprep.subr.bf16.mxu0 0
        %3439 = vmatpush1.bf16.msra.mxu0 0
        %3440 = vmatprep.subr.bf16.mxu0 0
        %3441 = vmatpush1.bf16.msra.mxu0 0
        %3442 = vmatprep.subr.bf16.mxu0 0
        %3443 = vmatpush1.bf16.msra.mxu0 0
        %3444 = vmatprep.subr.bf16.mxu0 0
        %3445 = vmatpush1.bf16.msra.mxu0 0
        %3446 = vmatprep.subr.bf16.mxu0 0
        %3447 = vmatpush1.bf16.msra.mxu0 0
        %3448 = vmatprep.subr.bf16.mxu0 0
        %3449 = vmatpush1.bf16.msra.mxu0 0
        %3450 = vmatprep.subr.bf16.mxu0 0
        %3451 = vmatpush1.bf16.msra.mxu0 0
        %3452 = vmatprep.subr.bf16.mxu0 0
        %3453 = vmatpush1.bf16.msra.mxu0 0
        %3454 = vmatprep.subr.bf16.mxu0 0
        %3455 = vmatpush1.bf16.msra.mxu0 0
        %3456 = vmatprep.subr.bf16.mxu0 0
        %3457 = vmatpush1.bf16.msra.mxu0 0
        %3458 = vmatprep.subr.bf16.mxu0 0
        %3459 = vmatpush1.bf16.msra.mxu0 0
        %3460 = vmatprep.subr.bf16.mxu0 0
        %3461 = vmatpush1.bf16.msra.mxu0 0
        %3462 = vmatprep.subr.bf16.mxu0 0
        %3463 = vmatpush1.bf16.msra.mxu0 0
        %3464 = vmatprep.subr.bf16.mxu0 0
        %3465 = vmatpush1.bf16.msra.mxu0 0
        %3466 = vmatprep.subr.bf16.mxu0 0
        %3467 = vmatpush1.bf16.msra.mxu0 0
        %3468 = vmatprep.mubr.bf16.mxu0 0
        %3469 = vmatmul.mubr.bf16.gmra.mrb[0].mxu0 %v3389
        %v3470 = vpop.f32.mrb[0].mxu0
        %v3471 = vadd.f32 0.0, %v3470
        %v3472 = vpop.f32.mrb[0].mxu0
        %v3473 = vadd.f32 0.0, %v3472
        %v3474 = vpop.f32.mrb[0].mxu0
        %v3475 = vadd.f32 0.0, %v3474
        %v3476 = vpop.f32.mrb[0].mxu0
        %v3477 = vadd.f32 0.0, %v3476
        %3478 = vmatprep.mubr.bf16.mxu0 0
        %3479 = vmatmul.mubr.bf16.gmra.mrb[0].mxu0 %v3392
        %v3480 = vpop.f32.mrb[0].mxu0
        %v3481 = vadd.f32 0.0, %v3480
        %v3482 = vpop.f32.mrb[0].mxu0
        %v3483 = vadd.f32 0.0, %v3482
        %v3484 = vpop.f32.mrb[0].mxu0
        %v3485 = vadd.f32 0.0, %v3484
        %v3486 = vpop.f32.mrb[0].mxu0
        %v3487 = vadd.f32 0.0, %v3486
        %3488 = vmatprep.mubr.bf16.mxu0 0
        %3489 = vmatmul.mubr.bf16.gmra.mrb[0].mxu0 %v3395
        %v3490 = vpop.f32.mrb[0].mxu0
        %v3491 = vadd.f32 0.0, %v3490
        %v3492 = vpop.f32.mrb[0].mxu0
        %v3493 = vadd.f32 0.0, %v3492
        %v3494 = vpop.f32.mrb[0].mxu0
        %v3495 = vadd.f32 0.0, %v3494
        %v3496 = vpop.f32.mrb[0].mxu0
        %v3497 = vadd.f32 0.0, %v3496
        %3498 = vmatprep.mubr.bf16.mxu0 0
        %3499 = vmatmul.mubr.bf16.gmra.mrb[0].mxu0 %v3398
        %v3500 = vpop.f32.mrb[0].mxu0
        %v3501 = vadd.f32 0.0, %v3500
        %v3502 = vpop.f32.mrb[0].mxu0
        %v3503 = vadd.f32 0.0, %v3502
        %v3504 = vpop.f32.mrb[0].mxu0
        %v3505 = vadd.f32 0.0, %v3504
        %v3506 = vpop.f32.mrb[0].mxu0
        %v3507 = vadd.f32 0.0, %v3506
        %3508 = vmatprep.mubr.bf16.mxu0 0
        %3509 = vmatmul.mubr.bf16.gmra.mrb[0].mxu0 %v3401
        %v3510 = vpop.f32.mrb[0].mxu0
        %v3511 = vadd.f32 0.0, %v3510
        %v3512 = vpop.f32.mrb[0].mxu0
        %v3513 = vadd.f32 0.0, %v3512
        %v3514 = vpop.f32.mrb[0].mxu0
        %v3515 = vadd.f32 0.0, %v3514
        %v3516 = vpop.f32.mrb[0].mxu0
        %v3517 = vadd.f32 0.0, %v3516
        %3518 = vmatprep.mubr.bf16.mxu0 0
        %3519 = vmatmul.mubr.bf16.gmra.mrb[0].mxu0 %v3404
        %v3520 = vpop.f32.mrb[0].mxu0
        %v3521 = vadd.f32 0.0, %v3520
        %v3522 = vpop.f32.mrb[0].mxu0
        %v3523 = vadd.f32 0.0, %v3522
        %v3524 = vpop.f32.mrb[0].mxu0
        %v3525 = vadd.f32 0.0, %v3524
        %v3526 = vpop.f32.mrb[0].mxu0
        %v3527 = vadd.f32 0.0, %v3526
        %3528 = vmatprep.mubr.bf16.mxu0 0
        %3529 = vmatmul.mubr.bf16.gmra.mrb[0].mxu0 %v3407
        %v3530 = vpop.f32.mrb[0].mxu0
        %v3531 = vadd.f32 0.0, %v3530
        %v3532 = vpop.f32.mrb[0].mxu0
        %v3533 = vadd.f32 0.0, %v3532
        %v3534 = vpop.f32.mrb[0].mxu0
        %v3535 = vadd.f32 0.0, %v3534
        %v3536 = vpop.f32.mrb[0].mxu0
        %v3537 = vadd.f32 0.0, %v3536
        %3538 = vmatprep.mubr.bf16.mxu0 0
        %3539 = vmatmul.mubr.bf16.gmra.mrb[0].mxu0 %v3410
        %v3540 = vpop.f32.mrb[0].mxu0
        %v3541 = vadd.f32 0.0, %v3540
        %v3542 = vpop.f32.mrb[0].mxu0
        %v3543 = vadd.f32 0.0, %v3542
        %v3544 = vpop.f32.mrb[0].mxu0
        %v3545 = vadd.f32 0.0, %v3544
        %v3546 = vpop.f32.mrb[0].mxu0
        %v3547 = vadd.f32 0.0, %v3546
        %3548 = vmatprep.mubr.bf16.mxu0 0
        %3549 = vmatmul.mubr.bf16.gmra.mrb[0].mxu0 %v3413
        %v3550 = vpop.f32.mrb[0].mxu0
        %v3551 = vadd.f32 0.0, %v3550
        %v3552 = vpop.f32.mrb[0].mxu0
        %v3553 = vadd.f32 0.0, %v3552
        %v3554 = vpop.f32.mrb[0].mxu0
        %v3555 = vadd.f32 0.0, %v3554
        %v3556 = vpop.f32.mrb[0].mxu0
        %v3557 = vadd.f32 0.0, %v3556
        %3558 = vmatprep.mubr.bf16.mxu0 0
        %3559 = vmatmul.mubr.bf16.gmra.mrb[0].mxu0 %v3416
        %v3560 = vpop.f32.mrb[0].mxu0
        %v3561 = vadd.f32 0.0, %v3560
        %v3562 = vpop.f32.mrb[0].mxu0
        %v3563 = vadd.f32 0.0, %v3562
        %v3564 = vpop.f32.mrb[0].mxu0
        %v3565 = vadd.f32 0.0, %v3564
        %v3566 = vpop.f32.mrb[0].mxu0
        %v3567 = vadd.f32 0.0, %v3566
        %3568 = vmatprep.mubr.bf16.mxu0 0
        %3569 = vmatmul.mubr.bf16.gmra.mrb[0].mxu0 %v3419
        %v3570 = vpop.f32.mrb[0].mxu0
        %v3571 = vadd.f32 0.0, %v3570
        %v3572 = vpop.f32.mrb[0].mxu0
        %v3573 = vadd.f32 0.0, %v3572
        %v3574 = vpop.f32.mrb[0].mxu0
        %v3575 = vadd.f32 0.0, %v3574
        %v3576 = vpop.f32.mrb[0].mxu0
        %v3577 = vadd.f32 0.0, %v3576
        %3578 = vmatprep.mubr.bf16.mxu0 0
        %3579 = vmatmul.mubr.bf16.gmra.mrb[0].mxu0 %v3422
        %v3580 = vpop.f32.mrb[0].mxu0
        %v3581 = vadd.f32 0.0, %v3580
        %v3582 = vpop.f32.mrb[0].mxu0
        %v3583 = vadd.f32 0.0, %v3582
        %v3584 = vpop.f32.mrb[0].mxu0
        %v3585 = vadd.f32 0.0, %v3584
        %v3586 = vpop.f32.mrb[0].mxu0
        %v3587 = vadd.f32 0.0, %v3586
        %3588 = vmatprep.mubr.bf16.mxu0 0
        %3589 = vmatmul.mubr.bf16.gmra.mrb[0].mxu0 %v3425
        %v3590 = vpop.f32.mrb[0].mxu0
        %v3591 = vadd.f32 0.0, %v3590
        %v3592 = vpop.f32.mrb[0].mxu0
        %v3593 = vadd.f32 0.0, %v3592
        %v3594 = vpop.f32.mrb[0].mxu0
        %v3595 = vadd.f32 0.0, %v3594
        %v3596 = vpop.f32.mrb[0].mxu0
        %v3597 = vadd.f32 0.0, %v3596
        %3598 = vmatprep.mubr.bf16.mxu0 0
        %3599 = vmatmul.mubr.bf16.gmra.mrb[0].mxu0 %v3428
        %v3600 = vpop.f32.mrb[0].mxu0
        %v3601 = vadd.f32 0.0, %v3600
        %v3602 = vpop.f32.mrb[0].mxu0
        %v3603 = vadd.f32 0.0, %v3602
        %v3604 = vpop.f32.mrb[0].mxu0
        %v3605 = vadd.f32 0.0, %v3604
        %v3606 = vpop.f32.mrb[0].mxu0
        %v3607 = vadd.f32 0.0, %v3606
        %3608 = vmatprep.mubr.bf16.mxu0 0
        %3609 = vmatmul.mubr.bf16.gmra.mrb[0].mxu0 %v3431
        %v3610 = vpop.f32.mrb[0].mxu0
        %v3611 = vadd.f32 0.0, %v3610
        %v3612 = vpop.f32.mrb[0].mxu0
        %v3613 = vadd.f32 0.0, %v3612
        %v3614 = vpop.f32.mrb[0].mxu0
        %v3615 = vadd.f32 0.0, %v3614
        %v3616 = vpop.f32.mrb[0].mxu0
        %v3617 = vadd.f32 0.0, %v3616
        %3618 = vmatprep.mubr.bf16.mxu0 0
        %3619 = vmatmul.mubr.bf16.gmra.mrb[0].mxu0 %v3434
        %v3620 = vpop.f32.mrb[0].mxu0
        %v3621 = vadd.f32 0.0, %v3620
        %v3622 = vpop.f32.mrb[0].mxu0
        %v3623 = vadd.f32 0.0, %v3622
        %v3624 = vpop.f32.mrb[0].mxu0
        %v3625 = vadd.f32 0.0, %v3624
        %v3626 = vpop.f32.mrb[0].mxu0
        %v3627 = vadd.f32 0.0, %v3626
        %3628 = vdwg.mxu0
        %3629 = vmatprep.subr.bf16.mxu0 %v3307
        %3630 = vmatpush1.bf16.msra.mxu0 %v3306
        %3631 = vmatprep.subr.bf16.mxu0 0
        %3632 = vmatpush1.bf16.msra.mxu0 0
        %3633 = vmatprep.subr.bf16.mxu0 0
        %3634 = vmatpush1.bf16.msra.mxu0 0
        %3635 = vmatprep.subr.bf16.mxu0 0
        %3636 = vmatpush1.bf16.msra.mxu0 0
        %3637 = vmatprep.subr.bf16.mxu0 0
        %3638 = vmatpush1.bf16.msra.mxu0 0
        %3639 = vmatprep.subr.bf16.mxu0 0
        %3640 = vmatpush1.bf16.msra.mxu0 0
        %3641 = vmatprep.subr.bf16.mxu0 0
        %3642 = vmatpush1.bf16.msra.mxu0 0
        %3643 = vmatprep.subr.bf16.mxu0 0
        %3644 = vmatpush1.bf16.msra.mxu0 0
        %3645 = vmatprep.subr.bf16.mxu0 0
        %3646 = vmatpush1.bf16.msra.mxu0 0
        %3647 = vmatprep.subr.bf16.mxu0 0
        %3648 = vmatpush1.bf16.msra.mxu0 0
        %3649 = vmatprep.subr.bf16.mxu0 0
        %3650 = vmatpush1.bf16.msra.mxu0 0
        %3651 = vmatprep.subr.bf16.mxu0 0
        %3652 = vmatpush1.bf16.msra.mxu0 0
        %3653 = vmatprep.subr.bf16.mxu0 0
        %3654 = vmatpush1.bf16.msra.mxu0 0
        %3655 = vmatprep.subr.bf16.mxu0 0
        %3656 = vmatpush1.bf16.msra.mxu0 0
        %3657 = vmatprep.subr.bf16.mxu0 0
        %3658 = vmatpush1.bf16.msra.mxu0 0
        %3659 = vmatprep.subr.bf16.mxu0 0
        %3660 = vmatpush1.bf16.msra.mxu0 0
        %3661 = vmatprep.mubr.bf16.mxu0 0
        %3662 = vmatmul.mubr.bf16.gmra.mrb[0].mxu0 %v3389
        %v3663 = vpop.f32.mrb[0].mxu0
        %v3664 = vadd.f32 0.0, %v3663
        %v3665 = vpop.f32.mrb[0].mxu0
        %v3666 = vadd.f32 0.0, %v3665
        %v3667 = vpop.f32.mrb[0].mxu0
        %v3668 = vadd.f32 0.0, %v3667
        %v3669 = vpop.f32.mrb[0].mxu0
        %v3670 = vadd.f32 0.0, %v3669
        %3671 = vmatprep.mubr.bf16.mxu0 0
        %3672 = vmatmul.mubr.bf16.gmra.mrb[0].mxu0 %v3392
        %v3673 = vpop.f32.mrb[0].mxu0
        %v3674 = vadd.f32 0.0, %v3673
        %v3675 = vpop.f32.mrb[0].mxu0
        %v3676 = vadd.f32 0.0, %v3675
        %v3677 = vpop.f32.mrb[0].mxu0
        %v3678 = vadd.f32 0.0, %v3677
        %v3679 = vpop.f32.mrb[0].mxu0
        %v3680 = vadd.f32 0.0, %v3679
        %3681 = vmatprep.mubr.bf16.mxu0 0
        %3682 = vmatmul.mubr.bf16.gmra.mrb[0].mxu0 %v3395
        %v3683 = vpop.f32.mrb[0].mxu0
        %v3684 = vadd.f32 0.0, %v3683
        %v3685 = vpop.f32.mrb[0].mxu0
        %v3686 = vadd.f32 0.0, %v3685
        %v3687 = vpop.f32.mrb[0].mxu0
        %v3688 = vadd.f32 0.0, %v3687
        %v3689 = vpop.f32.mrb[0].mxu0
        %v3690 = vadd.f32 0.0, %v3689
        %3691 = vmatprep.mubr.bf16.mxu0 0
        %3692 = vmatmul.mubr.bf16.gmra.mrb[0].mxu0 %v3398
        %v3693 = vpop.f32.mrb[0].mxu0
        %v3694 = vadd.f32 0.0, %v3693
        %v3695 = vpop.f32.mrb[0].mxu0
        %v3696 = vadd.f32 0.0, %v3695
        %v3697 = vpop.f32.mrb[0].mxu0
        %v3698 = vadd.f32 0.0, %v3697
        %v3699 = vpop.f32.mrb[0].mxu0
        %v3700 = vadd.f32 0.0, %v3699
        %3701 = vmatprep.mubr.bf16.mxu0 0
        %3702 = vmatmul.mubr.bf16.gmra.mrb[0].mxu0 %v3401
        %v3703 = vpop.f32.mrb[0].mxu0
        %v3704 = vadd.f32 0.0, %v3703
        %v3705 = vpop.f32.mrb[0].mxu0
        %v3706 = vadd.f32 0.0, %v3705
        %v3707 = vpop.f32.mrb[0].mxu0
        %v3708 = vadd.f32 0.0, %v3707
        %v3709 = vpop.f32.mrb[0].mxu0
        %v3710 = vadd.f32 0.0, %v3709
        %3711 = vmatprep.mubr.bf16.mxu0 0
        %3712 = vmatmul.mubr.bf16.gmra.mrb[0].mxu0 %v3404
        %v3713 = vpop.f32.mrb[0].mxu0
        %v3714 = vadd.f32 0.0, %v3713
        %v3715 = vpop.f32.mrb[0].mxu0
        %v3716 = vadd.f32 0.0, %v3715
        %v3717 = vpop.f32.mrb[0].mxu0
        %v3718 = vadd.f32 0.0, %v3717
        %v3719 = vpop.f32.mrb[0].mxu0
        %v3720 = vadd.f32 0.0, %v3719
        %3721 = vmatprep.mubr.bf16.mxu0 0
        %3722 = vmatmul.mubr.bf16.gmra.mrb[0].mxu0 %v3407
        %v3723 = vpop.f32.mrb[0].mxu0
        %v3724 = vadd.f32 0.0, %v3723
        %v3725 = vpop.f32.mrb[0].mxu0
        %v3726 = vadd.f32 0.0, %v3725
        %v3727 = vpop.f32.mrb[0].mxu0
        %v3728 = vadd.f32 0.0, %v3727
        %v3729 = vpop.f32.mrb[0].mxu0
        %v3730 = vadd.f32 0.0, %v3729
        %3731 = vmatprep.mubr.bf16.mxu0 0
        %3732 = vmatmul.mubr.bf16.gmra.mrb[0].mxu0 %v3410
        %v3733 = vpop.f32.mrb[0].mxu0
        %v3734 = vadd.f32 0.0, %v3733
        %v3735 = vpop.f32.mrb[0].mxu0
        %v3736 = vadd.f32 0.0, %v3735
        %v3737 = vpop.f32.mrb[0].mxu0
        %v3738 = vadd.f32 0.0, %v3737
        %v3739 = vpop.f32.mrb[0].mxu0
        %v3740 = vadd.f32 0.0, %v3739
        %3741 = vmatprep.mubr.bf16.mxu0 0
        %3742 = vmatmul.mubr.bf16.gmra.mrb[0].mxu0 %v3413
        %v3743 = vpop.f32.mrb[0].mxu0
        %v3744 = vadd.f32 0.0, %v3743
        %v3745 = vpop.f32.mrb[0].mxu0
        %v3746 = vadd.f32 0.0, %v3745
        %v3747 = vpop.f32.mrb[0].mxu0
        %v3748 = vadd.f32 0.0, %v3747
        %v3749 = vpop.f32.mrb[0].mxu0
        %v3750 = vadd.f32 0.0, %v3749
        %3751 = vmatprep.mubr.bf16.mxu0 0
        %3752 = vmatmul.mubr.bf16.gmra.mrb[0].mxu0 %v3416
        %v3753 = vpop.f32.mrb[0].mxu0
        %v3754 = vadd.f32 0.0, %v3753
        %v3755 = vpop.f32.mrb[0].mxu0
        %v3756 = vadd.f32 0.0, %v3755
        %v3757 = vpop.f32.mrb[0].mxu0
        %v3758 = vadd.f32 0.0, %v3757
        %v3759 = vpop.f32.mrb[0].mxu0
        %v3760 = vadd.f32 0.0, %v3759
        %3761 = vmatprep.mubr.bf16.mxu0 0
        %3762 = vmatmul.mubr.bf16.gmra.mrb[0].mxu0 %v3419
        %v3763 = vpop.f32.mrb[0].mxu0
        %v3764 = vadd.f32 0.0, %v3763
        %v3765 = vpop.f32.mrb[0].mxu0
        %v3766 = vadd.f32 0.0, %v3765
        %v3767 = vpop.f32.mrb[0].mxu0
        %v3768 = vadd.f32 0.0, %v3767
        %v3769 = vpop.f32.mrb[0].mxu0
        %v3770 = vadd.f32 0.0, %v3769
        %3771 = vmatprep.mubr.bf16.mxu0 0
        %3772 = vmatmul.mubr.bf16.gmra.mrb[0].mxu0 %v3422
        %v3773 = vpop.f32.mrb[0].mxu0
        %v3774 = vadd.f32 0.0, %v3773
        %v3775 = vpop.f32.mrb[0].mxu0
        %v3776 = vadd.f32 0.0, %v3775
        %v3777 = vpop.f32.mrb[0].mxu0
        %v3778 = vadd.f32 0.0, %v3777
        %v3779 = vpop.f32.mrb[0].mxu0
        %v3780 = vadd.f32 0.0, %v3779
        %3781 = vmatprep.mubr.bf16.mxu0 0
        %3782 = vmatmul.mubr.bf16.gmra.mrb[0].mxu0 %v3425
        %v3783 = vpop.f32.mrb[0].mxu0
        %v3784 = vadd.f32 0.0, %v3783
        %v3785 = vpop.f32.mrb[0].mxu0
        %v3786 = vadd.f32 0.0, %v3785
        %v3787 = vpop.f32.mrb[0].mxu0
        %v3788 = vadd.f32 0.0, %v3787
        %v3789 = vpop.f32.mrb[0].mxu0
        %v3790 = vadd.f32 0.0, %v3789
        %3791 = vmatprep.mubr.bf16.mxu0 0
        %3792 = vmatmul.mubr.bf16.gmra.mrb[0].mxu0 %v3428
        %v3793 = vpop.f32.mrb[0].mxu0
        %v3794 = vadd.f32 0.0, %v3793
        %v3795 = vpop.f32.mrb[0].mxu0
        %v3796 = vadd.f32 0.0, %v3795
        %v3797 = vpop.f32.mrb[0].mxu0
        %v3798 = vadd.f32 0.0, %v3797
        %v3799 = vpop.f32.mrb[0].mxu0
        %v3800 = vadd.f32 0.0, %v3799
        %3801 = vmatprep.mubr.bf16.mxu0 0
        %3802 = vmatmul.mubr.bf16.gmra.mrb[0].mxu0 %v3431
        %v3803 = vpop.f32.mrb[0].mxu0
        %v3804 = vadd.f32 0.0, %v3803
        %v3805 = vpop.f32.mrb[0].mxu0
        %v3806 = vadd.f32 0.0, %v3805
        %v3807 = vpop.f32.mrb[0].mxu0
        %v3808 = vadd.f32 0.0, %v3807
        %v3809 = vpop.f32.mrb[0].mxu0
        %v3810 = vadd.f32 0.0, %v3809
        %3811 = vmatprep.mubr.bf16.mxu0 0
        %3812 = vmatmul.mubr.bf16.gmra.mrb[0].mxu0 %v3434
        %v3813 = vpop.f32.mrb[0].mxu0
        %v3814 = vadd.f32 0.0, %v3813
        %v3815 = vpop.f32.mrb[0].mxu0
        %v3816 = vadd.f32 0.0, %v3815
        %v3817 = vpop.f32.mrb[0].mxu0
        %v3818 = vadd.f32 0.0, %v3817
        %v3819 = vpop.f32.mrb[0].mxu0
        %v3820 = vadd.f32 0.0, %v3819
        %3821 = vdwg.mxu0
        %3822 = vst [vmem:[#allocation2] sm:$0xff] %v3471
        %3823 = vst [vmem:[#allocation2 + $0x8] sm:$0xff] %v3473
        %3824 = vst [vmem:[#allocation2 + $0x10] sm:$0xff] %v3664
        %3825 = vst [vmem:[#allocation2 + $0x18] sm:$0xff] %v3666
        %3826 = vst [vmem:[#allocation2 + $0x20] sm:$0xff] %v3475
        %3827 = vst [vmem:[#allocation2 + $0x28] sm:$0xff] %v3477
        %3828 = vst [vmem:[#allocation2 + $0x30] sm:$0xff] %v3668
        %3829 = vst [vmem:[#allocation2 + $0x38] sm:$0xff] %v3670
        %3830 = vst [vmem:[#allocation2 + $0x40] sm:$0xff] %v3481
        %3831 = vst [vmem:[#allocation2 + $0x48] sm:$0xff] %v3483
        %3832 = vst [vmem:[#allocation2 + $0x50] sm:$0xff] %v3674
        %3833 = vst [vmem:[#allocation2 + $0x58] sm:$0xff] %v3676
        %3834 = vst [vmem:[#allocation2 + $0x60] sm:$0xff] %v3485
        %3835 = vst [vmem:[#allocation2 + $0x68] sm:$0xff] %v3487
        %3836 = vst [vmem:[#allocation2 + $0x70] sm:$0xff] %v3678
        %3837 = vst [vmem:[#allocation2 + $0x78] sm:$0xff] %v3680
        %3838 = vst [vmem:[#allocation2 + $0x80] sm:$0xff] %v3491
        %3839 = vst [vmem:[#allocation2 + $0x88] sm:$0xff] %v3493
        %3840 = vst [vmem:[#allocation2 + $0x90] sm:$0xff] %v3684
        %3841 = vst [vmem:[#allocation2 + $0x98] sm:$0xff] %v3686
        %3842 = vst [vmem:[#allocation2 + $0xa0] sm:$0xff] %v3495
        %3843 = vst [vmem:[#allocation2 + $0xa8] sm:$0xff] %v3497
        %3844 = vst [vmem:[#allocation2 + $0xb0] sm:$0xff] %v3688
        %3845 = vst [vmem:[#allocation2 + $0xb8] sm:$0xff] %v3690
        %3846 = vst [vmem:[#allocation2 + $0xc0] sm:$0xff] %v3501
        %3847 = vst [vmem:[#allocation2 + $0xc8] sm:$0xff] %v3503
        %3848 = vst [vmem:[#allocation2 + $0xd0] sm:$0xff] %v3694
        %3849 = vst [vmem:[#allocation2 + $0xd8] sm:$0xff] %v3696
        %3850 = vst [vmem:[#allocation2 + $0xe0] sm:$0xff] %v3505
        %3851 = vst [vmem:[#allocation2 + $0xe8] sm:$0xff] %v3507
        %3852 = vst [vmem:[#allocation2 + $0xf0] sm:$0xff] %v3698
        %3853 = vst [vmem:[#allocation2 + $0xf8] sm:$0xff] %v3700
        %3854 = vst [vmem:[#allocation2 + $0x100] sm:$0xff] %v3511
        %3855 = vst [vmem:[#allocation2 + $0x108] sm:$0xff] %v3513
        %3856 = vst [vmem:[#allocation2 + $0x110] sm:$0xff] %v3704
        %3857 = vst [vmem:[#allocation2 + $0x118] sm:$0xff] %v3706
        %3858 = vst [vmem:[#allocation2 + $0x120] sm:$0xff] %v3515
        %3859 = vst [vmem:[#allocation2 + $0x128] sm:$0xff] %v3517
        %3860 = vst [vmem:[#allocation2 + $0x130] sm:$0xff] %v3708
        %3861 = vst [vmem:[#allocation2 + $0x138] sm:$0xff] %v3710
        %3862 = vst [vmem:[#allocation2 + $0x140] sm:$0xff] %v3521
        %3863 = vst [vmem:[#allocation2 + $0x148] sm:$0xff] %v3523
        %3864 = vst [vmem:[#allocation2 + $0x150] sm:$0xff] %v3714
        %3865 = vst [vmem:[#allocation2 + $0x158] sm:$0xff] %v3716
        %3866 = vst [vmem:[#allocation2 + $0x160] sm:$0xff] %v3525
        %3867 = vst [vmem:[#allocation2 + $0x168] sm:$0xff] %v3527
        %3868 = vst [vmem:[#allocation2 + $0x170] sm:$0xff] %v3718
        %3869 = vst [vmem:[#allocation2 + $0x178] sm:$0xff] %v3720
        %3870 = vst [vmem:[#allocation2 + $0x180] sm:$0xff] %v3531
        %3871 = vst [vmem:[#allocation2 + $0x188] sm:$0xff] %v3533
        %3872 = vst [vmem:[#allocation2 + $0x190] sm:$0xff] %v3724
        %3873 = vst [vmem:[#allocation2 + $0x198] sm:$0xff] %v3726
        %3874 = vst [vmem:[#allocation2 + $0x1a0] sm:$0xff] %v3535
        %3875 = vst [vmem:[#allocation2 + $0x1a8] sm:$0xff] %v3537
        %3876 = vst [vmem:[#allocation2 + $0x1b0] sm:$0xff] %v3728
        %3877 = vst [vmem:[#allocation2 + $0x1b8] sm:$0xff] %v3730
        %3878 = vst [vmem:[#allocation2 + $0x1c0] sm:$0xff] %v3541
        %3879 = vst [vmem:[#allocation2 + $0x1c8] sm:$0xff] %v3543
        %3880 = vst [vmem:[#allocation2 + $0x1d0] sm:$0xff] %v3734
        %3881 = vst [vmem:[#allocation2 + $0x1d8] sm:$0xff] %v3736
        %3882 = vst [vmem:[#allocation2 + $0x1e0] sm:$0xff] %v3545
        %3883 = vst [vmem:[#allocation2 + $0x1e8] sm:$0xff] %v3547
        %3884 = vst [vmem:[#allocation2 + $0x1f0] sm:$0xff] %v3738
        %3885 = vst [vmem:[#allocation2 + $0x1f8] sm:$0xff] %v3740
        %3886 = vst [vmem:[#allocation2 + $0x200] sm:$0xff] %v3551
        %3887 = vst [vmem:[#allocation2 + $0x208] sm:$0xff] %v3553
        %3888 = vst [vmem:[#allocation2 + $0x210] sm:$0xff] %v3744
        %3889 = vst [vmem:[#allocation2 + $0x218] sm:$0xff] %v3746
        %3890 = vst [vmem:[#allocation2 + $0x220] sm:$0xff] %v3555
        %3891 = vst [vmem:[#allocation2 + $0x228] sm:$0xff] %v3557
        %3892 = vst [vmem:[#allocation2 + $0x230] sm:$0xff] %v3748
        %3893 = vst [vmem:[#allocation2 + $0x238] sm:$0xff] %v3750
        %3894 = vst [vmem:[#allocation2 + $0x240] sm:$0xff] %v3561
        %3895 = vst [vmem:[#allocation2 + $0x248] sm:$0xff] %v3563
        %3896 = vst [vmem:[#allocation2 + $0x250] sm:$0xff] %v3754
        %3897 = vst [vmem:[#allocation2 + $0x258] sm:$0xff] %v3756
        %3898 = vst [vmem:[#allocation2 + $0x260] sm:$0xff] %v3565
        %3899 = vst [vmem:[#allocation2 + $0x268] sm:$0xff] %v3567
        %3900 = vst [vmem:[#allocation2 + $0x270] sm:$0xff] %v3758
        %3901 = vst [vmem:[#allocation2 + $0x278] sm:$0xff] %v3760
        %3902 = vst [vmem:[#allocation2 + $0x280] sm:$0xff] %v3571
        %3903 = vst [vmem:[#allocation2 + $0x288] sm:$0xff] %v3573
        %3904 = vst [vmem:[#allocation2 + $0x290] sm:$0xff] %v3764
        %3905 = vst [vmem:[#allocation2 + $0x298] sm:$0xff] %v3766
        %3906 = vst [vmem:[#allocation2 + $0x2a0] sm:$0xff] %v3575
        %3907 = vst [vmem:[#allocation2 + $0x2a8] sm:$0xff] %v3577
        %3908 = vst [vmem:[#allocation2 + $0x2b0] sm:$0xff] %v3768
        %3909 = vst [vmem:[#allocation2 + $0x2b8] sm:$0xff] %v3770
        %3910 = vst [vmem:[#allocation2 + $0x2c0] sm:$0xff] %v3581
        %3911 = vst [vmem:[#allocation2 + $0x2c8] sm:$0xff] %v3583
        %3912 = vst [vmem:[#allocation2 + $0x2d0] sm:$0xff] %v3774
        %3913 = vst [vmem:[#allocation2 + $0x2d8] sm:$0xff] %v3776
        %3914 = vst [vmem:[#allocation2 + $0x2e0] sm:$0xff] %v3585
        %3915 = vst [vmem:[#allocation2 + $0x2e8] sm:$0xff] %v3587
        %3916 = vst [vmem:[#allocation2 + $0x2f0] sm:$0xff] %v3778
        %3917 = vst [vmem:[#allocation2 + $0x2f8] sm:$0xff] %v3780
        %3918 = vst [vmem:[#allocation2 + $0x300] sm:$0xff] %v3591
        %3919 = vst [vmem:[#allocation2 + $0x308] sm:$0xff] %v3593
        %3920 = vst [vmem:[#allocation2 + $0x310] sm:$0xff] %v3784
        %3921 = vst [vmem:[#allocation2 + $0x318] sm:$0xff] %v3786
        %3922 = vst [vmem:[#allocation2 + $0x320] sm:$0xff] %v3595
        %3923 = vst [vmem:[#allocation2 + $0x328] sm:$0xff] %v3597
        %3924 = vst [vmem:[#allocation2 + $0x330] sm:$0xff] %v3788
        %3925 = vst [vmem:[#allocation2 + $0x338] sm:$0xff] %v3790
        %3926 = vst [vmem:[#allocation2 + $0x340] sm:$0xff] %v3601
        %3927 = vst [vmem:[#allocation2 + $0x348] sm:$0xff] %v3603
        %3928 = vst [vmem:[#allocation2 + $0x350] sm:$0xff] %v3794
        %3929 = vst [vmem:[#allocation2 + $0x358] sm:$0xff] %v3796
        %3930 = vst [vmem:[#allocation2 + $0x360] sm:$0xff] %v3605
        %3931 = vst [vmem:[#allocation2 + $0x368] sm:$0xff] %v3607
        %3932 = vst [vmem:[#allocation2 + $0x370] sm:$0xff] %v3798
        %3933 = vst [vmem:[#allocation2 + $0x378] sm:$0xff] %v3800
        %3934 = vst [vmem:[#allocation2 + $0x380] sm:$0xff] %v3611
        %3935 = vst [vmem:[#allocation2 + $0x388] sm:$0xff] %v3613
        %3936 = vst [vmem:[#allocation2 + $0x390] sm:$0xff] %v3804
        %3937 = vst [vmem:[#allocation2 + $0x398] sm:$0xff] %v3806
        %3938 = vst [vmem:[#allocation2 + $0x3a0] sm:$0xff] %v3615
        %3939 = vst [vmem:[#allocation2 + $0x3a8] sm:$0xff] %v3617
        %3940 = vst [vmem:[#allocation2 + $0x3b0] sm:$0xff] %v3808
        %3941 = vst [vmem:[#allocation2 + $0x3b8] sm:$0xff] %v3810
        %3942 = vst [vmem:[#allocation2 + $0x3c0] sm:$0xff] %v3621
        %3943 = vst [vmem:[#allocation2 + $0x3c8] sm:$0xff] %v3623
        %3944 = vst [vmem:[#allocation2 + $0x3d0] sm:$0xff] %v3814
        %3945 = vst [vmem:[#allocation2 + $0x3d8] sm:$0xff] %v3816
        %3946 = vst [vmem:[#allocation2 + $0x3e0] sm:$0xff] %v3625
        %3947 = vst [vmem:[#allocation2 + $0x3e8] sm:$0xff] %v3627
        %3948 = vst [vmem:[#allocation2 + $0x3f0] sm:$0xff] %v3818
        %3949 = vst [vmem:[#allocation2 + $0x3f8] sm:$0xff] %v3820
        %s3950 = scalar_lea.vmem %s196, 3
        %v3951 = vld [vmem:[%s3950] ss:$8 sm:$0xf]
        %vm3952 = vcmp.eq.s32.totalorder %v3951, 0
        %v3953 = vsel %vm3952, 1, 0
        %v3954 = vcvt.s32.f32 %v3953
        %v3955 = vld [vmem:[#allocation2] sm:$0xff]
        %v3956 = vld [vmem:[#allocation2 + $0x8] sm:$0xff]
        %v3957 = vld [vmem:[#allocation2 + $0x10] sm:$0xff]
        %v3958 = vld [vmem:[#allocation2 + $0x18] sm:$0xff]
        %v3959 = vld [vmem:[#allocation2 + $0x20] sm:$0xff]
        %v3960 = vld [vmem:[#allocation2 + $0x28] sm:$0xff]
        %v3961 = vld [vmem:[#allocation2 + $0x30] sm:$0xff]
        %v3962 = vld [vmem:[#allocation2 + $0x38] sm:$0xff]
        %v3964 = vlaneseq
        %v3965 = vshrl.u32 %v3964, 7
        %v3966 = vsub.s32 0, %v3965
        %v3967 = vrot.slane %v3954, %v3966
        %v3968 = vlaneseq
        %v3969 = vshrl.u32 %v3968, 7
        %v3970 = vsub.s32 1, %v3969
        %v3971 = vrot.slane %v3954, %v3970
        %v3972 = vlaneseq
        %v3973 = vshrl.u32 %v3972, 7
        %v3974 = vsub.s32 2, %v3973
        %v3975 = vrot.slane %v3954, %v3974
        %v3976 = vlaneseq
        %v3977 = vshrl.u32 %v3976, 7
        %v3978 = vsub.s32 3, %v3977
        %v3979 = vrot.slane %v3954, %v3978
        %v3984 = vmul.f32 %v3967, %v3955
        %v3985 = vmul.f32 %v3971, %v3956
        %v3986 = vmul.f32 %v3975, %v3957
        %v3987 = vmul.f32 %v3979, %v3958
        %v3988 = vmul.f32 %v3967, %v3959
        %v3989 = vmul.f32 %v3971, %v3960
        %v3990 = vmul.f32 %v3975, %v3961
        %v3991 = vmul.f32 %v3979, %v3962
        %vm3992 = vcmp.eq.s32.totalorder %v3951, 1
        %v3993 = vsel %vm3992, 1, 0
        %v3994 = vcvt.s32.f32 %v3993
        %v3995 = vld [vmem:[#allocation2 + $0x40] sm:$0xff]
        %v3996 = vld [vmem:[#allocation2 + $0x48] sm:$0xff]
        %v3997 = vld [vmem:[#allocation2 + $0x50] sm:$0xff]
        %v3998 = vld [vmem:[#allocation2 + $0x58] sm:$0xff]
        %v3999 = vld [vmem:[#allocation2 + $0x60] sm:$0xff]
        %v4000 = vld [vmem:[#allocation2 + $0x68] sm:$0xff]
        %v4001 = vld [vmem:[#allocation2 + $0x70] sm:$0xff]
        %v4002 = vld [vmem:[#allocation2 + $0x78] sm:$0xff]
        %v4004 = vlaneseq
        %v4005 = vshrl.u32 %v4004, 7
        %v4006 = vsub.s32 0, %v4005
        %v4007 = vrot.slane %v3994, %v4006
        %v4008 = vlaneseq
        %v4009 = vshrl.u32 %v4008, 7
        %v4010 = vsub.s32 1, %v4009
        %v4011 = vrot.slane %v3994, %v4010
        %v4012 = vlaneseq
        %v4013 = vshrl.u32 %v4012, 7
        %v4014 = vsub.s32 2, %v4013
        %v4015 = vrot.slane %v3994, %v4014
        %v4016 = vlaneseq
        %v4017 = vshrl.u32 %v4016, 7
        %v4018 = vsub.s32 3, %v4017
        %v4019 = vrot.slane %v3994, %v4018
        %v4024 = vmul.f32 %v4007, %v3995
        %v4025 = vmul.f32 %v4011, %v3996
        %v4026 = vmul.f32 %v4015, %v3997
        %v4027 = vmul.f32 %v4019, %v3998
        %v4028 = vmul.f32 %v4007, %v3999
        %v4029 = vmul.f32 %v4011, %v4000
        %v4030 = vmul.f32 %v4015, %v4001
        %v4031 = vmul.f32 %v4019, %v4002
        %v4032 = vadd.f32 %v3984, %v4024
        %v4033 = vadd.f32 %v3985, %v4025
        %v4034 = vadd.f32 %v3986, %v4026
        %v4035 = vadd.f32 %v3987, %v4027
        %v4036 = vadd.f32 %v3988, %v4028
        %v4037 = vadd.f32 %v3989, %v4029
        %v4038 = vadd.f32 %v3990, %v4030
        %v4039 = vadd.f32 %v3991, %v4031
        %vm4040 = vcmp.eq.s32.totalorder %v3951, 2
        %v4041 = vsel %vm4040, 1, 0
        %v4042 = vcvt.s32.f32 %v4041
        %v4043 = vld [vmem:[#allocation2 + $0x80] sm:$0xff]
        %v4044 = vld [vmem:[#allocation2 + $0x88] sm:$0xff]
        %v4045 = vld [vmem:[#allocation2 + $0x90] sm:$0xff]
        %v4046 = vld [vmem:[#allocation2 + $0x98] sm:$0xff]
        %v4047 = vld [vmem:[#allocation2 + $0xa0] sm:$0xff]
        %v4048 = vld [vmem:[#allocation2 + $0xa8] sm:$0xff]
        %v4049 = vld [vmem:[#allocation2 + $0xb0] sm:$0xff]
        %v4050 = vld [vmem:[#allocation2 + $0xb8] sm:$0xff]
        %v4052 = vlaneseq
        %v4053 = vshrl.u32 %v4052, 7
        %v4054 = vsub.s32 0, %v4053
        %v4055 = vrot.slane %v4042, %v4054
        %v4056 = vlaneseq
        %v4057 = vshrl.u32 %v4056, 7
        %v4058 = vsub.s32 1, %v4057
        %v4059 = vrot.slane %v4042, %v4058
        %v4060 = vlaneseq
        %v4061 = vshrl.u32 %v4060, 7
        %v4062 = vsub.s32 2, %v4061
        %v4063 = vrot.slane %v4042, %v4062
        %v4064 = vlaneseq
        %v4065 = vshrl.u32 %v4064, 7
        %v4066 = vsub.s32 3, %v4065
        %v4067 = vrot.slane %v4042, %v4066
        %v4072 = vmul.f32 %v4055, %v4043
        %v4073 = vmul.f32 %v4059, %v4044
        %v4074 = vmul.f32 %v4063, %v4045
        %v4075 = vmul.f32 %v4067, %v4046
        %v4076 = vmul.f32 %v4055, %v4047
        %v4077 = vmul.f32 %v4059, %v4048
        %v4078 = vmul.f32 %v4063, %v4049
        %v4079 = vmul.f32 %v4067, %v4050
        %v4080 = vadd.f32 %v4032, %v4072
        %v4081 = vadd.f32 %v4033, %v4073
        %v4082 = vadd.f32 %v4034, %v4074
        %v4083 = vadd.f32 %v4035, %v4075
        %v4084 = vadd.f32 %v4036, %v4076
        %v4085 = vadd.f32 %v4037, %v4077
        %v4086 = vadd.f32 %v4038, %v4078
        %v4087 = vadd.f32 %v4039, %v4079
        %vm4088 = vcmp.eq.s32.totalorder %v3951, 3
        %v4089 = vsel %vm4088, 1, 0
        %v4090 = vcvt.s32.f32 %v4089
        %v4091 = vld [vmem:[#allocation2 + $0xc0] sm:$0xff]
        %v4092 = vld [vmem:[#allocation2 + $0xc8] sm:$0xff]
        %v4093 = vld [vmem:[#allocation2 + $0xd0] sm:$0xff]
        %v4094 = vld [vmem:[#allocation2 + $0xd8] sm:$0xff]
        %v4095 = vld [vmem:[#allocation2 + $0xe0] sm:$0xff]
        %v4096 = vld [vmem:[#allocation2 + $0xe8] sm:$0xff]
        %v4097 = vld [vmem:[#allocation2 + $0xf0] sm:$0xff]
        %v4098 = vld [vmem:[#allocation2 + $0xf8] sm:$0xff]
        %v4100 = vlaneseq
        %v4101 = vshrl.u32 %v4100, 7
        %v4102 = vsub.s32 0, %v4101
        %v4103 = vrot.slane %v4090, %v4102
        %v4104 = vlaneseq
        %v4105 = vshrl.u32 %v4104, 7
        %v4106 = vsub.s32 1, %v4105
        %v4107 = vrot.slane %v4090, %v4106
        %v4108 = vlaneseq
        %v4109 = vshrl.u32 %v4108, 7
        %v4110 = vsub.s32 2, %v4109
        %v4111 = vrot.slane %v4090, %v4110
        %v4112 = vlaneseq
        %v4113 = vshrl.u32 %v4112, 7
        %v4114 = vsub.s32 3, %v4113
        %v4115 = vrot.slane %v4090, %v4114
        %v4120 = vmul.f32 %v4103, %v4091
        %v4121 = vmul.f32 %v4107, %v4092
        %v4122 = vmul.f32 %v4111, %v4093
        %v4123 = vmul.f32 %v4115, %v4094
        %v4124 = vmul.f32 %v4103, %v4095
        %v4125 = vmul.f32 %v4107, %v4096
        %v4126 = vmul.f32 %v4111, %v4097
        %v4127 = vmul.f32 %v4115, %v4098
        %v4128 = vadd.f32 %v4080, %v4120
        %v4129 = vadd.f32 %v4081, %v4121
        %v4130 = vadd.f32 %v4082, %v4122
        %v4131 = vadd.f32 %v4083, %v4123
        %v4132 = vadd.f32 %v4084, %v4124
        %v4133 = vadd.f32 %v4085, %v4125
        %v4134 = vadd.f32 %v4086, %v4126
        %v4135 = vadd.f32 %v4087, %v4127
        %vm4136 = vcmp.eq.s32.totalorder %v3951, 4
        %v4137 = vsel %vm4136, 1, 0
        %v4138 = vcvt.s32.f32 %v4137
        %v4139 = vld [vmem:[#allocation2 + $0x100] sm:$0xff]
        %v4140 = vld [vmem:[#allocation2 + $0x108] sm:$0xff]
        %v4141 = vld [vmem:[#allocation2 + $0x110] sm:$0xff]
        %v4142 = vld [vmem:[#allocation2 + $0x118] sm:$0xff]
        %v4143 = vld [vmem:[#allocation2 + $0x120] sm:$0xff]
        %v4144 = vld [vmem:[#allocation2 + $0x128] sm:$0xff]
        %v4145 = vld [vmem:[#allocation2 + $0x130] sm:$0xff]
        %v4146 = vld [vmem:[#allocation2 + $0x138] sm:$0xff]
        %v4148 = vlaneseq
        %v4149 = vshrl.u32 %v4148, 7
        %v4150 = vsub.s32 0, %v4149
        %v4151 = vrot.slane %v4138, %v4150
        %v4152 = vlaneseq
        %v4153 = vshrl.u32 %v4152, 7
        %v4154 = vsub.s32 1, %v4153
        %v4155 = vrot.slane %v4138, %v4154
        %v4156 = vlaneseq
        %v4157 = vshrl.u32 %v4156, 7
        %v4158 = vsub.s32 2, %v4157
        %v4159 = vrot.slane %v4138, %v4158
        %v4160 = vlaneseq
        %v4161 = vshrl.u32 %v4160, 7
        %v4162 = vsub.s32 3, %v4161
        %v4163 = vrot.slane %v4138, %v4162
        %v4168 = vmul.f32 %v4151, %v4139
        %v4169 = vmul.f32 %v4155, %v4140
        %v4170 = vmul.f32 %v4159, %v4141
        %v4171 = vmul.f32 %v4163, %v4142
        %v4172 = vmul.f32 %v4151, %v4143
        %v4173 = vmul.f32 %v4155, %v4144
        %v4174 = vmul.f32 %v4159, %v4145
        %v4175 = vmul.f32 %v4163, %v4146
        %v4176 = vadd.f32 %v4128, %v4168
        %v4177 = vadd.f32 %v4129, %v4169
        %v4178 = vadd.f32 %v4130, %v4170
        %v4179 = vadd.f32 %v4131, %v4171
        %v4180 = vadd.f32 %v4132, %v4172
        %v4181 = vadd.f32 %v4133, %v4173
        %v4182 = vadd.f32 %v4134, %v4174
        %v4183 = vadd.f32 %v4135, %v4175
        %vm4184 = vcmp.eq.s32.totalorder %v3951, 5
        %v4185 = vsel %vm4184, 1, 0
        %v4186 = vcvt.s32.f32 %v4185
        %v4187 = vld [vmem:[#allocation2 + $0x140] sm:$0xff]
        %v4188 = vld [vmem:[#allocation2 + $0x148] sm:$0xff]
        %v4189 = vld [vmem:[#allocation2 + $0x150] sm:$0xff]
        %v4190 = vld [vmem:[#allocation2 + $0x158] sm:$0xff]
        %v4191 = vld [vmem:[#allocation2 + $0x160] sm:$0xff]
        %v4192 = vld [vmem:[#allocation2 + $0x168] sm:$0xff]
        %v4193 = vld [vmem:[#allocation2 + $0x170] sm:$0xff]
        %v4194 = vld [vmem:[#allocation2 + $0x178] sm:$0xff]
        %v4196 = vlaneseq
        %v4197 = vshrl.u32 %v4196, 7
        %v4198 = vsub.s32 0, %v4197
        %v4199 = vrot.slane %v4186, %v4198
        %v4200 = vlaneseq
        %v4201 = vshrl.u32 %v4200, 7
        %v4202 = vsub.s32 1, %v4201
        %v4203 = vrot.slane %v4186, %v4202
        %v4204 = vlaneseq
        %v4205 = vshrl.u32 %v4204, 7
        %v4206 = vsub.s32 2, %v4205
        %v4207 = vrot.slane %v4186, %v4206
        %v4208 = vlaneseq
        %v4209 = vshrl.u32 %v4208, 7
        %v4210 = vsub.s32 3, %v4209
        %v4211 = vrot.slane %v4186, %v4210
        %v4216 = vmul.f32 %v4199, %v4187
        %v4217 = vmul.f32 %v4203, %v4188
        %v4218 = vmul.f32 %v4207, %v4189
        %v4219 = vmul.f32 %v4211, %v4190
        %v4220 = vmul.f32 %v4199, %v4191
        %v4221 = vmul.f32 %v4203, %v4192
        %v4222 = vmul.f32 %v4207, %v4193
        %v4223 = vmul.f32 %v4211, %v4194
        %v4224 = vadd.f32 %v4176, %v4216
        %v4225 = vadd.f32 %v4177, %v4217
        %v4226 = vadd.f32 %v4178, %v4218
        %v4227 = vadd.f32 %v4179, %v4219
        %v4228 = vadd.f32 %v4180, %v4220
        %v4229 = vadd.f32 %v4181, %v4221
        %v4230 = vadd.f32 %v4182, %v4222
        %v4231 = vadd.f32 %v4183, %v4223
        %vm4232 = vcmp.eq.s32.totalorder %v3951, 6
        %v4233 = vsel %vm4232, 1, 0
        %v4234 = vcvt.s32.f32 %v4233
        %v4235 = vld [vmem:[#allocation2 + $0x180] sm:$0xff]
        %v4236 = vld [vmem:[#allocation2 + $0x188] sm:$0xff]
        %v4237 = vld [vmem:[#allocation2 + $0x190] sm:$0xff]
        %v4238 = vld [vmem:[#allocation2 + $0x198] sm:$0xff]
        %v4239 = vld [vmem:[#allocation2 + $0x1a0] sm:$0xff]
        %v4240 = vld [vmem:[#allocation2 + $0x1a8] sm:$0xff]
        %v4241 = vld [vmem:[#allocation2 + $0x1b0] sm:$0xff]
        %v4242 = vld [vmem:[#allocation2 + $0x1b8] sm:$0xff]
        %v4244 = vlaneseq
        %v4245 = vshrl.u32 %v4244, 7
        %v4246 = vsub.s32 0, %v4245
        %v4247 = vrot.slane %v4234, %v4246
        %v4248 = vlaneseq
        %v4249 = vshrl.u32 %v4248, 7
        %v4250 = vsub.s32 1, %v4249
        %v4251 = vrot.slane %v4234, %v4250
        %v4252 = vlaneseq
        %v4253 = vshrl.u32 %v4252, 7
        %v4254 = vsub.s32 2, %v4253
        %v4255 = vrot.slane %v4234, %v4254
        %v4256 = vlaneseq
        %v4257 = vshrl.u32 %v4256, 7
        %v4258 = vsub.s32 3, %v4257
        %v4259 = vrot.slane %v4234, %v4258
        %v4264 = vmul.f32 %v4247, %v4235
        %v4265 = vmul.f32 %v4251, %v4236
        %v4266 = vmul.f32 %v4255, %v4237
        %v4267 = vmul.f32 %v4259, %v4238
        %v4268 = vmul.f32 %v4247, %v4239
        %v4269 = vmul.f32 %v4251, %v4240
        %v4270 = vmul.f32 %v4255, %v4241
        %v4271 = vmul.f32 %v4259, %v4242
        %v4272 = vadd.f32 %v4224, %v4264
        %v4273 = vadd.f32 %v4225, %v4265
        %v4274 = vadd.f32 %v4226, %v4266
        %v4275 = vadd.f32 %v4227, %v4267
        %v4276 = vadd.f32 %v4228, %v4268
        %v4277 = vadd.f32 %v4229, %v4269
        %v4278 = vadd.f32 %v4230, %v4270
        %v4279 = vadd.f32 %v4231, %v4271
        %vm4280 = vcmp.eq.s32.totalorder %v3951, 7
        %v4281 = vsel %vm4280, 1, 0
        %v4282 = vcvt.s32.f32 %v4281
        %v4283 = vld [vmem:[#allocation2 + $0x1c0] sm:$0xff]
        %v4284 = vld [vmem:[#allocation2 + $0x1c8] sm:$0xff]
        %v4285 = vld [vmem:[#allocation2 + $0x1d0] sm:$0xff]
        %v4286 = vld [vmem:[#allocation2 + $0x1d8] sm:$0xff]
        %v4287 = vld [vmem:[#allocation2 + $0x1e0] sm:$0xff]
        %v4288 = vld [vmem:[#allocation2 + $0x1e8] sm:$0xff]
        %v4289 = vld [vmem:[#allocation2 + $0x1f0] sm:$0xff]
        %v4290 = vld [vmem:[#allocation2 + $0x1f8] sm:$0xff]
        %v4292 = vlaneseq
        %v4293 = vshrl.u32 %v4292, 7
        %v4294 = vsub.s32 0, %v4293
        %v4295 = vrot.slane %v4282, %v4294
        %v4296 = vlaneseq
        %v4297 = vshrl.u32 %v4296, 7
        %v4298 = vsub.s32 1, %v4297
        %v4299 = vrot.slane %v4282, %v4298
        %v4300 = vlaneseq
        %v4301 = vshrl.u32 %v4300, 7
        %v4302 = vsub.s32 2, %v4301
        %v4303 = vrot.slane %v4282, %v4302
        %v4304 = vlaneseq
        %v4305 = vshrl.u32 %v4304, 7
        %v4306 = vsub.s32 3, %v4305
        %v4307 = vrot.slane %v4282, %v4306
        %v4312 = vmul.f32 %v4295, %v4283
        %v4313 = vmul.f32 %v4299, %v4284
        %v4314 = vmul.f32 %v4303, %v4285
        %v4315 = vmul.f32 %v4307, %v4286
        %v4316 = vmul.f32 %v4295, %v4287
        %v4317 = vmul.f32 %v4299, %v4288
        %v4318 = vmul.f32 %v4303, %v4289
        %v4319 = vmul.f32 %v4307, %v4290
        %v4320 = vadd.f32 %v4272, %v4312
        %v4321 = vadd.f32 %v4273, %v4313
        %v4322 = vadd.f32 %v4274, %v4314
        %v4323 = vadd.f32 %v4275, %v4315
        %v4324 = vadd.f32 %v4276, %v4316
        %v4325 = vadd.f32 %v4277, %v4317
        %v4326 = vadd.f32 %v4278, %v4318
        %v4327 = vadd.f32 %v4279, %v4319
        %vm4328 = vcmp.eq.s32.totalorder %v3951, 8
        %v4329 = vsel %vm4328, 1, 0
        %v4330 = vcvt.s32.f32 %v4329
        %v4331 = vld [vmem:[#allocation2 + $0x200] sm:$0xff]
        %v4332 = vld [vmem:[#allocation2 + $0x208] sm:$0xff]
        %v4333 = vld [vmem:[#allocation2 + $0x210] sm:$0xff]
        %v4334 = vld [vmem:[#allocation2 + $0x218] sm:$0xff]
        %v4335 = vld [vmem:[#allocation2 + $0x220] sm:$0xff]
        %v4336 = vld [vmem:[#allocation2 + $0x228] sm:$0xff]
        %v4337 = vld [vmem:[#allocation2 + $0x230] sm:$0xff]
        %v4338 = vld [vmem:[#allocation2 + $0x238] sm:$0xff]
        %v4340 = vlaneseq
        %v4341 = vshrl.u32 %v4340, 7
        %v4342 = vsub.s32 0, %v4341
        %v4343 = vrot.slane %v4330, %v4342
        %v4344 = vlaneseq
        %v4345 = vshrl.u32 %v4344, 7
        %v4346 = vsub.s32 1, %v4345
        %v4347 = vrot.slane %v4330, %v4346
        %v4348 = vlaneseq
        %v4349 = vshrl.u32 %v4348, 7
        %v4350 = vsub.s32 2, %v4349
        %v4351 = vrot.slane %v4330, %v4350
        %v4352 = vlaneseq
        %v4353 = vshrl.u32 %v4352, 7
        %v4354 = vsub.s32 3, %v4353
        %v4355 = vrot.slane %v4330, %v4354
        %v4360 = vmul.f32 %v4343, %v4331
        %v4361 = vmul.f32 %v4347, %v4332
        %v4362 = vmul.f32 %v4351, %v4333
        %v4363 = vmul.f32 %v4355, %v4334
        %v4364 = vmul.f32 %v4343, %v4335
        %v4365 = vmul.f32 %v4347, %v4336
        %v4366 = vmul.f32 %v4351, %v4337
        %v4367 = vmul.f32 %v4355, %v4338
        %v4368 = vadd.f32 %v4320, %v4360
        %v4369 = vadd.f32 %v4321, %v4361
        %v4370 = vadd.f32 %v4322, %v4362
        %v4371 = vadd.f32 %v4323, %v4363
        %v4372 = vadd.f32 %v4324, %v4364
        %v4373 = vadd.f32 %v4325, %v4365
        %v4374 = vadd.f32 %v4326, %v4366
        %v4375 = vadd.f32 %v4327, %v4367
        %vm4376 = vcmp.eq.s32.totalorder %v3951, 9
        %v4377 = vsel %vm4376, 1, 0
        %v4378 = vcvt.s32.f32 %v4377
        %v4379 = vld [vmem:[#allocation2 + $0x240] sm:$0xff]
        %v4380 = vld [vmem:[#allocation2 + $0x248] sm:$0xff]
        %v4381 = vld [vmem:[#allocation2 + $0x250] sm:$0xff]
        %v4382 = vld [vmem:[#allocation2 + $0x258] sm:$0xff]
        %v4383 = vld [vmem:[#allocation2 + $0x260] sm:$0xff]
        %v4384 = vld [vmem:[#allocation2 + $0x268] sm:$0xff]
        %v4385 = vld [vmem:[#allocation2 + $0x270] sm:$0xff]
        %v4386 = vld [vmem:[#allocation2 + $0x278] sm:$0xff]
        %v4388 = vlaneseq
        %v4389 = vshrl.u32 %v4388, 7
        %v4390 = vsub.s32 0, %v4389
        %v4391 = vrot.slane %v4378, %v4390
        %v4392 = vlaneseq
        %v4393 = vshrl.u32 %v4392, 7
        %v4394 = vsub.s32 1, %v4393
        %v4395 = vrot.slane %v4378, %v4394
        %v4396 = vlaneseq
        %v4397 = vshrl.u32 %v4396, 7
        %v4398 = vsub.s32 2, %v4397
        %v4399 = vrot.slane %v4378, %v4398
        %v4400 = vlaneseq
        %v4401 = vshrl.u32 %v4400, 7
        %v4402 = vsub.s32 3, %v4401
        %v4403 = vrot.slane %v4378, %v4402
        %v4408 = vmul.f32 %v4391, %v4379
        %v4409 = vmul.f32 %v4395, %v4380
        %v4410 = vmul.f32 %v4399, %v4381
        %v4411 = vmul.f32 %v4403, %v4382
        %v4412 = vmul.f32 %v4391, %v4383
        %v4413 = vmul.f32 %v4395, %v4384
        %v4414 = vmul.f32 %v4399, %v4385
        %v4415 = vmul.f32 %v4403, %v4386
        %v4416 = vadd.f32 %v4368, %v4408
        %v4417 = vadd.f32 %v4369, %v4409
        %v4418 = vadd.f32 %v4370, %v4410
        %v4419 = vadd.f32 %v4371, %v4411
        %v4420 = vadd.f32 %v4372, %v4412
        %v4421 = vadd.f32 %v4373, %v4413
        %v4422 = vadd.f32 %v4374, %v4414
        %v4423 = vadd.f32 %v4375, %v4415
        %vm4424 = vcmp.eq.s32.totalorder %v3951, 10
        %v4425 = vsel %vm4424, 1, 0
        %v4426 = vcvt.s32.f32 %v4425
        %v4427 = vld [vmem:[#allocation2 + $0x280] sm:$0xff]
        %v4428 = vld [vmem:[#allocation2 + $0x288] sm:$0xff]
        %v4429 = vld [vmem:[#allocation2 + $0x290] sm:$0xff]
        %v4430 = vld [vmem:[#allocation2 + $0x298] sm:$0xff]
        %v4431 = vld [vmem:[#allocation2 + $0x2a0] sm:$0xff]
        %v4432 = vld [vmem:[#allocation2 + $0x2a8] sm:$0xff]
        %v4433 = vld [vmem:[#allocation2 + $0x2b0] sm:$0xff]
        %v4434 = vld [vmem:[#allocation2 + $0x2b8] sm:$0xff]
        %v4436 = vlaneseq
        %v4437 = vshrl.u32 %v4436, 7
        %v4438 = vsub.s32 0, %v4437
        %v4439 = vrot.slane %v4426, %v4438
        %v4440 = vlaneseq
        %v4441 = vshrl.u32 %v4440, 7
        %v4442 = vsub.s32 1, %v4441
        %v4443 = vrot.slane %v4426, %v4442
        %v4444 = vlaneseq
        %v4445 = vshrl.u32 %v4444, 7
        %v4446 = vsub.s32 2, %v4445
        %v4447 = vrot.slane %v4426, %v4446
        %v4448 = vlaneseq
        %v4449 = vshrl.u32 %v4448, 7
        %v4450 = vsub.s32 3, %v4449
        %v4451 = vrot.slane %v4426, %v4450
        %v4456 = vmul.f32 %v4439, %v4427
        %v4457 = vmul.f32 %v4443, %v4428
        %v4458 = vmul.f32 %v4447, %v4429
        %v4459 = vmul.f32 %v4451, %v4430
        %v4460 = vmul.f32 %v4439, %v4431
        %v4461 = vmul.f32 %v4443, %v4432
        %v4462 = vmul.f32 %v4447, %v4433
        %v4463 = vmul.f32 %v4451, %v4434
        %v4464 = vadd.f32 %v4416, %v4456
        %v4465 = vadd.f32 %v4417, %v4457
        %v4466 = vadd.f32 %v4418, %v4458
        %v4467 = vadd.f32 %v4419, %v4459
        %v4468 = vadd.f32 %v4420, %v4460
        %v4469 = vadd.f32 %v4421, %v4461
        %v4470 = vadd.f32 %v4422, %v4462
        %v4471 = vadd.f32 %v4423, %v4463
        %vm4472 = vcmp.eq.s32.totalorder %v3951, 11
        %v4473 = vsel %vm4472, 1, 0
        %v4474 = vcvt.s32.f32 %v4473
        %v4475 = vld [vmem:[#allocation2 + $0x2c0] sm:$0xff]
        %v4476 = vld [vmem:[#allocation2 + $0x2c8] sm:$0xff]
        %v4477 = vld [vmem:[#allocation2 + $0x2d0] sm:$0xff]
        %v4478 = vld [vmem:[#allocation2 + $0x2d8] sm:$0xff]
        %v4479 = vld [vmem:[#allocation2 + $0x2e0] sm:$0xff]
        %v4480 = vld [vmem:[#allocation2 + $0x2e8] sm:$0xff]
        %v4481 = vld [vmem:[#allocation2 + $0x2f0] sm:$0xff]
        %v4482 = vld [vmem:[#allocation2 + $0x2f8] sm:$0xff]
        %v4484 = vlaneseq
        %v4485 = vshrl.u32 %v4484, 7
        %v4486 = vsub.s32 0, %v4485
        %v4487 = vrot.slane %v4474, %v4486
        %v4488 = vlaneseq
        %v4489 = vshrl.u32 %v4488, 7
        %v4490 = vsub.s32 1, %v4489
        %v4491 = vrot.slane %v4474, %v4490
        %v4492 = vlaneseq
        %v4493 = vshrl.u32 %v4492, 7
        %v4494 = vsub.s32 2, %v4493
        %v4495 = vrot.slane %v4474, %v4494
        %v4496 = vlaneseq
        %v4497 = vshrl.u32 %v4496, 7
        %v4498 = vsub.s32 3, %v4497
        %v4499 = vrot.slane %v4474, %v4498
        %v4504 = vmul.f32 %v4487, %v4475
        %v4505 = vmul.f32 %v4491, %v4476
        %v4506 = vmul.f32 %v4495, %v4477
        %v4507 = vmul.f32 %v4499, %v4478
        %v4508 = vmul.f32 %v4487, %v4479
        %v4509 = vmul.f32 %v4491, %v4480
        %v4510 = vmul.f32 %v4495, %v4481
        %v4511 = vmul.f32 %v4499, %v4482
        %v4512 = vadd.f32 %v4464, %v4504
        %v4513 = vadd.f32 %v4465, %v4505
        %v4514 = vadd.f32 %v4466, %v4506
        %v4515 = vadd.f32 %v4467, %v4507
        %v4516 = vadd.f32 %v4468, %v4508
        %v4517 = vadd.f32 %v4469, %v4509
        %v4518 = vadd.f32 %v4470, %v4510
        %v4519 = vadd.f32 %v4471, %v4511
        %vm4520 = vcmp.eq.s32.totalorder %v3951, 12
        %v4521 = vsel %vm4520, 1, 0
        %v4522 = vcvt.s32.f32 %v4521
        %v4523 = vld [vmem:[#allocation2 + $0x300] sm:$0xff]
        %v4524 = vld [vmem:[#allocation2 + $0x308] sm:$0xff]
        %v4525 = vld [vmem:[#allocation2 + $0x310] sm:$0xff]
        %v4526 = vld [vmem:[#allocation2 + $0x318] sm:$0xff]
        %v4527 = vld [vmem:[#allocation2 + $0x320] sm:$0xff]
        %v4528 = vld [vmem:[#allocation2 + $0x328] sm:$0xff]
        %v4529 = vld [vmem:[#allocation2 + $0x330] sm:$0xff]
        %v4530 = vld [vmem:[#allocation2 + $0x338] sm:$0xff]
        %v4532 = vlaneseq
        %v4533 = vshrl.u32 %v4532, 7
        %v4534 = vsub.s32 0, %v4533
        %v4535 = vrot.slane %v4522, %v4534
        %v4536 = vlaneseq
        %v4537 = vshrl.u32 %v4536, 7
        %v4538 = vsub.s32 1, %v4537
        %v4539 = vrot.slane %v4522, %v4538
        %v4540 = vlaneseq
        %v4541 = vshrl.u32 %v4540, 7
        %v4542 = vsub.s32 2, %v4541
        %v4543 = vrot.slane %v4522, %v4542
        %v4544 = vlaneseq
        %v4545 = vshrl.u32 %v4544, 7
        %v4546 = vsub.s32 3, %v4545
        %v4547 = vrot.slane %v4522, %v4546
        %v4552 = vmul.f32 %v4535, %v4523
        %v4553 = vmul.f32 %v4539, %v4524
        %v4554 = vmul.f32 %v4543, %v4525
        %v4555 = vmul.f32 %v4547, %v4526
        %v4556 = vmul.f32 %v4535, %v4527
        %v4557 = vmul.f32 %v4539, %v4528
        %v4558 = vmul.f32 %v4543, %v4529
        %v4559 = vmul.f32 %v4547, %v4530
        %v4560 = vadd.f32 %v4512, %v4552
        %v4561 = vadd.f32 %v4513, %v4553
        %v4562 = vadd.f32 %v4514, %v4554
        %v4563 = vadd.f32 %v4515, %v4555
        %v4564 = vadd.f32 %v4516, %v4556
        %v4565 = vadd.f32 %v4517, %v4557
        %v4566 = vadd.f32 %v4518, %v4558
        %v4567 = vadd.f32 %v4519, %v4559
        %vm4568 = vcmp.eq.s32.totalorder %v3951, 13
        %v4569 = vsel %vm4568, 1, 0
        %v4570 = vcvt.s32.f32 %v4569
        %v4571 = vld [vmem:[#allocation2 + $0x340] sm:$0xff]
        %v4572 = vld [vmem:[#allocation2 + $0x348] sm:$0xff]
        %v4573 = vld [vmem:[#allocation2 + $0x350] sm:$0xff]
        %v4574 = vld [vmem:[#allocation2 + $0x358] sm:$0xff]
        %v4575 = vld [vmem:[#allocation2 + $0x360] sm:$0xff]
        %v4576 = vld [vmem:[#allocation2 + $0x368] sm:$0xff]
        %v4577 = vld [vmem:[#allocation2 + $0x370] sm:$0xff]
        %v4578 = vld [vmem:[#allocation2 + $0x378] sm:$0xff]
        %v4580 = vlaneseq
        %v4581 = vshrl.u32 %v4580, 7
        %v4582 = vsub.s32 0, %v4581
        %v4583 = vrot.slane %v4570, %v4582
        %v4584 = vlaneseq
        %v4585 = vshrl.u32 %v4584, 7
        %v4586 = vsub.s32 1, %v4585
        %v4587 = vrot.slane %v4570, %v4586
        %v4588 = vlaneseq
        %v4589 = vshrl.u32 %v4588, 7
        %v4590 = vsub.s32 2, %v4589
        %v4591 = vrot.slane %v4570, %v4590
        %v4592 = vlaneseq
        %v4593 = vshrl.u32 %v4592, 7
        %v4594 = vsub.s32 3, %v4593
        %v4595 = vrot.slane %v4570, %v4594
        %v4600 = vmul.f32 %v4583, %v4571
        %v4601 = vmul.f32 %v4587, %v4572
        %v4602 = vmul.f32 %v4591, %v4573
        %v4603 = vmul.f32 %v4595, %v4574
        %v4604 = vmul.f32 %v4583, %v4575
        %v4605 = vmul.f32 %v4587, %v4576
        %v4606 = vmul.f32 %v4591, %v4577
        %v4607 = vmul.f32 %v4595, %v4578
        %v4608 = vadd.f32 %v4560, %v4600
        %v4609 = vadd.f32 %v4561, %v4601
        %v4610 = vadd.f32 %v4562, %v4602
        %v4611 = vadd.f32 %v4563, %v4603
        %v4612 = vadd.f32 %v4564, %v4604
        %v4613 = vadd.f32 %v4565, %v4605
        %v4614 = vadd.f32 %v4566, %v4606
        %v4615 = vadd.f32 %v4567, %v4607
        %vm4616 = vcmp.eq.s32.totalorder %v3951, 14
        %v4617 = vsel %vm4616, 1, 0
        %v4618 = vcvt.s32.f32 %v4617
        %v4619 = vld [vmem:[#allocation2 + $0x380] sm:$0xff]
        %v4620 = vld [vmem:[#allocation2 + $0x388] sm:$0xff]
        %v4621 = vld [vmem:[#allocation2 + $0x390] sm:$0xff]
        %v4622 = vld [vmem:[#allocation2 + $0x398] sm:$0xff]
        %v4623 = vld [vmem:[#allocation2 + $0x3a0] sm:$0xff]
        %v4624 = vld [vmem:[#allocation2 + $0x3a8] sm:$0xff]
        %v4625 = vld [vmem:[#allocation2 + $0x3b0] sm:$0xff]
        %v4626 = vld [vmem:[#allocation2 + $0x3b8] sm:$0xff]
        %v4628 = vlaneseq
        %v4629 = vshrl.u32 %v4628, 7
        %v4630 = vsub.s32 0, %v4629
        %v4631 = vrot.slane %v4618, %v4630
        %v4632 = vlaneseq
        %v4633 = vshrl.u32 %v4632, 7
        %v4634 = vsub.s32 1, %v4633
        %v4635 = vrot.slane %v4618, %v4634
        %v4636 = vlaneseq
        %v4637 = vshrl.u32 %v4636, 7
        %v4638 = vsub.s32 2, %v4637
        %v4639 = vrot.slane %v4618, %v4638
        %v4640 = vlaneseq
        %v4641 = vshrl.u32 %v4640, 7
        %v4642 = vsub.s32 3, %v4641
        %v4643 = vrot.slane %v4618, %v4642
        %v4648 = vmul.f32 %v4631, %v4619
        %v4649 = vmul.f32 %v4635, %v4620
        %v4650 = vmul.f32 %v4639, %v4621
        %v4651 = vmul.f32 %v4643, %v4622
        %v4652 = vmul.f32 %v4631, %v4623
        %v4653 = vmul.f32 %v4635, %v4624
        %v4654 = vmul.f32 %v4639, %v4625
        %v4655 = vmul.f32 %v4643, %v4626
        %v4656 = vadd.f32 %v4608, %v4648
        %v4657 = vadd.f32 %v4609, %v4649
        %v4658 = vadd.f32 %v4610, %v4650
        %v4659 = vadd.f32 %v4611, %v4651
        %v4660 = vadd.f32 %v4612, %v4652
        %v4661 = vadd.f32 %v4613, %v4653
        %v4662 = vadd.f32 %v4614, %v4654
        %v4663 = vadd.f32 %v4615, %v4655
        %vm4664 = vcmp.eq.s32.totalorder %v3951, 15
        %v4665 = vsel %vm4664, 1, 0
        %v4666 = vcvt.s32.f32 %v4665
        %v4667 = vld [vmem:[#allocation2 + $0x3c0] sm:$0xff]
        %v4668 = vld [vmem:[#allocation2 + $0x3c8] sm:$0xff]
        %v4669 = vld [vmem:[#allocation2 + $0x3d0] sm:$0xff]
        %v4670 = vld [vmem:[#allocation2 + $0x3d8] sm:$0xff]
        %v4671 = vld [vmem:[#allocation2 + $0x3e0] sm:$0xff]
        %v4672 = vld [vmem:[#allocation2 + $0x3e8] sm:$0xff]
        %v4673 = vld [vmem:[#allocation2 + $0x3f0] sm:$0xff]
        %v4674 = vld [vmem:[#allocation2 + $0x3f8] sm:$0xff]
        %v4676 = vlaneseq
        %v4677 = vshrl.u32 %v4676, 7
        %v4678 = vsub.s32 0, %v4677
        %v4679 = vrot.slane %v4666, %v4678
        %v4680 = vlaneseq
        %v4681 = vshrl.u32 %v4680, 7
        %v4682 = vsub.s32 1, %v4681
        %v4683 = vrot.slane %v4666, %v4682
        %v4684 = vlaneseq
        %v4685 = vshrl.u32 %v4684, 7
        %v4686 = vsub.s32 2, %v4685
        %v4687 = vrot.slane %v4666, %v4686
        %v4688 = vlaneseq
        %v4689 = vshrl.u32 %v4688, 7
        %v4690 = vsub.s32 3, %v4689
        %v4691 = vrot.slane %v4666, %v4690
        %v4696 = vmul.f32 %v4679, %v4667
        %v4697 = vmul.f32 %v4683, %v4668
        %v4698 = vmul.f32 %v4687, %v4669
        %v4699 = vmul.f32 %v4691, %v4670
        %v4700 = vmul.f32 %v4679, %v4671
        %v4701 = vmul.f32 %v4683, %v4672
        %v4702 = vmul.f32 %v4687, %v4673
        %v4703 = vmul.f32 %v4691, %v4674
        %v4704 = vadd.f32 %v4656, %v4696
        %v4705 = vadd.f32 %v4657, %v4697
        %v4706 = vadd.f32 %v4658, %v4698
        %v4707 = vadd.f32 %v4659, %v4699
        %v4708 = vadd.f32 %v4660, %v4700
        %v4709 = vadd.f32 %v4661, %v4701
        %v4710 = vadd.f32 %v4662, %v4702
        %v4711 = vadd.f32 %v4663, %v4703
        %s4712 = scalar_lea.vmem %s2, 384
        %v4713 = vld [vmem:[%s4712] sm:$0xf]
        %v4714 = vld [vmem:[%s4712 + $0x4] sm:$0xf]
        %v4715 = vld [vmem:[%s4712 + $0x8] sm:$0xf]
        %v4716 = vld [vmem:[%s4712 + $0xc] sm:$0xf]
        %v4717 = vld [vmem:[%s4712 + $0x10] sm:$0xf]
        %v4718 = vld [vmem:[%s4712 + $0x14] sm:$0xf]
        %v4719 = vld [vmem:[%s4712 + $0x18] sm:$0xf]
        %v4720 = vld [vmem:[%s4712 + $0x1c] sm:$0xf]
        %v4721 = vld [vmem:[%s4712 + $0x20] sm:$0xf]
        %v4722 = vld [vmem:[%s4712 + $0x24] sm:$0xf]
        %v4723 = vld [vmem:[%s4712 + $0x28] sm:$0xf]
        %v4724 = vld [vmem:[%s4712 + $0x2c] sm:$0xf]
        %v4725 = vld [vmem:[%s4712 + $0x30] sm:$0xf]
        %v4726 = vld [vmem:[%s4712 + $0x34] sm:$0xf]
        %v4727 = vld [vmem:[%s4712 + $0x38] sm:$0xf]
        %v4728 = vld [vmem:[%s4712 + $0x3c] sm:$0xf]
        %v4729 = vld [vmem:[%s4712 + $0x40] sm:$0xf]
        %v4730 = vld [vmem:[%s4712 + $0x44] sm:$0xf]
        %v4731 = vld [vmem:[%s4712 + $0x48] sm:$0xf]
        %v4732 = vld [vmem:[%s4712 + $0x4c] sm:$0xf]
        %v4733 = vld [vmem:[%s4712 + $0x50] sm:$0xf]
        %v4734 = vld [vmem:[%s4712 + $0x54] sm:$0xf]
        %v4735 = vld [vmem:[%s4712 + $0x58] sm:$0xf]
        %v4736 = vld [vmem:[%s4712 + $0x5c] sm:$0xf]
        %v4737 = vld [vmem:[%s4712 + $0x60] sm:$0xf]
        %v4738 = vld [vmem:[%s4712 + $0x64] sm:$0xf]
        %v4739 = vld [vmem:[%s4712 + $0x68] sm:$0xf]
        %v4740 = vld [vmem:[%s4712 + $0x6c] sm:$0xf]
        %v4741 = vld [vmem:[%s4712 + $0x70] sm:$0xf]
        %v4742 = vld [vmem:[%s4712 + $0x74] sm:$0xf]
        %v4743 = vld [vmem:[%s4712 + $0x78] sm:$0xf]
        %v4744 = vld [vmem:[%s4712 + $0x7c] sm:$0xf]
        %v4745 = vpack.c.bf16 %v4708, %v4704
        %v4746 = vpack.c.bf16 %v4709, %v4705
        %v4747 = vpack.c.bf16 %v4710, %v4706
        %v4748 = vpack.c.bf16 %v4711, %v4707
        %v4781 = vunpack.c.l.b16 %v4713
        %v4782 = vunpack.c.l.b16 %v4714
        %v4783 = vunpack.c.l.b16 %v4715
        %v4784 = vunpack.c.l.b16 %v4716
        %v4785 = vunpack.c.l.b16 %v4717
        %v4786 = vunpack.c.l.b16 %v4718
        %v4787 = vunpack.c.l.b16 %v4719
        %v4788 = vunpack.c.l.b16 %v4720
        %v4789 = vunpack.c.l.b16 %v4721
        %v4790 = vunpack.c.l.b16 %v4722
        %v4791 = vunpack.c.l.b16 %v4723
        %v4792 = vunpack.c.l.b16 %v4724
        %v4793 = vunpack.c.l.b16 %v4725
        %v4794 = vunpack.c.l.b16 %v4726
        %v4795 = vunpack.c.l.b16 %v4727
        %v4796 = vunpack.c.l.b16 %v4728
        %v4797 = vunpack.c.l.b16 %v4729
        %v4798 = vunpack.c.l.b16 %v4730
        %v4799 = vunpack.c.l.b16 %v4731
        %v4800 = vunpack.c.l.b16 %v4732
        %v4801 = vunpack.c.l.b16 %v4733
        %v4802 = vunpack.c.l.b16 %v4734
        %v4803 = vunpack.c.l.b16 %v4735
        %v4804 = vunpack.c.l.b16 %v4736
        %v4805 = vunpack.c.l.b16 %v4737
        %v4806 = vunpack.c.l.b16 %v4738
        %v4807 = vunpack.c.l.b16 %v4739
        %v4808 = vunpack.c.l.b16 %v4740
        %v4809 = vunpack.c.l.b16 %v4741
        %v4810 = vunpack.c.l.b16 %v4742
        %v4811 = vunpack.c.l.b16 %v4743
        %v4812 = vunpack.c.l.b16 %v4744
        %v4813 = vpack.c.b16 %v4782, %v4781
        %v4814 = vpack.c.b16 %v4784, %v4783
        %v4815 = vpack.c.b16 %v4786, %v4785
        %v4816 = vpack.c.b16 %v4788, %v4787
        %v4817 = vpack.c.b16 %v4790, %v4789
        %v4818 = vpack.c.b16 %v4792, %v4791
        %v4819 = vpack.c.b16 %v4794, %v4793
        %v4820 = vpack.c.b16 %v4796, %v4795
        %v4821 = vpack.c.b16 %v4798, %v4797
        %v4822 = vpack.c.b16 %v4800, %v4799
        %v4823 = vpack.c.b16 %v4802, %v4801
        %v4824 = vpack.c.b16 %v4804, %v4803
        %v4825 = vpack.c.b16 %v4806, %v4805
        %v4826 = vpack.c.b16 %v4808, %v4807
        %v4827 = vpack.c.b16 %v4810, %v4809
        %v4828 = vpack.c.b16 %v4812, %v4811
        %v4830 = vsel %vm505, %v4813, 0
        %v4833 = vsel %vm505, %v4814, 0
        %v4836 = vsel %vm505, %v4815, 0
        %v4839 = vsel %vm505, %v4816, 0
        %v4842 = vsel %vm505, %v4817, 0
        %v4845 = vsel %vm505, %v4818, 0
        %v4848 = vsel %vm505, %v4819, 0
        %v4851 = vsel %vm505, %v4820, 0
        %v4854 = vsel %vm505, %v4821, 0
        %v4857 = vsel %vm505, %v4822, 0
        %v4860 = vsel %vm505, %v4823, 0
        %v4863 = vsel %vm505, %v4824, 0
        %v4866 = vsel %vm505, %v4825, 0
        %v4869 = vsel %vm505, %v4826, 0
        %v4872 = vsel %vm505, %v4827, 0
        %v4875 = vsel %vm505, %v4828, 0
        %4877 = vmatprep.subr.bf16.mxu0 %v4746
        %4878 = vmatpush1.bf16.msra.mxu0 %v4745
        %4879 = vmatprep.subr.bf16.mxu0 0
        %4880 = vmatpush1.bf16.msra.mxu0 0
        %4881 = vmatprep.subr.bf16.mxu0 0
        %4882 = vmatpush1.bf16.msra.mxu0 0
        %4883 = vmatprep.subr.bf16.mxu0 0
        %4884 = vmatpush1.bf16.msra.mxu0 0
        %4885 = vmatprep.subr.bf16.mxu0 0
        %4886 = vmatpush1.bf16.msra.mxu0 0
        %4887 = vmatprep.subr.bf16.mxu0 0
        %4888 = vmatpush1.bf16.msra.mxu0 0
        %4889 = vmatprep.subr.bf16.mxu0 0
        %4890 = vmatpush1.bf16.msra.mxu0 0
        %4891 = vmatprep.subr.bf16.mxu0 0
        %4892 = vmatpush1.bf16.msra.mxu0 0
        %4893 = vmatprep.subr.bf16.mxu0 0
        %4894 = vmatpush1.bf16.msra.mxu0 0
        %4895 = vmatprep.subr.bf16.mxu0 0
        %4896 = vmatpush1.bf16.msra.mxu0 0
        %4897 = vmatprep.subr.bf16.mxu0 0
        %4898 = vmatpush1.bf16.msra.mxu0 0
        %4899 = vmatprep.subr.bf16.mxu0 0
        %4900 = vmatpush1.bf16.msra.mxu0 0
        %4901 = vmatprep.subr.bf16.mxu0 0
        %4902 = vmatpush1.bf16.msra.mxu0 0
        %4903 = vmatprep.subr.bf16.mxu0 0
        %4904 = vmatpush1.bf16.msra.mxu0 0
        %4905 = vmatprep.subr.bf16.mxu0 0
        %4906 = vmatpush1.bf16.msra.mxu0 0
        %4907 = vmatprep.subr.bf16.mxu0 0
        %4908 = vmatpush1.bf16.msra.mxu0 0
        %4909 = vmatprep.mubr.bf16.mxu0 0
        %4910 = vmatmul.mubr.bf16.gmra.mrb[0].mxu0 %v4830
        %v4911 = vpop.f32.mrb[0].mxu0
        %v4912 = vadd.f32 0.0, %v4911
        %v4913 = vpop.f32.mrb[0].mxu0
        %v4914 = vadd.f32 0.0, %v4913
        %v4915 = vpop.f32.mrb[0].mxu0
        %v4916 = vadd.f32 0.0, %v4915
        %v4917 = vpop.f32.mrb[0].mxu0
        %v4918 = vadd.f32 0.0, %v4917
        %4919 = vmatprep.mubr.bf16.mxu0 0
        %4920 = vmatmul.mubr.bf16.gmra.mrb[0].mxu0 %v4833
        %v4921 = vpop.f32.mrb[0].mxu0
        %v4922 = vadd.f32 0.0, %v4921
        %v4923 = vpop.f32.mrb[0].mxu0
        %v4924 = vadd.f32 0.0, %v4923
        %v4925 = vpop.f32.mrb[0].mxu0
        %v4926 = vadd.f32 0.0, %v4925
        %v4927 = vpop.f32.mrb[0].mxu0
        %v4928 = vadd.f32 0.0, %v4927
        %4929 = vmatprep.mubr.bf16.mxu0 0
        %4930 = vmatmul.mubr.bf16.gmra.mrb[0].mxu0 %v4836
        %v4931 = vpop.f32.mrb[0].mxu0
        %v4932 = vadd.f32 0.0, %v4931
        %v4933 = vpop.f32.mrb[0].mxu0
        %v4934 = vadd.f32 0.0, %v4933
        %v4935 = vpop.f32.mrb[0].mxu0
        %v4936 = vadd.f32 0.0, %v4935
        %v4937 = vpop.f32.mrb[0].mxu0
        %v4938 = vadd.f32 0.0, %v4937
        %4939 = vmatprep.mubr.bf16.mxu0 0
        %4940 = vmatmul.mubr.bf16.gmra.mrb[0].mxu0 %v4839
        %v4941 = vpop.f32.mrb[0].mxu0
        %v4942 = vadd.f32 0.0, %v4941
        %v4943 = vpop.f32.mrb[0].mxu0
        %v4944 = vadd.f32 0.0, %v4943
        %v4945 = vpop.f32.mrb[0].mxu0
        %v4946 = vadd.f32 0.0, %v4945
        %v4947 = vpop.f32.mrb[0].mxu0
        %v4948 = vadd.f32 0.0, %v4947
        %4949 = vmatprep.mubr.bf16.mxu0 0
        %4950 = vmatmul.mubr.bf16.gmra.mrb[0].mxu0 %v4842
        %v4951 = vpop.f32.mrb[0].mxu0
        %v4952 = vadd.f32 0.0, %v4951
        %v4953 = vpop.f32.mrb[0].mxu0
        %v4954 = vadd.f32 0.0, %v4953
        %v4955 = vpop.f32.mrb[0].mxu0
        %v4956 = vadd.f32 0.0, %v4955
        %v4957 = vpop.f32.mrb[0].mxu0
        %v4958 = vadd.f32 0.0, %v4957
        %4959 = vmatprep.mubr.bf16.mxu0 0
        %4960 = vmatmul.mubr.bf16.gmra.mrb[0].mxu0 %v4845
        %v4961 = vpop.f32.mrb[0].mxu0
        %v4962 = vadd.f32 0.0, %v4961
        %v4963 = vpop.f32.mrb[0].mxu0
        %v4964 = vadd.f32 0.0, %v4963
        %v4965 = vpop.f32.mrb[0].mxu0
        %v4966 = vadd.f32 0.0, %v4965
        %v4967 = vpop.f32.mrb[0].mxu0
        %v4968 = vadd.f32 0.0, %v4967
        %4969 = vmatprep.mubr.bf16.mxu0 0
        %4970 = vmatmul.mubr.bf16.gmra.mrb[0].mxu0 %v4848
        %v4971 = vpop.f32.mrb[0].mxu0
        %v4972 = vadd.f32 0.0, %v4971
        %v4973 = vpop.f32.mrb[0].mxu0
        %v4974 = vadd.f32 0.0, %v4973
        %v4975 = vpop.f32.mrb[0].mxu0
        %v4976 = vadd.f32 0.0, %v4975
        %v4977 = vpop.f32.mrb[0].mxu0
        %v4978 = vadd.f32 0.0, %v4977
        %4979 = vmatprep.mubr.bf16.mxu0 0
        %4980 = vmatmul.mubr.bf16.gmra.mrb[0].mxu0 %v4851
        %v4981 = vpop.f32.mrb[0].mxu0
        %v4982 = vadd.f32 0.0, %v4981
        %v4983 = vpop.f32.mrb[0].mxu0
        %v4984 = vadd.f32 0.0, %v4983
        %v4985 = vpop.f32.mrb[0].mxu0
        %v4986 = vadd.f32 0.0, %v4985
        %v4987 = vpop.f32.mrb[0].mxu0
        %v4988 = vadd.f32 0.0, %v4987
        %4989 = vmatprep.mubr.bf16.mxu0 0
        %4990 = vmatmul.mubr.bf16.gmra.mrb[0].mxu0 %v4854
        %v4991 = vpop.f32.mrb[0].mxu0
        %v4992 = vadd.f32 0.0, %v4991
        %v4993 = vpop.f32.mrb[0].mxu0
        %v4994 = vadd.f32 0.0, %v4993
        %v4995 = vpop.f32.mrb[0].mxu0
        %v4996 = vadd.f32 0.0, %v4995
        %v4997 = vpop.f32.mrb[0].mxu0
        %v4998 = vadd.f32 0.0, %v4997
        %4999 = vmatprep.mubr.bf16.mxu0 0
        %5000 = vmatmul.mubr.bf16.gmra.mrb[0].mxu0 %v4857
        %v5001 = vpop.f32.mrb[0].mxu0
        %v5002 = vadd.f32 0.0, %v5001
        %v5003 = vpop.f32.mrb[0].mxu0
        %v5004 = vadd.f32 0.0, %v5003
        %v5005 = vpop.f32.mrb[0].mxu0
        %v5006 = vadd.f32 0.0, %v5005
        %v5007 = vpop.f32.mrb[0].mxu0
        %v5008 = vadd.f32 0.0, %v5007
        %5009 = vmatprep.mubr.bf16.mxu0 0
        %5010 = vmatmul.mubr.bf16.gmra.mrb[0].mxu0 %v4860
        %v5011 = vpop.f32.mrb[0].mxu0
        %v5012 = vadd.f32 0.0, %v5011
        %v5013 = vpop.f32.mrb[0].mxu0
        %v5014 = vadd.f32 0.0, %v5013
        %v5015 = vpop.f32.mrb[0].mxu0
        %v5016 = vadd.f32 0.0, %v5015
        %v5017 = vpop.f32.mrb[0].mxu0
        %v5018 = vadd.f32 0.0, %v5017
        %5019 = vmatprep.mubr.bf16.mxu0 0
        %5020 = vmatmul.mubr.bf16.gmra.mrb[0].mxu0 %v4863
        %v5021 = vpop.f32.mrb[0].mxu0
        %v5022 = vadd.f32 0.0, %v5021
        %v5023 = vpop.f32.mrb[0].mxu0
        %v5024 = vadd.f32 0.0, %v5023
        %v5025 = vpop.f32.mrb[0].mxu0
        %v5026 = vadd.f32 0.0, %v5025
        %v5027 = vpop.f32.mrb[0].mxu0
        %v5028 = vadd.f32 0.0, %v5027
        %5029 = vmatprep.mubr.bf16.mxu0 0
        %5030 = vmatmul.mubr.bf16.gmra.mrb[0].mxu0 %v4866
        %v5031 = vpop.f32.mrb[0].mxu0
        %v5032 = vadd.f32 0.0, %v5031
        %v5033 = vpop.f32.mrb[0].mxu0
        %v5034 = vadd.f32 0.0, %v5033
        %v5035 = vpop.f32.mrb[0].mxu0
        %v5036 = vadd.f32 0.0, %v5035
        %v5037 = vpop.f32.mrb[0].mxu0
        %v5038 = vadd.f32 0.0, %v5037
        %5039 = vmatprep.mubr.bf16.mxu0 0
        %5040 = vmatmul.mubr.bf16.gmra.mrb[0].mxu0 %v4869
        %v5041 = vpop.f32.mrb[0].mxu0
        %v5042 = vadd.f32 0.0, %v5041
        %v5043 = vpop.f32.mrb[0].mxu0
        %v5044 = vadd.f32 0.0, %v5043
        %v5045 = vpop.f32.mrb[0].mxu0
        %v5046 = vadd.f32 0.0, %v5045
        %v5047 = vpop.f32.mrb[0].mxu0
        %v5048 = vadd.f32 0.0, %v5047
        %5049 = vmatprep.mubr.bf16.mxu0 0
        %5050 = vmatmul.mubr.bf16.gmra.mrb[0].mxu0 %v4872
        %v5051 = vpop.f32.mrb[0].mxu0
        %v5052 = vadd.f32 0.0, %v5051
        %v5053 = vpop.f32.mrb[0].mxu0
        %v5054 = vadd.f32 0.0, %v5053
        %v5055 = vpop.f32.mrb[0].mxu0
        %v5056 = vadd.f32 0.0, %v5055
        %v5057 = vpop.f32.mrb[0].mxu0
        %v5058 = vadd.f32 0.0, %v5057
        %5059 = vmatprep.mubr.bf16.mxu0 0
        %5060 = vmatmul.mubr.bf16.gmra.mrb[0].mxu0 %v4875
        %v5061 = vpop.f32.mrb[0].mxu0
        %v5062 = vadd.f32 0.0, %v5061
        %v5063 = vpop.f32.mrb[0].mxu0
        %v5064 = vadd.f32 0.0, %v5063
        %v5065 = vpop.f32.mrb[0].mxu0
        %v5066 = vadd.f32 0.0, %v5065
        %v5067 = vpop.f32.mrb[0].mxu0
        %v5068 = vadd.f32 0.0, %v5067
        %5069 = vdwg.mxu0
        %5070 = vmatprep.subr.bf16.mxu0 %v4748
        %5071 = vmatpush1.bf16.msra.mxu0 %v4747
        %5072 = vmatprep.subr.bf16.mxu0 0
        %5073 = vmatpush1.bf16.msra.mxu0 0
        %5074 = vmatprep.subr.bf16.mxu0 0
        %5075 = vmatpush1.bf16.msra.mxu0 0
        %5076 = vmatprep.subr.bf16.mxu0 0
        %5077 = vmatpush1.bf16.msra.mxu0 0
        %5078 = vmatprep.subr.bf16.mxu0 0
        %5079 = vmatpush1.bf16.msra.mxu0 0
        %5080 = vmatprep.subr.bf16.mxu0 0
        %5081 = vmatpush1.bf16.msra.mxu0 0
        %5082 = vmatprep.subr.bf16.mxu0 0
        %5083 = vmatpush1.bf16.msra.mxu0 0
        %5084 = vmatprep.subr.bf16.mxu0 0
        %5085 = vmatpush1.bf16.msra.mxu0 0
        %5086 = vmatprep.subr.bf16.mxu0 0
        %5087 = vmatpush1.bf16.msra.mxu0 0
        %5088 = vmatprep.subr.bf16.mxu0 0
        %5089 = vmatpush1.bf16.msra.mxu0 0
        %5090 = vmatprep.subr.bf16.mxu0 0
        %5091 = vmatpush1.bf16.msra.mxu0 0
        %5092 = vmatprep.subr.bf16.mxu0 0
        %5093 = vmatpush1.bf16.msra.mxu0 0
        %5094 = vmatprep.subr.bf16.mxu0 0
        %5095 = vmatpush1.bf16.msra.mxu0 0
        %5096 = vmatprep.subr.bf16.mxu0 0
        %5097 = vmatpush1.bf16.msra.mxu0 0
        %5098 = vmatprep.subr.bf16.mxu0 0
        %5099 = vmatpush1.bf16.msra.mxu0 0
        %5100 = vmatprep.subr.bf16.mxu0 0
        %5101 = vmatpush1.bf16.msra.mxu0 0
        %5102 = vmatprep.mubr.bf16.mxu0 0
        %5103 = vmatmul.mubr.bf16.gmra.mrb[0].mxu0 %v4830
        %v5104 = vpop.f32.mrb[0].mxu0
        %v5105 = vadd.f32 0.0, %v5104
        %v5106 = vpop.f32.mrb[0].mxu0
        %v5107 = vadd.f32 0.0, %v5106
        %v5108 = vpop.f32.mrb[0].mxu0
        %v5109 = vadd.f32 0.0, %v5108
        %v5110 = vpop.f32.mrb[0].mxu0
        %v5111 = vadd.f32 0.0, %v5110
        %5112 = vmatprep.mubr.bf16.mxu0 0
        %5113 = vmatmul.mubr.bf16.gmra.mrb[0].mxu0 %v4833
        %v5114 = vpop.f32.mrb[0].mxu0
        %v5115 = vadd.f32 0.0, %v5114
        %v5116 = vpop.f32.mrb[0].mxu0
        %v5117 = vadd.f32 0.0, %v5116
        %v5118 = vpop.f32.mrb[0].mxu0
        %v5119 = vadd.f32 0.0, %v5118
        %v5120 = vpop.f32.mrb[0].mxu0
        %v5121 = vadd.f32 0.0, %v5120
        %5122 = vmatprep.mubr.bf16.mxu0 0
        %5123 = vmatmul.mubr.bf16.gmra.mrb[0].mxu0 %v4836
        %v5124 = vpop.f32.mrb[0].mxu0
        %v5125 = vadd.f32 0.0, %v5124
        %v5126 = vpop.f32.mrb[0].mxu0
        %v5127 = vadd.f32 0.0, %v5126
        %v5128 = vpop.f32.mrb[0].mxu0
        %v5129 = vadd.f32 0.0, %v5128
        %v5130 = vpop.f32.mrb[0].mxu0
        %v5131 = vadd.f32 0.0, %v5130
        %5132 = vmatprep.mubr.bf16.mxu0 0
        %5133 = vmatmul.mubr.bf16.gmra.mrb[0].mxu0 %v4839
        %v5134 = vpop.f32.mrb[0].mxu0
        %v5135 = vadd.f32 0.0, %v5134
        %v5136 = vpop.f32.mrb[0].mxu0
        %v5137 = vadd.f32 0.0, %v5136
        %v5138 = vpop.f32.mrb[0].mxu0
        %v5139 = vadd.f32 0.0, %v5138
        %v5140 = vpop.f32.mrb[0].mxu0
        %v5141 = vadd.f32 0.0, %v5140
        %5142 = vmatprep.mubr.bf16.mxu0 0
        %5143 = vmatmul.mubr.bf16.gmra.mrb[0].mxu0 %v4842
        %v5144 = vpop.f32.mrb[0].mxu0
        %v5145 = vadd.f32 0.0, %v5144
        %v5146 = vpop.f32.mrb[0].mxu0
        %v5147 = vadd.f32 0.0, %v5146
        %v5148 = vpop.f32.mrb[0].mxu0
        %v5149 = vadd.f32 0.0, %v5148
        %v5150 = vpop.f32.mrb[0].mxu0
        %v5151 = vadd.f32 0.0, %v5150
        %5152 = vmatprep.mubr.bf16.mxu0 0
        %5153 = vmatmul.mubr.bf16.gmra.mrb[0].mxu0 %v4845
        %v5154 = vpop.f32.mrb[0].mxu0
        %v5155 = vadd.f32 0.0, %v5154
        %v5156 = vpop.f32.mrb[0].mxu0
        %v5157 = vadd.f32 0.0, %v5156
        %v5158 = vpop.f32.mrb[0].mxu0
        %v5159 = vadd.f32 0.0, %v5158
        %v5160 = vpop.f32.mrb[0].mxu0
        %v5161 = vadd.f32 0.0, %v5160
        %5162 = vmatprep.mubr.bf16.mxu0 0
        %5163 = vmatmul.mubr.bf16.gmra.mrb[0].mxu0 %v4848
        %v5164 = vpop.f32.mrb[0].mxu0
        %v5165 = vadd.f32 0.0, %v5164
        %v5166 = vpop.f32.mrb[0].mxu0
        %v5167 = vadd.f32 0.0, %v5166
        %v5168 = vpop.f32.mrb[0].mxu0
        %v5169 = vadd.f32 0.0, %v5168
        %v5170 = vpop.f32.mrb[0].mxu0
        %v5171 = vadd.f32 0.0, %v5170
        %5172 = vmatprep.mubr.bf16.mxu0 0
        %5173 = vmatmul.mubr.bf16.gmra.mrb[0].mxu0 %v4851
        %v5174 = vpop.f32.mrb[0].mxu0
        %v5175 = vadd.f32 0.0, %v5174
        %v5176 = vpop.f32.mrb[0].mxu0
        %v5177 = vadd.f32 0.0, %v5176
        %v5178 = vpop.f32.mrb[0].mxu0
        %v5179 = vadd.f32 0.0, %v5178
        %v5180 = vpop.f32.mrb[0].mxu0
        %v5181 = vadd.f32 0.0, %v5180
        %5182 = vmatprep.mubr.bf16.mxu0 0
        %5183 = vmatmul.mubr.bf16.gmra.mrb[0].mxu0 %v4854
        %v5184 = vpop.f32.mrb[0].mxu0
        %v5185 = vadd.f32 0.0, %v5184
        %v5186 = vpop.f32.mrb[0].mxu0
        %v5187 = vadd.f32 0.0, %v5186
        %v5188 = vpop.f32.mrb[0].mxu0
        %v5189 = vadd.f32 0.0, %v5188
        %v5190 = vpop.f32.mrb[0].mxu0
        %v5191 = vadd.f32 0.0, %v5190
        %5192 = vmatprep.mubr.bf16.mxu0 0
        %5193 = vmatmul.mubr.bf16.gmra.mrb[0].mxu0 %v4857
        %v5194 = vpop.f32.mrb[0].mxu0
        %v5195 = vadd.f32 0.0, %v5194
        %v5196 = vpop.f32.mrb[0].mxu0
        %v5197 = vadd.f32 0.0, %v5196
        %v5198 = vpop.f32.mrb[0].mxu0
        %v5199 = vadd.f32 0.0, %v5198
        %v5200 = vpop.f32.mrb[0].mxu0
        %v5201 = vadd.f32 0.0, %v5200
        %5202 = vmatprep.mubr.bf16.mxu0 0
        %5203 = vmatmul.mubr.bf16.gmra.mrb[0].mxu0 %v4860
        %v5204 = vpop.f32.mrb[0].mxu0
        %v5205 = vadd.f32 0.0, %v5204
        %v5206 = vpop.f32.mrb[0].mxu0
        %v5207 = vadd.f32 0.0, %v5206
        %v5208 = vpop.f32.mrb[0].mxu0
        %v5209 = vadd.f32 0.0, %v5208
        %v5210 = vpop.f32.mrb[0].mxu0
        %v5211 = vadd.f32 0.0, %v5210
        %5212 = vmatprep.mubr.bf16.mxu0 0
        %5213 = vmatmul.mubr.bf16.gmra.mrb[0].mxu0 %v4863
        %v5214 = vpop.f32.mrb[0].mxu0
        %v5215 = vadd.f32 0.0, %v5214
        %v5216 = vpop.f32.mrb[0].mxu0
        %v5217 = vadd.f32 0.0, %v5216
        %v5218 = vpop.f32.mrb[0].mxu0
        %v5219 = vadd.f32 0.0, %v5218
        %v5220 = vpop.f32.mrb[0].mxu0
        %v5221 = vadd.f32 0.0, %v5220
        %5222 = vmatprep.mubr.bf16.mxu0 0
        %5223 = vmatmul.mubr.bf16.gmra.mrb[0].mxu0 %v4866
        %v5224 = vpop.f32.mrb[0].mxu0
        %v5225 = vadd.f32 0.0, %v5224
        %v5226 = vpop.f32.mrb[0].mxu0
        %v5227 = vadd.f32 0.0, %v5226
        %v5228 = vpop.f32.mrb[0].mxu0
        %v5229 = vadd.f32 0.0, %v5228
        %v5230 = vpop.f32.mrb[0].mxu0
        %v5231 = vadd.f32 0.0, %v5230
        %5232 = vmatprep.mubr.bf16.mxu0 0
        %5233 = vmatmul.mubr.bf16.gmra.mrb[0].mxu0 %v4869
        %v5234 = vpop.f32.mrb[0].mxu0
        %v5235 = vadd.f32 0.0, %v5234
        %v5236 = vpop.f32.mrb[0].mxu0
        %v5237 = vadd.f32 0.0, %v5236
        %v5238 = vpop.f32.mrb[0].mxu0
        %v5239 = vadd.f32 0.0, %v5238
        %v5240 = vpop.f32.mrb[0].mxu0
        %v5241 = vadd.f32 0.0, %v5240
        %5242 = vmatprep.mubr.bf16.mxu0 0
        %5243 = vmatmul.mubr.bf16.gmra.mrb[0].mxu0 %v4872
        %v5244 = vpop.f32.mrb[0].mxu0
        %v5245 = vadd.f32 0.0, %v5244
        %v5246 = vpop.f32.mrb[0].mxu0
        %v5247 = vadd.f32 0.0, %v5246
        %v5248 = vpop.f32.mrb[0].mxu0
        %v5249 = vadd.f32 0.0, %v5248
        %v5250 = vpop.f32.mrb[0].mxu0
        %v5251 = vadd.f32 0.0, %v5250
        %5252 = vmatprep.mubr.bf16.mxu0 0
        %5253 = vmatmul.mubr.bf16.gmra.mrb[0].mxu0 %v4875
        %v5254 = vpop.f32.mrb[0].mxu0
        %v5255 = vadd.f32 0.0, %v5254
        %v5256 = vpop.f32.mrb[0].mxu0
        %v5257 = vadd.f32 0.0, %v5256
        %v5258 = vpop.f32.mrb[0].mxu0
        %v5259 = vadd.f32 0.0, %v5258
        %v5260 = vpop.f32.mrb[0].mxu0
        %v5261 = vadd.f32 0.0, %v5260
        %5262 = vdwg.mxu0
        %5263 = vst [vmem:[#allocation2] sm:$0xff] %v4912
        %5264 = vst [vmem:[#allocation2 + $0x8] sm:$0xff] %v4914
        %5265 = vst [vmem:[#allocation2 + $0x10] sm:$0xff] %v5105
        %5266 = vst [vmem:[#allocation2 + $0x18] sm:$0xff] %v5107
        %5267 = vst [vmem:[#allocation2 + $0x20] sm:$0xff] %v4916
        %5268 = vst [vmem:[#allocation2 + $0x28] sm:$0xff] %v4918
        %5269 = vst [vmem:[#allocation2 + $0x30] sm:$0xff] %v5109
        %5270 = vst [vmem:[#allocation2 + $0x38] sm:$0xff] %v5111
        %5271 = vst [vmem:[#allocation2 + $0x40] sm:$0xff] %v4922
        %5272 = vst [vmem:[#allocation2 + $0x48] sm:$0xff] %v4924
        %5273 = vst [vmem:[#allocation2 + $0x50] sm:$0xff] %v5115
        %5274 = vst [vmem:[#allocation2 + $0x58] sm:$0xff] %v5117
        %5275 = vst [vmem:[#allocation2 + $0x60] sm:$0xff] %v4926
        %5276 = vst [vmem:[#allocation2 + $0x68] sm:$0xff] %v4928
        %5277 = vst [vmem:[#allocation2 + $0x70] sm:$0xff] %v5119
        %5278 = vst [vmem:[#allocation2 + $0x78] sm:$0xff] %v5121
        %5279 = vst [vmem:[#allocation2 + $0x80] sm:$0xff] %v4932
        %5280 = vst [vmem:[#allocation2 + $0x88] sm:$0xff] %v4934
        %5281 = vst [vmem:[#allocation2 + $0x90] sm:$0xff] %v5125
        %5282 = vst [vmem:[#allocation2 + $0x98] sm:$0xff] %v5127
        %5283 = vst [vmem:[#allocation2 + $0xa0] sm:$0xff] %v4936
        %5284 = vst [vmem:[#allocation2 + $0xa8] sm:$0xff] %v4938
        %5285 = vst [vmem:[#allocation2 + $0xb0] sm:$0xff] %v5129
        %5286 = vst [vmem:[#allocation2 + $0xb8] sm:$0xff] %v5131
        %5287 = vst [vmem:[#allocation2 + $0xc0] sm:$0xff] %v4942
        %5288 = vst [vmem:[#allocation2 + $0xc8] sm:$0xff] %v4944
        %5289 = vst [vmem:[#allocation2 + $0xd0] sm:$0xff] %v5135
        %5290 = vst [vmem:[#allocation2 + $0xd8] sm:$0xff] %v5137
        %5291 = vst [vmem:[#allocation2 + $0xe0] sm:$0xff] %v4946
        %5292 = vst [vmem:[#allocation2 + $0xe8] sm:$0xff] %v4948
        %5293 = vst [vmem:[#allocation2 + $0xf0] sm:$0xff] %v5139
        %5294 = vst [vmem:[#allocation2 + $0xf8] sm:$0xff] %v5141
        %5295 = vst [vmem:[#allocation2 + $0x100] sm:$0xff] %v4952
        %5296 = vst [vmem:[#allocation2 + $0x108] sm:$0xff] %v4954
        %5297 = vst [vmem:[#allocation2 + $0x110] sm:$0xff] %v5145
        %5298 = vst [vmem:[#allocation2 + $0x118] sm:$0xff] %v5147
        %5299 = vst [vmem:[#allocation2 + $0x120] sm:$0xff] %v4956
        %5300 = vst [vmem:[#allocation2 + $0x128] sm:$0xff] %v4958
        %5301 = vst [vmem:[#allocation2 + $0x130] sm:$0xff] %v5149
        %5302 = vst [vmem:[#allocation2 + $0x138] sm:$0xff] %v5151
        %5303 = vst [vmem:[#allocation2 + $0x140] sm:$0xff] %v4962
        %5304 = vst [vmem:[#allocation2 + $0x148] sm:$0xff] %v4964
        %5305 = vst [vmem:[#allocation2 + $0x150] sm:$0xff] %v5155
        %5306 = vst [vmem:[#allocation2 + $0x158] sm:$0xff] %v5157
        %5307 = vst [vmem:[#allocation2 + $0x160] sm:$0xff] %v4966
        %5308 = vst [vmem:[#allocation2 + $0x168] sm:$0xff] %v4968
        %5309 = vst [vmem:[#allocation2 + $0x170] sm:$0xff] %v5159
        %5310 = vst [vmem:[#allocation2 + $0x178] sm:$0xff] %v5161
        %5311 = vst [vmem:[#allocation2 + $0x180] sm:$0xff] %v4972
        %5312 = vst [vmem:[#allocation2 + $0x188] sm:$0xff] %v4974
        %5313 = vst [vmem:[#allocation2 + $0x190] sm:$0xff] %v5165
        %5314 = vst [vmem:[#allocation2 + $0x198] sm:$0xff] %v5167
        %5315 = vst [vmem:[#allocation2 + $0x1a0] sm:$0xff] %v4976
        %5316 = vst [vmem:[#allocation2 + $0x1a8] sm:$0xff] %v4978
        %5317 = vst [vmem:[#allocation2 + $0x1b0] sm:$0xff] %v5169
        %5318 = vst [vmem:[#allocation2 + $0x1b8] sm:$0xff] %v5171
        %5319 = vst [vmem:[#allocation2 + $0x1c0] sm:$0xff] %v4982
        %5320 = vst [vmem:[#allocation2 + $0x1c8] sm:$0xff] %v4984
        %5321 = vst [vmem:[#allocation2 + $0x1d0] sm:$0xff] %v5175
        %5322 = vst [vmem:[#allocation2 + $0x1d8] sm:$0xff] %v5177
        %5323 = vst [vmem:[#allocation2 + $0x1e0] sm:$0xff] %v4986
        %5324 = vst [vmem:[#allocation2 + $0x1e8] sm:$0xff] %v4988
        %5325 = vst [vmem:[#allocation2 + $0x1f0] sm:$0xff] %v5179
        %5326 = vst [vmem:[#allocation2 + $0x1f8] sm:$0xff] %v5181
        %5327 = vst [vmem:[#allocation2 + $0x200] sm:$0xff] %v4992
        %5328 = vst [vmem:[#allocation2 + $0x208] sm:$0xff] %v4994
        %5329 = vst [vmem:[#allocation2 + $0x210] sm:$0xff] %v5185
        %5330 = vst [vmem:[#allocation2 + $0x218] sm:$0xff] %v5187
        %5331 = vst [vmem:[#allocation2 + $0x220] sm:$0xff] %v4996
        %5332 = vst [vmem:[#allocation2 + $0x228] sm:$0xff] %v4998
        %5333 = vst [vmem:[#allocation2 + $0x230] sm:$0xff] %v5189
        %5334 = vst [vmem:[#allocation2 + $0x238] sm:$0xff] %v5191
        %5335 = vst [vmem:[#allocation2 + $0x240] sm:$0xff] %v5002
        %5336 = vst [vmem:[#allocation2 + $0x248] sm:$0xff] %v5004
        %5337 = vst [vmem:[#allocation2 + $0x250] sm:$0xff] %v5195
        %5338 = vst [vmem:[#allocation2 + $0x258] sm:$0xff] %v5197
        %5339 = vst [vmem:[#allocation2 + $0x260] sm:$0xff] %v5006
        %5340 = vst [vmem:[#allocation2 + $0x268] sm:$0xff] %v5008
        %5341 = vst [vmem:[#allocation2 + $0x270] sm:$0xff] %v5199
        %5342 = vst [vmem:[#allocation2 + $0x278] sm:$0xff] %v5201
        %5343 = vst [vmem:[#allocation2 + $0x280] sm:$0xff] %v5012
        %5344 = vst [vmem:[#allocation2 + $0x288] sm:$0xff] %v5014
        %5345 = vst [vmem:[#allocation2 + $0x290] sm:$0xff] %v5205
        %5346 = vst [vmem:[#allocation2 + $0x298] sm:$0xff] %v5207
        %5347 = vst [vmem:[#allocation2 + $0x2a0] sm:$0xff] %v5016
        %5348 = vst [vmem:[#allocation2 + $0x2a8] sm:$0xff] %v5018
        %5349 = vst [vmem:[#allocation2 + $0x2b0] sm:$0xff] %v5209
        %5350 = vst [vmem:[#allocation2 + $0x2b8] sm:$0xff] %v5211
        %5351 = vst [vmem:[#allocation2 + $0x2c0] sm:$0xff] %v5022
        %5352 = vst [vmem:[#allocation2 + $0x2c8] sm:$0xff] %v5024
        %5353 = vst [vmem:[#allocation2 + $0x2d0] sm:$0xff] %v5215
        %5354 = vst [vmem:[#allocation2 + $0x2d8] sm:$0xff] %v5217
        %5355 = vst [vmem:[#allocation2 + $0x2e0] sm:$0xff] %v5026
        %5356 = vst [vmem:[#allocation2 + $0x2e8] sm:$0xff] %v5028
        %5357 = vst [vmem:[#allocation2 + $0x2f0] sm:$0xff] %v5219
        %5358 = vst [vmem:[#allocation2 + $0x2f8] sm:$0xff] %v5221
        %5359 = vst [vmem:[#allocation2 + $0x300] sm:$0xff] %v5032
        %5360 = vst [vmem:[#allocation2 + $0x308] sm:$0xff] %v5034
        %5361 = vst [vmem:[#allocation2 + $0x310] sm:$0xff] %v5225
        %5362 = vst [vmem:[#allocation2 + $0x318] sm:$0xff] %v5227
        %5363 = vst [vmem:[#allocation2 + $0x320] sm:$0xff] %v5036
        %5364 = vst [vmem:[#allocation2 + $0x328] sm:$0xff] %v5038
        %5365 = vst [vmem:[#allocation2 + $0x330] sm:$0xff] %v5229
        %5366 = vst [vmem:[#allocation2 + $0x338] sm:$0xff] %v5231
        %5367 = vst [vmem:[#allocation2 + $0x340] sm:$0xff] %v5042
        %5368 = vst [vmem:[#allocation2 + $0x348] sm:$0xff] %v5044
        %5369 = vst [vmem:[#allocation2 + $0x350] sm:$0xff] %v5235
        %5370 = vst [vmem:[#allocation2 + $0x358] sm:$0xff] %v5237
        %5371 = vst [vmem:[#allocation2 + $0x360] sm:$0xff] %v5046
        %5372 = vst [vmem:[#allocation2 + $0x368] sm:$0xff] %v5048
        %5373 = vst [vmem:[#allocation2 + $0x370] sm:$0xff] %v5239
        %5374 = vst [vmem:[#allocation2 + $0x378] sm:$0xff] %v5241
        %5375 = vst [vmem:[#allocation2 + $0x380] sm:$0xff] %v5052
        %5376 = vst [vmem:[#allocation2 + $0x388] sm:$0xff] %v5054
        %5377 = vst [vmem:[#allocation2 + $0x390] sm:$0xff] %v5245
        %5378 = vst [vmem:[#allocation2 + $0x398] sm:$0xff] %v5247
        %5379 = vst [vmem:[#allocation2 + $0x3a0] sm:$0xff] %v5056
        %5380 = vst [vmem:[#allocation2 + $0x3a8] sm:$0xff] %v5058
        %5381 = vst [vmem:[#allocation2 + $0x3b0] sm:$0xff] %v5249
        %5382 = vst [vmem:[#allocation2 + $0x3b8] sm:$0xff] %v5251
        %5383 = vst [vmem:[#allocation2 + $0x3c0] sm:$0xff] %v5062
        %5384 = vst [vmem:[#allocation2 + $0x3c8] sm:$0xff] %v5064
        %5385 = vst [vmem:[#allocation2 + $0x3d0] sm:$0xff] %v5255
        %5386 = vst [vmem:[#allocation2 + $0x3d8] sm:$0xff] %v5257
        %5387 = vst [vmem:[#allocation2 + $0x3e0] sm:$0xff] %v5066
        %5388 = vst [vmem:[#allocation2 + $0x3e8] sm:$0xff] %v5068
        %5389 = vst [vmem:[#allocation2 + $0x3f0] sm:$0xff] %v5259
        %5390 = vst [vmem:[#allocation2 + $0x3f8] sm:$0xff] %v5261
        %s5391 = scalar_lea.vmem %s196, 4
        %v5392 = vld [vmem:[%s5391] ss:$8 sm:$0xf]
        %vm5393 = vcmp.eq.s32.totalorder %v5392, 0
        %v5394 = vsel %vm5393, 1, 0
        %v5395 = vcvt.s32.f32 %v5394
        %v5396 = vld [vmem:[#allocation2] sm:$0xff]
        %v5397 = vld [vmem:[#allocation2 + $0x8] sm:$0xff]
        %v5398 = vld [vmem:[#allocation2 + $0x10] sm:$0xff]
        %v5399 = vld [vmem:[#allocation2 + $0x18] sm:$0xff]
        %v5400 = vld [vmem:[#allocation2 + $0x20] sm:$0xff]
        %v5401 = vld [vmem:[#allocation2 + $0x28] sm:$0xff]
        %v5402 = vld [vmem:[#allocation2 + $0x30] sm:$0xff]
        %v5403 = vld [vmem:[#allocation2 + $0x38] sm:$0xff]
        %v5405 = vlaneseq
        %v5406 = vshrl.u32 %v5405, 7
        %v5407 = vsub.s32 0, %v5406
        %v5408 = vrot.slane %v5395, %v5407
        %v5409 = vlaneseq
        %v5410 = vshrl.u32 %v5409, 7
        %v5411 = vsub.s32 1, %v5410
        %v5412 = vrot.slane %v5395, %v5411
        %v5413 = vlaneseq
        %v5414 = vshrl.u32 %v5413, 7
        %v5415 = vsub.s32 2, %v5414
        %v5416 = vrot.slane %v5395, %v5415
        %v5417 = vlaneseq
        %v5418 = vshrl.u32 %v5417, 7
        %v5419 = vsub.s32 3, %v5418
        %v5420 = vrot.slane %v5395, %v5419
        %v5425 = vmul.f32 %v5408, %v5396
        %v5426 = vmul.f32 %v5412, %v5397
        %v5427 = vmul.f32 %v5416, %v5398
        %v5428 = vmul.f32 %v5420, %v5399
        %v5429 = vmul.f32 %v5408, %v5400
        %v5430 = vmul.f32 %v5412, %v5401
        %v5431 = vmul.f32 %v5416, %v5402
        %v5432 = vmul.f32 %v5420, %v5403
        %vm5433 = vcmp.eq.s32.totalorder %v5392, 1
        %v5434 = vsel %vm5433, 1, 0
        %v5435 = vcvt.s32.f32 %v5434
        %v5436 = vld [vmem:[#allocation2 + $0x40] sm:$0xff]
        %v5437 = vld [vmem:[#allocation2 + $0x48] sm:$0xff]
        %v5438 = vld [vmem:[#allocation2 + $0x50] sm:$0xff]
        %v5439 = vld [vmem:[#allocation2 + $0x58] sm:$0xff]
        %v5440 = vld [vmem:[#allocation2 + $0x60] sm:$0xff]
        %v5441 = vld [vmem:[#allocation2 + $0x68] sm:$0xff]
        %v5442 = vld [vmem:[#allocation2 + $0x70] sm:$0xff]
        %v5443 = vld [vmem:[#allocation2 + $0x78] sm:$0xff]
        %v5445 = vlaneseq
        %v5446 = vshrl.u32 %v5445, 7
        %v5447 = vsub.s32 0, %v5446
        %v5448 = vrot.slane %v5435, %v5447
        %v5449 = vlaneseq
        %v5450 = vshrl.u32 %v5449, 7
        %v5451 = vsub.s32 1, %v5450
        %v5452 = vrot.slane %v5435, %v5451
        %v5453 = vlaneseq
        %v5454 = vshrl.u32 %v5453, 7
        %v5455 = vsub.s32 2, %v5454
        %v5456 = vrot.slane %v5435, %v5455
        %v5457 = vlaneseq
        %v5458 = vshrl.u32 %v5457, 7
        %v5459 = vsub.s32 3, %v5458
        %v5460 = vrot.slane %v5435, %v5459
        %v5465 = vmul.f32 %v5448, %v5436
        %v5466 = vmul.f32 %v5452, %v5437
        %v5467 = vmul.f32 %v5456, %v5438
        %v5468 = vmul.f32 %v5460, %v5439
        %v5469 = vmul.f32 %v5448, %v5440
        %v5470 = vmul.f32 %v5452, %v5441
        %v5471 = vmul.f32 %v5456, %v5442
        %v5472 = vmul.f32 %v5460, %v5443
        %v5473 = vadd.f32 %v5425, %v5465
        %v5474 = vadd.f32 %v5426, %v5466
        %v5475 = vadd.f32 %v5427, %v5467
        %v5476 = vadd.f32 %v5428, %v5468
        %v5477 = vadd.f32 %v5429, %v5469
        %v5478 = vadd.f32 %v5430, %v5470
        %v5479 = vadd.f32 %v5431, %v5471
        %v5480 = vadd.f32 %v5432, %v5472
        %vm5481 = vcmp.eq.s32.totalorder %v5392, 2
        %v5482 = vsel %vm5481, 1, 0
        %v5483 = vcvt.s32.f32 %v5482
        %v5484 = vld [vmem:[#allocation2 + $0x80] sm:$0xff]
        %v5485 = vld [vmem:[#allocation2 + $0x88] sm:$0xff]
        %v5486 = vld [vmem:[#allocation2 + $0x90] sm:$0xff]
        %v5487 = vld [vmem:[#allocation2 + $0x98] sm:$0xff]
        %v5488 = vld [vmem:[#allocation2 + $0xa0] sm:$0xff]
        %v5489 = vld [vmem:[#allocation2 + $0xa8] sm:$0xff]
        %v5490 = vld [vmem:[#allocation2 + $0xb0] sm:$0xff]
        %v5491 = vld [vmem:[#allocation2 + $0xb8] sm:$0xff]
        %v5493 = vlaneseq
        %v5494 = vshrl.u32 %v5493, 7
        %v5495 = vsub.s32 0, %v5494
        %v5496 = vrot.slane %v5483, %v5495
        %v5497 = vlaneseq
        %v5498 = vshrl.u32 %v5497, 7
        %v5499 = vsub.s32 1, %v5498
        %v5500 = vrot.slane %v5483, %v5499
        %v5501 = vlaneseq
        %v5502 = vshrl.u32 %v5501, 7
        %v5503 = vsub.s32 2, %v5502
        %v5504 = vrot.slane %v5483, %v5503
        %v5505 = vlaneseq
        %v5506 = vshrl.u32 %v5505, 7
        %v5507 = vsub.s32 3, %v5506
        %v5508 = vrot.slane %v5483, %v5507
        %v5513 = vmul.f32 %v5496, %v5484
        %v5514 = vmul.f32 %v5500, %v5485
        %v5515 = vmul.f32 %v5504, %v5486
        %v5516 = vmul.f32 %v5508, %v5487
        %v5517 = vmul.f32 %v5496, %v5488
        %v5518 = vmul.f32 %v5500, %v5489
        %v5519 = vmul.f32 %v5504, %v5490
        %v5520 = vmul.f32 %v5508, %v5491
        %v5521 = vadd.f32 %v5473, %v5513
        %v5522 = vadd.f32 %v5474, %v5514
        %v5523 = vadd.f32 %v5475, %v5515
        %v5524 = vadd.f32 %v5476, %v5516
        %v5525 = vadd.f32 %v5477, %v5517
        %v5526 = vadd.f32 %v5478, %v5518
        %v5527 = vadd.f32 %v5479, %v5519
        %v5528 = vadd.f32 %v5480, %v5520
        %vm5529 = vcmp.eq.s32.totalorder %v5392, 3
        %v5530 = vsel %vm5529, 1, 0
        %v5531 = vcvt.s32.f32 %v5530
        %v5532 = vld [vmem:[#allocation2 + $0xc0] sm:$0xff]
        %v5533 = vld [vmem:[#allocation2 + $0xc8] sm:$0xff]
        %v5534 = vld [vmem:[#allocation2 + $0xd0] sm:$0xff]
        %v5535 = vld [vmem:[#allocation2 + $0xd8] sm:$0xff]
        %v5536 = vld [vmem:[#allocation2 + $0xe0] sm:$0xff]
        %v5537 = vld [vmem:[#allocation2 + $0xe8] sm:$0xff]
        %v5538 = vld [vmem:[#allocation2 + $0xf0] sm:$0xff]
        %v5539 = vld [vmem:[#allocation2 + $0xf8] sm:$0xff]
        %v5541 = vlaneseq
        %v5542 = vshrl.u32 %v5541, 7
        %v5543 = vsub.s32 0, %v5542
        %v5544 = vrot.slane %v5531, %v5543
        %v5545 = vlaneseq
        %v5546 = vshrl.u32 %v5545, 7
        %v5547 = vsub.s32 1, %v5546
        %v5548 = vrot.slane %v5531, %v5547
        %v5549 = vlaneseq
        %v5550 = vshrl.u32 %v5549, 7
        %v5551 = vsub.s32 2, %v5550
        %v5552 = vrot.slane %v5531, %v5551
        %v5553 = vlaneseq
        %v5554 = vshrl.u32 %v5553, 7
        %v5555 = vsub.s32 3, %v5554
        %v5556 = vrot.slane %v5531, %v5555
        %v5561 = vmul.f32 %v5544, %v5532
        %v5562 = vmul.f32 %v5548, %v5533
        %v5563 = vmul.f32 %v5552, %v5534
        %v5564 = vmul.f32 %v5556, %v5535
        %v5565 = vmul.f32 %v5544, %v5536
        %v5566 = vmul.f32 %v5548, %v5537
        %v5567 = vmul.f32 %v5552, %v5538
        %v5568 = vmul.f32 %v5556, %v5539
        %v5569 = vadd.f32 %v5521, %v5561
        %v5570 = vadd.f32 %v5522, %v5562
        %v5571 = vadd.f32 %v5523, %v5563
        %v5572 = vadd.f32 %v5524, %v5564
        %v5573 = vadd.f32 %v5525, %v5565
        %v5574 = vadd.f32 %v5526, %v5566
        %v5575 = vadd.f32 %v5527, %v5567
        %v5576 = vadd.f32 %v5528, %v5568
        %vm5577 = vcmp.eq.s32.totalorder %v5392, 4
        %v5578 = vsel %vm5577, 1, 0
        %v5579 = vcvt.s32.f32 %v5578
        %v5580 = vld [vmem:[#allocation2 + $0x100] sm:$0xff]
        %v5581 = vld [vmem:[#allocation2 + $0x108] sm:$0xff]
        %v5582 = vld [vmem:[#allocation2 + $0x110] sm:$0xff]
        %v5583 = vld [vmem:[#allocation2 + $0x118] sm:$0xff]
        %v5584 = vld [vmem:[#allocation2 + $0x120] sm:$0xff]
        %v5585 = vld [vmem:[#allocation2 + $0x128] sm:$0xff]
        %v5586 = vld [vmem:[#allocation2 + $0x130] sm:$0xff]
        %v5587 = vld [vmem:[#allocation2 + $0x138] sm:$0xff]
        %v5589 = vlaneseq
        %v5590 = vshrl.u32 %v5589, 7
        %v5591 = vsub.s32 0, %v5590
        %v5592 = vrot.slane %v5579, %v5591
        %v5593 = vlaneseq
        %v5594 = vshrl.u32 %v5593, 7
        %v5595 = vsub.s32 1, %v5594
        %v5596 = vrot.slane %v5579, %v5595
        %v5597 = vlaneseq
        %v5598 = vshrl.u32 %v5597, 7
        %v5599 = vsub.s32 2, %v5598
        %v5600 = vrot.slane %v5579, %v5599
        %v5601 = vlaneseq
        %v5602 = vshrl.u32 %v5601, 7
        %v5603 = vsub.s32 3, %v5602
        %v5604 = vrot.slane %v5579, %v5603
        %v5609 = vmul.f32 %v5592, %v5580
        %v5610 = vmul.f32 %v5596, %v5581
        %v5611 = vmul.f32 %v5600, %v5582
        %v5612 = vmul.f32 %v5604, %v5583
        %v5613 = vmul.f32 %v5592, %v5584
        %v5614 = vmul.f32 %v5596, %v5585
        %v5615 = vmul.f32 %v5600, %v5586
        %v5616 = vmul.f32 %v5604, %v5587
        %v5617 = vadd.f32 %v5569, %v5609
        %v5618 = vadd.f32 %v5570, %v5610
        %v5619 = vadd.f32 %v5571, %v5611
        %v5620 = vadd.f32 %v5572, %v5612
        %v5621 = vadd.f32 %v5573, %v5613
        %v5622 = vadd.f32 %v5574, %v5614
        %v5623 = vadd.f32 %v5575, %v5615
        %v5624 = vadd.f32 %v5576, %v5616
        %vm5625 = vcmp.eq.s32.totalorder %v5392, 5
        %v5626 = vsel %vm5625, 1, 0
        %v5627 = vcvt.s32.f32 %v5626
        %v5628 = vld [vmem:[#allocation2 + $0x140] sm:$0xff]
        %v5629 = vld [vmem:[#allocation2 + $0x148] sm:$0xff]
        %v5630 = vld [vmem:[#allocation2 + $0x150] sm:$0xff]
        %v5631 = vld [vmem:[#allocation2 + $0x158] sm:$0xff]
        %v5632 = vld [vmem:[#allocation2 + $0x160] sm:$0xff]
        %v5633 = vld [vmem:[#allocation2 + $0x168] sm:$0xff]
        %v5634 = vld [vmem:[#allocation2 + $0x170] sm:$0xff]
        %v5635 = vld [vmem:[#allocation2 + $0x178] sm:$0xff]
        %v5637 = vlaneseq
        %v5638 = vshrl.u32 %v5637, 7
        %v5639 = vsub.s32 0, %v5638
        %v5640 = vrot.slane %v5627, %v5639
        %v5641 = vlaneseq
        %v5642 = vshrl.u32 %v5641, 7
        %v5643 = vsub.s32 1, %v5642
        %v5644 = vrot.slane %v5627, %v5643
        %v5645 = vlaneseq
        %v5646 = vshrl.u32 %v5645, 7
        %v5647 = vsub.s32 2, %v5646
        %v5648 = vrot.slane %v5627, %v5647
        %v5649 = vlaneseq
        %v5650 = vshrl.u32 %v5649, 7
        %v5651 = vsub.s32 3, %v5650
        %v5652 = vrot.slane %v5627, %v5651
        %v5657 = vmul.f32 %v5640, %v5628
        %v5658 = vmul.f32 %v5644, %v5629
        %v5659 = vmul.f32 %v5648, %v5630
        %v5660 = vmul.f32 %v5652, %v5631
        %v5661 = vmul.f32 %v5640, %v5632
        %v5662 = vmul.f32 %v5644, %v5633
        %v5663 = vmul.f32 %v5648, %v5634
        %v5664 = vmul.f32 %v5652, %v5635
        %v5665 = vadd.f32 %v5617, %v5657
        %v5666 = vadd.f32 %v5618, %v5658
        %v5667 = vadd.f32 %v5619, %v5659
        %v5668 = vadd.f32 %v5620, %v5660
        %v5669 = vadd.f32 %v5621, %v5661
        %v5670 = vadd.f32 %v5622, %v5662
        %v5671 = vadd.f32 %v5623, %v5663
        %v5672 = vadd.f32 %v5624, %v5664
        %vm5673 = vcmp.eq.s32.totalorder %v5392, 6
        %v5674 = vsel %vm5673, 1, 0
        %v5675 = vcvt.s32.f32 %v5674
        %v5676 = vld [vmem:[#allocation2 + $0x180] sm:$0xff]
        %v5677 = vld [vmem:[#allocation2 + $0x188] sm:$0xff]
        %v5678 = vld [vmem:[#allocation2 + $0x190] sm:$0xff]
        %v5679 = vld [vmem:[#allocation2 + $0x198] sm:$0xff]
        %v5680 = vld [vmem:[#allocation2 + $0x1a0] sm:$0xff]
        %v5681 = vld [vmem:[#allocation2 + $0x1a8] sm:$0xff]
        %v5682 = vld [vmem:[#allocation2 + $0x1b0] sm:$0xff]
        %v5683 = vld [vmem:[#allocation2 + $0x1b8] sm:$0xff]
        %v5685 = vlaneseq
        %v5686 = vshrl.u32 %v5685, 7
        %v5687 = vsub.s32 0, %v5686
        %v5688 = vrot.slane %v5675, %v5687
        %v5689 = vlaneseq
        %v5690 = vshrl.u32 %v5689, 7
        %v5691 = vsub.s32 1, %v5690
        %v5692 = vrot.slane %v5675, %v5691
        %v5693 = vlaneseq
        %v5694 = vshrl.u32 %v5693, 7
        %v5695 = vsub.s32 2, %v5694
        %v5696 = vrot.slane %v5675, %v5695
        %v5697 = vlaneseq
        %v5698 = vshrl.u32 %v5697, 7
        %v5699 = vsub.s32 3, %v5698
        %v5700 = vrot.slane %v5675, %v5699
        %v5705 = vmul.f32 %v5688, %v5676
        %v5706 = vmul.f32 %v5692, %v5677
        %v5707 = vmul.f32 %v5696, %v5678
        %v5708 = vmul.f32 %v5700, %v5679
        %v5709 = vmul.f32 %v5688, %v5680
        %v5710 = vmul.f32 %v5692, %v5681
        %v5711 = vmul.f32 %v5696, %v5682
        %v5712 = vmul.f32 %v5700, %v5683
        %v5713 = vadd.f32 %v5665, %v5705
        %v5714 = vadd.f32 %v5666, %v5706
        %v5715 = vadd.f32 %v5667, %v5707
        %v5716 = vadd.f32 %v5668, %v5708
        %v5717 = vadd.f32 %v5669, %v5709
        %v5718 = vadd.f32 %v5670, %v5710
        %v5719 = vadd.f32 %v5671, %v5711
        %v5720 = vadd.f32 %v5672, %v5712
        %vm5721 = vcmp.eq.s32.totalorder %v5392, 7
        %v5722 = vsel %vm5721, 1, 0
        %v5723 = vcvt.s32.f32 %v5722
        %v5724 = vld [vmem:[#allocation2 + $0x1c0] sm:$0xff]
        %v5725 = vld [vmem:[#allocation2 + $0x1c8] sm:$0xff]
        %v5726 = vld [vmem:[#allocation2 + $0x1d0] sm:$0xff]
        %v5727 = vld [vmem:[#allocation2 + $0x1d8] sm:$0xff]
        %v5728 = vld [vmem:[#allocation2 + $0x1e0] sm:$0xff]
        %v5729 = vld [vmem:[#allocation2 + $0x1e8] sm:$0xff]
        %v5730 = vld [vmem:[#allocation2 + $0x1f0] sm:$0xff]
        %v5731 = vld [vmem:[#allocation2 + $0x1f8] sm:$0xff]
        %v5733 = vlaneseq
        %v5734 = vshrl.u32 %v5733, 7
        %v5735 = vsub.s32 0, %v5734
        %v5736 = vrot.slane %v5723, %v5735
        %v5737 = vlaneseq
        %v5738 = vshrl.u32 %v5737, 7
        %v5739 = vsub.s32 1, %v5738
        %v5740 = vrot.slane %v5723, %v5739
        %v5741 = vlaneseq
        %v5742 = vshrl.u32 %v5741, 7
        %v5743 = vsub.s32 2, %v5742
        %v5744 = vrot.slane %v5723, %v5743
        %v5745 = vlaneseq
        %v5746 = vshrl.u32 %v5745, 7
        %v5747 = vsub.s32 3, %v5746
        %v5748 = vrot.slane %v5723, %v5747
        %v5753 = vmul.f32 %v5736, %v5724
        %v5754 = vmul.f32 %v5740, %v5725
        %v5755 = vmul.f32 %v5744, %v5726
        %v5756 = vmul.f32 %v5748, %v5727
        %v5757 = vmul.f32 %v5736, %v5728
        %v5758 = vmul.f32 %v5740, %v5729
        %v5759 = vmul.f32 %v5744, %v5730
        %v5760 = vmul.f32 %v5748, %v5731
        %v5761 = vadd.f32 %v5713, %v5753
        %v5762 = vadd.f32 %v5714, %v5754
        %v5763 = vadd.f32 %v5715, %v5755
        %v5764 = vadd.f32 %v5716, %v5756
        %v5765 = vadd.f32 %v5717, %v5757
        %v5766 = vadd.f32 %v5718, %v5758
        %v5767 = vadd.f32 %v5719, %v5759
        %v5768 = vadd.f32 %v5720, %v5760
        %vm5769 = vcmp.eq.s32.totalorder %v5392, 8
        %v5770 = vsel %vm5769, 1, 0
        %v5771 = vcvt.s32.f32 %v5770
        %v5772 = vld [vmem:[#allocation2 + $0x200] sm:$0xff]
        %v5773 = vld [vmem:[#allocation2 + $0x208] sm:$0xff]
        %v5774 = vld [vmem:[#allocation2 + $0x210] sm:$0xff]
        %v5775 = vld [vmem:[#allocation2 + $0x218] sm:$0xff]
        %v5776 = vld [vmem:[#allocation2 + $0x220] sm:$0xff]
        %v5777 = vld [vmem:[#allocation2 + $0x228] sm:$0xff]
        %v5778 = vld [vmem:[#allocation2 + $0x230] sm:$0xff]
        %v5779 = vld [vmem:[#allocation2 + $0x238] sm:$0xff]
        %v5781 = vlaneseq
        %v5782 = vshrl.u32 %v5781, 7
        %v5783 = vsub.s32 0, %v5782
        %v5784 = vrot.slane %v5771, %v5783
        %v5785 = vlaneseq
        %v5786 = vshrl.u32 %v5785, 7
        %v5787 = vsub.s32 1, %v5786
        %v5788 = vrot.slane %v5771, %v5787
        %v5789 = vlaneseq
        %v5790 = vshrl.u32 %v5789, 7
        %v5791 = vsub.s32 2, %v5790
        %v5792 = vrot.slane %v5771, %v5791
        %v5793 = vlaneseq
        %v5794 = vshrl.u32 %v5793, 7
        %v5795 = vsub.s32 3, %v5794
        %v5796 = vrot.slane %v5771, %v5795
        %v5801 = vmul.f32 %v5784, %v5772
        %v5802 = vmul.f32 %v5788, %v5773
        %v5803 = vmul.f32 %v5792, %v5774
        %v5804 = vmul.f32 %v5796, %v5775
        %v5805 = vmul.f32 %v5784, %v5776
        %v5806 = vmul.f32 %v5788, %v5777
        %v5807 = vmul.f32 %v5792, %v5778
        %v5808 = vmul.f32 %v5796, %v5779
        %v5809 = vadd.f32 %v5761, %v5801
        %v5810 = vadd.f32 %v5762, %v5802
        %v5811 = vadd.f32 %v5763, %v5803
        %v5812 = vadd.f32 %v5764, %v5804
        %v5813 = vadd.f32 %v5765, %v5805
        %v5814 = vadd.f32 %v5766, %v5806
        %v5815 = vadd.f32 %v5767, %v5807
        %v5816 = vadd.f32 %v5768, %v5808
        %vm5817 = vcmp.eq.s32.totalorder %v5392, 9
        %v5818 = vsel %vm5817, 1, 0
        %v5819 = vcvt.s32.f32 %v5818
        %v5820 = vld [vmem:[#allocation2 + $0x240] sm:$0xff]
        %v5821 = vld [vmem:[#allocation2 + $0x248] sm:$0xff]
        %v5822 = vld [vmem:[#allocation2 + $0x250] sm:$0xff]
        %v5823 = vld [vmem:[#allocation2 + $0x258] sm:$0xff]
        %v5824 = vld [vmem:[#allocation2 + $0x260] sm:$0xff]
        %v5825 = vld [vmem:[#allocation2 + $0x268] sm:$0xff]
        %v5826 = vld [vmem:[#allocation2 + $0x270] sm:$0xff]
        %v5827 = vld [vmem:[#allocation2 + $0x278] sm:$0xff]
        %v5829 = vlaneseq
        %v5830 = vshrl.u32 %v5829, 7
        %v5831 = vsub.s32 0, %v5830
        %v5832 = vrot.slane %v5819, %v5831
        %v5833 = vlaneseq
        %v5834 = vshrl.u32 %v5833, 7
        %v5835 = vsub.s32 1, %v5834
        %v5836 = vrot.slane %v5819, %v5835
        %v5837 = vlaneseq
        %v5838 = vshrl.u32 %v5837, 7
        %v5839 = vsub.s32 2, %v5838
        %v5840 = vrot.slane %v5819, %v5839
        %v5841 = vlaneseq
        %v5842 = vshrl.u32 %v5841, 7
        %v5843 = vsub.s32 3, %v5842
        %v5844 = vrot.slane %v5819, %v5843
        %v5849 = vmul.f32 %v5832, %v5820
        %v5850 = vmul.f32 %v5836, %v5821
        %v5851 = vmul.f32 %v5840, %v5822
        %v5852 = vmul.f32 %v5844, %v5823
        %v5853 = vmul.f32 %v5832, %v5824
        %v5854 = vmul.f32 %v5836, %v5825
        %v5855 = vmul.f32 %v5840, %v5826
        %v5856 = vmul.f32 %v5844, %v5827
        %v5857 = vadd.f32 %v5809, %v5849
        %v5858 = vadd.f32 %v5810, %v5850
        %v5859 = vadd.f32 %v5811, %v5851
        %v5860 = vadd.f32 %v5812, %v5852
        %v5861 = vadd.f32 %v5813, %v5853
        %v5862 = vadd.f32 %v5814, %v5854
        %v5863 = vadd.f32 %v5815, %v5855
        %v5864 = vadd.f32 %v5816, %v5856
        %vm5865 = vcmp.eq.s32.totalorder %v5392, 10
        %v5866 = vsel %vm5865, 1, 0
        %v5867 = vcvt.s32.f32 %v5866
        %v5868 = vld [vmem:[#allocation2 + $0x280] sm:$0xff]
        %v5869 = vld [vmem:[#allocation2 + $0x288] sm:$0xff]
        %v5870 = vld [vmem:[#allocation2 + $0x290] sm:$0xff]
        %v5871 = vld [vmem:[#allocation2 + $0x298] sm:$0xff]
        %v5872 = vld [vmem:[#allocation2 + $0x2a0] sm:$0xff]
        %v5873 = vld [vmem:[#allocation2 + $0x2a8] sm:$0xff]
        %v5874 = vld [vmem:[#allocation2 + $0x2b0] sm:$0xff]
        %v5875 = vld [vmem:[#allocation2 + $0x2b8] sm:$0xff]
        %v5877 = vlaneseq
        %v5878 = vshrl.u32 %v5877, 7
        %v5879 = vsub.s32 0, %v5878
        %v5880 = vrot.slane %v5867, %v5879
        %v5881 = vlaneseq
        %v5882 = vshrl.u32 %v5881, 7
        %v5883 = vsub.s32 1, %v5882
        %v5884 = vrot.slane %v5867, %v5883
        %v5885 = vlaneseq
        %v5886 = vshrl.u32 %v5885, 7
        %v5887 = vsub.s32 2, %v5886
        %v5888 = vrot.slane %v5867, %v5887
        %v5889 = vlaneseq
        %v5890 = vshrl.u32 %v5889, 7
        %v5891 = vsub.s32 3, %v5890
        %v5892 = vrot.slane %v5867, %v5891
        %v5897 = vmul.f32 %v5880, %v5868
        %v5898 = vmul.f32 %v5884, %v5869
        %v5899 = vmul.f32 %v5888, %v5870
        %v5900 = vmul.f32 %v5892, %v5871
        %v5901 = vmul.f32 %v5880, %v5872
        %v5902 = vmul.f32 %v5884, %v5873
        %v5903 = vmul.f32 %v5888, %v5874
        %v5904 = vmul.f32 %v5892, %v5875
        %v5905 = vadd.f32 %v5857, %v5897
        %v5906 = vadd.f32 %v5858, %v5898
        %v5907 = vadd.f32 %v5859, %v5899
        %v5908 = vadd.f32 %v5860, %v5900
        %v5909 = vadd.f32 %v5861, %v5901
        %v5910 = vadd.f32 %v5862, %v5902
        %v5911 = vadd.f32 %v5863, %v5903
        %v5912 = vadd.f32 %v5864, %v5904
        %vm5913 = vcmp.eq.s32.totalorder %v5392, 11
        %v5914 = vsel %vm5913, 1, 0
        %v5915 = vcvt.s32.f32 %v5914
        %v5916 = vld [vmem:[#allocation2 + $0x2c0] sm:$0xff]
        %v5917 = vld [vmem:[#allocation2 + $0x2c8] sm:$0xff]
        %v5918 = vld [vmem:[#allocation2 + $0x2d0] sm:$0xff]
        %v5919 = vld [vmem:[#allocation2 + $0x2d8] sm:$0xff]
        %v5920 = vld [vmem:[#allocation2 + $0x2e0] sm:$0xff]
        %v5921 = vld [vmem:[#allocation2 + $0x2e8] sm:$0xff]
        %v5922 = vld [vmem:[#allocation2 + $0x2f0] sm:$0xff]
        %v5923 = vld [vmem:[#allocation2 + $0x2f8] sm:$0xff]
        %v5925 = vlaneseq
        %v5926 = vshrl.u32 %v5925, 7
        %v5927 = vsub.s32 0, %v5926
        %v5928 = vrot.slane %v5915, %v5927
        %v5929 = vlaneseq
        %v5930 = vshrl.u32 %v5929, 7
        %v5931 = vsub.s32 1, %v5930
        %v5932 = vrot.slane %v5915, %v5931
        %v5933 = vlaneseq
        %v5934 = vshrl.u32 %v5933, 7
        %v5935 = vsub.s32 2, %v5934
        %v5936 = vrot.slane %v5915, %v5935
        %v5937 = vlaneseq
        %v5938 = vshrl.u32 %v5937, 7
        %v5939 = vsub.s32 3, %v5938
        %v5940 = vrot.slane %v5915, %v5939
        %v5945 = vmul.f32 %v5928, %v5916
        %v5946 = vmul.f32 %v5932, %v5917
        %v5947 = vmul.f32 %v5936, %v5918
        %v5948 = vmul.f32 %v5940, %v5919
        %v5949 = vmul.f32 %v5928, %v5920
        %v5950 = vmul.f32 %v5932, %v5921
        %v5951 = vmul.f32 %v5936, %v5922
        %v5952 = vmul.f32 %v5940, %v5923
        %v5953 = vadd.f32 %v5905, %v5945
        %v5954 = vadd.f32 %v5906, %v5946
        %v5955 = vadd.f32 %v5907, %v5947
        %v5956 = vadd.f32 %v5908, %v5948
        %v5957 = vadd.f32 %v5909, %v5949
        %v5958 = vadd.f32 %v5910, %v5950
        %v5959 = vadd.f32 %v5911, %v5951
        %v5960 = vadd.f32 %v5912, %v5952
        %vm5961 = vcmp.eq.s32.totalorder %v5392, 12
        %v5962 = vsel %vm5961, 1, 0
        %v5963 = vcvt.s32.f32 %v5962
        %v5964 = vld [vmem:[#allocation2 + $0x300] sm:$0xff]
        %v5965 = vld [vmem:[#allocation2 + $0x308] sm:$0xff]
        %v5966 = vld [vmem:[#allocation2 + $0x310] sm:$0xff]
        %v5967 = vld [vmem:[#allocation2 + $0x318] sm:$0xff]
        %v5968 = vld [vmem:[#allocation2 + $0x320] sm:$0xff]
        %v5969 = vld [vmem:[#allocation2 + $0x328] sm:$0xff]
        %v5970 = vld [vmem:[#allocation2 + $0x330] sm:$0xff]
        %v5971 = vld [vmem:[#allocation2 + $0x338] sm:$0xff]
        %v5973 = vlaneseq
        %v5974 = vshrl.u32 %v5973, 7
        %v5975 = vsub.s32 0, %v5974
        %v5976 = vrot.slane %v5963, %v5975
        %v5977 = vlaneseq
        %v5978 = vshrl.u32 %v5977, 7
        %v5979 = vsub.s32 1, %v5978
        %v5980 = vrot.slane %v5963, %v5979
        %v5981 = vlaneseq
        %v5982 = vshrl.u32 %v5981, 7
        %v5983 = vsub.s32 2, %v5982
        %v5984 = vrot.slane %v5963, %v5983
        %v5985 = vlaneseq
        %v5986 = vshrl.u32 %v5985, 7
        %v5987 = vsub.s32 3, %v5986
        %v5988 = vrot.slane %v5963, %v5987
        %v5993 = vmul.f32 %v5976, %v5964
        %v5994 = vmul.f32 %v5980, %v5965
        %v5995 = vmul.f32 %v5984, %v5966
        %v5996 = vmul.f32 %v5988, %v5967
        %v5997 = vmul.f32 %v5976, %v5968
        %v5998 = vmul.f32 %v5980, %v5969
        %v5999 = vmul.f32 %v5984, %v5970
        %v6000 = vmul.f32 %v5988, %v5971
        %v6001 = vadd.f32 %v5953, %v5993
        %v6002 = vadd.f32 %v5954, %v5994
        %v6003 = vadd.f32 %v5955, %v5995
        %v6004 = vadd.f32 %v5956, %v5996
        %v6005 = vadd.f32 %v5957, %v5997
        %v6006 = vadd.f32 %v5958, %v5998
        %v6007 = vadd.f32 %v5959, %v5999
        %v6008 = vadd.f32 %v5960, %v6000
        %vm6009 = vcmp.eq.s32.totalorder %v5392, 13
        %v6010 = vsel %vm6009, 1, 0
        %v6011 = vcvt.s32.f32 %v6010
        %v6012 = vld [vmem:[#allocation2 + $0x340] sm:$0xff]
        %v6013 = vld [vmem:[#allocation2 + $0x348] sm:$0xff]
        %v6014 = vld [vmem:[#allocation2 + $0x350] sm:$0xff]
        %v6015 = vld [vmem:[#allocation2 + $0x358] sm:$0xff]
        %v6016 = vld [vmem:[#allocation2 + $0x360] sm:$0xff]
        %v6017 = vld [vmem:[#allocation2 + $0x368] sm:$0xff]
        %v6018 = vld [vmem:[#allocation2 + $0x370] sm:$0xff]
        %v6019 = vld [vmem:[#allocation2 + $0x378] sm:$0xff]
        %v6021 = vlaneseq
        %v6022 = vshrl.u32 %v6021, 7
        %v6023 = vsub.s32 0, %v6022
        %v6024 = vrot.slane %v6011, %v6023
        %v6025 = vlaneseq
        %v6026 = vshrl.u32 %v6025, 7
        %v6027 = vsub.s32 1, %v6026
        %v6028 = vrot.slane %v6011, %v6027
        %v6029 = vlaneseq
        %v6030 = vshrl.u32 %v6029, 7
        %v6031 = vsub.s32 2, %v6030
        %v6032 = vrot.slane %v6011, %v6031
        %v6033 = vlaneseq
        %v6034 = vshrl.u32 %v6033, 7
        %v6035 = vsub.s32 3, %v6034
        %v6036 = vrot.slane %v6011, %v6035
        %v6041 = vmul.f32 %v6024, %v6012
        %v6042 = vmul.f32 %v6028, %v6013
        %v6043 = vmul.f32 %v6032, %v6014
        %v6044 = vmul.f32 %v6036, %v6015
        %v6045 = vmul.f32 %v6024, %v6016
        %v6046 = vmul.f32 %v6028, %v6017
        %v6047 = vmul.f32 %v6032, %v6018
        %v6048 = vmul.f32 %v6036, %v6019
        %v6049 = vadd.f32 %v6001, %v6041
        %v6050 = vadd.f32 %v6002, %v6042
        %v6051 = vadd.f32 %v6003, %v6043
        %v6052 = vadd.f32 %v6004, %v6044
        %v6053 = vadd.f32 %v6005, %v6045
        %v6054 = vadd.f32 %v6006, %v6046
        %v6055 = vadd.f32 %v6007, %v6047
        %v6056 = vadd.f32 %v6008, %v6048
        %vm6057 = vcmp.eq.s32.totalorder %v5392, 14
        %v6058 = vsel %vm6057, 1, 0
        %v6059 = vcvt.s32.f32 %v6058
        %v6060 = vld [vmem:[#allocation2 + $0x380] sm:$0xff]
        %v6061 = vld [vmem:[#allocation2 + $0x388] sm:$0xff]
        %v6062 = vld [vmem:[#allocation2 + $0x390] sm:$0xff]
        %v6063 = vld [vmem:[#allocation2 + $0x398] sm:$0xff]
        %v6064 = vld [vmem:[#allocation2 + $0x3a0] sm:$0xff]
        %v6065 = vld [vmem:[#allocation2 + $0x3a8] sm:$0xff]
        %v6066 = vld [vmem:[#allocation2 + $0x3b0] sm:$0xff]
        %v6067 = vld [vmem:[#allocation2 + $0x3b8] sm:$0xff]
        %v6069 = vlaneseq
        %v6070 = vshrl.u32 %v6069, 7
        %v6071 = vsub.s32 0, %v6070
        %v6072 = vrot.slane %v6059, %v6071
        %v6073 = vlaneseq
        %v6074 = vshrl.u32 %v6073, 7
        %v6075 = vsub.s32 1, %v6074
        %v6076 = vrot.slane %v6059, %v6075
        %v6077 = vlaneseq
        %v6078 = vshrl.u32 %v6077, 7
        %v6079 = vsub.s32 2, %v6078
        %v6080 = vrot.slane %v6059, %v6079
        %v6081 = vlaneseq
        %v6082 = vshrl.u32 %v6081, 7
        %v6083 = vsub.s32 3, %v6082
        %v6084 = vrot.slane %v6059, %v6083
        %v6089 = vmul.f32 %v6072, %v6060
        %v6090 = vmul.f32 %v6076, %v6061
        %v6091 = vmul.f32 %v6080, %v6062
        %v6092 = vmul.f32 %v6084, %v6063
        %v6093 = vmul.f32 %v6072, %v6064
        %v6094 = vmul.f32 %v6076, %v6065
        %v6095 = vmul.f32 %v6080, %v6066
        %v6096 = vmul.f32 %v6084, %v6067
        %v6097 = vadd.f32 %v6049, %v6089
        %v6098 = vadd.f32 %v6050, %v6090
        %v6099 = vadd.f32 %v6051, %v6091
        %v6100 = vadd.f32 %v6052, %v6092
        %v6101 = vadd.f32 %v6053, %v6093
        %v6102 = vadd.f32 %v6054, %v6094
        %v6103 = vadd.f32 %v6055, %v6095
        %v6104 = vadd.f32 %v6056, %v6096
        %vm6105 = vcmp.eq.s32.totalorder %v5392, 15
        %v6106 = vsel %vm6105, 1, 0
        %v6107 = vcvt.s32.f32 %v6106
        %v6108 = vld [vmem:[#allocation2 + $0x3c0] sm:$0xff]
        %v6109 = vld [vmem:[#allocation2 + $0x3c8] sm:$0xff]
        %v6110 = vld [vmem:[#allocation2 + $0x3d0] sm:$0xff]
        %v6111 = vld [vmem:[#allocation2 + $0x3d8] sm:$0xff]
        %v6112 = vld [vmem:[#allocation2 + $0x3e0] sm:$0xff]
        %v6113 = vld [vmem:[#allocation2 + $0x3e8] sm:$0xff]
        %v6114 = vld [vmem:[#allocation2 + $0x3f0] sm:$0xff]
        %v6115 = vld [vmem:[#allocation2 + $0x3f8] sm:$0xff]
        %v6117 = vlaneseq
        %v6118 = vshrl.u32 %v6117, 7
        %v6119 = vsub.s32 0, %v6118
        %v6120 = vrot.slane %v6107, %v6119
        %v6121 = vlaneseq
        %v6122 = vshrl.u32 %v6121, 7
        %v6123 = vsub.s32 1, %v6122
        %v6124 = vrot.slane %v6107, %v6123
        %v6125 = vlaneseq
        %v6126 = vshrl.u32 %v6125, 7
        %v6127 = vsub.s32 2, %v6126
        %v6128 = vrot.slane %v6107, %v6127
        %v6129 = vlaneseq
        %v6130 = vshrl.u32 %v6129, 7
        %v6131 = vsub.s32 3, %v6130
        %v6132 = vrot.slane %v6107, %v6131
        %v6137 = vmul.f32 %v6120, %v6108
        %v6138 = vmul.f32 %v6124, %v6109
        %v6139 = vmul.f32 %v6128, %v6110
        %v6140 = vmul.f32 %v6132, %v6111
        %v6141 = vmul.f32 %v6120, %v6112
        %v6142 = vmul.f32 %v6124, %v6113
        %v6143 = vmul.f32 %v6128, %v6114
        %v6144 = vmul.f32 %v6132, %v6115
        %v6145 = vadd.f32 %v6097, %v6137
        %v6146 = vadd.f32 %v6098, %v6138
        %v6147 = vadd.f32 %v6099, %v6139
        %v6148 = vadd.f32 %v6100, %v6140
        %v6149 = vadd.f32 %v6101, %v6141
        %v6150 = vadd.f32 %v6102, %v6142
        %v6151 = vadd.f32 %v6103, %v6143
        %v6152 = vadd.f32 %v6104, %v6144
        %s6153 = scalar_lea.vmem %s196, 5
        %v6154 = vld [vmem:[%s6153] ss:$8 sm:$0xf]
        %vm6155 = vcmp.eq.s32.totalorder %v6154, 0
        %v6156 = vsel %vm6155, 1, 0
        %v6157 = vcvt.s32.f32 %v6156
        %v6158 = vld [vmem:[%s3] sm:$0xff]
        %v6159 = vld [vmem:[%s3 + $0x8] sm:$0xff]
        %v6161 = vlaneseq
        %v6162 = vshrl.u32 %v6161, 7
        %v6163 = vsub.s32 0, %v6162
        %v6164 = vrot.slane %v6157, %v6163
        %v6165 = vlaneseq
        %v6166 = vshrl.u32 %v6165, 7
        %v6167 = vsub.s32 1, %v6166
        %v6168 = vrot.slane %v6157, %v6167
        %v6169 = vlaneseq
        %v6170 = vshrl.u32 %v6169, 7
        %v6171 = vsub.s32 2, %v6170
        %v6172 = vrot.slane %v6157, %v6171
        %v6173 = vlaneseq
        %v6174 = vshrl.u32 %v6173, 7
        %v6175 = vsub.s32 3, %v6174
        %v6176 = vrot.slane %v6157, %v6175
        %6182 = vset.pattern.permute.xlu0 0
        %6183 = vperm.xlu0 %6182, %v6158
        %v6184 = vpop.permute.xlu0 %6183
        %6187 = vset.pattern.permute.xlu0 0
        %6188 = vperm.xlu0 %6187, %v6159
        %v6189 = vpop.permute.xlu0 %6188
        %v6191 = vmul.f32 %v6164, %v6184
        %v6192 = vmul.f32 %v6168, %v6184
        %v6193 = vmul.f32 %v6172, %v6184
        %v6194 = vmul.f32 %v6176, %v6184
        %v6195 = vmul.f32 %v6164, %v6189
        %v6196 = vmul.f32 %v6168, %v6189
        %v6197 = vmul.f32 %v6172, %v6189
        %v6198 = vmul.f32 %v6176, %v6189
        %vm6199 = vcmp.eq.s32.totalorder %v6154, 1
        %v6200 = vsel %vm6199, 1, 0
        %v6201 = vcvt.s32.f32 %v6200
        %v6203 = vlaneseq
        %v6204 = vshrl.u32 %v6203, 7
        %v6205 = vsub.s32 0, %v6204
        %v6206 = vrot.slane %v6201, %v6205
        %v6207 = vlaneseq
        %v6208 = vshrl.u32 %v6207, 7
        %v6209 = vsub.s32 1, %v6208
        %v6210 = vrot.slane %v6201, %v6209
        %v6211 = vlaneseq
        %v6212 = vshrl.u32 %v6211, 7
        %v6213 = vsub.s32 2, %v6212
        %v6214 = vrot.slane %v6201, %v6213
        %v6215 = vlaneseq
        %v6216 = vshrl.u32 %v6215, 7
        %v6217 = vsub.s32 3, %v6216
        %v6218 = vrot.slane %v6201, %v6217
        %6223 = vset.pattern.permute.xlu0 1
        %6224 = vperm.xlu0 %6223, %v6158
        %v6225 = vpop.permute.xlu0 %6224
        %6227 = vset.pattern.permute.xlu0 1
        %6228 = vperm.xlu0 %6227, %v6159
        %v6229 = vpop.permute.xlu0 %6228
        %v6231 = vmul.f32 %v6206, %v6225
        %v6232 = vmul.f32 %v6210, %v6225
        %v6233 = vmul.f32 %v6214, %v6225
        %v6234 = vmul.f32 %v6218, %v6225
        %v6235 = vmul.f32 %v6206, %v6229
        %v6236 = vmul.f32 %v6210, %v6229
        %v6237 = vmul.f32 %v6214, %v6229
        %v6238 = vmul.f32 %v6218, %v6229
        %v6239 = vadd.f32 %v6191, %v6231
        %v6240 = vadd.f32 %v6192, %v6232
        %v6241 = vadd.f32 %v6193, %v6233
        %v6242 = vadd.f32 %v6194, %v6234
        %v6243 = vadd.f32 %v6195, %v6235
        %v6244 = vadd.f32 %v6196, %v6236
        %v6245 = vadd.f32 %v6197, %v6237
        %v6246 = vadd.f32 %v6198, %v6238
        %vm6247 = vcmp.eq.s32.totalorder %v6154, 2
        %v6248 = vsel %vm6247, 1, 0
        %v6249 = vcvt.s32.f32 %v6248
        %v6251 = vlaneseq
        %v6252 = vshrl.u32 %v6251, 7
        %v6253 = vsub.s32 0, %v6252
        %v6254 = vrot.slane %v6249, %v6253
        %v6255 = vlaneseq
        %v6256 = vshrl.u32 %v6255, 7
        %v6257 = vsub.s32 1, %v6256
        %v6258 = vrot.slane %v6249, %v6257
        %v6259 = vlaneseq
        %v6260 = vshrl.u32 %v6259, 7
        %v6261 = vsub.s32 2, %v6260
        %v6262 = vrot.slane %v6249, %v6261
        %v6263 = vlaneseq
        %v6264 = vshrl.u32 %v6263, 7
        %v6265 = vsub.s32 3, %v6264
        %v6266 = vrot.slane %v6249, %v6265
        %6271 = vset.pattern.permute.xlu0 2
        %6272 = vperm.xlu0 %6271, %v6158
        %v6273 = vpop.permute.xlu0 %6272
        %6275 = vset.pattern.permute.xlu0 2
        %6276 = vperm.xlu0 %6275, %v6159
        %v6277 = vpop.permute.xlu0 %6276
        %v6279 = vmul.f32 %v6254, %v6273
        %v6280 = vmul.f32 %v6258, %v6273
        %v6281 = vmul.f32 %v6262, %v6273
        %v6282 = vmul.f32 %v6266, %v6273
        %v6283 = vmul.f32 %v6254, %v6277
        %v6284 = vmul.f32 %v6258, %v6277
        %v6285 = vmul.f32 %v6262, %v6277
        %v6286 = vmul.f32 %v6266, %v6277
        %v6287 = vadd.f32 %v6239, %v6279
        %v6288 = vadd.f32 %v6240, %v6280
        %v6289 = vadd.f32 %v6241, %v6281
        %v6290 = vadd.f32 %v6242, %v6282
        %v6291 = vadd.f32 %v6243, %v6283
        %v6292 = vadd.f32 %v6244, %v6284
        %v6293 = vadd.f32 %v6245, %v6285
        %v6294 = vadd.f32 %v6246, %v6286
        %vm6295 = vcmp.eq.s32.totalorder %v6154, 3
        %v6296 = vsel %vm6295, 1, 0
        %v6297 = vcvt.s32.f32 %v6296
        %v6299 = vlaneseq
        %v6300 = vshrl.u32 %v6299, 7
        %v6301 = vsub.s32 0, %v6300
        %v6302 = vrot.slane %v6297, %v6301
        %v6303 = vlaneseq
        %v6304 = vshrl.u32 %v6303, 7
        %v6305 = vsub.s32 1, %v6304
        %v6306 = vrot.slane %v6297, %v6305
        %v6307 = vlaneseq
        %v6308 = vshrl.u32 %v6307, 7
        %v6309 = vsub.s32 2, %v6308
        %v6310 = vrot.slane %v6297, %v6309
        %v6311 = vlaneseq
        %v6312 = vshrl.u32 %v6311, 7
        %v6313 = vsub.s32 3, %v6312
        %v6314 = vrot.slane %v6297, %v6313
        %6319 = vset.pattern.permute.xlu0 3
        %6320 = vperm.xlu0 %6319, %v6158
        %v6321 = vpop.permute.xlu0 %6320
        %6323 = vset.pattern.permute.xlu0 3
        %6324 = vperm.xlu0 %6323, %v6159
        %v6325 = vpop.permute.xlu0 %6324
        %v6327 = vmul.f32 %v6302, %v6321
        %v6328 = vmul.f32 %v6306, %v6321
        %v6329 = vmul.f32 %v6310, %v6321
        %v6330 = vmul.f32 %v6314, %v6321
        %v6331 = vmul.f32 %v6302, %v6325
        %v6332 = vmul.f32 %v6306, %v6325
        %v6333 = vmul.f32 %v6310, %v6325
        %v6334 = vmul.f32 %v6314, %v6325
        %v6335 = vadd.f32 %v6287, %v6327
        %v6336 = vadd.f32 %v6288, %v6328
        %v6337 = vadd.f32 %v6289, %v6329
        %v6338 = vadd.f32 %v6290, %v6330
        %v6339 = vadd.f32 %v6291, %v6331
        %v6340 = vadd.f32 %v6292, %v6332
        %v6341 = vadd.f32 %v6293, %v6333
        %v6342 = vadd.f32 %v6294, %v6334
        %v6343 = vmul.f32 %v6335, %v6145
        %v6344 = vmul.f32 %v6336, %v6146
        %v6345 = vmul.f32 %v6337, %v6147
        %v6346 = vmul.f32 %v6338, %v6148
        %v6347 = vmul.f32 %v6339, %v6149
        %v6348 = vmul.f32 %v6340, %v6150
        %v6349 = vmul.f32 %v6341, %v6151
        %v6350 = vmul.f32 %v6342, %v6152
        %v6351 = vadd.f32 %v6343, %v6347
        %v6352 = vrot.slane %v6351, 4
        %v6353 = vadd.f32 %v6351, %v6352
        %v6354 = vrot.slane %v6353, 2
        %v6355 = vadd.f32 %v6353, %v6354
        %v6356 = vrot.slane %v6355, 1
        %v6357 = vadd.f32 %v6355, %v6356
        %v6358 = vadd.f32 %v6344, %v6348
        %v6359 = vrot.slane %v6358, 4
        %v6360 = vadd.f32 %v6358, %v6359
        %v6361 = vrot.slane %v6360, 2
        %v6362 = vadd.f32 %v6360, %v6361
        %v6363 = vrot.slane %v6362, 1
        %v6364 = vadd.f32 %v6362, %v6363
        %v6365 = vadd.f32 %v6345, %v6349
        %v6366 = vrot.slane %v6365, 4
        %v6367 = vadd.f32 %v6365, %v6366
        %v6368 = vrot.slane %v6367, 2
        %v6369 = vadd.f32 %v6367, %v6368
        %v6370 = vrot.slane %v6369, 1
        %v6371 = vadd.f32 %v6369, %v6370
        %v6372 = vadd.f32 %v6346, %v6350
        %v6373 = vrot.slane %v6372, 4
        %v6374 = vadd.f32 %v6372, %v6373
        %v6375 = vrot.slane %v6374, 2
        %v6376 = vadd.f32 %v6374, %v6375
        %v6377 = vrot.slane %v6376, 1
        %v6378 = vadd.f32 %v6376, %v6377
        %v6383 = vcombine.low %v6357, %v6364
        %v6384 = vcombine.low %v6371, %v6378
        %v6386 = vunpack.c.l.s4 1966171168
        %v6387 = vunpack.c.0.s8 %v6386
        %v6388 = vlaneseq
        %v6389 = vshrl.u32 %v6388, 7
        %v6390 = vsub.s32 %v6387, %v6389
        %v6391 = vrot.slane %v6383, %v6390
        %v6393 = vunpack.c.l.s4 1966171168
        %v6394 = vunpack.c.0.s8 %v6393
        %v6395 = vlaneseq
        %v6396 = vshrl.u32 %v6395, 7
        %v6397 = vsub.s32 %v6394, %v6396
        %v6398 = vrot.slane %v6384, %v6397
        %v6399 = vcombine.low %v6391, %v6398
        %v6401 = vunpack.c.l.s4 1966171168
        %v6402 = vunpack.c.0.s8 %v6401
        %v6403 = vlaneseq
        %v6404 = vshrl.u32 %v6403, 7
        %v6405 = vsub.s32 %v6402, %v6404
        %v6406 = vrot.slane %v6399, %v6405
        %v6408 = vlaneseq
        %vm6409 = vcmp.ge.s32.totalorder %v6408, 0
        %vm6410 = vcmp.lt.s32.totalorder %v6408, 512
        %vm6411 = vmand %vm6409, %vm6410
        %6412 = vst.msk [vmem:[%s191] sm:$0xf] %vm6411, %v6406
        %s6413 = sand.u32 %s115, 1
        %s6414 = scalar_lea.sflag [#allocation4], %s6413
        %s6415 = sand.u32 %s115, 1
        %s6416 = smul.addr %s6415, 4
        %s6417 = scalar_lea.vmem [#allocation3], %s6416
        // Predicated region
        $region37: #{tpu_custom_call.1} parent=35 // pred_check
          %p6418 = pneg %p125
        $region38: #{tpu_custom_call.1} parent=35 // pred_check_branch
          %6420 = sbr.rel (%p6418) target = $region40
        $region39: #{tpu_custom_call.1} parent=35 // pred_region
          %s6421 = smul.u32 4, %s18
          %s6423 = ssub.s32 64, 64
          %6424 = vsyncadd %s6414, %s6423
          %s6425 = smul.addr %s6421, 16
          %s6426 = scalar_lea.hbm %s4, %s6425
          %s6428 = sshll.u32 %s6417, 4
          %s6429 = int_to_ptr.vmem [resolvable:$true] %s6428
          %6431 = dma.vmem_to_hbm [thread:$0]  %s6429, 64, %s6426, %s6414
        $region40: #{tpu_custom_call.1} parent=35 // pred_fallthru
          _
      $region36: #{tpu_custom_call.1} parent=5 // pred_fallthru
        _
      %p6432 = scmp.le.s32.totalorder 2, %s13
      // Predicated region
      $region41: #{tpu_custom_call.1} parent=5 // pred_check
        %p6433 = pneg %p6432
      $region42: #{tpu_custom_call.1} parent=5 // pred_check_branch
        %6435 = sbr.rel (%p6433) target = $region44
      $region43: #{tpu_custom_call.1} parent=5 // pred_region
        %s6436 = ssub.s32 %s13, 2
        // Predicated region
        $region45: #{tpu_custom_call.1} parent=43 // pred_check
          %p6437 = pneg %p131
        $region46: #{tpu_custom_call.1} parent=43 // pred_check_branch
          %6439 = sbr.rel (%p6437) target = $region48
        $region47: #{tpu_custom_call.1} parent=43 // pred_region
          %s6440 = sand.u32 %s116, 1
          %s6441 = scalar_lea.sflag [#allocation4], %s6440
          %s6442 = sand.u32 %s116, 1
          %s6443 = smul.addr %s6442, 4
          %s6444 = scalar_lea.vmem [#allocation3], %s6443
          %6445 = dma.done %s6441, 64
        $region48: #{tpu_custom_call.1} parent=43 // pred_fallthru
          _
      $region44: #{tpu_custom_call.1} parent=5 // pred_fallthru
        _
    $region6: #{tpu_custom_call.1} parent=1 // loop_footer
      %s17 = sadd.s32 1, %s13
    $region7: #{tpu_custom_call.1} parent=1 // loop_footer_branch
      %12 = sbr.rel target = $region3
    $region8: #{tpu_custom_call.1} parent=1 // loop_exit
      _
    %6446 = vsyncpa [#allocation4], 1
    %s6447 = scalar_lea.sflag [#allocation4], 1
    %6448 = vsyncpa %s6447, 1

</llo_original>
